<compile_context>
chip_gen: v7x
topology: tpu7x:2x2x1
jax: 0.10.0
libtpu: 0.0.40
codegen_flags: <defaults>
</compile_context>

<pallas_src>
import jax
import jax.numpy as jnp
from jax.experimental import pallas as pl
from jax.experimental.pallas import tpu as pltpu

# Keep kernel matmuls and the XLA reference at full f32 precision so they agree.
jax.config.update("jax_default_matmul_precision", "highest")
HIGH = jax.lax.Precision.HIGHEST

# ---- problem sizes (small, consistent with the module) ----
BS, QLEN, DMODEL, NHEADS, DFF = 2, 16, 32, 4, 64
DK = DMODEL // NHEADS
DV = DMODEL // NHEADS
M = BS * QLEN
EPS = 1e-5
SCALE = float(DK) ** (-0.5)

# Packed-weight column offsets (128-lane aligned so in-kernel slices are clean sub-tiles)
WQKV_OFF, WO_OFF, W1_OFF = 0, 128, 256
WPACK_COLS = 384
VEC_COLS = 128
# Rows of the packed vector tile
R_BQKV, R_BO, R_B1, R_B2, R_G1, R_BE1, R_G2, R_BE2 = range(8)


def _gelu_exact(x):
    # nn.GELU() default = exact erf formulation
    return 0.5 * x * (1.0 + jax.lax.erf(x * (2.0 ** -0.5)))


def _batchnorm_2pass(x, gamma, beta):
    # BatchNorm1d over channels (last dim); biased variance over all rows (batch*seq),
    # centered two-pass form (matches the PyTorch training-mode forward), eps=1e-5.
    inv_n = 1.0 / x.shape[0]
    mean = jnp.sum(x, axis=0, keepdims=True) * inv_n
    xc = x - mean
    var = jnp.sum(xc * xc, axis=0, keepdims=True) * inv_n
    scale = jax.lax.rsqrt(var + EPS) * gamma       # per-channel, fused before broadcast
    return xc * scale + beta


def tst_encoder_layer_kernel(x_ref, wpack_ref, w2_ref, vecs_ref, out_ref):
    x = x_ref[...]                                              # [M, D] = [32, 32]

    # --- packed weights: static, 128-aligned lane slices of one VMEM operand ---
    wqkv = wpack_ref[:, WQKV_OFF:WQKV_OFF + 3 * DMODEL]         # [D, 3D]
    wo = wpack_ref[:, WO_OFF:WO_OFF + DMODEL]                   # [D, D]
    w1 = wpack_ref[:, W1_OFF:W1_OFF + DFF]                      # [D, DFF]
    w2 = w2_ref[...]                                            # [DFF, D]

    vecs = vecs_ref[...]                                        # [8, 128] single tile
    bqkv = vecs[R_BQKV:R_BQKV + 1, 0:3 * DMODEL]
    bo = vecs[R_BO:R_BO + 1, 0:DMODEL]
    b1 = vecs[R_B1:R_B1 + 1, 0:DFF]
    b2 = vecs[R_B2:R_B2 + 1, 0:DMODEL]
    g1 = vecs[R_G1:R_G1 + 1, 0:DMODEL]
    be1 = vecs[R_BE1:R_BE1 + 1, 0:DMODEL]
    g2 = vecs[R_G2:R_G2 + 1, 0:DMODEL]
    be2 = vecs[R_BE2:R_BE2 + 1, 0:DMODEL]

    # --- fused QKV projection: one MXU matmul, 96 output lanes ---
    qkv = jnp.dot(x, wqkv, preferred_element_type=jnp.float32,
                  precision=HIGH) + bqkv                        # [M, 3D]

    # --- head-batched scaled dot-product attention ---
    def gather_heads(col0):
        # [M, DK] lane-slices -> [B, Q, DK] (leading-dim split) -> concat on axis 0
        parts = [
            qkv[:, col0 + h * DK:col0 + (h + 1) * DK].reshape(BS, QLEN, DK)
            for h in range(NHEADS)
        ]
        return jnp.concatenate(parts, axis=0)                   # [H*B, Q, DK], n=h*B+b

    qh = gather_heads(0)
    kh = gather_heads(DMODEL)
    vh = gather_heads(2 * DMODEL)

    s = jnp.einsum("nqd,nkd->nqk", qh, kh, preferred_element_type=jnp.float32,
                   precision=HIGH) * SCALE                      # [H*B, Q, Q]
    mx = jnp.max(s, axis=-1, keepdims=True)
    p = jnp.exp(s - mx)
    denom = jnp.sum(p, axis=-1, keepdims=True)
    p = p / denom                                               # softmax; dropout(p)=id
    o = jnp.einsum("nqk,nkd->nqd", p, vh, preferred_element_type=jnp.float32,
                   precision=HIGH)                              # [H*B, Q, DV]

    # reassemble [M, D] with head-major feature columns (matches torch .view(bs,-1,H*dv))
    attn_out = jnp.concatenate(
        [o[h * BS:(h + 1) * BS].reshape(M, DV) for h in range(NHEADS)],
        axis=-1)                                                # [M, D]

    # --- output projection + residual + norm_attn ---
    src = x + jnp.dot(attn_out, wo, preferred_element_type=jnp.float32,
                      precision=HIGH) + bo
    src = _batchnorm_2pass(src, g1, be1)

    # --- position-wise feed-forward + residual + norm_ffn ---
    h1 = jnp.dot(src, w1, preferred_element_type=jnp.float32, precision=HIGH) + b1
    h1 = _gelu_exact(h1)
    src = src + jnp.dot(h1, w2, preferred_element_type=jnp.float32,
                        precision=HIGH) + b2
    src = _batchnorm_2pass(src, g2, be2)

    out_ref[...] = src.astype(out_ref.dtype)


# ----------------------------- host-side packing & wrapper -----------------------------
def pack_params(p):
    """One-time packing: 16 small tensors -> 3 operands (wpack, w2, vecs)."""
    wqkv = jnp.concatenate([p["wq"], p["wk"], p["wv"]], axis=1)          # [D, 3D]
    wpack = jnp.zeros((DMODEL, WPACK_COLS), jnp.float32)
    wpack = wpack.at[:, WQKV_OFF:WQKV_OFF + 3 * DMODEL].set(wqkv)
    wpack = wpack.at[:, WO_OFF:WO_OFF + DMODEL].set(p["wo"])
    wpack = wpack.at[:, W1_OFF:W1_OFF + DFF].set(p["w1"])

    def row(v):
        v = jnp.reshape(v, (-1,)).astype(jnp.float32)
        return jnp.pad(v, (0, VEC_COLS - v.shape[0]))

    bqkv = jnp.concatenate(
        [p["bq"].reshape(-1), p["bk"].reshape(-1), p["bv"].reshape(-1)])
    vecs = jnp.stack(
        [row(bqkv), row(p["bo"]), row(p["b1"]), row(p["b2"]),
         row(p["g1"]), row(p["be1"]), row(p["g2"]), row(p["be2"])], axis=0)  # [8, 128]
    return wpack, p["w2"].astype(jnp.float32), vecs


def tst_encoder_layer(x, wpack, w2, vecs):
    b, q, d = x.shape
    x2d = x.reshape(b * q, d)     # flatten (B, Q) -> M rows once, outside the kernel
    out2d = pl.pallas_call(
        tst_encoder_layer_kernel,
        out_shape=jax.ShapeDtypeStruct((b * q, d), x.dtype),
        in_specs=[pl.BlockSpec(memory_space=pltpu.MemorySpace.VMEM)] * 4,
        out_specs=pl.BlockSpec(memory_space=pltpu.MemorySpace.VMEM),
    )(x2d, wpack, w2, vecs)
    return out2d.reshape(b, q, d)


# ----------------------- pure-JAX reference (exact math, for verification) -----------------------
def _batchnorm_ref(x, gamma, beta):
    mu = jnp.mean(x, axis=(0, 1), keepdims=True)
    var = jnp.mean((x - mu) ** 2, axis=(0, 1), keepdims=True)
    return (x - mu) / jnp.sqrt(var + EPS) * gamma + beta


def reference_forward(x, p):
    q = jnp.einsum("bqd,de->bqe", x, p["wq"], precision=HIGH) + p["bq"]
    k = jnp.einsum("bqd,de->bqe", x, p["wk"], precision=HIGH) + p["bk"]
    v = jnp.einsum("bqd,de->bqe", x, p["wv"], precision=HIGH) + p["bv"]
    outs = []
    for h in range(NHEADS):
        qh = q[:, :, h * DK:(h + 1) * DK]
        kh = k[:, :, h * DK:(h + 1) * DK]
        vh = v[:, :, h * DV:(h + 1) * DV]
        s = jnp.einsum("bqd,bkd->bqk", qh, kh, precision=HIGH) * SCALE
        pw = jax.nn.softmax(s, axis=-1)
        outs.append(jnp.einsum("bqk,bkd->bqd", pw, vh, precision=HIGH))
    attn_out = jnp.concatenate(outs, axis=-1)
    src = x + jnp.einsum("bqd,de->bqe", attn_out, p["wo"], precision=HIGH) + p["bo"]
    src = _batchnorm_ref(src, p["g1"], p["be1"])
    h1 = jnp.einsum("bqd,df->bqf", src, p["w1"], precision=HIGH) + p["b1"]
    h1 = 0.5 * h1 * (1.0 + jax.lax.erf(h1 * (2.0 ** -0.5)))
    src = src + jnp.einsum("bqf,fd->bqd", h1, p["w2"], precision=HIGH) + p["b2"]
    src = _batchnorm_ref(src, p["g2"], p["be2"])
    return src


def make_params(key):
    ks = jax.random.split(key, 16)

    def lin_w(k, fan_in, shape):
        return jax.random.normal(k, shape, jnp.float32) / jnp.sqrt(fan_in)

    def lin_b(k, fan_in, n):
        bound = 1.0 / jnp.sqrt(fan_in)
        return jax.random.uniform(k, (1, n), jnp.float32, -bound, bound)

    return {
        # W_Q / W_K / W_V: Linear(d_model, d_k*n_heads), stored as [in, out]
        "wq": lin_w(ks[0], DMODEL, (DMODEL, NHEADS * DK)),
        "bq": lin_b(ks[1], DMODEL, NHEADS * DK),
        "wk": lin_w(ks[2], DMODEL, (DMODEL, NHEADS * DK)),
        "bk": lin_b(ks[3], DMODEL, NHEADS * DK),
        "wv": lin_w(ks[4], DMODEL, (DMODEL, NHEADS * DV)),
        "bv": lin_b(ks[5], DMODEL, NHEADS * DV),
        # to_out: Linear(n_heads*d_v, d_model)
        "wo": lin_w(ks[6], NHEADS * DV, (NHEADS * DV, DMODEL)),
        "bo": lin_b(ks[7], NHEADS * DV, DMODEL),
        # ff: Linear(d_model, d_ff), Linear(d_ff, d_model)
        "w1": lin_w(ks[8], DMODEL, (DMODEL, DFF)),
        "b1": lin_b(ks[9], DMODEL, DFF),
        "w2": lin_w(ks[10], DFF, (DFF, DMODEL)),
        "b2": lin_b(ks[11], DFF, DMODEL),
        # BatchNorm affine params (non-trivial values to exercise the math)
        "g1": 1.0 + 0.1 * jax.random.normal(ks[12], (1, DMODEL), jnp.float32),
        "be1": 0.1 * jax.random.normal(ks[13], (1, DMODEL), jnp.float32),
        "g2": 1.0 + 0.1 * jax.random.normal(ks[14], (1, DMODEL), jnp.float32),
        "be2": 0.1 * jax.random.normal(ks[15], (1, DMODEL), jnp.float32),
    }


if __name__ == "__main__":
    root = jax.random.PRNGKey(0)
    k_x, k_p = jax.random.split(root)

    x = jax.random.normal(k_x, (BS, QLEN, DMODEL), jnp.float32)
    params = make_params(k_p)
    wpack, w2, vecs = pack_params(params)          # one-time host-side packing

    out = jax.block_until_ready(tst_encoder_layer(x, wpack, w2, vecs))
    ref = jax.block_until_ready(reference_forward(x, params))

    assert out.shape == (BS, QLEN, DMODEL)
    max_err = float(jnp.max(jnp.abs(out - ref)))
    assert jnp.allclose(out, ref, rtol=2e-3, atol=2e-3), max_err

    print("KERNEL_OK")
</pallas_src>

<mosaic_0001>
module attributes {stable_mosaic.version = 11 : i64} {
  func.func @tst_encoder_layer_kernel(%arg0: memref<32x32xf32, #tpu.memory_space<vmem>>, %arg1: memref<32x384xf32, #tpu.memory_space<vmem>>, %arg2: memref<64x32xf32, #tpu.memory_space<vmem>>, %arg3: memref<8x128xf32, #tpu.memory_space<vmem>>, %arg4: memref<32x32xf32, #tpu.memory_space<vmem>>) attributes {dimension_semantics = [], scalar_prefetch = 0 : i64, scratch_operands = 0 : i64, tpu.core_type = #tpu.core_type<tc>} {
    %c0 = arith.constant 0 : index
    %c0_0 = arith.constant 0 : index
    %0 = vector.load %arg0[%c0, %c0_0] : memref<32x32xf32, #tpu.memory_space<vmem>>, vector<32x32xf32>
    %c0_1 = arith.constant 0 : index
    %c0_2 = arith.constant 0 : index
    %1 = vector.load %arg1[%c0_1, %c0_2] : memref<32x384xf32, #tpu.memory_space<vmem>>, vector<32x96xf32>
    %c0_3 = arith.constant 0 : index
    %c128 = arith.constant 128 : index
    %2 = vector.load %arg1[%c0_3, %c128] : memref<32x384xf32, #tpu.memory_space<vmem>>, vector<32x32xf32>
    %c0_4 = arith.constant 0 : index
    %c256 = arith.constant 256 : index
    %3 = vector.load %arg1[%c0_4, %c256] : memref<32x384xf32, #tpu.memory_space<vmem>>, vector<32x64xf32>
    %c0_5 = arith.constant 0 : index
    %c0_6 = arith.constant 0 : index
    %4 = vector.load %arg2[%c0_5, %c0_6] : memref<64x32xf32, #tpu.memory_space<vmem>>, vector<64x32xf32>
    %c0_7 = arith.constant 0 : index
    %c0_8 = arith.constant 0 : index
    %5 = vector.load %arg3[%c0_7, %c0_8] : memref<8x128xf32, #tpu.memory_space<vmem>>, vector<8x128xf32>
    %6 = vector.extract_strided_slice %5 {offsets = [0, 0], sizes = [1, 96], strides = [1, 1]} : vector<8x128xf32> to vector<1x96xf32>
    %7 = vector.extract_strided_slice %5 {offsets = [1, 0], sizes = [1, 32], strides = [1, 1]} : vector<8x128xf32> to vector<1x32xf32>
    %8 = vector.extract_strided_slice %5 {offsets = [2, 0], sizes = [1, 64], strides = [1, 1]} : vector<8x128xf32> to vector<1x64xf32>
    %9 = vector.extract_strided_slice %5 {offsets = [3, 0], sizes = [1, 32], strides = [1, 1]} : vector<8x128xf32> to vector<1x32xf32>
    %10 = vector.extract_strided_slice %5 {offsets = [4, 0], sizes = [1, 32], strides = [1, 1]} : vector<8x128xf32> to vector<1x32xf32>
    %11 = vector.extract_strided_slice %5 {offsets = [5, 0], sizes = [1, 32], strides = [1, 1]} : vector<8x128xf32> to vector<1x32xf32>
    %12 = vector.extract_strided_slice %5 {offsets = [6, 0], sizes = [1, 32], strides = [1, 1]} : vector<8x128xf32> to vector<1x32xf32>
    %13 = vector.extract_strided_slice %5 {offsets = [7, 0], sizes = [1, 32], strides = [1, 1]} : vector<8x128xf32> to vector<1x32xf32>
    %cst = arith.constant dense<0.000000e+00> : vector<32x96xf32>
    %14 = tpu.matmul %0, %1, %cst {dimension_numbers = #tpu.dot_dimension_numbers<[1], [0], [0], [1], [0, 0, 1, 1], [], []>, precision = #tpu.contract_precision<fp32>} : vector<32x32xf32>, vector<32x96xf32>, vector<32x96xf32> -> vector<32x96xf32>
    %15 = vector.broadcast %6 : vector<1x96xf32> to vector<32x96xf32>
    %16 = arith.addf %14, %15 : vector<32x96xf32>
    %17 = vector.extract_strided_slice %16 {offsets = [0, 0], sizes = [32, 8], strides = [1, 1]} : vector<32x96xf32> to vector<32x8xf32>
    %18 = vector.shape_cast %17 : vector<32x8xf32> to vector<2x16x8xf32>
    %19 = vector.extract_strided_slice %16 {offsets = [0, 8], sizes = [32, 8], strides = [1, 1]} : vector<32x96xf32> to vector<32x8xf32>
    %20 = vector.shape_cast %19 : vector<32x8xf32> to vector<2x16x8xf32>
    %21 = vector.extract_strided_slice %16 {offsets = [0, 16], sizes = [32, 8], strides = [1, 1]} : vector<32x96xf32> to vector<32x8xf32>
    %22 = vector.shape_cast %21 : vector<32x8xf32> to vector<2x16x8xf32>
    %23 = vector.extract_strided_slice %16 {offsets = [0, 24], sizes = [32, 8], strides = [1, 1]} : vector<32x96xf32> to vector<32x8xf32>
    %24 = vector.shape_cast %23 : vector<32x8xf32> to vector<2x16x8xf32>
    %25 = tpu.concatenate %18, %20, %22, %24 in 0 : vector<2x16x8xf32>, vector<2x16x8xf32>, vector<2x16x8xf32>, vector<2x16x8xf32> -> vector<8x16x8xf32>
    %26 = vector.extract_strided_slice %16 {offsets = [0, 32], sizes = [32, 8], strides = [1, 1]} : vector<32x96xf32> to vector<32x8xf32>
    %27 = vector.shape_cast %26 : vector<32x8xf32> to vector<2x16x8xf32>
    %28 = vector.extract_strided_slice %16 {offsets = [0, 40], sizes = [32, 8], strides = [1, 1]} : vector<32x96xf32> to vector<32x8xf32>
    %29 = vector.shape_cast %28 : vector<32x8xf32> to vector<2x16x8xf32>
    %30 = vector.extract_strided_slice %16 {offsets = [0, 48], sizes = [32, 8], strides = [1, 1]} : vector<32x96xf32> to vector<32x8xf32>
    %31 = vector.shape_cast %30 : vector<32x8xf32> to vector<2x16x8xf32>
    %32 = vector.extract_strided_slice %16 {offsets = [0, 56], sizes = [32, 8], strides = [1, 1]} : vector<32x96xf32> to vector<32x8xf32>
    %33 = vector.shape_cast %32 : vector<32x8xf32> to vector<2x16x8xf32>
    %34 = tpu.concatenate %27, %29, %31, %33 in 0 : vector<2x16x8xf32>, vector<2x16x8xf32>, vector<2x16x8xf32>, vector<2x16x8xf32> -> vector<8x16x8xf32>
    %35 = vector.extract_strided_slice %16 {offsets = [0, 64], sizes = [32, 8], strides = [1, 1]} : vector<32x96xf32> to vector<32x8xf32>
    %36 = vector.shape_cast %35 : vector<32x8xf32> to vector<2x16x8xf32>
    %37 = vector.extract_strided_slice %16 {offsets = [0, 72], sizes = [32, 8], strides = [1, 1]} : vector<32x96xf32> to vector<32x8xf32>
    %38 = vector.shape_cast %37 : vector<32x8xf32> to vector<2x16x8xf32>
    %39 = vector.extract_strided_slice %16 {offsets = [0, 80], sizes = [32, 8], strides = [1, 1]} : vector<32x96xf32> to vector<32x8xf32>
    %40 = vector.shape_cast %39 : vector<32x8xf32> to vector<2x16x8xf32>
    %41 = vector.extract_strided_slice %16 {offsets = [0, 88], sizes = [32, 8], strides = [1, 1]} : vector<32x96xf32> to vector<32x8xf32>
    %42 = vector.shape_cast %41 : vector<32x8xf32> to vector<2x16x8xf32>
    %43 = tpu.concatenate %36, %38, %40, %42 in 0 : vector<2x16x8xf32>, vector<2x16x8xf32>, vector<2x16x8xf32>, vector<2x16x8xf32> -> vector<8x16x8xf32>
    "tpu.trace_start"() <{level = 10 : i32, message = "nqd,nkd->nqk"}> : () -> ()
    %cst_9 = arith.constant dense<0.000000e+00> : vector<8x16x16xf32>
    %44 = tpu.matmul %25, %34, %cst_9 {dimension_numbers = #tpu.dot_dimension_numbers<[2], [2], [1], [1], [0, 0, 0, 1, 1, 1], [0], [0]>, precision = #tpu.contract_precision<fp32>} : vector<8x16x8xf32>, vector<8x16x8xf32>, vector<8x16x16xf32> -> vector<8x16x16xf32>
    "tpu.trace_stop"() : () -> ()
    %cst_10 = arith.constant 0.353553385 : f32
    %45 = vector.broadcast %cst_10 : f32 to vector<8x16x16xf32>
    %46 = arith.mulf %44, %45 : vector<8x16x16xf32>
    %cst_11 = arith.constant dense<0xFF800000> : vector<8x16xf32>
    %47 = vector.multi_reduction <maximumf>, %46, %cst_11 [2] : vector<8x16x16xf32> to vector<8x16xf32>
    %48 = vector.shape_cast %47 : vector<8x16xf32> to vector<8x16x1xf32>
    %49 = vector.broadcast %48 : vector<8x16x1xf32> to vector<8x16x16xf32>
    %50 = arith.subf %46, %49 : vector<8x16x16xf32>
    %51 = math.exp %50 : vector<8x16x16xf32>
    %cst_12 = arith.constant dense<0.000000e+00> : vector<8x16xf32>
    %52 = vector.multi_reduction <add>, %51, %cst_12 [2] : vector<8x16x16xf32> to vector<8x16xf32>
    %53 = vector.shape_cast %52 : vector<8x16xf32> to vector<8x16x1xf32>
    %54 = vector.broadcast %53 : vector<8x16x1xf32> to vector<8x16x16xf32>
    %55 = arith.divf %51, %54 : vector<8x16x16xf32>
    "tpu.trace_start"() <{level = 10 : i32, message = "nqk,nkd->nqd"}> : () -> ()
    %cst_13 = arith.constant dense<0.000000e+00> : vector<8x16x8xf32>
    %56 = tpu.matmul %55, %43, %cst_13 {dimension_numbers = #tpu.dot_dimension_numbers<[2], [1], [1], [2], [0, 0, 0, 1, 1, 2], [0], [0]>, precision = #tpu.contract_precision<fp32>} : vector<8x16x16xf32>, vector<8x16x8xf32>, vector<8x16x8xf32> -> vector<8x16x8xf32>
    "tpu.trace_stop"() : () -> ()
    %57 = vector.extract_strided_slice %56 {offsets = [0, 0, 0], sizes = [2, 16, 8], strides = [1, 1, 1]} : vector<8x16x8xf32> to vector<2x16x8xf32>
    %58 = vector.shape_cast %57 : vector<2x16x8xf32> to vector<32x8xf32>
    %59 = vector.extract_strided_slice %56 {offsets = [2, 0, 0], sizes = [2, 16, 8], strides = [1, 1, 1]} : vector<8x16x8xf32> to vector<2x16x8xf32>
    %60 = vector.shape_cast %59 : vector<2x16x8xf32> to vector<32x8xf32>
    %61 = vector.extract_strided_slice %56 {offsets = [4, 0, 0], sizes = [2, 16, 8], strides = [1, 1, 1]} : vector<8x16x8xf32> to vector<2x16x8xf32>
    %62 = vector.shape_cast %61 : vector<2x16x8xf32> to vector<32x8xf32>
    %63 = vector.extract_strided_slice %56 {offsets = [6, 0, 0], sizes = [2, 16, 8], strides = [1, 1, 1]} : vector<8x16x8xf32> to vector<2x16x8xf32>
    %64 = vector.shape_cast %63 : vector<2x16x8xf32> to vector<32x8xf32>
    %65 = tpu.concatenate %58, %60, %62, %64 in 1 : vector<32x8xf32>, vector<32x8xf32>, vector<32x8xf32>, vector<32x8xf32> -> vector<32x32xf32>
    %cst_14 = arith.constant dense<0.000000e+00> : vector<32x32xf32>
    %66 = tpu.matmul %65, %2, %cst_14 {dimension_numbers = #tpu.dot_dimension_numbers<[1], [0], [0], [1], [0, 0, 1, 1], [], []>, precision = #tpu.contract_precision<fp32>} : vector<32x32xf32>, vector<32x32xf32>, vector<32x32xf32> -> vector<32x32xf32>
    %67 = arith.addf %0, %66 : vector<32x32xf32>
    %68 = vector.broadcast %7 : vector<1x32xf32> to vector<32x32xf32>
    %69 = arith.addf %67, %68 : vector<32x32xf32>
    %cst_15 = arith.constant dense<0.000000e+00> : vector<32xf32>
    %70 = vector.multi_reduction <add>, %69, %cst_15 [0] : vector<32x32xf32> to vector<32xf32>
    %71 = vector.shape_cast %70 : vector<32xf32> to vector<1x32xf32>
    %cst_16 = arith.constant 3.125000e-02 : f32
    %72 = vector.broadcast %cst_16 : f32 to vector<1x32xf32>
    %73 = arith.mulf %71, %72 : vector<1x32xf32>
    %74 = vector.broadcast %73 : vector<1x32xf32> to vector<32x32xf32>
    %75 = arith.subf %69, %74 : vector<32x32xf32>
    %76 = arith.mulf %75, %75 : vector<32x32xf32>
    %cst_17 = arith.constant dense<0.000000e+00> : vector<32xf32>
    %77 = vector.multi_reduction <add>, %76, %cst_17 [0] : vector<32x32xf32> to vector<32xf32>
    %78 = vector.shape_cast %77 : vector<32xf32> to vector<1x32xf32>
    %cst_18 = arith.constant 3.125000e-02 : f32
    %79 = vector.broadcast %cst_18 : f32 to vector<1x32xf32>
    %80 = arith.mulf %78, %79 : vector<1x32xf32>
    %cst_19 = arith.constant 9.99999974E-6 : f32
    %81 = vector.broadcast %cst_19 : f32 to vector<1x32xf32>
    %82 = arith.addf %80, %81 : vector<1x32xf32>
    %83 = math.rsqrt %82 : vector<1x32xf32>
    %84 = arith.mulf %83, %10 : vector<1x32xf32>
    %85 = vector.broadcast %84 : vector<1x32xf32> to vector<32x32xf32>
    %86 = arith.mulf %75, %85 : vector<32x32xf32>
    %87 = vector.broadcast %11 : vector<1x32xf32> to vector<32x32xf32>
    %88 = arith.addf %86, %87 : vector<32x32xf32>
    %cst_20 = arith.constant dense<0.000000e+00> : vector<32x64xf32>
    %89 = tpu.matmul %88, %3, %cst_20 {dimension_numbers = #tpu.dot_dimension_numbers<[1], [0], [0], [1], [0, 0, 1, 1], [], []>, precision = #tpu.contract_precision<fp32>} : vector<32x32xf32>, vector<32x64xf32>, vector<32x64xf32> -> vector<32x64xf32>
    %90 = vector.broadcast %8 : vector<1x64xf32> to vector<32x64xf32>
    %91 = arith.addf %89, %90 : vector<32x64xf32>
    %cst_21 = arith.constant 5.000000e-01 : f32
    %92 = vector.broadcast %cst_21 : f32 to vector<32x64xf32>
    %93 = arith.mulf %92, %91 : vector<32x64xf32>
    %cst_22 = arith.constant 0.707106769 : f32
    %94 = vector.broadcast %cst_22 : f32 to vector<32x64xf32>
    %95 = arith.mulf %91, %94 : vector<32x64xf32>
    %96 = math.erf %95 : vector<32x64xf32>
    %cst_23 = arith.constant 1.000000e+00 : f32
    %97 = vector.broadcast %cst_23 : f32 to vector<32x64xf32>
    %98 = arith.addf %97, %96 : vector<32x64xf32>
    %99 = arith.mulf %93, %98 : vector<32x64xf32>
    %cst_24 = arith.constant dense<0.000000e+00> : vector<32x32xf32>
    %100 = tpu.matmul %99, %4, %cst_24 {dimension_numbers = #tpu.dot_dimension_numbers<[1], [0], [0], [1], [0, 0, 1, 1], [], []>, precision = #tpu.contract_precision<fp32>} : vector<32x64xf32>, vector<64x32xf32>, vector<32x32xf32> -> vector<32x32xf32>
    %101 = arith.addf %88, %100 : vector<32x32xf32>
    %102 = vector.broadcast %9 : vector<1x32xf32> to vector<32x32xf32>
    %103 = arith.addf %101, %102 : vector<32x32xf32>
    %cst_25 = arith.constant dense<0.000000e+00> : vector<32xf32>
    %104 = vector.multi_reduction <add>, %103, %cst_25 [0] : vector<32x32xf32> to vector<32xf32>
    %105 = vector.shape_cast %104 : vector<32xf32> to vector<1x32xf32>
    %cst_26 = arith.constant 3.125000e-02 : f32
    %106 = vector.broadcast %cst_26 : f32 to vector<1x32xf32>
    %107 = arith.mulf %105, %106 : vector<1x32xf32>
    %108 = vector.broadcast %107 : vector<1x32xf32> to vector<32x32xf32>
    %109 = arith.subf %103, %108 : vector<32x32xf32>
    %110 = arith.mulf %109, %109 : vector<32x32xf32>
    %cst_27 = arith.constant dense<0.000000e+00> : vector<32xf32>
    %111 = vector.multi_reduction <add>, %110, %cst_27 [0] : vector<32x32xf32> to vector<32xf32>
    %112 = vector.shape_cast %111 : vector<32xf32> to vector<1x32xf32>
    %cst_28 = arith.constant 3.125000e-02 : f32
    %113 = vector.broadcast %cst_28 : f32 to vector<1x32xf32>
    %114 = arith.mulf %112, %113 : vector<1x32xf32>
    %cst_29 = arith.constant 9.99999974E-6 : f32
    %115 = vector.broadcast %cst_29 : f32 to vector<1x32xf32>
    %116 = arith.addf %114, %115 : vector<1x32xf32>
    %117 = math.rsqrt %116 : vector<1x32xf32>
    %118 = arith.mulf %117, %12 : vector<1x32xf32>
    %119 = vector.broadcast %118 : vector<1x32xf32> to vector<32x32xf32>
    %120 = arith.mulf %109, %119 : vector<32x32xf32>
    %121 = vector.broadcast %13 : vector<1x32xf32> to vector<32x32xf32>
    %122 = arith.addf %120, %121 : vector<32x32xf32>
    %c0_30 = arith.constant 0 : index
    %c0_31 = arith.constant 0 : index
    %123 = vector.load %arg4[%c0_30, %c0_31] : memref<32x32xf32, #tpu.memory_space<vmem>>, vector<32x32xf32>
    tpu.vector_store %arg4[%c0_30, %c0_31], %122 {strides = array<i32>} : memref<32x32xf32, #tpu.memory_space<vmem>>, vector<32x32xf32>,
    return
  }
}

</mosaic_0001>

<llo_original>
// kernel: tpu_custom_call.1
$region0: #{tpu_custom_call.1}
  #allocation0 [shape = 'u32[]', space=smem, size = 0x4, offset = 0x4, fixed_abs, tag = 'smem constant byte address 0x4 - core index']
  #allocation1 [shape = 'u32[144,128]{1,0:T(1,128)}', space=vmem, size = 0x12000, scoped, tag = 'internal scratch']
  %s0 = inlined_call_operand.hbm [shape: f32[32,32], index: 0, kind: input, shape index: {}]
  %s1 = inlined_call_operand.vmem [shape: f32[32,384], index: 1, kind: input, shape index: {}]
  %s2 = inlined_call_operand.vmem [shape: f32[64,32], index: 2, kind: input, shape index: {}]
  %s3 = inlined_call_operand.vmem [shape: f32[8,128], index: 3, kind: input, shape index: {}]
  %s4 = inlined_call_operand.hbm [shape: f32[32,32], index: 4, kind: output, shape index: {}]
  %s5 = sld [smem:[#allocation0]]
  $region30: #{tpu_custom_call.1} parent=0
    _
  %s7 = ssub.s32 1, %s5
  %s8 = scalar_select 0, %s7, %s5
  $region1: #{tpu_custom_call.1} parent=0
    #allocation2 [shape = 'u8[16384]{0}', space=vmem, size = 0x4000, scoped, tag = 'input window, operand 0, single buffered']
    #allocation3 [shape = 's32[1]{0}', space=sflag, size = 0x4, scoped, tag = 'scoped memory for tpu_custom_call.1']
    #allocation4 [shape = 's32[1]{0}', space=sflag, size = 0x4, scoped, tag = 'scoped memory for tpu_custom_call.1']
    #allocation5 [shape = 'u8[16384]{0}', space=vmem, size = 0x4000, scoped, tag = 'output window, operand 0, single buffered']
    %9 = vsyncpa [#allocation3], 0
    %10 = vsyncpa [#allocation4], 0
    // Predicated region
    $region2: #{tpu_custom_call.1} parent=1 // pred_check
      _
    $region3: #{tpu_custom_call.1} parent=1 // pred_check_branch
      %12 = sbr.rel (0) target = $region5
    $region4: #{tpu_custom_call.1} parent=1 // pred_region
      %s14 = ssub.s32 512, 512
      %15 = vsyncadd [#allocation3], %s14
      %s16 = sshll.u32 [#allocation2], 4
      %s17 = int_to_ptr.vmem [resolvable:$true] %s16
      %22 = dma.hbm_to_vmem [thread:$0]  %s0, 512, %s17, [#allocation3], 128, 128, 8
    $region5: #{tpu_custom_call.1} parent=1 // pred_fallthru
      _
    // Predicated region
    $region6: #{tpu_custom_call.1} parent=1 // pred_check
      _
    $region7: #{tpu_custom_call.1} parent=1 // pred_check_branch
      %24 = sbr.rel (0) target = $region9
    $region8: #{tpu_custom_call.1} parent=1 // pred_region
      _
    $region9: #{tpu_custom_call.1} parent=1 // pred_fallthru
      _
    // Predicated region
    $region10: #{tpu_custom_call.1} parent=1 // pred_check
      _
    $region11: #{tpu_custom_call.1} parent=1 // pred_check_branch
      %26 = sbr.rel (0) target = $region13
    $region12: #{tpu_custom_call.1} parent=1 // pred_region
      _
    $region13: #{tpu_custom_call.1} parent=1 // pred_fallthru
      _
    // Predicated region
    $region14: #{tpu_custom_call.1} parent=1 // pred_check
      _
    $region15: #{tpu_custom_call.1} parent=1 // pred_check_branch
      %28 = sbr.rel (0) target = $region17
    $region16: #{tpu_custom_call.1} parent=1 // pred_region
      _
    $region17: #{tpu_custom_call.1} parent=1 // pred_fallthru
      _
    // Predicated region
    $region18: #{tpu_custom_call.1} parent=1 // pred_check
      _
    $region19: #{tpu_custom_call.1} parent=1 // pred_check_branch
      %30 = sbr.rel (0) target = $region21
    $region20: #{tpu_custom_call.1} parent=1 // pred_region
      %31 = dma.done [#allocation3], 512
    $region21: #{tpu_custom_call.1} parent=1 // pred_fallthru
      _
    %v32 = vld [vmem:[#allocation2] sm:$0xff]
    %v33 = vld [vmem:[#allocation2 + $0x8] sm:$0xff]
    %v34 = vld [vmem:[#allocation2 + $0x10] sm:$0xff]
    %v35 = vld [vmem:[#allocation2 + $0x18] sm:$0xff]
    %v36 = vld [vmem:[%s1] sm:$0xff]
    %v37 = vld [vmem:[%s1 + $0x18] sm:$0xff]
    %v38 = vld [vmem:[%s1 + $0x30] sm:$0xff]
    %v39 = vld [vmem:[%s1 + $0x48] sm:$0xff]
    %v40 = vld [vmem:[%s1 + $0x8] sm:$0xff]
    %v41 = vld [vmem:[%s1 + $0x20] sm:$0xff]
    %v42 = vld [vmem:[%s1 + $0x38] sm:$0xff]
    %v43 = vld [vmem:[%s1 + $0x50] sm:$0xff]
    %v44 = vld [vmem:[%s1 + $0x10] sm:$0xff]
    %v45 = vld [vmem:[%s1 + $0x28] sm:$0xff]
    %v46 = vld [vmem:[%s1 + $0x40] sm:$0xff]
    %v47 = vld [vmem:[%s1 + $0x58] sm:$0xff]
    %v48 = vld [vmem:[%s2] sm:$0xff]
    %v49 = vld [vmem:[%s2 + $0x8] sm:$0xff]
    %v50 = vld [vmem:[%s2 + $0x10] sm:$0xff]
    %v51 = vld [vmem:[%s2 + $0x18] sm:$0xff]
    %v52 = vld [vmem:[%s2 + $0x20] sm:$0xff]
    %v53 = vld [vmem:[%s2 + $0x28] sm:$0xff]
    %v54 = vld [vmem:[%s2 + $0x30] sm:$0xff]
    %v55 = vld [vmem:[%s2 + $0x38] sm:$0xff]
    %v56 = vld [vmem:[%s3] sm:$0xff]
    %v57 = vlaneseq
    %v58 = vshrl.u32 %v57, 7
    %v59 = vsub.s32 0, %v58
    %v60 = vrot.slane %v56, %v59
    %vm61 = vcmask 261120
    %v63 = vsel %vm61, %v32, 0
    %v66 = vsel %vm61, %v33, 0
    %v69 = vsel %vm61, %v34, 0
    %v72 = vsel %vm61, %v35, 0
    %74 = vmatprep.subr.mxu0 0.0
    %v75 = vand.u32 %v36, 4294901760
    %76 = vmatpush1.msra.mxu0 %v75
    %77 = vmatprep.subr.mxu0 0.0
    %v78 = vand.u32 %v37, 4294901760
    %79 = vmatpush1.msra.mxu0 %v78
    %80 = vmatprep.subr.mxu0 0.0
    %v81 = vand.u32 %v38, 4294901760
    %82 = vmatpush1.msra.mxu0 %v81
    %83 = vmatprep.subr.mxu0 0.0
    %v84 = vand.u32 %v39, 4294901760
    %85 = vmatpush1.msra.mxu0 %v84
    %86 = vmatprep.subr.mxu0 0.0
    %87 = vmatpush1.msra.mxu0 0.0
    %88 = vmatprep.subr.mxu0 0.0
    %89 = vmatpush1.msra.mxu0 0.0
    %90 = vmatprep.subr.mxu0 0.0
    %91 = vmatpush1.msra.mxu0 0.0
    %92 = vmatprep.subr.mxu0 0.0
    %93 = vmatpush1.msra.mxu0 0.0
    %94 = vmatprep.subr.mxu0 0.0
    %95 = vmatpush1.msra.mxu0 0.0
    %96 = vmatprep.subr.mxu0 0.0
    %97 = vmatpush1.msra.mxu0 0.0
    %98 = vmatprep.subr.mxu0 0.0
    %99 = vmatpush1.msra.mxu0 0.0
    %100 = vmatprep.subr.mxu0 0.0
    %101 = vmatpush1.msra.mxu0 0.0
    %102 = vmatprep.subr.mxu0 0.0
    %103 = vmatpush1.msra.mxu0 0.0
    %104 = vmatprep.subr.mxu0 0.0
    %105 = vmatpush1.msra.mxu0 0.0
    %106 = vmatprep.subr.mxu0 0.0
    %107 = vmatpush1.msra.mxu0 0.0
    %108 = vmatprep.subr.mxu0 0.0
    %109 = vmatpush1.msra.mxu0 0.0
    %110 = vmatprep.subr.mxu0 0.0
    %111 = vmatpush1.msra.mxu0 0.0
    %112 = vmatprep.subr.mxu0 0.0
    %113 = vmatpush1.msra.mxu0 0.0
    %114 = vmatprep.subr.mxu0 0.0
    %115 = vmatpush1.msra.mxu0 0.0
    %116 = vmatprep.subr.mxu0 0.0
    %117 = vmatpush1.msra.mxu0 0.0
    %118 = vmatprep.subr.mxu0 0.0
    %119 = vmatpush1.msra.mxu0 0.0
    %120 = vmatprep.subr.mxu0 0.0
    %121 = vmatpush1.msra.mxu0 0.0
    %122 = vmatprep.subr.mxu0 0.0
    %123 = vmatpush1.msra.mxu0 0.0
    %124 = vmatprep.subr.mxu0 0.0
    %125 = vmatpush1.msra.mxu0 0.0
    %126 = vmatprep.subr.mxu0 0.0
    %127 = vmatpush1.msra.mxu0 0.0
    %128 = vmatprep.subr.mxu0 0.0
    %129 = vmatpush1.msra.mxu0 0.0
    %130 = vmatprep.subr.mxu0 0.0
    %131 = vmatpush1.msra.mxu0 0.0
    %132 = vmatprep.subr.mxu0 0.0
    %133 = vmatpush1.msra.mxu0 0.0
    %134 = vmatprep.subr.mxu0 0.0
    %135 = vmatpush1.msra.mxu0 0.0
    %136 = vmatprep.subr.mxu0 0.0
    %137 = vmatpush1.msra.mxu0 0.0
    %138 = vmatprep.subr.mxu0 0.0
    %139 = vmatpush1.msra.mxu0 0.0
    %140 = vmatprep.subr.mxu0 0.0
    %141 = vmatpush1.msra.mxu0 0.0
    %142 = vmatprep.mubr.f32.mxu0 0.0
    %v143 = vand.u32 %v63, 4294901760
    %v144 = vsub.f32 %v63, %v143
    %v145 = vand.u32 %v144, 4294901760
    %v146 = vsub.f32 %v144, %v145
    %v147 = vand.u32 %v146, 4294901760
    %148 = vmatmul.mubr.f32.gmra.mrb[0].mxu0 %v147
    %v149 = vpop.f32.mrb[0].mxu0
    %v150 = vadd.f32 %v60, %v149
    %v151 = vpop.f32.mrb[0].mxu0
    %152 = vmatprep.mubr.f32.mxu0 0.0
    %v153 = vand.u32 %v66, 4294901760
    %v154 = vsub.f32 %v66, %v153
    %v155 = vand.u32 %v154, 4294901760
    %v156 = vsub.f32 %v154, %v155
    %v157 = vand.u32 %v156, 4294901760
    %158 = vmatmul.mubr.f32.gmra.mrb[0].mxu0 %v157
    %v159 = vpop.f32.mrb[0].mxu0
    %v160 = vadd.f32 %v60, %v159
    %v161 = vpop.f32.mrb[0].mxu0
    %162 = vmatprep.mubr.f32.mxu0 0.0
    %v163 = vand.u32 %v69, 4294901760
    %v164 = vsub.f32 %v69, %v163
    %v165 = vand.u32 %v164, 4294901760
    %v166 = vsub.f32 %v164, %v165
    %v167 = vand.u32 %v166, 4294901760
    %168 = vmatmul.mubr.f32.gmra.mrb[0].mxu0 %v167
    %v169 = vpop.f32.mrb[0].mxu0
    %v170 = vadd.f32 %v60, %v169
    %v171 = vpop.f32.mrb[0].mxu0
    %172 = vmatprep.mubr.f32.mxu0 0.0
    %v173 = vand.u32 %v72, 4294901760
    %v174 = vsub.f32 %v72, %v173
    %v175 = vand.u32 %v174, 4294901760
    %v176 = vsub.f32 %v174, %v175
    %v177 = vand.u32 %v176, 4294901760
    %178 = vmatmul.mubr.f32.gmra.mrb[0].mxu0 %v177
    %v179 = vpop.f32.mrb[0].mxu0
    %v180 = vadd.f32 %v60, %v179
    %v181 = vpop.f32.mrb[0].mxu0
    %182 = vdwg.mxu0
    %183 = vmatprep.subr.mxu0 0.0
    %v184 = vand.u32 %v36, 4294901760
    %v185 = vsub.f32 %v36, %v184
    %v186 = vand.u32 %v185, 4294901760
    %v187 = vsub.f32 %v185, %v186
    %v188 = vand.u32 %v187, 4294901760
    %189 = vmatpush1.msra.mxu0 %v188
    %190 = vmatprep.subr.mxu0 0.0
    %v191 = vand.u32 %v37, 4294901760
    %v192 = vsub.f32 %v37, %v191
    %v193 = vand.u32 %v192, 4294901760
    %v194 = vsub.f32 %v192, %v193
    %v195 = vand.u32 %v194, 4294901760
    %196 = vmatpush1.msra.mxu0 %v195
    %197 = vmatprep.subr.mxu0 0.0
    %v198 = vand.u32 %v38, 4294901760
    %v199 = vsub.f32 %v38, %v198
    %v200 = vand.u32 %v199, 4294901760
    %v201 = vsub.f32 %v199, %v200
    %v202 = vand.u32 %v201, 4294901760
    %203 = vmatpush1.msra.mxu0 %v202
    %204 = vmatprep.subr.mxu0 0.0
    %v205 = vand.u32 %v39, 4294901760
    %v206 = vsub.f32 %v39, %v205
    %v207 = vand.u32 %v206, 4294901760
    %v208 = vsub.f32 %v206, %v207
    %v209 = vand.u32 %v208, 4294901760
    %210 = vmatpush1.msra.mxu0 %v209
    %211 = vmatprep.subr.mxu0 0.0
    %212 = vmatpush1.msra.mxu0 0.0
    %213 = vmatprep.subr.mxu0 0.0
    %214 = vmatpush1.msra.mxu0 0.0
    %215 = vmatprep.subr.mxu0 0.0
    %216 = vmatpush1.msra.mxu0 0.0
    %217 = vmatprep.subr.mxu0 0.0
    %218 = vmatpush1.msra.mxu0 0.0
    %219 = vmatprep.subr.mxu0 0.0
    %220 = vmatpush1.msra.mxu0 0.0
    %221 = vmatprep.subr.mxu0 0.0
    %222 = vmatpush1.msra.mxu0 0.0
    %223 = vmatprep.subr.mxu0 0.0
    %224 = vmatpush1.msra.mxu0 0.0
    %225 = vmatprep.subr.mxu0 0.0
    %226 = vmatpush1.msra.mxu0 0.0
    %227 = vmatprep.subr.mxu0 0.0
    %228 = vmatpush1.msra.mxu0 0.0
    %229 = vmatprep.subr.mxu0 0.0
    %230 = vmatpush1.msra.mxu0 0.0
    %231 = vmatprep.subr.mxu0 0.0
    %232 = vmatpush1.msra.mxu0 0.0
    %233 = vmatprep.subr.mxu0 0.0
    %234 = vmatpush1.msra.mxu0 0.0
    %235 = vmatprep.subr.mxu0 0.0
    %236 = vmatpush1.msra.mxu0 0.0
    %237 = vmatprep.subr.mxu0 0.0
    %238 = vmatpush1.msra.mxu0 0.0
    %239 = vmatprep.subr.mxu0 0.0
    %240 = vmatpush1.msra.mxu0 0.0
    %241 = vmatprep.subr.mxu0 0.0
    %242 = vmatpush1.msra.mxu0 0.0
    %243 = vmatprep.subr.mxu0 0.0
    %244 = vmatpush1.msra.mxu0 0.0
    %245 = vmatprep.subr.mxu0 0.0
    %246 = vmatpush1.msra.mxu0 0.0
    %247 = vmatprep.subr.mxu0 0.0
    %248 = vmatpush1.msra.mxu0 0.0
    %249 = vmatprep.subr.mxu0 0.0
    %250 = vmatpush1.msra.mxu0 0.0
    %251 = vmatprep.subr.mxu0 0.0
    %252 = vmatpush1.msra.mxu0 0.0
    %253 = vmatprep.subr.mxu0 0.0
    %254 = vmatpush1.msra.mxu0 0.0
    %255 = vmatprep.subr.mxu0 0.0
    %256 = vmatpush1.msra.mxu0 0.0
    %257 = vmatprep.subr.mxu0 0.0
    %258 = vmatpush1.msra.mxu0 0.0
    %259 = vmatprep.subr.mxu0 0.0
    %260 = vmatpush1.msra.mxu0 0.0
    %261 = vmatprep.subr.mxu0 0.0
    %262 = vmatpush1.msra.mxu0 0.0
    %263 = vmatprep.subr.mxu0 0.0
    %264 = vmatpush1.msra.mxu0 0.0
    %265 = vmatprep.subr.mxu0 0.0
    %266 = vmatpush1.msra.mxu0 0.0
    %267 = vmatprep.mubr.f32.mxu0 0.0
    %v268 = vand.u32 %v63, 4294901760
    %269 = vmatmul.mubr.f32.gmra.mrb[0].mxu0 %v268
    %v270 = vpop.f32.mrb[0].mxu0
    %v271 = vadd.f32 %v150, %v270
    %v272 = vpop.f32.mrb[0].mxu0
    %273 = vmatprep.mubr.f32.mxu0 0.0
    %v274 = vand.u32 %v66, 4294901760
    %275 = vmatmul.mubr.f32.gmra.mrb[0].mxu0 %v274
    %v276 = vpop.f32.mrb[0].mxu0
    %v277 = vadd.f32 %v160, %v276
    %v278 = vpop.f32.mrb[0].mxu0
    %279 = vmatprep.mubr.f32.mxu0 0.0
    %v280 = vand.u32 %v69, 4294901760
    %281 = vmatmul.mubr.f32.gmra.mrb[0].mxu0 %v280
    %v282 = vpop.f32.mrb[0].mxu0
    %v283 = vadd.f32 %v170, %v282
    %v284 = vpop.f32.mrb[0].mxu0
    %285 = vmatprep.mubr.f32.mxu0 0.0
    %v286 = vand.u32 %v72, 4294901760
    %287 = vmatmul.mubr.f32.gmra.mrb[0].mxu0 %v286
    %v288 = vpop.f32.mrb[0].mxu0
    %v289 = vadd.f32 %v180, %v288
    %v290 = vpop.f32.mrb[0].mxu0
    %291 = vdwg.mxu0
    %292 = vmatprep.subr.mxu0 0.0
    %v293 = vand.u32 %v36, 4294901760
    %v294 = vsub.f32 %v36, %v293
    %295 = vmatpush1.msra.mxu0 %v294
    %296 = vmatprep.subr.mxu0 0.0
    %v297 = vand.u32 %v37, 4294901760
    %v298 = vsub.f32 %v37, %v297
    %299 = vmatpush1.msra.mxu0 %v298
    %300 = vmatprep.subr.mxu0 0.0
    %v301 = vand.u32 %v38, 4294901760
    %v302 = vsub.f32 %v38, %v301
    %303 = vmatpush1.msra.mxu0 %v302
    %304 = vmatprep.subr.mxu0 0.0
    %v305 = vand.u32 %v39, 4294901760
    %v306 = vsub.f32 %v39, %v305
    %307 = vmatpush1.msra.mxu0 %v306
    %308 = vmatprep.subr.mxu0 0.0
    %309 = vmatpush1.msra.mxu0 0.0
    %310 = vmatprep.subr.mxu0 0.0
    %311 = vmatpush1.msra.mxu0 0.0
    %312 = vmatprep.subr.mxu0 0.0
    %313 = vmatpush1.msra.mxu0 0.0
    %314 = vmatprep.subr.mxu0 0.0
    %315 = vmatpush1.msra.mxu0 0.0
    %316 = vmatprep.subr.mxu0 0.0
    %317 = vmatpush1.msra.mxu0 0.0
    %318 = vmatprep.subr.mxu0 0.0
    %319 = vmatpush1.msra.mxu0 0.0
    %320 = vmatprep.subr.mxu0 0.0
    %321 = vmatpush1.msra.mxu0 0.0
    %322 = vmatprep.subr.mxu0 0.0
    %323 = vmatpush1.msra.mxu0 0.0
    %324 = vmatprep.subr.mxu0 0.0
    %325 = vmatpush1.msra.mxu0 0.0
    %326 = vmatprep.subr.mxu0 0.0
    %327 = vmatpush1.msra.mxu0 0.0
    %328 = vmatprep.subr.mxu0 0.0
    %329 = vmatpush1.msra.mxu0 0.0
    %330 = vmatprep.subr.mxu0 0.0
    %331 = vmatpush1.msra.mxu0 0.0
    %332 = vmatprep.subr.mxu0 0.0
    %333 = vmatpush1.msra.mxu0 0.0
    %334 = vmatprep.subr.mxu0 0.0
    %335 = vmatpush1.msra.mxu0 0.0
    %336 = vmatprep.subr.mxu0 0.0
    %337 = vmatpush1.msra.mxu0 0.0
    %338 = vmatprep.subr.mxu0 0.0
    %339 = vmatpush1.msra.mxu0 0.0
    %340 = vmatprep.subr.mxu0 0.0
    %341 = vmatpush1.msra.mxu0 0.0
    %342 = vmatprep.subr.mxu0 0.0
    %343 = vmatpush1.msra.mxu0 0.0
    %344 = vmatprep.subr.mxu0 0.0
    %345 = vmatpush1.msra.mxu0 0.0
    %346 = vmatprep.subr.mxu0 0.0
    %347 = vmatpush1.msra.mxu0 0.0
    %348 = vmatprep.subr.mxu0 0.0
    %349 = vmatpush1.msra.mxu0 0.0
    %350 = vmatprep.subr.mxu0 0.0
    %351 = vmatpush1.msra.mxu0 0.0
    %352 = vmatprep.subr.mxu0 0.0
    %353 = vmatpush1.msra.mxu0 0.0
    %354 = vmatprep.subr.mxu0 0.0
    %355 = vmatpush1.msra.mxu0 0.0
    %356 = vmatprep.subr.mxu0 0.0
    %357 = vmatpush1.msra.mxu0 0.0
    %358 = vmatprep.subr.mxu0 0.0
    %359 = vmatpush1.msra.mxu0 0.0
    %360 = vmatprep.subr.mxu0 0.0
    %361 = vmatpush1.msra.mxu0 0.0
    %362 = vmatprep.subr.mxu0 0.0
    %363 = vmatpush1.msra.mxu0 0.0
    %364 = vmatprep.mubr.f32.mxu0 0.0
    %v365 = vand.u32 %v63, 4294901760
    %v366 = vsub.f32 %v63, %v365
    %367 = vmatmul.mubr.f32.gmra.mrb[0].mxu0 %v366
    %v368 = vpop.f32.mrb[0].mxu0
    %v369 = vadd.f32 %v271, %v368
    %v370 = vpop.f32.mrb[0].mxu0
    %371 = vmatprep.mubr.f32.mxu0 0.0
    %v372 = vand.u32 %v66, 4294901760
    %v373 = vsub.f32 %v66, %v372
    %374 = vmatmul.mubr.f32.gmra.mrb[0].mxu0 %v373
    %v375 = vpop.f32.mrb[0].mxu0
    %v376 = vadd.f32 %v277, %v375
    %v377 = vpop.f32.mrb[0].mxu0
    %378 = vmatprep.mubr.f32.mxu0 0.0
    %v379 = vand.u32 %v69, 4294901760
    %v380 = vsub.f32 %v69, %v379
    %381 = vmatmul.mubr.f32.gmra.mrb[0].mxu0 %v380
    %v382 = vpop.f32.mrb[0].mxu0
    %v383 = vadd.f32 %v283, %v382
    %v384 = vpop.f32.mrb[0].mxu0
    %385 = vmatprep.mubr.f32.mxu0 0.0
    %v386 = vand.u32 %v72, 4294901760
    %v387 = vsub.f32 %v72, %v386
    %388 = vmatmul.mubr.f32.gmra.mrb[0].mxu0 %v387
    %v389 = vpop.f32.mrb[0].mxu0
    %v390 = vadd.f32 %v289, %v389
    %v391 = vpop.f32.mrb[0].mxu0
    %392 = vdwg.mxu0
    %393 = vmatprep.subr.mxu0 0.0
    %v394 = vand.u32 %v36, 4294901760
    %395 = vmatpush1.msra.mxu0 %v394
    %396 = vmatprep.subr.mxu0 0.0
    %v397 = vand.u32 %v37, 4294901760
    %398 = vmatpush1.msra.mxu0 %v397
    %399 = vmatprep.subr.mxu0 0.0
    %v400 = vand.u32 %v38, 4294901760
    %401 = vmatpush1.msra.mxu0 %v400
    %402 = vmatprep.subr.mxu0 0.0
    %v403 = vand.u32 %v39, 4294901760
    %404 = vmatpush1.msra.mxu0 %v403
    %405 = vmatprep.subr.mxu0 0.0
    %406 = vmatpush1.msra.mxu0 0.0
    %407 = vmatprep.subr.mxu0 0.0
    %408 = vmatpush1.msra.mxu0 0.0
    %409 = vmatprep.subr.mxu0 0.0
    %410 = vmatpush1.msra.mxu0 0.0
    %411 = vmatprep.subr.mxu0 0.0
    %412 = vmatpush1.msra.mxu0 0.0
    %413 = vmatprep.subr.mxu0 0.0
    %414 = vmatpush1.msra.mxu0 0.0
    %415 = vmatprep.subr.mxu0 0.0
    %416 = vmatpush1.msra.mxu0 0.0
    %417 = vmatprep.subr.mxu0 0.0
    %418 = vmatpush1.msra.mxu0 0.0
    %419 = vmatprep.subr.mxu0 0.0
    %420 = vmatpush1.msra.mxu0 0.0
    %421 = vmatprep.subr.mxu0 0.0
    %422 = vmatpush1.msra.mxu0 0.0
    %423 = vmatprep.subr.mxu0 0.0
    %424 = vmatpush1.msra.mxu0 0.0
    %425 = vmatprep.subr.mxu0 0.0
    %426 = vmatpush1.msra.mxu0 0.0
    %427 = vmatprep.subr.mxu0 0.0
    %428 = vmatpush1.msra.mxu0 0.0
    %429 = vmatprep.subr.mxu0 0.0
    %430 = vmatpush1.msra.mxu0 0.0
    %431 = vmatprep.subr.mxu0 0.0
    %432 = vmatpush1.msra.mxu0 0.0
    %433 = vmatprep.subr.mxu0 0.0
    %434 = vmatpush1.msra.mxu0 0.0
    %435 = vmatprep.subr.mxu0 0.0
    %436 = vmatpush1.msra.mxu0 0.0
    %437 = vmatprep.subr.mxu0 0.0
    %438 = vmatpush1.msra.mxu0 0.0
    %439 = vmatprep.subr.mxu0 0.0
    %440 = vmatpush1.msra.mxu0 0.0
    %441 = vmatprep.subr.mxu0 0.0
    %442 = vmatpush1.msra.mxu0 0.0
    %443 = vmatprep.subr.mxu0 0.0
    %444 = vmatpush1.msra.mxu0 0.0
    %445 = vmatprep.subr.mxu0 0.0
    %446 = vmatpush1.msra.mxu0 0.0
    %447 = vmatprep.subr.mxu0 0.0
    %448 = vmatpush1.msra.mxu0 0.0
    %449 = vmatprep.subr.mxu0 0.0
    %450 = vmatpush1.msra.mxu0 0.0
    %451 = vmatprep.subr.mxu0 0.0
    %452 = vmatpush1.msra.mxu0 0.0
    %453 = vmatprep.subr.mxu0 0.0
    %454 = vmatpush1.msra.mxu0 0.0
    %455 = vmatprep.subr.mxu0 0.0
    %456 = vmatpush1.msra.mxu0 0.0
    %457 = vmatprep.subr.mxu0 0.0
    %458 = vmatpush1.msra.mxu0 0.0
    %459 = vmatprep.subr.mxu0 0.0
    %460 = vmatpush1.msra.mxu0 0.0
    %461 = vmatprep.mubr.f32.mxu0 0.0
    %v462 = vand.u32 %v63, 4294901760
    %v463 = vsub.f32 %v63, %v462
    %v464 = vand.u32 %v463, 4294901760
    %465 = vmatmul.mubr.f32.gmra.mrb[0].mxu0 %v464
    %v466 = vpop.f32.mrb[0].mxu0
    %v467 = vadd.f32 %v369, %v466
    %v468 = vpop.f32.mrb[0].mxu0
    %469 = vmatprep.mubr.f32.mxu0 0.0
    %v470 = vand.u32 %v66, 4294901760
    %v471 = vsub.f32 %v66, %v470
    %v472 = vand.u32 %v471, 4294901760
    %473 = vmatmul.mubr.f32.gmra.mrb[0].mxu0 %v472
    %v474 = vpop.f32.mrb[0].mxu0
    %v475 = vadd.f32 %v376, %v474
    %v476 = vpop.f32.mrb[0].mxu0
    %477 = vmatprep.mubr.f32.mxu0 0.0
    %v478 = vand.u32 %v69, 4294901760
    %v479 = vsub.f32 %v69, %v478
    %v480 = vand.u32 %v479, 4294901760
    %481 = vmatmul.mubr.f32.gmra.mrb[0].mxu0 %v480
    %v482 = vpop.f32.mrb[0].mxu0
    %v483 = vadd.f32 %v383, %v482
    %v484 = vpop.f32.mrb[0].mxu0
    %485 = vmatprep.mubr.f32.mxu0 0.0
    %v486 = vand.u32 %v72, 4294901760
    %v487 = vsub.f32 %v72, %v486
    %v488 = vand.u32 %v487, 4294901760
    %489 = vmatmul.mubr.f32.gmra.mrb[0].mxu0 %v488
    %v490 = vpop.f32.mrb[0].mxu0
    %v491 = vadd.f32 %v390, %v490
    %v492 = vpop.f32.mrb[0].mxu0
    %493 = vdwg.mxu0
    %494 = vmatprep.subr.mxu0 0.0
    %v495 = vand.u32 %v36, 4294901760
    %v496 = vsub.f32 %v36, %v495
    %v497 = vand.u32 %v496, 4294901760
    %498 = vmatpush1.msra.mxu0 %v497
    %499 = vmatprep.subr.mxu0 0.0
    %v500 = vand.u32 %v37, 4294901760
    %v501 = vsub.f32 %v37, %v500
    %v502 = vand.u32 %v501, 4294901760
    %503 = vmatpush1.msra.mxu0 %v502
    %504 = vmatprep.subr.mxu0 0.0
    %v505 = vand.u32 %v38, 4294901760
    %v506 = vsub.f32 %v38, %v505
    %v507 = vand.u32 %v506, 4294901760
    %508 = vmatpush1.msra.mxu0 %v507
    %509 = vmatprep.subr.mxu0 0.0
    %v510 = vand.u32 %v39, 4294901760
    %v511 = vsub.f32 %v39, %v510
    %v512 = vand.u32 %v511, 4294901760
    %513 = vmatpush1.msra.mxu0 %v512
    %514 = vmatprep.subr.mxu0 0.0
    %515 = vmatpush1.msra.mxu0 0.0
    %516 = vmatprep.subr.mxu0 0.0
    %517 = vmatpush1.msra.mxu0 0.0
    %518 = vmatprep.subr.mxu0 0.0
    %519 = vmatpush1.msra.mxu0 0.0
    %520 = vmatprep.subr.mxu0 0.0
    %521 = vmatpush1.msra.mxu0 0.0
    %522 = vmatprep.subr.mxu0 0.0
    %523 = vmatpush1.msra.mxu0 0.0
    %524 = vmatprep.subr.mxu0 0.0
    %525 = vmatpush1.msra.mxu0 0.0
    %526 = vmatprep.subr.mxu0 0.0
    %527 = vmatpush1.msra.mxu0 0.0
    %528 = vmatprep.subr.mxu0 0.0
    %529 = vmatpush1.msra.mxu0 0.0
    %530 = vmatprep.subr.mxu0 0.0
    %531 = vmatpush1.msra.mxu0 0.0
    %532 = vmatprep.subr.mxu0 0.0
    %533 = vmatpush1.msra.mxu0 0.0
    %534 = vmatprep.subr.mxu0 0.0
    %535 = vmatpush1.msra.mxu0 0.0
    %536 = vmatprep.subr.mxu0 0.0
    %537 = vmatpush1.msra.mxu0 0.0
    %538 = vmatprep.subr.mxu0 0.0
    %539 = vmatpush1.msra.mxu0 0.0
    %540 = vmatprep.subr.mxu0 0.0
    %541 = vmatpush1.msra.mxu0 0.0
    %542 = vmatprep.subr.mxu0 0.0
    %543 = vmatpush1.msra.mxu0 0.0
    %544 = vmatprep.subr.mxu0 0.0
    %545 = vmatpush1.msra.mxu0 0.0
    %546 = vmatprep.subr.mxu0 0.0
    %547 = vmatpush1.msra.mxu0 0.0
    %548 = vmatprep.subr.mxu0 0.0
    %549 = vmatpush1.msra.mxu0 0.0
    %550 = vmatprep.subr.mxu0 0.0
    %551 = vmatpush1.msra.mxu0 0.0
    %552 = vmatprep.subr.mxu0 0.0
    %553 = vmatpush1.msra.mxu0 0.0
    %554 = vmatprep.subr.mxu0 0.0
    %555 = vmatpush1.msra.mxu0 0.0
    %556 = vmatprep.subr.mxu0 0.0
    %557 = vmatpush1.msra.mxu0 0.0
    %558 = vmatprep.subr.mxu0 0.0
    %559 = vmatpush1.msra.mxu0 0.0
    %560 = vmatprep.subr.mxu0 0.0
    %561 = vmatpush1.msra.mxu0 0.0
    %562 = vmatprep.subr.mxu0 0.0
    %563 = vmatpush1.msra.mxu0 0.0
    %564 = vmatprep.subr.mxu0 0.0
    %565 = vmatpush1.msra.mxu0 0.0
    %566 = vmatprep.subr.mxu0 0.0
    %567 = vmatpush1.msra.mxu0 0.0
    %568 = vmatprep.subr.mxu0 0.0
    %569 = vmatpush1.msra.mxu0 0.0
    %570 = vmatprep.mubr.f32.mxu0 0.0
    %v571 = vand.u32 %v63, 4294901760
    %572 = vmatmul.mubr.f32.gmra.mrb[0].mxu0 %v571
    %v573 = vpop.f32.mrb[0].mxu0
    %v574 = vadd.f32 %v467, %v573
    %v575 = vpop.f32.mrb[0].mxu0
    %576 = vmatprep.mubr.f32.mxu0 0.0
    %v577 = vand.u32 %v66, 4294901760
    %578 = vmatmul.mubr.f32.gmra.mrb[0].mxu0 %v577
    %v579 = vpop.f32.mrb[0].mxu0
    %v580 = vadd.f32 %v475, %v579
    %v581 = vpop.f32.mrb[0].mxu0
    %582 = vmatprep.mubr.f32.mxu0 0.0
    %v583 = vand.u32 %v69, 4294901760
    %584 = vmatmul.mubr.f32.gmra.mrb[0].mxu0 %v583
    %v585 = vpop.f32.mrb[0].mxu0
    %v586 = vadd.f32 %v483, %v585
    %v587 = vpop.f32.mrb[0].mxu0
    %588 = vmatprep.mubr.f32.mxu0 0.0
    %v589 = vand.u32 %v72, 4294901760
    %590 = vmatmul.mubr.f32.gmra.mrb[0].mxu0 %v589
    %v591 = vpop.f32.mrb[0].mxu0
    %v592 = vadd.f32 %v491, %v591
    %v593 = vpop.f32.mrb[0].mxu0
    %594 = vdwg.mxu0
    %595 = vmatprep.subr.mxu0 0.0
    %v596 = vand.u32 %v36, 4294901760
    %597 = vmatpush1.msra.mxu0 %v596
    %598 = vmatprep.subr.mxu0 0.0
    %v599 = vand.u32 %v37, 4294901760
    %600 = vmatpush1.msra.mxu0 %v599
    %601 = vmatprep.subr.mxu0 0.0
    %v602 = vand.u32 %v38, 4294901760
    %603 = vmatpush1.msra.mxu0 %v602
    %604 = vmatprep.subr.mxu0 0.0
    %v605 = vand.u32 %v39, 4294901760
    %606 = vmatpush1.msra.mxu0 %v605
    %607 = vmatprep.subr.mxu0 0.0
    %608 = vmatpush1.msra.mxu0 0.0
    %609 = vmatprep.subr.mxu0 0.0
    %610 = vmatpush1.msra.mxu0 0.0
    %611 = vmatprep.subr.mxu0 0.0
    %612 = vmatpush1.msra.mxu0 0.0
    %613 = vmatprep.subr.mxu0 0.0
    %614 = vmatpush1.msra.mxu0 0.0
    %615 = vmatprep.subr.mxu0 0.0
    %616 = vmatpush1.msra.mxu0 0.0
    %617 = vmatprep.subr.mxu0 0.0
    %618 = vmatpush1.msra.mxu0 0.0
    %619 = vmatprep.subr.mxu0 0.0
    %620 = vmatpush1.msra.mxu0 0.0
    %621 = vmatprep.subr.mxu0 0.0
    %622 = vmatpush1.msra.mxu0 0.0
    %623 = vmatprep.subr.mxu0 0.0
    %624 = vmatpush1.msra.mxu0 0.0
    %625 = vmatprep.subr.mxu0 0.0
    %626 = vmatpush1.msra.mxu0 0.0
    %627 = vmatprep.subr.mxu0 0.0
    %628 = vmatpush1.msra.mxu0 0.0
    %629 = vmatprep.subr.mxu0 0.0
    %630 = vmatpush1.msra.mxu0 0.0
    %631 = vmatprep.subr.mxu0 0.0
    %632 = vmatpush1.msra.mxu0 0.0
    %633 = vmatprep.subr.mxu0 0.0
    %634 = vmatpush1.msra.mxu0 0.0
    %635 = vmatprep.subr.mxu0 0.0
    %636 = vmatpush1.msra.mxu0 0.0
    %637 = vmatprep.subr.mxu0 0.0
    %638 = vmatpush1.msra.mxu0 0.0
    %639 = vmatprep.subr.mxu0 0.0
    %640 = vmatpush1.msra.mxu0 0.0
    %641 = vmatprep.subr.mxu0 0.0
    %642 = vmatpush1.msra.mxu0 0.0
    %643 = vmatprep.subr.mxu0 0.0
    %644 = vmatpush1.msra.mxu0 0.0
    %645 = vmatprep.subr.mxu0 0.0
    %646 = vmatpush1.msra.mxu0 0.0
    %647 = vmatprep.subr.mxu0 0.0
    %648 = vmatpush1.msra.mxu0 0.0
    %649 = vmatprep.subr.mxu0 0.0
    %650 = vmatpush1.msra.mxu0 0.0
    %651 = vmatprep.subr.mxu0 0.0
    %652 = vmatpush1.msra.mxu0 0.0
    %653 = vmatprep.subr.mxu0 0.0
    %654 = vmatpush1.msra.mxu0 0.0
    %655 = vmatprep.subr.mxu0 0.0
    %656 = vmatpush1.msra.mxu0 0.0
    %657 = vmatprep.subr.mxu0 0.0
    %658 = vmatpush1.msra.mxu0 0.0
    %659 = vmatprep.subr.mxu0 0.0
    %660 = vmatpush1.msra.mxu0 0.0
    %661 = vmatprep.subr.mxu0 0.0
    %662 = vmatpush1.msra.mxu0 0.0
    %663 = vmatprep.mubr.f32.mxu0 0.0
    %v664 = vand.u32 %v63, 4294901760
    %665 = vmatmul.mubr.f32.gmra.mrb[0].mxu0 %v664
    %v666 = vpop.f32.mrb[0].mxu0
    %v667 = vadd.f32 %v574, %v666
    %v668 = vpop.f32.mrb[0].mxu0
    %669 = vmatprep.mubr.f32.mxu0 0.0
    %v670 = vand.u32 %v66, 4294901760
    %671 = vmatmul.mubr.f32.gmra.mrb[0].mxu0 %v670
    %v672 = vpop.f32.mrb[0].mxu0
    %v673 = vadd.f32 %v580, %v672
    %v674 = vpop.f32.mrb[0].mxu0
    %675 = vmatprep.mubr.f32.mxu0 0.0
    %v676 = vand.u32 %v69, 4294901760
    %677 = vmatmul.mubr.f32.gmra.mrb[0].mxu0 %v676
    %v678 = vpop.f32.mrb[0].mxu0
    %v679 = vadd.f32 %v586, %v678
    %v680 = vpop.f32.mrb[0].mxu0
    %681 = vmatprep.mubr.f32.mxu0 0.0
    %v682 = vand.u32 %v72, 4294901760
    %683 = vmatmul.mubr.f32.gmra.mrb[0].mxu0 %v682
    %v684 = vpop.f32.mrb[0].mxu0
    %v685 = vadd.f32 %v592, %v684
    %v686 = vpop.f32.mrb[0].mxu0
    %687 = vdwg.mxu0
    %692 = vrot.lane.b32.xlu0 %v667, 120
    %v693 = vpop.permute.xlu0 %692
    %694 = vrot.lane.b32.xlu0 %v673, 120
    %v695 = vpop.permute.xlu0 %694
    %696 = vrot.lane.b32.xlu0 %v679, 120
    %v697 = vpop.permute.xlu0 %696
    %698 = vrot.lane.b32.xlu0 %v685, 120
    %v699 = vpop.permute.xlu0 %698
    %700 = vrot.lane.b32.xlu0 %v667, 112
    %v701 = vpop.permute.xlu0 %700
    %702 = vrot.lane.b32.xlu0 %v673, 112
    %v703 = vpop.permute.xlu0 %702
    %704 = vrot.lane.b32.xlu0 %v679, 112
    %v705 = vpop.permute.xlu0 %704
    %706 = vrot.lane.b32.xlu0 %v685, 112
    %v707 = vpop.permute.xlu0 %706
    %708 = vrot.lane.b32.xlu0 %v667, 104
    %v709 = vpop.permute.xlu0 %708
    %710 = vrot.lane.b32.xlu0 %v673, 104
    %v711 = vpop.permute.xlu0 %710
    %712 = vrot.lane.b32.xlu0 %v679, 104
    %v713 = vpop.permute.xlu0 %712
    %714 = vrot.lane.b32.xlu0 %v685, 104
    %v715 = vpop.permute.xlu0 %714
    %716 = vrot.lane.b32.xlu0 %v667, 96
    %v717 = vpop.permute.xlu0 %716
    %718 = vrot.lane.b32.xlu0 %v673, 96
    %v719 = vpop.permute.xlu0 %718
    %vm720 = vcmask 64512
    %v721 = vsel %vm720, %v667, 0
    %v723 = vsel %vm720, %v673, 0
    %v725 = vsel %vm720, %v717, 0
    %v727 = vsel %vm720, %v719, 0
    %729 = vmatprep.subr.mxu0 0.0
    %v730 = vand.u32 %v725, 4294901760
    %731 = vmatpush1.xpose.msra.mxu0 %v730
    %732 = vmatprep.subr.mxu0 0.0
    %v733 = vand.u32 %v727, 4294901760
    %734 = vmatpush1.xpose.msra.mxu0 %v733
    %735 = vmatprep.subr.mxu0 0.0
    %736 = vmatpush1.xpose.msra.mxu0 0.0
    %737 = vmatprep.subr.mxu0 0.0
    %738 = vmatpush1.xpose.msra.mxu0 0.0
    %739 = vmatprep.subr.mxu0 0.0
    %740 = vmatpush1.xpose.msra.mxu0 0.0
    %741 = vmatprep.subr.mxu0 0.0
    %742 = vmatpush1.xpose.msra.mxu0 0.0
    %743 = vmatprep.subr.mxu0 0.0
    %744 = vmatpush1.xpose.msra.mxu0 0.0
    %745 = vmatprep.subr.mxu0 0.0
    %746 = vmatpush1.xpose.msra.mxu0 0.0
    %747 = vmatprep.subr.mxu0 0.0
    %748 = vmatpush1.xpose.msra.mxu0 0.0
    %749 = vmatprep.subr.mxu0 0.0
    %750 = vmatpush1.xpose.msra.mxu0 0.0
    %751 = vmatprep.subr.mxu0 0.0
    %752 = vmatpush1.xpose.msra.mxu0 0.0
    %753 = vmatprep.subr.mxu0 0.0
    %754 = vmatpush1.xpose.msra.mxu0 0.0
    %755 = vmatprep.subr.mxu0 0.0
    %756 = vmatpush1.xpose.msra.mxu0 0.0
    %757 = vmatprep.subr.mxu0 0.0
    %758 = vmatpush1.xpose.msra.mxu0 0.0
    %759 = vmatprep.subr.mxu0 0.0
    %760 = vmatpush1.xpose.msra.mxu0 0.0
    %761 = vmatprep.subr.mxu0 0.0
    %762 = vmatpush1.xpose.msra.mxu0 0.0
    %763 = vmatprep.subr.mxu0 0.0
    %764 = vmatpush1.xpose.msra.mxu0 0.0
    %765 = vmatprep.subr.mxu0 0.0
    %766 = vmatpush1.xpose.msra.mxu0 0.0
    %767 = vmatprep.subr.mxu0 0.0
    %768 = vmatpush1.xpose.msra.mxu0 0.0
    %769 = vmatprep.subr.mxu0 0.0
    %770 = vmatpush1.xpose.msra.mxu0 0.0
    %771 = vmatprep.subr.mxu0 0.0
    %772 = vmatpush1.xpose.msra.mxu0 0.0
    %773 = vmatprep.subr.mxu0 0.0
    %774 = vmatpush1.xpose.msra.mxu0 0.0
    %775 = vmatprep.subr.mxu0 0.0
    %776 = vmatpush1.xpose.msra.mxu0 0.0
    %777 = vmatprep.subr.mxu0 0.0
    %778 = vmatpush1.xpose.msra.mxu0 0.0
    %779 = vmatprep.subr.mxu0 0.0
    %780 = vmatpush1.xpose.msra.mxu0 0.0
    %781 = vmatprep.subr.mxu0 0.0
    %782 = vmatpush1.xpose.msra.mxu0 0.0
    %783 = vmatprep.subr.mxu0 0.0
    %784 = vmatpush1.xpose.msra.mxu0 0.0
    %785 = vmatprep.subr.mxu0 0.0
    %786 = vmatpush1.xpose.msra.mxu0 0.0
    %787 = vmatprep.subr.mxu0 0.0
    %788 = vmatpush1.xpose.msra.mxu0 0.0
    %789 = vmatprep.subr.mxu0 0.0
    %790 = vmatpush1.xpose.msra.mxu0 0.0
    %791 = vmatprep.subr.mxu0 0.0
    %792 = vmatpush1.xpose.msra.mxu0 0.0
    %793 = vmatprep.subr.mxu0 0.0
    %794 = vmatpush1.xpose.msra.mxu0 0.0
    %795 = vmatprep.mubr.f32.mxu0 0.0
    %v796 = vand.u32 %v721, 4294901760
    %v797 = vsub.f32 %v721, %v796
    %v798 = vand.u32 %v797, 4294901760
    %v799 = vsub.f32 %v797, %v798
    %v800 = vand.u32 %v799, 4294901760
    %801 = vmatmul.mubr.f32.gmra.mrb[0].mxu0 %v800
    %v802 = vpop.f32.mrb[0].mxu0
    %v803 = vadd.f32 0.0, %v802
    %v804 = vpop.f32.mrb[0].mxu0
    %805 = vmatprep.mubr.f32.mxu0 0.0
    %v806 = vand.u32 %v723, 4294901760
    %v807 = vsub.f32 %v723, %v806
    %v808 = vand.u32 %v807, 4294901760
    %v809 = vsub.f32 %v807, %v808
    %v810 = vand.u32 %v809, 4294901760
    %811 = vmatmul.mubr.f32.gmra.mrb[0].mxu0 %v810
    %v812 = vpop.f32.mrb[0].mxu0
    %v813 = vadd.f32 0.0, %v812
    %v814 = vpop.f32.mrb[0].mxu0
    %815 = vdwg.mxu0
    %816 = vmatprep.subr.mxu0 0.0
    %v817 = vand.u32 %v725, 4294901760
    %v818 = vsub.f32 %v725, %v817
    %v819 = vand.u32 %v818, 4294901760
    %v820 = vsub.f32 %v818, %v819
    %v821 = vand.u32 %v820, 4294901760
    %822 = vmatpush1.xpose.msra.mxu0 %v821
    %823 = vmatprep.subr.mxu0 0.0
    %v824 = vand.u32 %v727, 4294901760
    %v825 = vsub.f32 %v727, %v824
    %v826 = vand.u32 %v825, 4294901760
    %v827 = vsub.f32 %v825, %v826
    %v828 = vand.u32 %v827, 4294901760
    %829 = vmatpush1.xpose.msra.mxu0 %v828
    %830 = vmatprep.subr.mxu0 0.0
    %831 = vmatpush1.xpose.msra.mxu0 0.0
    %832 = vmatprep.subr.mxu0 0.0
    %833 = vmatpush1.xpose.msra.mxu0 0.0
    %834 = vmatprep.subr.mxu0 0.0
    %835 = vmatpush1.xpose.msra.mxu0 0.0
    %836 = vmatprep.subr.mxu0 0.0
    %837 = vmatpush1.xpose.msra.mxu0 0.0
    %838 = vmatprep.subr.mxu0 0.0
    %839 = vmatpush1.xpose.msra.mxu0 0.0
    %840 = vmatprep.subr.mxu0 0.0
    %841 = vmatpush1.xpose.msra.mxu0 0.0
    %842 = vmatprep.subr.mxu0 0.0
    %843 = vmatpush1.xpose.msra.mxu0 0.0
    %844 = vmatprep.subr.mxu0 0.0
    %845 = vmatpush1.xpose.msra.mxu0 0.0
    %846 = vmatprep.subr.mxu0 0.0
    %847 = vmatpush1.xpose.msra.mxu0 0.0
    %848 = vmatprep.subr.mxu0 0.0
    %849 = vmatpush1.xpose.msra.mxu0 0.0
    %850 = vmatprep.subr.mxu0 0.0
    %851 = vmatpush1.xpose.msra.mxu0 0.0
    %852 = vmatprep.subr.mxu0 0.0
    %853 = vmatpush1.xpose.msra.mxu0 0.0
    %854 = vmatprep.subr.mxu0 0.0
    %855 = vmatpush1.xpose.msra.mxu0 0.0
    %856 = vmatprep.subr.mxu0 0.0
    %857 = vmatpush1.xpose.msra.mxu0 0.0
    %858 = vmatprep.subr.mxu0 0.0
    %859 = vmatpush1.xpose.msra.mxu0 0.0
    %860 = vmatprep.subr.mxu0 0.0
    %861 = vmatpush1.xpose.msra.mxu0 0.0
    %862 = vmatprep.subr.mxu0 0.0
    %863 = vmatpush1.xpose.msra.mxu0 0.0
    %864 = vmatprep.subr.mxu0 0.0
    %865 = vmatpush1.xpose.msra.mxu0 0.0
    %866 = vmatprep.subr.mxu0 0.0
    %867 = vmatpush1.xpose.msra.mxu0 0.0
    %868 = vmatprep.subr.mxu0 0.0
    %869 = vmatpush1.xpose.msra.mxu0 0.0
    %870 = vmatprep.subr.mxu0 0.0
    %871 = vmatpush1.xpose.msra.mxu0 0.0
    %872 = vmatprep.subr.mxu0 0.0
    %873 = vmatpush1.xpose.msra.mxu0 0.0
    %874 = vmatprep.subr.mxu0 0.0
    %875 = vmatpush1.xpose.msra.mxu0 0.0
    %876 = vmatprep.subr.mxu0 0.0
    %877 = vmatpush1.xpose.msra.mxu0 0.0
    %878 = vmatprep.subr.mxu0 0.0
    %879 = vmatpush1.xpose.msra.mxu0 0.0
    %880 = vmatprep.subr.mxu0 0.0
    %881 = vmatpush1.xpose.msra.mxu0 0.0
    %882 = vmatprep.subr.mxu0 0.0
    %883 = vmatpush1.xpose.msra.mxu0 0.0
    %884 = vmatprep.subr.mxu0 0.0
    %885 = vmatpush1.xpose.msra.mxu0 0.0
    %886 = vmatprep.subr.mxu0 0.0
    %887 = vmatpush1.xpose.msra.mxu0 0.0
    %888 = vmatprep.subr.mxu0 0.0
    %889 = vmatpush1.xpose.msra.mxu0 0.0
    %890 = vmatprep.mubr.f32.mxu0 0.0
    %v891 = vand.u32 %v721, 4294901760
    %892 = vmatmul.mubr.f32.gmra.mrb[0].mxu0 %v891
    %v893 = vpop.f32.mrb[0].mxu0
    %v894 = vadd.f32 %v803, %v893
    %v895 = vpop.f32.mrb[0].mxu0
    %896 = vmatprep.mubr.f32.mxu0 0.0
    %v897 = vand.u32 %v723, 4294901760
    %898 = vmatmul.mubr.f32.gmra.mrb[0].mxu0 %v897
    %v899 = vpop.f32.mrb[0].mxu0
    %v900 = vadd.f32 %v813, %v899
    %v901 = vpop.f32.mrb[0].mxu0
    %902 = vdwg.mxu0
    %903 = vmatprep.subr.mxu0 0.0
    %v904 = vand.u32 %v725, 4294901760
    %v905 = vsub.f32 %v725, %v904
    %906 = vmatpush1.xpose.msra.mxu0 %v905
    %907 = vmatprep.subr.mxu0 0.0
    %v908 = vand.u32 %v727, 4294901760
    %v909 = vsub.f32 %v727, %v908
    %910 = vmatpush1.xpose.msra.mxu0 %v909
    %911 = vmatprep.subr.mxu0 0.0
    %912 = vmatpush1.xpose.msra.mxu0 0.0
    %913 = vmatprep.subr.mxu0 0.0
    %914 = vmatpush1.xpose.msra.mxu0 0.0
    %915 = vmatprep.subr.mxu0 0.0
    %916 = vmatpush1.xpose.msra.mxu0 0.0
    %917 = vmatprep.subr.mxu0 0.0
    %918 = vmatpush1.xpose.msra.mxu0 0.0
    %919 = vmatprep.subr.mxu0 0.0
    %920 = vmatpush1.xpose.msra.mxu0 0.0
    %921 = vmatprep.subr.mxu0 0.0
    %922 = vmatpush1.xpose.msra.mxu0 0.0
    %923 = vmatprep.subr.mxu0 0.0
    %924 = vmatpush1.xpose.msra.mxu0 0.0
    %925 = vmatprep.subr.mxu0 0.0
    %926 = vmatpush1.xpose.msra.mxu0 0.0
    %927 = vmatprep.subr.mxu0 0.0
    %928 = vmatpush1.xpose.msra.mxu0 0.0
    %929 = vmatprep.subr.mxu0 0.0
    %930 = vmatpush1.xpose.msra.mxu0 0.0
    %931 = vmatprep.subr.mxu0 0.0
    %932 = vmatpush1.xpose.msra.mxu0 0.0
    %933 = vmatprep.subr.mxu0 0.0
    %934 = vmatpush1.xpose.msra.mxu0 0.0
    %935 = vmatprep.subr.mxu0 0.0
    %936 = vmatpush1.xpose.msra.mxu0 0.0
    %937 = vmatprep.subr.mxu0 0.0
    %938 = vmatpush1.xpose.msra.mxu0 0.0
    %939 = vmatprep.subr.mxu0 0.0
    %940 = vmatpush1.xpose.msra.mxu0 0.0
    %941 = vmatprep.subr.mxu0 0.0
    %942 = vmatpush1.xpose.msra.mxu0 0.0
    %943 = vmatprep.subr.mxu0 0.0
    %944 = vmatpush1.xpose.msra.mxu0 0.0
    %945 = vmatprep.subr.mxu0 0.0
    %946 = vmatpush1.xpose.msra.mxu0 0.0
    %947 = vmatprep.subr.mxu0 0.0
    %948 = vmatpush1.xpose.msra.mxu0 0.0
    %949 = vmatprep.subr.mxu0 0.0
    %950 = vmatpush1.xpose.msra.mxu0 0.0
    %951 = vmatprep.subr.mxu0 0.0
    %952 = vmatpush1.xpose.msra.mxu0 0.0
    %953 = vmatprep.subr.mxu0 0.0
    %954 = vmatpush1.xpose.msra.mxu0 0.0
    %955 = vmatprep.subr.mxu0 0.0
    %956 = vmatpush1.xpose.msra.mxu0 0.0
    %957 = vmatprep.subr.mxu0 0.0
    %958 = vmatpush1.xpose.msra.mxu0 0.0
    %959 = vmatprep.subr.mxu0 0.0
    %960 = vmatpush1.xpose.msra.mxu0 0.0
    %961 = vmatprep.subr.mxu0 0.0
    %962 = vmatpush1.xpose.msra.mxu0 0.0
    %963 = vmatprep.subr.mxu0 0.0
    %964 = vmatpush1.xpose.msra.mxu0 0.0
    %965 = vmatprep.subr.mxu0 0.0
    %966 = vmatpush1.xpose.msra.mxu0 0.0
    %967 = vmatprep.subr.mxu0 0.0
    %968 = vmatpush1.xpose.msra.mxu0 0.0
    %969 = vmatprep.subr.mxu0 0.0
    %970 = vmatpush1.xpose.msra.mxu0 0.0
    %971 = vmatprep.mubr.f32.mxu0 0.0
    %v972 = vand.u32 %v721, 4294901760
    %v973 = vsub.f32 %v721, %v972
    %974 = vmatmul.mubr.f32.gmra.mrb[0].mxu0 %v973
    %v975 = vpop.f32.mrb[0].mxu0
    %v976 = vadd.f32 %v894, %v975
    %v977 = vpop.f32.mrb[0].mxu0
    %978 = vmatprep.mubr.f32.mxu0 0.0
    %v979 = vand.u32 %v723, 4294901760
    %v980 = vsub.f32 %v723, %v979
    %981 = vmatmul.mubr.f32.gmra.mrb[0].mxu0 %v980
    %v982 = vpop.f32.mrb[0].mxu0
    %v983 = vadd.f32 %v900, %v982
    %v984 = vpop.f32.mrb[0].mxu0
    %985 = vdwg.mxu0
    %986 = vmatprep.subr.mxu0 0.0
    %v987 = vand.u32 %v725, 4294901760
    %988 = vmatpush1.xpose.msra.mxu0 %v987
    %989 = vmatprep.subr.mxu0 0.0
    %v990 = vand.u32 %v727, 4294901760
    %991 = vmatpush1.xpose.msra.mxu0 %v990
    %992 = vmatprep.subr.mxu0 0.0
    %993 = vmatpush1.xpose.msra.mxu0 0.0
    %994 = vmatprep.subr.mxu0 0.0
    %995 = vmatpush1.xpose.msra.mxu0 0.0
    %996 = vmatprep.subr.mxu0 0.0
    %997 = vmatpush1.xpose.msra.mxu0 0.0
    %998 = vmatprep.subr.mxu0 0.0
    %999 = vmatpush1.xpose.msra.mxu0 0.0
    %1000 = vmatprep.subr.mxu0 0.0
    %1001 = vmatpush1.xpose.msra.mxu0 0.0
    %1002 = vmatprep.subr.mxu0 0.0
    %1003 = vmatpush1.xpose.msra.mxu0 0.0
    %1004 = vmatprep.subr.mxu0 0.0
    %1005 = vmatpush1.xpose.msra.mxu0 0.0
    %1006 = vmatprep.subr.mxu0 0.0
    %1007 = vmatpush1.xpose.msra.mxu0 0.0
    %1008 = vmatprep.subr.mxu0 0.0
    %1009 = vmatpush1.xpose.msra.mxu0 0.0
    %1010 = vmatprep.subr.mxu0 0.0
    %1011 = vmatpush1.xpose.msra.mxu0 0.0
    %1012 = vmatprep.subr.mxu0 0.0
    %1013 = vmatpush1.xpose.msra.mxu0 0.0
    %1014 = vmatprep.subr.mxu0 0.0
    %1015 = vmatpush1.xpose.msra.mxu0 0.0
    %1016 = vmatprep.subr.mxu0 0.0
    %1017 = vmatpush1.xpose.msra.mxu0 0.0
    %1018 = vmatprep.subr.mxu0 0.0
    %1019 = vmatpush1.xpose.msra.mxu0 0.0
    %1020 = vmatprep.subr.mxu0 0.0
    %1021 = vmatpush1.xpose.msra.mxu0 0.0
    %1022 = vmatprep.subr.mxu0 0.0
    %1023 = vmatpush1.xpose.msra.mxu0 0.0
    %1024 = vmatprep.subr.mxu0 0.0
    %1025 = vmatpush1.xpose.msra.mxu0 0.0
    %1026 = vmatprep.subr.mxu0 0.0
    %1027 = vmatpush1.xpose.msra.mxu0 0.0
    %1028 = vmatprep.subr.mxu0 0.0
    %1029 = vmatpush1.xpose.msra.mxu0 0.0
    %1030 = vmatprep.subr.mxu0 0.0
    %1031 = vmatpush1.xpose.msra.mxu0 0.0
    %1032 = vmatprep.subr.mxu0 0.0
    %1033 = vmatpush1.xpose.msra.mxu0 0.0
    %1034 = vmatprep.subr.mxu0 0.0
    %1035 = vmatpush1.xpose.msra.mxu0 0.0
    %1036 = vmatprep.subr.mxu0 0.0
    %1037 = vmatpush1.xpose.msra.mxu0 0.0
    %1038 = vmatprep.subr.mxu0 0.0
    %1039 = vmatpush1.xpose.msra.mxu0 0.0
    %1040 = vmatprep.subr.mxu0 0.0
    %1041 = vmatpush1.xpose.msra.mxu0 0.0
    %1042 = vmatprep.subr.mxu0 0.0
    %1043 = vmatpush1.xpose.msra.mxu0 0.0
    %1044 = vmatprep.subr.mxu0 0.0
    %1045 = vmatpush1.xpose.msra.mxu0 0.0
    %1046 = vmatprep.subr.mxu0 0.0
    %1047 = vmatpush1.xpose.msra.mxu0 0.0
    %1048 = vmatprep.subr.mxu0 0.0
    %1049 = vmatpush1.xpose.msra.mxu0 0.0
    %1050 = vmatprep.subr.mxu0 0.0
    %1051 = vmatpush1.xpose.msra.mxu0 0.0
    %1052 = vmatprep.mubr.f32.mxu0 0.0
    %v1053 = vand.u32 %v721, 4294901760
    %v1054 = vsub.f32 %v721, %v1053
    %v1055 = vand.u32 %v1054, 4294901760
    %1056 = vmatmul.mubr.f32.gmra.mrb[0].mxu0 %v1055
    %v1057 = vpop.f32.mrb[0].mxu0
    %v1058 = vadd.f32 %v976, %v1057
    %v1059 = vpop.f32.mrb[0].mxu0
    %1060 = vmatprep.mubr.f32.mxu0 0.0
    %v1061 = vand.u32 %v723, 4294901760
    %v1062 = vsub.f32 %v723, %v1061
    %v1063 = vand.u32 %v1062, 4294901760
    %1064 = vmatmul.mubr.f32.gmra.mrb[0].mxu0 %v1063
    %v1065 = vpop.f32.mrb[0].mxu0
    %v1066 = vadd.f32 %v983, %v1065
    %v1067 = vpop.f32.mrb[0].mxu0
    %1068 = vdwg.mxu0
    %1069 = vmatprep.subr.mxu0 0.0
    %v1070 = vand.u32 %v725, 4294901760
    %v1071 = vsub.f32 %v725, %v1070
    %v1072 = vand.u32 %v1071, 4294901760
    %1073 = vmatpush1.xpose.msra.mxu0 %v1072
    %1074 = vmatprep.subr.mxu0 0.0
    %v1075 = vand.u32 %v727, 4294901760
    %v1076 = vsub.f32 %v727, %v1075
    %v1077 = vand.u32 %v1076, 4294901760
    %1078 = vmatpush1.xpose.msra.mxu0 %v1077
    %1079 = vmatprep.subr.mxu0 0.0
    %1080 = vmatpush1.xpose.msra.mxu0 0.0
    %1081 = vmatprep.subr.mxu0 0.0
    %1082 = vmatpush1.xpose.msra.mxu0 0.0
    %1083 = vmatprep.subr.mxu0 0.0
    %1084 = vmatpush1.xpose.msra.mxu0 0.0
    %1085 = vmatprep.subr.mxu0 0.0
    %1086 = vmatpush1.xpose.msra.mxu0 0.0
    %1087 = vmatprep.subr.mxu0 0.0
    %1088 = vmatpush1.xpose.msra.mxu0 0.0
    %1089 = vmatprep.subr.mxu0 0.0
    %1090 = vmatpush1.xpose.msra.mxu0 0.0
    %1091 = vmatprep.subr.mxu0 0.0
    %1092 = vmatpush1.xpose.msra.mxu0 0.0
    %1093 = vmatprep.subr.mxu0 0.0
    %1094 = vmatpush1.xpose.msra.mxu0 0.0
    %1095 = vmatprep.subr.mxu0 0.0
    %1096 = vmatpush1.xpose.msra.mxu0 0.0
    %1097 = vmatprep.subr.mxu0 0.0
    %1098 = vmatpush1.xpose.msra.mxu0 0.0
    %1099 = vmatprep.subr.mxu0 0.0
    %1100 = vmatpush1.xpose.msra.mxu0 0.0
    %1101 = vmatprep.subr.mxu0 0.0
    %1102 = vmatpush1.xpose.msra.mxu0 0.0
    %1103 = vmatprep.subr.mxu0 0.0
    %1104 = vmatpush1.xpose.msra.mxu0 0.0
    %1105 = vmatprep.subr.mxu0 0.0
    %1106 = vmatpush1.xpose.msra.mxu0 0.0
    %1107 = vmatprep.subr.mxu0 0.0
    %1108 = vmatpush1.xpose.msra.mxu0 0.0
    %1109 = vmatprep.subr.mxu0 0.0
    %1110 = vmatpush1.xpose.msra.mxu0 0.0
    %1111 = vmatprep.subr.mxu0 0.0
    %1112 = vmatpush1.xpose.msra.mxu0 0.0
    %1113 = vmatprep.subr.mxu0 0.0
    %1114 = vmatpush1.xpose.msra.mxu0 0.0
    %1115 = vmatprep.subr.mxu0 0.0
    %1116 = vmatpush1.xpose.msra.mxu0 0.0
    %1117 = vmatprep.subr.mxu0 0.0
    %1118 = vmatpush1.xpose.msra.mxu0 0.0
    %1119 = vmatprep.subr.mxu0 0.0
    %1120 = vmatpush1.xpose.msra.mxu0 0.0
    %1121 = vmatprep.subr.mxu0 0.0
    %1122 = vmatpush1.xpose.msra.mxu0 0.0
    %1123 = vmatprep.subr.mxu0 0.0
    %1124 = vmatpush1.xpose.msra.mxu0 0.0
    %1125 = vmatprep.subr.mxu0 0.0
    %1126 = vmatpush1.xpose.msra.mxu0 0.0
    %1127 = vmatprep.subr.mxu0 0.0
    %1128 = vmatpush1.xpose.msra.mxu0 0.0
    %1129 = vmatprep.subr.mxu0 0.0
    %1130 = vmatpush1.xpose.msra.mxu0 0.0
    %1131 = vmatprep.subr.mxu0 0.0
    %1132 = vmatpush1.xpose.msra.mxu0 0.0
    %1133 = vmatprep.subr.mxu0 0.0
    %1134 = vmatpush1.xpose.msra.mxu0 0.0
    %1135 = vmatprep.subr.mxu0 0.0
    %1136 = vmatpush1.xpose.msra.mxu0 0.0
    %1137 = vmatprep.subr.mxu0 0.0
    %1138 = vmatpush1.xpose.msra.mxu0 0.0
    %1139 = vmatprep.mubr.f32.mxu0 0.0
    %v1140 = vand.u32 %v721, 4294901760
    %1141 = vmatmul.mubr.f32.gmra.mrb[0].mxu0 %v1140
    %v1142 = vpop.f32.mrb[0].mxu0
    %v1143 = vadd.f32 %v1058, %v1142
    %v1144 = vpop.f32.mrb[0].mxu0
    %1145 = vmatprep.mubr.f32.mxu0 0.0
    %v1146 = vand.u32 %v723, 4294901760
    %1147 = vmatmul.mubr.f32.gmra.mrb[0].mxu0 %v1146
    %v1148 = vpop.f32.mrb[0].mxu0
    %v1149 = vadd.f32 %v1066, %v1148
    %v1150 = vpop.f32.mrb[0].mxu0
    %1151 = vdwg.mxu0
    %1152 = vmatprep.subr.mxu0 0.0
    %v1153 = vand.u32 %v725, 4294901760
    %1154 = vmatpush1.xpose.msra.mxu0 %v1153
    %1155 = vmatprep.subr.mxu0 0.0
    %v1156 = vand.u32 %v727, 4294901760
    %1157 = vmatpush1.xpose.msra.mxu0 %v1156
    %1158 = vmatprep.subr.mxu0 0.0
    %1159 = vmatpush1.xpose.msra.mxu0 0.0
    %1160 = vmatprep.subr.mxu0 0.0
    %1161 = vmatpush1.xpose.msra.mxu0 0.0
    %1162 = vmatprep.subr.mxu0 0.0
    %1163 = vmatpush1.xpose.msra.mxu0 0.0
    %1164 = vmatprep.subr.mxu0 0.0
    %1165 = vmatpush1.xpose.msra.mxu0 0.0
    %1166 = vmatprep.subr.mxu0 0.0
    %1167 = vmatpush1.xpose.msra.mxu0 0.0
    %1168 = vmatprep.subr.mxu0 0.0
    %1169 = vmatpush1.xpose.msra.mxu0 0.0
    %1170 = vmatprep.subr.mxu0 0.0
    %1171 = vmatpush1.xpose.msra.mxu0 0.0
    %1172 = vmatprep.subr.mxu0 0.0
    %1173 = vmatpush1.xpose.msra.mxu0 0.0
    %1174 = vmatprep.subr.mxu0 0.0
    %1175 = vmatpush1.xpose.msra.mxu0 0.0
    %1176 = vmatprep.subr.mxu0 0.0
    %1177 = vmatpush1.xpose.msra.mxu0 0.0
    %1178 = vmatprep.subr.mxu0 0.0
    %1179 = vmatpush1.xpose.msra.mxu0 0.0
    %1180 = vmatprep.subr.mxu0 0.0
    %1181 = vmatpush1.xpose.msra.mxu0 0.0
    %1182 = vmatprep.subr.mxu0 0.0
    %1183 = vmatpush1.xpose.msra.mxu0 0.0
    %1184 = vmatprep.subr.mxu0 0.0
    %1185 = vmatpush1.xpose.msra.mxu0 0.0
    %1186 = vmatprep.subr.mxu0 0.0
    %1187 = vmatpush1.xpose.msra.mxu0 0.0
    %1188 = vmatprep.subr.mxu0 0.0
    %1189 = vmatpush1.xpose.msra.mxu0 0.0
    %1190 = vmatprep.subr.mxu0 0.0
    %1191 = vmatpush1.xpose.msra.mxu0 0.0
    %1192 = vmatprep.subr.mxu0 0.0
    %1193 = vmatpush1.xpose.msra.mxu0 0.0
    %1194 = vmatprep.subr.mxu0 0.0
    %1195 = vmatpush1.xpose.msra.mxu0 0.0
    %1196 = vmatprep.subr.mxu0 0.0
    %1197 = vmatpush1.xpose.msra.mxu0 0.0
    %1198 = vmatprep.subr.mxu0 0.0
    %1199 = vmatpush1.xpose.msra.mxu0 0.0
    %1200 = vmatprep.subr.mxu0 0.0
    %1201 = vmatpush1.xpose.msra.mxu0 0.0
    %1202 = vmatprep.subr.mxu0 0.0
    %1203 = vmatpush1.xpose.msra.mxu0 0.0
    %1204 = vmatprep.subr.mxu0 0.0
    %1205 = vmatpush1.xpose.msra.mxu0 0.0
    %1206 = vmatprep.subr.mxu0 0.0
    %1207 = vmatpush1.xpose.msra.mxu0 0.0
    %1208 = vmatprep.subr.mxu0 0.0
    %1209 = vmatpush1.xpose.msra.mxu0 0.0
    %1210 = vmatprep.subr.mxu0 0.0
    %1211 = vmatpush1.xpose.msra.mxu0 0.0
    %1212 = vmatprep.subr.mxu0 0.0
    %1213 = vmatpush1.xpose.msra.mxu0 0.0
    %1214 = vmatprep.subr.mxu0 0.0
    %1215 = vmatpush1.xpose.msra.mxu0 0.0
    %1216 = vmatprep.subr.mxu0 0.0
    %1217 = vmatpush1.xpose.msra.mxu0 0.0
    %1218 = vmatprep.mubr.f32.mxu0 0.0
    %v1219 = vand.u32 %v721, 4294901760
    %1220 = vmatmul.mubr.f32.gmra.mrb[0].mxu0 %v1219
    %v1221 = vpop.f32.mrb[0].mxu0
    %v1222 = vadd.f32 %v1143, %v1221
    %v1223 = vpop.f32.mrb[0].mxu0
    %1224 = vmatprep.mubr.f32.mxu0 0.0
    %v1225 = vand.u32 %v723, 4294901760
    %1226 = vmatmul.mubr.f32.gmra.mrb[0].mxu0 %v1225
    %v1227 = vpop.f32.mrb[0].mxu0
    %v1228 = vadd.f32 %v1149, %v1227
    %v1229 = vpop.f32.mrb[0].mxu0
    %1230 = vdwg.mxu0
    %1231 = vrot.lane.b32.xlu0 %v679, 96
    %v1232 = vpop.permute.xlu0 %1231
    %1233 = vrot.lane.b32.xlu0 %v685, 96
    %v1234 = vpop.permute.xlu0 %1233
    %v1235 = vsel %vm720, %v679, 0
    %v1237 = vsel %vm720, %v685, 0
    %v1239 = vsel %vm720, %v1232, 0
    %v1241 = vsel %vm720, %v1234, 0
    %1243 = vmatprep.subr.mxu0 0.0
    %v1244 = vand.u32 %v1239, 4294901760
    %1245 = vmatpush1.xpose.msra.mxu0 %v1244
    %1246 = vmatprep.subr.mxu0 0.0
    %v1247 = vand.u32 %v1241, 4294901760
    %1248 = vmatpush1.xpose.msra.mxu0 %v1247
    %1249 = vmatprep.subr.mxu0 0.0
    %1250 = vmatpush1.xpose.msra.mxu0 0.0
    %1251 = vmatprep.subr.mxu0 0.0
    %1252 = vmatpush1.xpose.msra.mxu0 0.0
    %1253 = vmatprep.subr.mxu0 0.0
    %1254 = vmatpush1.xpose.msra.mxu0 0.0
    %1255 = vmatprep.subr.mxu0 0.0
    %1256 = vmatpush1.xpose.msra.mxu0 0.0
    %1257 = vmatprep.subr.mxu0 0.0
    %1258 = vmatpush1.xpose.msra.mxu0 0.0
    %1259 = vmatprep.subr.mxu0 0.0
    %1260 = vmatpush1.xpose.msra.mxu0 0.0
    %1261 = vmatprep.subr.mxu0 0.0
    %1262 = vmatpush1.xpose.msra.mxu0 0.0
    %1263 = vmatprep.subr.mxu0 0.0
    %1264 = vmatpush1.xpose.msra.mxu0 0.0
    %1265 = vmatprep.subr.mxu0 0.0
    %1266 = vmatpush1.xpose.msra.mxu0 0.0
    %1267 = vmatprep.subr.mxu0 0.0
    %1268 = vmatpush1.xpose.msra.mxu0 0.0
    %1269 = vmatprep.subr.mxu0 0.0
    %1270 = vmatpush1.xpose.msra.mxu0 0.0
    %1271 = vmatprep.subr.mxu0 0.0
    %1272 = vmatpush1.xpose.msra.mxu0 0.0
    %1273 = vmatprep.subr.mxu0 0.0
    %1274 = vmatpush1.xpose.msra.mxu0 0.0
    %1275 = vmatprep.subr.mxu0 0.0
    %1276 = vmatpush1.xpose.msra.mxu0 0.0
    %1277 = vmatprep.subr.mxu0 0.0
    %1278 = vmatpush1.xpose.msra.mxu0 0.0
    %1279 = vmatprep.subr.mxu0 0.0
    %1280 = vmatpush1.xpose.msra.mxu0 0.0
    %1281 = vmatprep.subr.mxu0 0.0
    %1282 = vmatpush1.xpose.msra.mxu0 0.0
    %1283 = vmatprep.subr.mxu0 0.0
    %1284 = vmatpush1.xpose.msra.mxu0 0.0
    %1285 = vmatprep.subr.mxu0 0.0
    %1286 = vmatpush1.xpose.msra.mxu0 0.0
    %1287 = vmatprep.subr.mxu0 0.0
    %1288 = vmatpush1.xpose.msra.mxu0 0.0
    %1289 = vmatprep.subr.mxu0 0.0
    %1290 = vmatpush1.xpose.msra.mxu0 0.0
    %1291 = vmatprep.subr.mxu0 0.0
    %1292 = vmatpush1.xpose.msra.mxu0 0.0
    %1293 = vmatprep.subr.mxu0 0.0
    %1294 = vmatpush1.xpose.msra.mxu0 0.0
    %1295 = vmatprep.subr.mxu0 0.0
    %1296 = vmatpush1.xpose.msra.mxu0 0.0
    %1297 = vmatprep.subr.mxu0 0.0
    %1298 = vmatpush1.xpose.msra.mxu0 0.0
    %1299 = vmatprep.subr.mxu0 0.0
    %1300 = vmatpush1.xpose.msra.mxu0 0.0
    %1301 = vmatprep.subr.mxu0 0.0
    %1302 = vmatpush1.xpose.msra.mxu0 0.0
    %1303 = vmatprep.subr.mxu0 0.0
    %1304 = vmatpush1.xpose.msra.mxu0 0.0
    %1305 = vmatprep.subr.mxu0 0.0
    %1306 = vmatpush1.xpose.msra.mxu0 0.0
    %1307 = vmatprep.subr.mxu0 0.0
    %1308 = vmatpush1.xpose.msra.mxu0 0.0
    %1309 = vmatprep.mubr.f32.mxu0 0.0
    %v1310 = vand.u32 %v1235, 4294901760
    %v1311 = vsub.f32 %v1235, %v1310
    %v1312 = vand.u32 %v1311, 4294901760
    %v1313 = vsub.f32 %v1311, %v1312
    %v1314 = vand.u32 %v1313, 4294901760
    %1315 = vmatmul.mubr.f32.gmra.mrb[0].mxu0 %v1314
    %v1316 = vpop.f32.mrb[0].mxu0
    %v1317 = vadd.f32 0.0, %v1316
    %v1318 = vpop.f32.mrb[0].mxu0
    %1319 = vmatprep.mubr.f32.mxu0 0.0
    %v1320 = vand.u32 %v1237, 4294901760
    %v1321 = vsub.f32 %v1237, %v1320
    %v1322 = vand.u32 %v1321, 4294901760
    %v1323 = vsub.f32 %v1321, %v1322
    %v1324 = vand.u32 %v1323, 4294901760
    %1325 = vmatmul.mubr.f32.gmra.mrb[0].mxu0 %v1324
    %v1326 = vpop.f32.mrb[0].mxu0
    %v1327 = vadd.f32 0.0, %v1326
    %v1328 = vpop.f32.mrb[0].mxu0
    %1329 = vdwg.mxu0
    %1330 = vmatprep.subr.mxu0 0.0
    %v1331 = vand.u32 %v1239, 4294901760
    %v1332 = vsub.f32 %v1239, %v1331
    %v1333 = vand.u32 %v1332, 4294901760
    %v1334 = vsub.f32 %v1332, %v1333
    %v1335 = vand.u32 %v1334, 4294901760
    %1336 = vmatpush1.xpose.msra.mxu0 %v1335
    %1337 = vmatprep.subr.mxu0 0.0
    %v1338 = vand.u32 %v1241, 4294901760
    %v1339 = vsub.f32 %v1241, %v1338
    %v1340 = vand.u32 %v1339, 4294901760
    %v1341 = vsub.f32 %v1339, %v1340
    %v1342 = vand.u32 %v1341, 4294901760
    %1343 = vmatpush1.xpose.msra.mxu0 %v1342
    %1344 = vmatprep.subr.mxu0 0.0
    %1345 = vmatpush1.xpose.msra.mxu0 0.0
    %1346 = vmatprep.subr.mxu0 0.0
    %1347 = vmatpush1.xpose.msra.mxu0 0.0
    %1348 = vmatprep.subr.mxu0 0.0
    %1349 = vmatpush1.xpose.msra.mxu0 0.0
    %1350 = vmatprep.subr.mxu0 0.0
    %1351 = vmatpush1.xpose.msra.mxu0 0.0
    %1352 = vmatprep.subr.mxu0 0.0
    %1353 = vmatpush1.xpose.msra.mxu0 0.0
    %1354 = vmatprep.subr.mxu0 0.0
    %1355 = vmatpush1.xpose.msra.mxu0 0.0
    %1356 = vmatprep.subr.mxu0 0.0
    %1357 = vmatpush1.xpose.msra.mxu0 0.0
    %1358 = vmatprep.subr.mxu0 0.0
    %1359 = vmatpush1.xpose.msra.mxu0 0.0
    %1360 = vmatprep.subr.mxu0 0.0
    %1361 = vmatpush1.xpose.msra.mxu0 0.0
    %1362 = vmatprep.subr.mxu0 0.0
    %1363 = vmatpush1.xpose.msra.mxu0 0.0
    %1364 = vmatprep.subr.mxu0 0.0
    %1365 = vmatpush1.xpose.msra.mxu0 0.0
    %1366 = vmatprep.subr.mxu0 0.0
    %1367 = vmatpush1.xpose.msra.mxu0 0.0
    %1368 = vmatprep.subr.mxu0 0.0
    %1369 = vmatpush1.xpose.msra.mxu0 0.0
    %1370 = vmatprep.subr.mxu0 0.0
    %1371 = vmatpush1.xpose.msra.mxu0 0.0
    %1372 = vmatprep.subr.mxu0 0.0
    %1373 = vmatpush1.xpose.msra.mxu0 0.0
    %1374 = vmatprep.subr.mxu0 0.0
    %1375 = vmatpush1.xpose.msra.mxu0 0.0
    %1376 = vmatprep.subr.mxu0 0.0
    %1377 = vmatpush1.xpose.msra.mxu0 0.0
    %1378 = vmatprep.subr.mxu0 0.0
    %1379 = vmatpush1.xpose.msra.mxu0 0.0
    %1380 = vmatprep.subr.mxu0 0.0
    %1381 = vmatpush1.xpose.msra.mxu0 0.0
    %1382 = vmatprep.subr.mxu0 0.0
    %1383 = vmatpush1.xpose.msra.mxu0 0.0
    %1384 = vmatprep.subr.mxu0 0.0
    %1385 = vmatpush1.xpose.msra.mxu0 0.0
    %1386 = vmatprep.subr.mxu0 0.0
    %1387 = vmatpush1.xpose.msra.mxu0 0.0
    %1388 = vmatprep.subr.mxu0 0.0
    %1389 = vmatpush1.xpose.msra.mxu0 0.0
    %1390 = vmatprep.subr.mxu0 0.0
    %1391 = vmatpush1.xpose.msra.mxu0 0.0
    %1392 = vmatprep.subr.mxu0 0.0
    %1393 = vmatpush1.xpose.msra.mxu0 0.0
    %1394 = vmatprep.subr.mxu0 0.0
    %1395 = vmatpush1.xpose.msra.mxu0 0.0
    %1396 = vmatprep.subr.mxu0 0.0
    %1397 = vmatpush1.xpose.msra.mxu0 0.0
    %1398 = vmatprep.subr.mxu0 0.0
    %1399 = vmatpush1.xpose.msra.mxu0 0.0
    %1400 = vmatprep.subr.mxu0 0.0
    %1401 = vmatpush1.xpose.msra.mxu0 0.0
    %1402 = vmatprep.subr.mxu0 0.0
    %1403 = vmatpush1.xpose.msra.mxu0 0.0
    %1404 = vmatprep.mubr.f32.mxu0 0.0
    %v1405 = vand.u32 %v1235, 4294901760
    %1406 = vmatmul.mubr.f32.gmra.mrb[0].mxu0 %v1405
    %v1407 = vpop.f32.mrb[0].mxu0
    %v1408 = vadd.f32 %v1317, %v1407
    %v1409 = vpop.f32.mrb[0].mxu0
    %1410 = vmatprep.mubr.f32.mxu0 0.0
    %v1411 = vand.u32 %v1237, 4294901760
    %1412 = vmatmul.mubr.f32.gmra.mrb[0].mxu0 %v1411
    %v1413 = vpop.f32.mrb[0].mxu0
    %v1414 = vadd.f32 %v1327, %v1413
    %v1415 = vpop.f32.mrb[0].mxu0
    %1416 = vdwg.mxu0
    %1417 = vmatprep.subr.mxu0 0.0
    %v1418 = vand.u32 %v1239, 4294901760
    %v1419 = vsub.f32 %v1239, %v1418
    %1420 = vmatpush1.xpose.msra.mxu0 %v1419
    %1421 = vmatprep.subr.mxu0 0.0
    %v1422 = vand.u32 %v1241, 4294901760
    %v1423 = vsub.f32 %v1241, %v1422
    %1424 = vmatpush1.xpose.msra.mxu0 %v1423
    %1425 = vmatprep.subr.mxu0 0.0
    %1426 = vmatpush1.xpose.msra.mxu0 0.0
    %1427 = vmatprep.subr.mxu0 0.0
    %1428 = vmatpush1.xpose.msra.mxu0 0.0
    %1429 = vmatprep.subr.mxu0 0.0
    %1430 = vmatpush1.xpose.msra.mxu0 0.0
    %1431 = vmatprep.subr.mxu0 0.0
    %1432 = vmatpush1.xpose.msra.mxu0 0.0
    %1433 = vmatprep.subr.mxu0 0.0
    %1434 = vmatpush1.xpose.msra.mxu0 0.0
    %1435 = vmatprep.subr.mxu0 0.0
    %1436 = vmatpush1.xpose.msra.mxu0 0.0
    %1437 = vmatprep.subr.mxu0 0.0
    %1438 = vmatpush1.xpose.msra.mxu0 0.0
    %1439 = vmatprep.subr.mxu0 0.0
    %1440 = vmatpush1.xpose.msra.mxu0 0.0
    %1441 = vmatprep.subr.mxu0 0.0
    %1442 = vmatpush1.xpose.msra.mxu0 0.0
    %1443 = vmatprep.subr.mxu0 0.0
    %1444 = vmatpush1.xpose.msra.mxu0 0.0
    %1445 = vmatprep.subr.mxu0 0.0
    %1446 = vmatpush1.xpose.msra.mxu0 0.0
    %1447 = vmatprep.subr.mxu0 0.0
    %1448 = vmatpush1.xpose.msra.mxu0 0.0
    %1449 = vmatprep.subr.mxu0 0.0
    %1450 = vmatpush1.xpose.msra.mxu0 0.0
    %1451 = vmatprep.subr.mxu0 0.0
    %1452 = vmatpush1.xpose.msra.mxu0 0.0
    %1453 = vmatprep.subr.mxu0 0.0
    %1454 = vmatpush1.xpose.msra.mxu0 0.0
    %1455 = vmatprep.subr.mxu0 0.0
    %1456 = vmatpush1.xpose.msra.mxu0 0.0
    %1457 = vmatprep.subr.mxu0 0.0
    %1458 = vmatpush1.xpose.msra.mxu0 0.0
    %1459 = vmatprep.subr.mxu0 0.0
    %1460 = vmatpush1.xpose.msra.mxu0 0.0
    %1461 = vmatprep.subr.mxu0 0.0
    %1462 = vmatpush1.xpose.msra.mxu0 0.0
    %1463 = vmatprep.subr.mxu0 0.0
    %1464 = vmatpush1.xpose.msra.mxu0 0.0
    %1465 = vmatprep.subr.mxu0 0.0
    %1466 = vmatpush1.xpose.msra.mxu0 0.0
    %1467 = vmatprep.subr.mxu0 0.0
    %1468 = vmatpush1.xpose.msra.mxu0 0.0
    %1469 = vmatprep.subr.mxu0 0.0
    %1470 = vmatpush1.xpose.msra.mxu0 0.0
    %1471 = vmatprep.subr.mxu0 0.0
    %1472 = vmatpush1.xpose.msra.mxu0 0.0
    %1473 = vmatprep.subr.mxu0 0.0
    %1474 = vmatpush1.xpose.msra.mxu0 0.0
    %1475 = vmatprep.subr.mxu0 0.0
    %1476 = vmatpush1.xpose.msra.mxu0 0.0
    %1477 = vmatprep.subr.mxu0 0.0
    %1478 = vmatpush1.xpose.msra.mxu0 0.0
    %1479 = vmatprep.subr.mxu0 0.0
    %1480 = vmatpush1.xpose.msra.mxu0 0.0
    %1481 = vmatprep.subr.mxu0 0.0
    %1482 = vmatpush1.xpose.msra.mxu0 0.0
    %1483 = vmatprep.subr.mxu0 0.0
    %1484 = vmatpush1.xpose.msra.mxu0 0.0
    %1485 = vmatprep.mubr.f32.mxu0 0.0
    %v1486 = vand.u32 %v1235, 4294901760
    %v1487 = vsub.f32 %v1235, %v1486
    %1488 = vmatmul.mubr.f32.gmra.mrb[0].mxu0 %v1487
    %v1489 = vpop.f32.mrb[0].mxu0
    %v1490 = vadd.f32 %v1408, %v1489
    %v1491 = vpop.f32.mrb[0].mxu0
    %1492 = vmatprep.mubr.f32.mxu0 0.0
    %v1493 = vand.u32 %v1237, 4294901760
    %v1494 = vsub.f32 %v1237, %v1493
    %1495 = vmatmul.mubr.f32.gmra.mrb[0].mxu0 %v1494
    %v1496 = vpop.f32.mrb[0].mxu0
    %v1497 = vadd.f32 %v1414, %v1496
    %v1498 = vpop.f32.mrb[0].mxu0
    %1499 = vdwg.mxu0
    %1500 = vmatprep.subr.mxu0 0.0
    %v1501 = vand.u32 %v1239, 4294901760
    %1502 = vmatpush1.xpose.msra.mxu0 %v1501
    %1503 = vmatprep.subr.mxu0 0.0
    %v1504 = vand.u32 %v1241, 4294901760
    %1505 = vmatpush1.xpose.msra.mxu0 %v1504
    %1506 = vmatprep.subr.mxu0 0.0
    %1507 = vmatpush1.xpose.msra.mxu0 0.0
    %1508 = vmatprep.subr.mxu0 0.0
    %1509 = vmatpush1.xpose.msra.mxu0 0.0
    %1510 = vmatprep.subr.mxu0 0.0
    %1511 = vmatpush1.xpose.msra.mxu0 0.0
    %1512 = vmatprep.subr.mxu0 0.0
    %1513 = vmatpush1.xpose.msra.mxu0 0.0
    %1514 = vmatprep.subr.mxu0 0.0
    %1515 = vmatpush1.xpose.msra.mxu0 0.0
    %1516 = vmatprep.subr.mxu0 0.0
    %1517 = vmatpush1.xpose.msra.mxu0 0.0
    %1518 = vmatprep.subr.mxu0 0.0
    %1519 = vmatpush1.xpose.msra.mxu0 0.0
    %1520 = vmatprep.subr.mxu0 0.0
    %1521 = vmatpush1.xpose.msra.mxu0 0.0
    %1522 = vmatprep.subr.mxu0 0.0
    %1523 = vmatpush1.xpose.msra.mxu0 0.0
    %1524 = vmatprep.subr.mxu0 0.0
    %1525 = vmatpush1.xpose.msra.mxu0 0.0
    %1526 = vmatprep.subr.mxu0 0.0
    %1527 = vmatpush1.xpose.msra.mxu0 0.0
    %1528 = vmatprep.subr.mxu0 0.0
    %1529 = vmatpush1.xpose.msra.mxu0 0.0
    %1530 = vmatprep.subr.mxu0 0.0
    %1531 = vmatpush1.xpose.msra.mxu0 0.0
    %1532 = vmatprep.subr.mxu0 0.0
    %1533 = vmatpush1.xpose.msra.mxu0 0.0
    %1534 = vmatprep.subr.mxu0 0.0
    %1535 = vmatpush1.xpose.msra.mxu0 0.0
    %1536 = vmatprep.subr.mxu0 0.0
    %1537 = vmatpush1.xpose.msra.mxu0 0.0
    %1538 = vmatprep.subr.mxu0 0.0
    %1539 = vmatpush1.xpose.msra.mxu0 0.0
    %1540 = vmatprep.subr.mxu0 0.0
    %1541 = vmatpush1.xpose.msra.mxu0 0.0
    %1542 = vmatprep.subr.mxu0 0.0
    %1543 = vmatpush1.xpose.msra.mxu0 0.0
    %1544 = vmatprep.subr.mxu0 0.0
    %1545 = vmatpush1.xpose.msra.mxu0 0.0
    %1546 = vmatprep.subr.mxu0 0.0
    %1547 = vmatpush1.xpose.msra.mxu0 0.0
    %1548 = vmatprep.subr.mxu0 0.0
    %1549 = vmatpush1.xpose.msra.mxu0 0.0
    %1550 = vmatprep.subr.mxu0 0.0
    %1551 = vmatpush1.xpose.msra.mxu0 0.0
    %1552 = vmatprep.subr.mxu0 0.0
    %1553 = vmatpush1.xpose.msra.mxu0 0.0
    %1554 = vmatprep.subr.mxu0 0.0
    %1555 = vmatpush1.xpose.msra.mxu0 0.0
    %1556 = vmatprep.subr.mxu0 0.0
    %1557 = vmatpush1.xpose.msra.mxu0 0.0
    %1558 = vmatprep.subr.mxu0 0.0
    %1559 = vmatpush1.xpose.msra.mxu0 0.0
    %1560 = vmatprep.subr.mxu0 0.0
    %1561 = vmatpush1.xpose.msra.mxu0 0.0
    %1562 = vmatprep.subr.mxu0 0.0
    %1563 = vmatpush1.xpose.msra.mxu0 0.0
    %1564 = vmatprep.subr.mxu0 0.0
    %1565 = vmatpush1.xpose.msra.mxu0 0.0
    %1566 = vmatprep.mubr.f32.mxu0 0.0
    %v1567 = vand.u32 %v1235, 4294901760
    %v1568 = vsub.f32 %v1235, %v1567
    %v1569 = vand.u32 %v1568, 4294901760
    %1570 = vmatmul.mubr.f32.gmra.mrb[0].mxu0 %v1569
    %v1571 = vpop.f32.mrb[0].mxu0
    %v1572 = vadd.f32 %v1490, %v1571
    %v1573 = vpop.f32.mrb[0].mxu0
    %1574 = vmatprep.mubr.f32.mxu0 0.0
    %v1575 = vand.u32 %v1237, 4294901760
    %v1576 = vsub.f32 %v1237, %v1575
    %v1577 = vand.u32 %v1576, 4294901760
    %1578 = vmatmul.mubr.f32.gmra.mrb[0].mxu0 %v1577
    %v1579 = vpop.f32.mrb[0].mxu0
    %v1580 = vadd.f32 %v1497, %v1579
    %v1581 = vpop.f32.mrb[0].mxu0
    %1582 = vdwg.mxu0
    %1583 = vmatprep.subr.mxu0 0.0
    %v1584 = vand.u32 %v1239, 4294901760
    %v1585 = vsub.f32 %v1239, %v1584
    %v1586 = vand.u32 %v1585, 4294901760
    %1587 = vmatpush1.xpose.msra.mxu0 %v1586
    %1588 = vmatprep.subr.mxu0 0.0
    %v1589 = vand.u32 %v1241, 4294901760
    %v1590 = vsub.f32 %v1241, %v1589
    %v1591 = vand.u32 %v1590, 4294901760
    %1592 = vmatpush1.xpose.msra.mxu0 %v1591
    %1593 = vmatprep.subr.mxu0 0.0
    %1594 = vmatpush1.xpose.msra.mxu0 0.0
    %1595 = vmatprep.subr.mxu0 0.0
    %1596 = vmatpush1.xpose.msra.mxu0 0.0
    %1597 = vmatprep.subr.mxu0 0.0
    %1598 = vmatpush1.xpose.msra.mxu0 0.0
    %1599 = vmatprep.subr.mxu0 0.0
    %1600 = vmatpush1.xpose.msra.mxu0 0.0
    %1601 = vmatprep.subr.mxu0 0.0
    %1602 = vmatpush1.xpose.msra.mxu0 0.0
    %1603 = vmatprep.subr.mxu0 0.0
    %1604 = vmatpush1.xpose.msra.mxu0 0.0
    %1605 = vmatprep.subr.mxu0 0.0
    %1606 = vmatpush1.xpose.msra.mxu0 0.0
    %1607 = vmatprep.subr.mxu0 0.0
    %1608 = vmatpush1.xpose.msra.mxu0 0.0
    %1609 = vmatprep.subr.mxu0 0.0
    %1610 = vmatpush1.xpose.msra.mxu0 0.0
    %1611 = vmatprep.subr.mxu0 0.0
    %1612 = vmatpush1.xpose.msra.mxu0 0.0
    %1613 = vmatprep.subr.mxu0 0.0
    %1614 = vmatpush1.xpose.msra.mxu0 0.0
    %1615 = vmatprep.subr.mxu0 0.0
    %1616 = vmatpush1.xpose.msra.mxu0 0.0
    %1617 = vmatprep.subr.mxu0 0.0
    %1618 = vmatpush1.xpose.msra.mxu0 0.0
    %1619 = vmatprep.subr.mxu0 0.0
    %1620 = vmatpush1.xpose.msra.mxu0 0.0
    %1621 = vmatprep.subr.mxu0 0.0
    %1622 = vmatpush1.xpose.msra.mxu0 0.0
    %1623 = vmatprep.subr.mxu0 0.0
    %1624 = vmatpush1.xpose.msra.mxu0 0.0
    %1625 = vmatprep.subr.mxu0 0.0
    %1626 = vmatpush1.xpose.msra.mxu0 0.0
    %1627 = vmatprep.subr.mxu0 0.0
    %1628 = vmatpush1.xpose.msra.mxu0 0.0
    %1629 = vmatprep.subr.mxu0 0.0
    %1630 = vmatpush1.xpose.msra.mxu0 0.0
    %1631 = vmatprep.subr.mxu0 0.0
    %1632 = vmatpush1.xpose.msra.mxu0 0.0
    %1633 = vmatprep.subr.mxu0 0.0
    %1634 = vmatpush1.xpose.msra.mxu0 0.0
    %1635 = vmatprep.subr.mxu0 0.0
    %1636 = vmatpush1.xpose.msra.mxu0 0.0
    %1637 = vmatprep.subr.mxu0 0.0
    %1638 = vmatpush1.xpose.msra.mxu0 0.0
    %1639 = vmatprep.subr.mxu0 0.0
    %1640 = vmatpush1.xpose.msra.mxu0 0.0
    %1641 = vmatprep.subr.mxu0 0.0
    %1642 = vmatpush1.xpose.msra.mxu0 0.0
    %1643 = vmatprep.subr.mxu0 0.0
    %1644 = vmatpush1.xpose.msra.mxu0 0.0
    %1645 = vmatprep.subr.mxu0 0.0
    %1646 = vmatpush1.xpose.msra.mxu0 0.0
    %1647 = vmatprep.subr.mxu0 0.0
    %1648 = vmatpush1.xpose.msra.mxu0 0.0
    %1649 = vmatprep.subr.mxu0 0.0
    %1650 = vmatpush1.xpose.msra.mxu0 0.0
    %1651 = vmatprep.subr.mxu0 0.0
    %1652 = vmatpush1.xpose.msra.mxu0 0.0
    %1653 = vmatprep.mubr.f32.mxu0 0.0
    %v1654 = vand.u32 %v1235, 4294901760
    %1655 = vmatmul.mubr.f32.gmra.mrb[0].mxu0 %v1654
    %v1656 = vpop.f32.mrb[0].mxu0
    %v1657 = vadd.f32 %v1572, %v1656
    %v1658 = vpop.f32.mrb[0].mxu0
    %1659 = vmatprep.mubr.f32.mxu0 0.0
    %v1660 = vand.u32 %v1237, 4294901760
    %1661 = vmatmul.mubr.f32.gmra.mrb[0].mxu0 %v1660
    %v1662 = vpop.f32.mrb[0].mxu0
    %v1663 = vadd.f32 %v1580, %v1662
    %v1664 = vpop.f32.mrb[0].mxu0
    %1665 = vdwg.mxu0
    %1666 = vmatprep.subr.mxu0 0.0
    %v1667 = vand.u32 %v1239, 4294901760
    %1668 = vmatpush1.xpose.msra.mxu0 %v1667
    %1669 = vmatprep.subr.mxu0 0.0
    %v1670 = vand.u32 %v1241, 4294901760
    %1671 = vmatpush1.xpose.msra.mxu0 %v1670
    %1672 = vmatprep.subr.mxu0 0.0
    %1673 = vmatpush1.xpose.msra.mxu0 0.0
    %1674 = vmatprep.subr.mxu0 0.0
    %1675 = vmatpush1.xpose.msra.mxu0 0.0
    %1676 = vmatprep.subr.mxu0 0.0
    %1677 = vmatpush1.xpose.msra.mxu0 0.0
    %1678 = vmatprep.subr.mxu0 0.0
    %1679 = vmatpush1.xpose.msra.mxu0 0.0
    %1680 = vmatprep.subr.mxu0 0.0
    %1681 = vmatpush1.xpose.msra.mxu0 0.0
    %1682 = vmatprep.subr.mxu0 0.0
    %1683 = vmatpush1.xpose.msra.mxu0 0.0
    %1684 = vmatprep.subr.mxu0 0.0
    %1685 = vmatpush1.xpose.msra.mxu0 0.0
    %1686 = vmatprep.subr.mxu0 0.0
    %1687 = vmatpush1.xpose.msra.mxu0 0.0
    %1688 = vmatprep.subr.mxu0 0.0
    %1689 = vmatpush1.xpose.msra.mxu0 0.0
    %1690 = vmatprep.subr.mxu0 0.0
    %1691 = vmatpush1.xpose.msra.mxu0 0.0
    %1692 = vmatprep.subr.mxu0 0.0
    %1693 = vmatpush1.xpose.msra.mxu0 0.0
    %1694 = vmatprep.subr.mxu0 0.0
    %1695 = vmatpush1.xpose.msra.mxu0 0.0
    %1696 = vmatprep.subr.mxu0 0.0
    %1697 = vmatpush1.xpose.msra.mxu0 0.0
    %1698 = vmatprep.subr.mxu0 0.0
    %1699 = vmatpush1.xpose.msra.mxu0 0.0
    %1700 = vmatprep.subr.mxu0 0.0
    %1701 = vmatpush1.xpose.msra.mxu0 0.0
    %1702 = vmatprep.subr.mxu0 0.0
    %1703 = vmatpush1.xpose.msra.mxu0 0.0
    %1704 = vmatprep.subr.mxu0 0.0
    %1705 = vmatpush1.xpose.msra.mxu0 0.0
    %1706 = vmatprep.subr.mxu0 0.0
    %1707 = vmatpush1.xpose.msra.mxu0 0.0
    %1708 = vmatprep.subr.mxu0 0.0
    %1709 = vmatpush1.xpose.msra.mxu0 0.0
    %1710 = vmatprep.subr.mxu0 0.0
    %1711 = vmatpush1.xpose.msra.mxu0 0.0
    %1712 = vmatprep.subr.mxu0 0.0
    %1713 = vmatpush1.xpose.msra.mxu0 0.0
    %1714 = vmatprep.subr.mxu0 0.0
    %1715 = vmatpush1.xpose.msra.mxu0 0.0
    %1716 = vmatprep.subr.mxu0 0.0
    %1717 = vmatpush1.xpose.msra.mxu0 0.0
    %1718 = vmatprep.subr.mxu0 0.0
    %1719 = vmatpush1.xpose.msra.mxu0 0.0
    %1720 = vmatprep.subr.mxu0 0.0
    %1721 = vmatpush1.xpose.msra.mxu0 0.0
    %1722 = vmatprep.subr.mxu0 0.0
    %1723 = vmatpush1.xpose.msra.mxu0 0.0
    %1724 = vmatprep.subr.mxu0 0.0
    %1725 = vmatpush1.xpose.msra.mxu0 0.0
    %1726 = vmatprep.subr.mxu0 0.0
    %1727 = vmatpush1.xpose.msra.mxu0 0.0
    %1728 = vmatprep.subr.mxu0 0.0
    %1729 = vmatpush1.xpose.msra.mxu0 0.0
    %1730 = vmatprep.subr.mxu0 0.0
    %1731 = vmatpush1.xpose.msra.mxu0 0.0
    %1732 = vmatprep.mubr.f32.mxu0 0.0
    %v1733 = vand.u32 %v1235, 4294901760
    %1734 = vmatmul.mubr.f32.gmra.mrb[0].mxu0 %v1733
    %v1735 = vpop.f32.mrb[0].mxu0
    %v1736 = vadd.f32 %v1657, %v1735
    %v1737 = vpop.f32.mrb[0].mxu0
    %1738 = vmatprep.mubr.f32.mxu0 0.0
    %v1739 = vand.u32 %v1237, 4294901760
    %1740 = vmatmul.mubr.f32.gmra.mrb[0].mxu0 %v1739
    %v1741 = vpop.f32.mrb[0].mxu0
    %v1742 = vadd.f32 %v1663, %v1741
    %v1743 = vpop.f32.mrb[0].mxu0
    %1744 = vdwg.mxu0
    %1745 = vrot.lane.b32.xlu0 %v693, 96
    %v1746 = vpop.permute.xlu0 %1745
    %1747 = vrot.lane.b32.xlu0 %v695, 96
    %v1748 = vpop.permute.xlu0 %1747
    %v1749 = vsel %vm720, %v693, 0
    %v1751 = vsel %vm720, %v695, 0
    %v1753 = vsel %vm720, %v1746, 0
    %v1755 = vsel %vm720, %v1748, 0
    %1757 = vmatprep.subr.mxu0 0.0
    %v1758 = vand.u32 %v1753, 4294901760
    %1759 = vmatpush1.xpose.msra.mxu0 %v1758
    %1760 = vmatprep.subr.mxu0 0.0
    %v1761 = vand.u32 %v1755, 4294901760
    %1762 = vmatpush1.xpose.msra.mxu0 %v1761
    %1763 = vmatprep.subr.mxu0 0.0
    %1764 = vmatpush1.xpose.msra.mxu0 0.0
    %1765 = vmatprep.subr.mxu0 0.0
    %1766 = vmatpush1.xpose.msra.mxu0 0.0
    %1767 = vmatprep.subr.mxu0 0.0
    %1768 = vmatpush1.xpose.msra.mxu0 0.0
    %1769 = vmatprep.subr.mxu0 0.0
    %1770 = vmatpush1.xpose.msra.mxu0 0.0
    %1771 = vmatprep.subr.mxu0 0.0
    %1772 = vmatpush1.xpose.msra.mxu0 0.0
    %1773 = vmatprep.subr.mxu0 0.0
    %1774 = vmatpush1.xpose.msra.mxu0 0.0
    %1775 = vmatprep.subr.mxu0 0.0
    %1776 = vmatpush1.xpose.msra.mxu0 0.0
    %1777 = vmatprep.subr.mxu0 0.0
    %1778 = vmatpush1.xpose.msra.mxu0 0.0
    %1779 = vmatprep.subr.mxu0 0.0
    %1780 = vmatpush1.xpose.msra.mxu0 0.0
    %1781 = vmatprep.subr.mxu0 0.0
    %1782 = vmatpush1.xpose.msra.mxu0 0.0
    %1783 = vmatprep.subr.mxu0 0.0
    %1784 = vmatpush1.xpose.msra.mxu0 0.0
    %1785 = vmatprep.subr.mxu0 0.0
    %1786 = vmatpush1.xpose.msra.mxu0 0.0
    %1787 = vmatprep.subr.mxu0 0.0
    %1788 = vmatpush1.xpose.msra.mxu0 0.0
    %1789 = vmatprep.subr.mxu0 0.0
    %1790 = vmatpush1.xpose.msra.mxu0 0.0
    %1791 = vmatprep.subr.mxu0 0.0
    %1792 = vmatpush1.xpose.msra.mxu0 0.0
    %1793 = vmatprep.subr.mxu0 0.0
    %1794 = vmatpush1.xpose.msra.mxu0 0.0
    %1795 = vmatprep.subr.mxu0 0.0
    %1796 = vmatpush1.xpose.msra.mxu0 0.0
    %1797 = vmatprep.subr.mxu0 0.0
    %1798 = vmatpush1.xpose.msra.mxu0 0.0
    %1799 = vmatprep.subr.mxu0 0.0
    %1800 = vmatpush1.xpose.msra.mxu0 0.0
    %1801 = vmatprep.subr.mxu0 0.0
    %1802 = vmatpush1.xpose.msra.mxu0 0.0
    %1803 = vmatprep.subr.mxu0 0.0
    %1804 = vmatpush1.xpose.msra.mxu0 0.0
    %1805 = vmatprep.subr.mxu0 0.0
    %1806 = vmatpush1.xpose.msra.mxu0 0.0
    %1807 = vmatprep.subr.mxu0 0.0
    %1808 = vmatpush1.xpose.msra.mxu0 0.0
    %1809 = vmatprep.subr.mxu0 0.0
    %1810 = vmatpush1.xpose.msra.mxu0 0.0
    %1811 = vmatprep.subr.mxu0 0.0
    %1812 = vmatpush1.xpose.msra.mxu0 0.0
    %1813 = vmatprep.subr.mxu0 0.0
    %1814 = vmatpush1.xpose.msra.mxu0 0.0
    %1815 = vmatprep.subr.mxu0 0.0
    %1816 = vmatpush1.xpose.msra.mxu0 0.0
    %1817 = vmatprep.subr.mxu0 0.0
    %1818 = vmatpush1.xpose.msra.mxu0 0.0
    %1819 = vmatprep.subr.mxu0 0.0
    %1820 = vmatpush1.xpose.msra.mxu0 0.0
    %1821 = vmatprep.subr.mxu0 0.0
    %1822 = vmatpush1.xpose.msra.mxu0 0.0
    %1823 = vmatprep.mubr.f32.mxu0 0.0
    %v1824 = vand.u32 %v1749, 4294901760
    %v1825 = vsub.f32 %v1749, %v1824
    %v1826 = vand.u32 %v1825, 4294901760
    %v1827 = vsub.f32 %v1825, %v1826
    %v1828 = vand.u32 %v1827, 4294901760
    %1829 = vmatmul.mubr.f32.gmra.mrb[0].mxu0 %v1828
    %v1830 = vpop.f32.mrb[0].mxu0
    %v1831 = vadd.f32 0.0, %v1830
    %v1832 = vpop.f32.mrb[0].mxu0
    %1833 = vmatprep.mubr.f32.mxu0 0.0
    %v1834 = vand.u32 %v1751, 4294901760
    %v1835 = vsub.f32 %v1751, %v1834
    %v1836 = vand.u32 %v1835, 4294901760
    %v1837 = vsub.f32 %v1835, %v1836
    %v1838 = vand.u32 %v1837, 4294901760
    %1839 = vmatmul.mubr.f32.gmra.mrb[0].mxu0 %v1838
    %v1840 = vpop.f32.mrb[0].mxu0
    %v1841 = vadd.f32 0.0, %v1840
    %v1842 = vpop.f32.mrb[0].mxu0
    %1843 = vdwg.mxu0
    %1844 = vmatprep.subr.mxu0 0.0
    %v1845 = vand.u32 %v1753, 4294901760
    %v1846 = vsub.f32 %v1753, %v1845
    %v1847 = vand.u32 %v1846, 4294901760
    %v1848 = vsub.f32 %v1846, %v1847
    %v1849 = vand.u32 %v1848, 4294901760
    %1850 = vmatpush1.xpose.msra.mxu0 %v1849
    %1851 = vmatprep.subr.mxu0 0.0
    %v1852 = vand.u32 %v1755, 4294901760
    %v1853 = vsub.f32 %v1755, %v1852
    %v1854 = vand.u32 %v1853, 4294901760
    %v1855 = vsub.f32 %v1853, %v1854
    %v1856 = vand.u32 %v1855, 4294901760
    %1857 = vmatpush1.xpose.msra.mxu0 %v1856
    %1858 = vmatprep.subr.mxu0 0.0
    %1859 = vmatpush1.xpose.msra.mxu0 0.0
    %1860 = vmatprep.subr.mxu0 0.0
    %1861 = vmatpush1.xpose.msra.mxu0 0.0
    %1862 = vmatprep.subr.mxu0 0.0
    %1863 = vmatpush1.xpose.msra.mxu0 0.0
    %1864 = vmatprep.subr.mxu0 0.0
    %1865 = vmatpush1.xpose.msra.mxu0 0.0
    %1866 = vmatprep.subr.mxu0 0.0
    %1867 = vmatpush1.xpose.msra.mxu0 0.0
    %1868 = vmatprep.subr.mxu0 0.0
    %1869 = vmatpush1.xpose.msra.mxu0 0.0
    %1870 = vmatprep.subr.mxu0 0.0
    %1871 = vmatpush1.xpose.msra.mxu0 0.0
    %1872 = vmatprep.subr.mxu0 0.0
    %1873 = vmatpush1.xpose.msra.mxu0 0.0
    %1874 = vmatprep.subr.mxu0 0.0
    %1875 = vmatpush1.xpose.msra.mxu0 0.0
    %1876 = vmatprep.subr.mxu0 0.0
    %1877 = vmatpush1.xpose.msra.mxu0 0.0
    %1878 = vmatprep.subr.mxu0 0.0
    %1879 = vmatpush1.xpose.msra.mxu0 0.0
    %1880 = vmatprep.subr.mxu0 0.0
    %1881 = vmatpush1.xpose.msra.mxu0 0.0
    %1882 = vmatprep.subr.mxu0 0.0
    %1883 = vmatpush1.xpose.msra.mxu0 0.0
    %1884 = vmatprep.subr.mxu0 0.0
    %1885 = vmatpush1.xpose.msra.mxu0 0.0
    %1886 = vmatprep.subr.mxu0 0.0
    %1887 = vmatpush1.xpose.msra.mxu0 0.0
    %1888 = vmatprep.subr.mxu0 0.0
    %1889 = vmatpush1.xpose.msra.mxu0 0.0
    %1890 = vmatprep.subr.mxu0 0.0
    %1891 = vmatpush1.xpose.msra.mxu0 0.0
    %1892 = vmatprep.subr.mxu0 0.0
    %1893 = vmatpush1.xpose.msra.mxu0 0.0
    %1894 = vmatprep.subr.mxu0 0.0
    %1895 = vmatpush1.xpose.msra.mxu0 0.0
    %1896 = vmatprep.subr.mxu0 0.0
    %1897 = vmatpush1.xpose.msra.mxu0 0.0
    %1898 = vmatprep.subr.mxu0 0.0
    %1899 = vmatpush1.xpose.msra.mxu0 0.0
    %1900 = vmatprep.subr.mxu0 0.0
    %1901 = vmatpush1.xpose.msra.mxu0 0.0
    %1902 = vmatprep.subr.mxu0 0.0
    %1903 = vmatpush1.xpose.msra.mxu0 0.0
    %1904 = vmatprep.subr.mxu0 0.0
    %1905 = vmatpush1.xpose.msra.mxu0 0.0
    %1906 = vmatprep.subr.mxu0 0.0
    %1907 = vmatpush1.xpose.msra.mxu0 0.0
    %1908 = vmatprep.subr.mxu0 0.0
    %1909 = vmatpush1.xpose.msra.mxu0 0.0
    %1910 = vmatprep.subr.mxu0 0.0
    %1911 = vmatpush1.xpose.msra.mxu0 0.0
    %1912 = vmatprep.subr.mxu0 0.0
    %1913 = vmatpush1.xpose.msra.mxu0 0.0
    %1914 = vmatprep.subr.mxu0 0.0
    %1915 = vmatpush1.xpose.msra.mxu0 0.0
    %1916 = vmatprep.subr.mxu0 0.0
    %1917 = vmatpush1.xpose.msra.mxu0 0.0
    %1918 = vmatprep.mubr.f32.mxu0 0.0
    %v1919 = vand.u32 %v1749, 4294901760
    %1920 = vmatmul.mubr.f32.gmra.mrb[0].mxu0 %v1919
    %v1921 = vpop.f32.mrb[0].mxu0
    %v1922 = vadd.f32 %v1831, %v1921
    %v1923 = vpop.f32.mrb[0].mxu0
    %1924 = vmatprep.mubr.f32.mxu0 0.0
    %v1925 = vand.u32 %v1751, 4294901760
    %1926 = vmatmul.mubr.f32.gmra.mrb[0].mxu0 %v1925
    %v1927 = vpop.f32.mrb[0].mxu0
    %v1928 = vadd.f32 %v1841, %v1927
    %v1929 = vpop.f32.mrb[0].mxu0
    %1930 = vdwg.mxu0
    %1931 = vmatprep.subr.mxu0 0.0
    %v1932 = vand.u32 %v1753, 4294901760
    %v1933 = vsub.f32 %v1753, %v1932
    %1934 = vmatpush1.xpose.msra.mxu0 %v1933
    %1935 = vmatprep.subr.mxu0 0.0
    %v1936 = vand.u32 %v1755, 4294901760
    %v1937 = vsub.f32 %v1755, %v1936
    %1938 = vmatpush1.xpose.msra.mxu0 %v1937
    %1939 = vmatprep.subr.mxu0 0.0
    %1940 = vmatpush1.xpose.msra.mxu0 0.0
    %1941 = vmatprep.subr.mxu0 0.0
    %1942 = vmatpush1.xpose.msra.mxu0 0.0
    %1943 = vmatprep.subr.mxu0 0.0
    %1944 = vmatpush1.xpose.msra.mxu0 0.0
    %1945 = vmatprep.subr.mxu0 0.0
    %1946 = vmatpush1.xpose.msra.mxu0 0.0
    %1947 = vmatprep.subr.mxu0 0.0
    %1948 = vmatpush1.xpose.msra.mxu0 0.0
    %1949 = vmatprep.subr.mxu0 0.0
    %1950 = vmatpush1.xpose.msra.mxu0 0.0
    %1951 = vmatprep.subr.mxu0 0.0
    %1952 = vmatpush1.xpose.msra.mxu0 0.0
    %1953 = vmatprep.subr.mxu0 0.0
    %1954 = vmatpush1.xpose.msra.mxu0 0.0
    %1955 = vmatprep.subr.mxu0 0.0
    %1956 = vmatpush1.xpose.msra.mxu0 0.0
    %1957 = vmatprep.subr.mxu0 0.0
    %1958 = vmatpush1.xpose.msra.mxu0 0.0
    %1959 = vmatprep.subr.mxu0 0.0
    %1960 = vmatpush1.xpose.msra.mxu0 0.0
    %1961 = vmatprep.subr.mxu0 0.0
    %1962 = vmatpush1.xpose.msra.mxu0 0.0
    %1963 = vmatprep.subr.mxu0 0.0
    %1964 = vmatpush1.xpose.msra.mxu0 0.0
    %1965 = vmatprep.subr.mxu0 0.0
    %1966 = vmatpush1.xpose.msra.mxu0 0.0
    %1967 = vmatprep.subr.mxu0 0.0
    %1968 = vmatpush1.xpose.msra.mxu0 0.0
    %1969 = vmatprep.subr.mxu0 0.0
    %1970 = vmatpush1.xpose.msra.mxu0 0.0
    %1971 = vmatprep.subr.mxu0 0.0
    %1972 = vmatpush1.xpose.msra.mxu0 0.0
    %1973 = vmatprep.subr.mxu0 0.0
    %1974 = vmatpush1.xpose.msra.mxu0 0.0
    %1975 = vmatprep.subr.mxu0 0.0
    %1976 = vmatpush1.xpose.msra.mxu0 0.0
    %1977 = vmatprep.subr.mxu0 0.0
    %1978 = vmatpush1.xpose.msra.mxu0 0.0
    %1979 = vmatprep.subr.mxu0 0.0
    %1980 = vmatpush1.xpose.msra.mxu0 0.0
    %1981 = vmatprep.subr.mxu0 0.0
    %1982 = vmatpush1.xpose.msra.mxu0 0.0
    %1983 = vmatprep.subr.mxu0 0.0
    %1984 = vmatpush1.xpose.msra.mxu0 0.0
    %1985 = vmatprep.subr.mxu0 0.0
    %1986 = vmatpush1.xpose.msra.mxu0 0.0
    %1987 = vmatprep.subr.mxu0 0.0
    %1988 = vmatpush1.xpose.msra.mxu0 0.0
    %1989 = vmatprep.subr.mxu0 0.0
    %1990 = vmatpush1.xpose.msra.mxu0 0.0
    %1991 = vmatprep.subr.mxu0 0.0
    %1992 = vmatpush1.xpose.msra.mxu0 0.0
    %1993 = vmatprep.subr.mxu0 0.0
    %1994 = vmatpush1.xpose.msra.mxu0 0.0
    %1995 = vmatprep.subr.mxu0 0.0
    %1996 = vmatpush1.xpose.msra.mxu0 0.0
    %1997 = vmatprep.subr.mxu0 0.0
    %1998 = vmatpush1.xpose.msra.mxu0 0.0
    %1999 = vmatprep.mubr.f32.mxu0 0.0
    %v2000 = vand.u32 %v1749, 4294901760
    %v2001 = vsub.f32 %v1749, %v2000
    %2002 = vmatmul.mubr.f32.gmra.mrb[0].mxu0 %v2001
    %v2003 = vpop.f32.mrb[0].mxu0
    %v2004 = vadd.f32 %v1922, %v2003
    %v2005 = vpop.f32.mrb[0].mxu0
    %2006 = vmatprep.mubr.f32.mxu0 0.0
    %v2007 = vand.u32 %v1751, 4294901760
    %v2008 = vsub.f32 %v1751, %v2007
    %2009 = vmatmul.mubr.f32.gmra.mrb[0].mxu0 %v2008
    %v2010 = vpop.f32.mrb[0].mxu0
    %v2011 = vadd.f32 %v1928, %v2010
    %v2012 = vpop.f32.mrb[0].mxu0
    %2013 = vdwg.mxu0
    %2014 = vmatprep.subr.mxu0 0.0
    %v2015 = vand.u32 %v1753, 4294901760
    %2016 = vmatpush1.xpose.msra.mxu0 %v2015
    %2017 = vmatprep.subr.mxu0 0.0
    %v2018 = vand.u32 %v1755, 4294901760
    %2019 = vmatpush1.xpose.msra.mxu0 %v2018
    %2020 = vmatprep.subr.mxu0 0.0
    %2021 = vmatpush1.xpose.msra.mxu0 0.0
    %2022 = vmatprep.subr.mxu0 0.0
    %2023 = vmatpush1.xpose.msra.mxu0 0.0
    %2024 = vmatprep.subr.mxu0 0.0
    %2025 = vmatpush1.xpose.msra.mxu0 0.0
    %2026 = vmatprep.subr.mxu0 0.0
    %2027 = vmatpush1.xpose.msra.mxu0 0.0
    %2028 = vmatprep.subr.mxu0 0.0
    %2029 = vmatpush1.xpose.msra.mxu0 0.0
    %2030 = vmatprep.subr.mxu0 0.0
    %2031 = vmatpush1.xpose.msra.mxu0 0.0
    %2032 = vmatprep.subr.mxu0 0.0
    %2033 = vmatpush1.xpose.msra.mxu0 0.0
    %2034 = vmatprep.subr.mxu0 0.0
    %2035 = vmatpush1.xpose.msra.mxu0 0.0
    %2036 = vmatprep.subr.mxu0 0.0
    %2037 = vmatpush1.xpose.msra.mxu0 0.0
    %2038 = vmatprep.subr.mxu0 0.0
    %2039 = vmatpush1.xpose.msra.mxu0 0.0
    %2040 = vmatprep.subr.mxu0 0.0
    %2041 = vmatpush1.xpose.msra.mxu0 0.0
    %2042 = vmatprep.subr.mxu0 0.0
    %2043 = vmatpush1.xpose.msra.mxu0 0.0
    %2044 = vmatprep.subr.mxu0 0.0
    %2045 = vmatpush1.xpose.msra.mxu0 0.0
    %2046 = vmatprep.subr.mxu0 0.0
    %2047 = vmatpush1.xpose.msra.mxu0 0.0
    %2048 = vmatprep.subr.mxu0 0.0
    %2049 = vmatpush1.xpose.msra.mxu0 0.0
    %2050 = vmatprep.subr.mxu0 0.0
    %2051 = vmatpush1.xpose.msra.mxu0 0.0
    %2052 = vmatprep.subr.mxu0 0.0
    %2053 = vmatpush1.xpose.msra.mxu0 0.0
    %2054 = vmatprep.subr.mxu0 0.0
    %2055 = vmatpush1.xpose.msra.mxu0 0.0
    %2056 = vmatprep.subr.mxu0 0.0
    %2057 = vmatpush1.xpose.msra.mxu0 0.0
    %2058 = vmatprep.subr.mxu0 0.0
    %2059 = vmatpush1.xpose.msra.mxu0 0.0
    %2060 = vmatprep.subr.mxu0 0.0
    %2061 = vmatpush1.xpose.msra.mxu0 0.0
    %2062 = vmatprep.subr.mxu0 0.0
    %2063 = vmatpush1.xpose.msra.mxu0 0.0
    %2064 = vmatprep.subr.mxu0 0.0
    %2065 = vmatpush1.xpose.msra.mxu0 0.0
    %2066 = vmatprep.subr.mxu0 0.0
    %2067 = vmatpush1.xpose.msra.mxu0 0.0
    %2068 = vmatprep.subr.mxu0 0.0
    %2069 = vmatpush1.xpose.msra.mxu0 0.0
    %2070 = vmatprep.subr.mxu0 0.0
    %2071 = vmatpush1.xpose.msra.mxu0 0.0
    %2072 = vmatprep.subr.mxu0 0.0
    %2073 = vmatpush1.xpose.msra.mxu0 0.0
    %2074 = vmatprep.subr.mxu0 0.0
    %2075 = vmatpush1.xpose.msra.mxu0 0.0
    %2076 = vmatprep.subr.mxu0 0.0
    %2077 = vmatpush1.xpose.msra.mxu0 0.0
    %2078 = vmatprep.subr.mxu0 0.0
    %2079 = vmatpush1.xpose.msra.mxu0 0.0
    %2080 = vmatprep.mubr.f32.mxu0 0.0
    %v2081 = vand.u32 %v1749, 4294901760
    %v2082 = vsub.f32 %v1749, %v2081
    %v2083 = vand.u32 %v2082, 4294901760
    %2084 = vmatmul.mubr.f32.gmra.mrb[0].mxu0 %v2083
    %v2085 = vpop.f32.mrb[0].mxu0
    %v2086 = vadd.f32 %v2004, %v2085
    %v2087 = vpop.f32.mrb[0].mxu0
    %2088 = vmatprep.mubr.f32.mxu0 0.0
    %v2089 = vand.u32 %v1751, 4294901760
    %v2090 = vsub.f32 %v1751, %v2089
    %v2091 = vand.u32 %v2090, 4294901760
    %2092 = vmatmul.mubr.f32.gmra.mrb[0].mxu0 %v2091
    %v2093 = vpop.f32.mrb[0].mxu0
    %v2094 = vadd.f32 %v2011, %v2093
    %v2095 = vpop.f32.mrb[0].mxu0
    %2096 = vdwg.mxu0
    %2097 = vmatprep.subr.mxu0 0.0
    %v2098 = vand.u32 %v1753, 4294901760
    %v2099 = vsub.f32 %v1753, %v2098
    %v2100 = vand.u32 %v2099, 4294901760
    %2101 = vmatpush1.xpose.msra.mxu0 %v2100
    %2102 = vmatprep.subr.mxu0 0.0
    %v2103 = vand.u32 %v1755, 4294901760
    %v2104 = vsub.f32 %v1755, %v2103
    %v2105 = vand.u32 %v2104, 4294901760
    %2106 = vmatpush1.xpose.msra.mxu0 %v2105
    %2107 = vmatprep.subr.mxu0 0.0
    %2108 = vmatpush1.xpose.msra.mxu0 0.0
    %2109 = vmatprep.subr.mxu0 0.0
    %2110 = vmatpush1.xpose.msra.mxu0 0.0
    %2111 = vmatprep.subr.mxu0 0.0
    %2112 = vmatpush1.xpose.msra.mxu0 0.0
    %2113 = vmatprep.subr.mxu0 0.0
    %2114 = vmatpush1.xpose.msra.mxu0 0.0
    %2115 = vmatprep.subr.mxu0 0.0
    %2116 = vmatpush1.xpose.msra.mxu0 0.0
    %2117 = vmatprep.subr.mxu0 0.0
    %2118 = vmatpush1.xpose.msra.mxu0 0.0
    %2119 = vmatprep.subr.mxu0 0.0
    %2120 = vmatpush1.xpose.msra.mxu0 0.0
    %2121 = vmatprep.subr.mxu0 0.0
    %2122 = vmatpush1.xpose.msra.mxu0 0.0
    %2123 = vmatprep.subr.mxu0 0.0
    %2124 = vmatpush1.xpose.msra.mxu0 0.0
    %2125 = vmatprep.subr.mxu0 0.0
    %2126 = vmatpush1.xpose.msra.mxu0 0.0
    %2127 = vmatprep.subr.mxu0 0.0
    %2128 = vmatpush1.xpose.msra.mxu0 0.0
    %2129 = vmatprep.subr.mxu0 0.0
    %2130 = vmatpush1.xpose.msra.mxu0 0.0
    %2131 = vmatprep.subr.mxu0 0.0
    %2132 = vmatpush1.xpose.msra.mxu0 0.0
    %2133 = vmatprep.subr.mxu0 0.0
    %2134 = vmatpush1.xpose.msra.mxu0 0.0
    %2135 = vmatprep.subr.mxu0 0.0
    %2136 = vmatpush1.xpose.msra.mxu0 0.0
    %2137 = vmatprep.subr.mxu0 0.0
    %2138 = vmatpush1.xpose.msra.mxu0 0.0
    %2139 = vmatprep.subr.mxu0 0.0
    %2140 = vmatpush1.xpose.msra.mxu0 0.0
    %2141 = vmatprep.subr.mxu0 0.0
    %2142 = vmatpush1.xpose.msra.mxu0 0.0
    %2143 = vmatprep.subr.mxu0 0.0
    %2144 = vmatpush1.xpose.msra.mxu0 0.0
    %2145 = vmatprep.subr.mxu0 0.0
    %2146 = vmatpush1.xpose.msra.mxu0 0.0
    %2147 = vmatprep.subr.mxu0 0.0
    %2148 = vmatpush1.xpose.msra.mxu0 0.0
    %2149 = vmatprep.subr.mxu0 0.0
    %2150 = vmatpush1.xpose.msra.mxu0 0.0
    %2151 = vmatprep.subr.mxu0 0.0
    %2152 = vmatpush1.xpose.msra.mxu0 0.0
    %2153 = vmatprep.subr.mxu0 0.0
    %2154 = vmatpush1.xpose.msra.mxu0 0.0
    %2155 = vmatprep.subr.mxu0 0.0
    %2156 = vmatpush1.xpose.msra.mxu0 0.0
    %2157 = vmatprep.subr.mxu0 0.0
    %2158 = vmatpush1.xpose.msra.mxu0 0.0
    %2159 = vmatprep.subr.mxu0 0.0
    %2160 = vmatpush1.xpose.msra.mxu0 0.0
    %2161 = vmatprep.subr.mxu0 0.0
    %2162 = vmatpush1.xpose.msra.mxu0 0.0
    %2163 = vmatprep.subr.mxu0 0.0
    %2164 = vmatpush1.xpose.msra.mxu0 0.0
    %2165 = vmatprep.subr.mxu0 0.0
    %2166 = vmatpush1.xpose.msra.mxu0 0.0
    %2167 = vmatprep.mubr.f32.mxu0 0.0
    %v2168 = vand.u32 %v1749, 4294901760
    %2169 = vmatmul.mubr.f32.gmra.mrb[0].mxu0 %v2168
    %v2170 = vpop.f32.mrb[0].mxu0
    %v2171 = vadd.f32 %v2086, %v2170
    %v2172 = vpop.f32.mrb[0].mxu0
    %2173 = vmatprep.mubr.f32.mxu0 0.0
    %v2174 = vand.u32 %v1751, 4294901760
    %2175 = vmatmul.mubr.f32.gmra.mrb[0].mxu0 %v2174
    %v2176 = vpop.f32.mrb[0].mxu0
    %v2177 = vadd.f32 %v2094, %v2176
    %v2178 = vpop.f32.mrb[0].mxu0
    %2179 = vdwg.mxu0
    %2180 = vmatprep.subr.mxu0 0.0
    %v2181 = vand.u32 %v1753, 4294901760
    %2182 = vmatpush1.xpose.msra.mxu0 %v2181
    %2183 = vmatprep.subr.mxu0 0.0
    %v2184 = vand.u32 %v1755, 4294901760
    %2185 = vmatpush1.xpose.msra.mxu0 %v2184
    %2186 = vmatprep.subr.mxu0 0.0
    %2187 = vmatpush1.xpose.msra.mxu0 0.0
    %2188 = vmatprep.subr.mxu0 0.0
    %2189 = vmatpush1.xpose.msra.mxu0 0.0
    %2190 = vmatprep.subr.mxu0 0.0
    %2191 = vmatpush1.xpose.msra.mxu0 0.0
    %2192 = vmatprep.subr.mxu0 0.0
    %2193 = vmatpush1.xpose.msra.mxu0 0.0
    %2194 = vmatprep.subr.mxu0 0.0
    %2195 = vmatpush1.xpose.msra.mxu0 0.0
    %2196 = vmatprep.subr.mxu0 0.0
    %2197 = vmatpush1.xpose.msra.mxu0 0.0
    %2198 = vmatprep.subr.mxu0 0.0
    %2199 = vmatpush1.xpose.msra.mxu0 0.0
    %2200 = vmatprep.subr.mxu0 0.0
    %2201 = vmatpush1.xpose.msra.mxu0 0.0
    %2202 = vmatprep.subr.mxu0 0.0
    %2203 = vmatpush1.xpose.msra.mxu0 0.0
    %2204 = vmatprep.subr.mxu0 0.0
    %2205 = vmatpush1.xpose.msra.mxu0 0.0
    %2206 = vmatprep.subr.mxu0 0.0
    %2207 = vmatpush1.xpose.msra.mxu0 0.0
    %2208 = vmatprep.subr.mxu0 0.0
    %2209 = vmatpush1.xpose.msra.mxu0 0.0
    %2210 = vmatprep.subr.mxu0 0.0
    %2211 = vmatpush1.xpose.msra.mxu0 0.0
    %2212 = vmatprep.subr.mxu0 0.0
    %2213 = vmatpush1.xpose.msra.mxu0 0.0
    %2214 = vmatprep.subr.mxu0 0.0
    %2215 = vmatpush1.xpose.msra.mxu0 0.0
    %2216 = vmatprep.subr.mxu0 0.0
    %2217 = vmatpush1.xpose.msra.mxu0 0.0
    %2218 = vmatprep.subr.mxu0 0.0
    %2219 = vmatpush1.xpose.msra.mxu0 0.0
    %2220 = vmatprep.subr.mxu0 0.0
    %2221 = vmatpush1.xpose.msra.mxu0 0.0
    %2222 = vmatprep.subr.mxu0 0.0
    %2223 = vmatpush1.xpose.msra.mxu0 0.0
    %2224 = vmatprep.subr.mxu0 0.0
    %2225 = vmatpush1.xpose.msra.mxu0 0.0
    %2226 = vmatprep.subr.mxu0 0.0
    %2227 = vmatpush1.xpose.msra.mxu0 0.0
    %2228 = vmatprep.subr.mxu0 0.0
    %2229 = vmatpush1.xpose.msra.mxu0 0.0
    %2230 = vmatprep.subr.mxu0 0.0
    %2231 = vmatpush1.xpose.msra.mxu0 0.0
    %2232 = vmatprep.subr.mxu0 0.0
    %2233 = vmatpush1.xpose.msra.mxu0 0.0
    %2234 = vmatprep.subr.mxu0 0.0
    %2235 = vmatpush1.xpose.msra.mxu0 0.0
    %2236 = vmatprep.subr.mxu0 0.0
    %2237 = vmatpush1.xpose.msra.mxu0 0.0
    %2238 = vmatprep.subr.mxu0 0.0
    %2239 = vmatpush1.xpose.msra.mxu0 0.0
    %2240 = vmatprep.subr.mxu0 0.0
    %2241 = vmatpush1.xpose.msra.mxu0 0.0
    %2242 = vmatprep.subr.mxu0 0.0
    %2243 = vmatpush1.xpose.msra.mxu0 0.0
    %2244 = vmatprep.subr.mxu0 0.0
    %2245 = vmatpush1.xpose.msra.mxu0 0.0
    %2246 = vmatprep.mubr.f32.mxu0 0.0
    %v2247 = vand.u32 %v1749, 4294901760
    %2248 = vmatmul.mubr.f32.gmra.mrb[0].mxu0 %v2247
    %v2249 = vpop.f32.mrb[0].mxu0
    %v2250 = vadd.f32 %v2171, %v2249
    %v2251 = vpop.f32.mrb[0].mxu0
    %2252 = vmatprep.mubr.f32.mxu0 0.0
    %v2253 = vand.u32 %v1751, 4294901760
    %2254 = vmatmul.mubr.f32.gmra.mrb[0].mxu0 %v2253
    %v2255 = vpop.f32.mrb[0].mxu0
    %v2256 = vadd.f32 %v2177, %v2255
    %v2257 = vpop.f32.mrb[0].mxu0
    %2258 = vdwg.mxu0
    %2259 = vrot.lane.b32.xlu0 %v697, 96
    %v2260 = vpop.permute.xlu0 %2259
    %2261 = vrot.lane.b32.xlu0 %v699, 96
    %v2262 = vpop.permute.xlu0 %2261
    %v2263 = vsel %vm720, %v697, 0
    %v2265 = vsel %vm720, %v699, 0
    %v2267 = vsel %vm720, %v2260, 0
    %v2269 = vsel %vm720, %v2262, 0
    %2271 = vmatprep.subr.mxu0 0.0
    %v2272 = vand.u32 %v2267, 4294901760
    %2273 = vmatpush1.xpose.msra.mxu0 %v2272
    %2274 = vmatprep.subr.mxu0 0.0
    %v2275 = vand.u32 %v2269, 4294901760
    %2276 = vmatpush1.xpose.msra.mxu0 %v2275
    %2277 = vmatprep.subr.mxu0 0.0
    %2278 = vmatpush1.xpose.msra.mxu0 0.0
    %2279 = vmatprep.subr.mxu0 0.0
    %2280 = vmatpush1.xpose.msra.mxu0 0.0
    %2281 = vmatprep.subr.mxu0 0.0
    %2282 = vmatpush1.xpose.msra.mxu0 0.0
    %2283 = vmatprep.subr.mxu0 0.0
    %2284 = vmatpush1.xpose.msra.mxu0 0.0
    %2285 = vmatprep.subr.mxu0 0.0
    %2286 = vmatpush1.xpose.msra.mxu0 0.0
    %2287 = vmatprep.subr.mxu0 0.0
    %2288 = vmatpush1.xpose.msra.mxu0 0.0
    %2289 = vmatprep.subr.mxu0 0.0
    %2290 = vmatpush1.xpose.msra.mxu0 0.0
    %2291 = vmatprep.subr.mxu0 0.0
    %2292 = vmatpush1.xpose.msra.mxu0 0.0
    %2293 = vmatprep.subr.mxu0 0.0
    %2294 = vmatpush1.xpose.msra.mxu0 0.0
    %2295 = vmatprep.subr.mxu0 0.0
    %2296 = vmatpush1.xpose.msra.mxu0 0.0
    %2297 = vmatprep.subr.mxu0 0.0
    %2298 = vmatpush1.xpose.msra.mxu0 0.0
    %2299 = vmatprep.subr.mxu0 0.0
    %2300 = vmatpush1.xpose.msra.mxu0 0.0
    %2301 = vmatprep.subr.mxu0 0.0
    %2302 = vmatpush1.xpose.msra.mxu0 0.0
    %2303 = vmatprep.subr.mxu0 0.0
    %2304 = vmatpush1.xpose.msra.mxu0 0.0
    %2305 = vmatprep.subr.mxu0 0.0
    %2306 = vmatpush1.xpose.msra.mxu0 0.0
    %2307 = vmatprep.subr.mxu0 0.0
    %2308 = vmatpush1.xpose.msra.mxu0 0.0
    %2309 = vmatprep.subr.mxu0 0.0
    %2310 = vmatpush1.xpose.msra.mxu0 0.0
    %2311 = vmatprep.subr.mxu0 0.0
    %2312 = vmatpush1.xpose.msra.mxu0 0.0
    %2313 = vmatprep.subr.mxu0 0.0
    %2314 = vmatpush1.xpose.msra.mxu0 0.0
    %2315 = vmatprep.subr.mxu0 0.0
    %2316 = vmatpush1.xpose.msra.mxu0 0.0
    %2317 = vmatprep.subr.mxu0 0.0
    %2318 = vmatpush1.xpose.msra.mxu0 0.0
    %2319 = vmatprep.subr.mxu0 0.0
    %2320 = vmatpush1.xpose.msra.mxu0 0.0
    %2321 = vmatprep.subr.mxu0 0.0
    %2322 = vmatpush1.xpose.msra.mxu0 0.0
    %2323 = vmatprep.subr.mxu0 0.0
    %2324 = vmatpush1.xpose.msra.mxu0 0.0
    %2325 = vmatprep.subr.mxu0 0.0
    %2326 = vmatpush1.xpose.msra.mxu0 0.0
    %2327 = vmatprep.subr.mxu0 0.0
    %2328 = vmatpush1.xpose.msra.mxu0 0.0
    %2329 = vmatprep.subr.mxu0 0.0
    %2330 = vmatpush1.xpose.msra.mxu0 0.0
    %2331 = vmatprep.subr.mxu0 0.0
    %2332 = vmatpush1.xpose.msra.mxu0 0.0
    %2333 = vmatprep.subr.mxu0 0.0
    %2334 = vmatpush1.xpose.msra.mxu0 0.0
    %2335 = vmatprep.subr.mxu0 0.0
    %2336 = vmatpush1.xpose.msra.mxu0 0.0
    %2337 = vmatprep.mubr.f32.mxu0 0.0
    %v2338 = vand.u32 %v2263, 4294901760
    %v2339 = vsub.f32 %v2263, %v2338
    %v2340 = vand.u32 %v2339, 4294901760
    %v2341 = vsub.f32 %v2339, %v2340
    %v2342 = vand.u32 %v2341, 4294901760
    %2343 = vmatmul.mubr.f32.gmra.mrb[0].mxu0 %v2342
    %v2344 = vpop.f32.mrb[0].mxu0
    %v2345 = vadd.f32 0.0, %v2344
    %v2346 = vpop.f32.mrb[0].mxu0
    %2347 = vmatprep.mubr.f32.mxu0 0.0
    %v2348 = vand.u32 %v2265, 4294901760
    %v2349 = vsub.f32 %v2265, %v2348
    %v2350 = vand.u32 %v2349, 4294901760
    %v2351 = vsub.f32 %v2349, %v2350
    %v2352 = vand.u32 %v2351, 4294901760
    %2353 = vmatmul.mubr.f32.gmra.mrb[0].mxu0 %v2352
    %v2354 = vpop.f32.mrb[0].mxu0
    %v2355 = vadd.f32 0.0, %v2354
    %v2356 = vpop.f32.mrb[0].mxu0
    %2357 = vdwg.mxu0
    %2358 = vmatprep.subr.mxu0 0.0
    %v2359 = vand.u32 %v2267, 4294901760
    %v2360 = vsub.f32 %v2267, %v2359
    %v2361 = vand.u32 %v2360, 4294901760
    %v2362 = vsub.f32 %v2360, %v2361
    %v2363 = vand.u32 %v2362, 4294901760
    %2364 = vmatpush1.xpose.msra.mxu0 %v2363
    %2365 = vmatprep.subr.mxu0 0.0
    %v2366 = vand.u32 %v2269, 4294901760
    %v2367 = vsub.f32 %v2269, %v2366
    %v2368 = vand.u32 %v2367, 4294901760
    %v2369 = vsub.f32 %v2367, %v2368
    %v2370 = vand.u32 %v2369, 4294901760
    %2371 = vmatpush1.xpose.msra.mxu0 %v2370
    %2372 = vmatprep.subr.mxu0 0.0
    %2373 = vmatpush1.xpose.msra.mxu0 0.0
    %2374 = vmatprep.subr.mxu0 0.0
    %2375 = vmatpush1.xpose.msra.mxu0 0.0
    %2376 = vmatprep.subr.mxu0 0.0
    %2377 = vmatpush1.xpose.msra.mxu0 0.0
    %2378 = vmatprep.subr.mxu0 0.0
    %2379 = vmatpush1.xpose.msra.mxu0 0.0
    %2380 = vmatprep.subr.mxu0 0.0
    %2381 = vmatpush1.xpose.msra.mxu0 0.0
    %2382 = vmatprep.subr.mxu0 0.0
    %2383 = vmatpush1.xpose.msra.mxu0 0.0
    %2384 = vmatprep.subr.mxu0 0.0
    %2385 = vmatpush1.xpose.msra.mxu0 0.0
    %2386 = vmatprep.subr.mxu0 0.0
    %2387 = vmatpush1.xpose.msra.mxu0 0.0
    %2388 = vmatprep.subr.mxu0 0.0
    %2389 = vmatpush1.xpose.msra.mxu0 0.0
    %2390 = vmatprep.subr.mxu0 0.0
    %2391 = vmatpush1.xpose.msra.mxu0 0.0
    %2392 = vmatprep.subr.mxu0 0.0
    %2393 = vmatpush1.xpose.msra.mxu0 0.0
    %2394 = vmatprep.subr.mxu0 0.0
    %2395 = vmatpush1.xpose.msra.mxu0 0.0
    %2396 = vmatprep.subr.mxu0 0.0
    %2397 = vmatpush1.xpose.msra.mxu0 0.0
    %2398 = vmatprep.subr.mxu0 0.0
    %2399 = vmatpush1.xpose.msra.mxu0 0.0
    %2400 = vmatprep.subr.mxu0 0.0
    %2401 = vmatpush1.xpose.msra.mxu0 0.0
    %2402 = vmatprep.subr.mxu0 0.0
    %2403 = vmatpush1.xpose.msra.mxu0 0.0
    %2404 = vmatprep.subr.mxu0 0.0
    %2405 = vmatpush1.xpose.msra.mxu0 0.0
    %2406 = vmatprep.subr.mxu0 0.0
    %2407 = vmatpush1.xpose.msra.mxu0 0.0
    %2408 = vmatprep.subr.mxu0 0.0
    %2409 = vmatpush1.xpose.msra.mxu0 0.0
    %2410 = vmatprep.subr.mxu0 0.0
    %2411 = vmatpush1.xpose.msra.mxu0 0.0
    %2412 = vmatprep.subr.mxu0 0.0
    %2413 = vmatpush1.xpose.msra.mxu0 0.0
    %2414 = vmatprep.subr.mxu0 0.0
    %2415 = vmatpush1.xpose.msra.mxu0 0.0
    %2416 = vmatprep.subr.mxu0 0.0
    %2417 = vmatpush1.xpose.msra.mxu0 0.0
    %2418 = vmatprep.subr.mxu0 0.0
    %2419 = vmatpush1.xpose.msra.mxu0 0.0
    %2420 = vmatprep.subr.mxu0 0.0
    %2421 = vmatpush1.xpose.msra.mxu0 0.0
    %2422 = vmatprep.subr.mxu0 0.0
    %2423 = vmatpush1.xpose.msra.mxu0 0.0
    %2424 = vmatprep.subr.mxu0 0.0
    %2425 = vmatpush1.xpose.msra.mxu0 0.0
    %2426 = vmatprep.subr.mxu0 0.0
    %2427 = vmatpush1.xpose.msra.mxu0 0.0
    %2428 = vmatprep.subr.mxu0 0.0
    %2429 = vmatpush1.xpose.msra.mxu0 0.0
    %2430 = vmatprep.subr.mxu0 0.0
    %2431 = vmatpush1.xpose.msra.mxu0 0.0
    %2432 = vmatprep.mubr.f32.mxu0 0.0
    %v2433 = vand.u32 %v2263, 4294901760
    %2434 = vmatmul.mubr.f32.gmra.mrb[0].mxu0 %v2433
    %v2435 = vpop.f32.mrb[0].mxu0
    %v2436 = vadd.f32 %v2345, %v2435
    %v2437 = vpop.f32.mrb[0].mxu0
    %2438 = vmatprep.mubr.f32.mxu0 0.0
    %v2439 = vand.u32 %v2265, 4294901760
    %2440 = vmatmul.mubr.f32.gmra.mrb[0].mxu0 %v2439
    %v2441 = vpop.f32.mrb[0].mxu0
    %v2442 = vadd.f32 %v2355, %v2441
    %v2443 = vpop.f32.mrb[0].mxu0
    %2444 = vdwg.mxu0
    %2445 = vmatprep.subr.mxu0 0.0
    %v2446 = vand.u32 %v2267, 4294901760
    %v2447 = vsub.f32 %v2267, %v2446
    %2448 = vmatpush1.xpose.msra.mxu0 %v2447
    %2449 = vmatprep.subr.mxu0 0.0
    %v2450 = vand.u32 %v2269, 4294901760
    %v2451 = vsub.f32 %v2269, %v2450
    %2452 = vmatpush1.xpose.msra.mxu0 %v2451
    %2453 = vmatprep.subr.mxu0 0.0
    %2454 = vmatpush1.xpose.msra.mxu0 0.0
    %2455 = vmatprep.subr.mxu0 0.0
    %2456 = vmatpush1.xpose.msra.mxu0 0.0
    %2457 = vmatprep.subr.mxu0 0.0
    %2458 = vmatpush1.xpose.msra.mxu0 0.0
    %2459 = vmatprep.subr.mxu0 0.0
    %2460 = vmatpush1.xpose.msra.mxu0 0.0
    %2461 = vmatprep.subr.mxu0 0.0
    %2462 = vmatpush1.xpose.msra.mxu0 0.0
    %2463 = vmatprep.subr.mxu0 0.0
    %2464 = vmatpush1.xpose.msra.mxu0 0.0
    %2465 = vmatprep.subr.mxu0 0.0
    %2466 = vmatpush1.xpose.msra.mxu0 0.0
    %2467 = vmatprep.subr.mxu0 0.0
    %2468 = vmatpush1.xpose.msra.mxu0 0.0
    %2469 = vmatprep.subr.mxu0 0.0
    %2470 = vmatpush1.xpose.msra.mxu0 0.0
    %2471 = vmatprep.subr.mxu0 0.0
    %2472 = vmatpush1.xpose.msra.mxu0 0.0
    %2473 = vmatprep.subr.mxu0 0.0
    %2474 = vmatpush1.xpose.msra.mxu0 0.0
    %2475 = vmatprep.subr.mxu0 0.0
    %2476 = vmatpush1.xpose.msra.mxu0 0.0
    %2477 = vmatprep.subr.mxu0 0.0
    %2478 = vmatpush1.xpose.msra.mxu0 0.0
    %2479 = vmatprep.subr.mxu0 0.0
    %2480 = vmatpush1.xpose.msra.mxu0 0.0
    %2481 = vmatprep.subr.mxu0 0.0
    %2482 = vmatpush1.xpose.msra.mxu0 0.0
    %2483 = vmatprep.subr.mxu0 0.0
    %2484 = vmatpush1.xpose.msra.mxu0 0.0
    %2485 = vmatprep.subr.mxu0 0.0
    %2486 = vmatpush1.xpose.msra.mxu0 0.0
    %2487 = vmatprep.subr.mxu0 0.0
    %2488 = vmatpush1.xpose.msra.mxu0 0.0
    %2489 = vmatprep.subr.mxu0 0.0
    %2490 = vmatpush1.xpose.msra.mxu0 0.0
    %2491 = vmatprep.subr.mxu0 0.0
    %2492 = vmatpush1.xpose.msra.mxu0 0.0
    %2493 = vmatprep.subr.mxu0 0.0
    %2494 = vmatpush1.xpose.msra.mxu0 0.0
    %2495 = vmatprep.subr.mxu0 0.0
    %2496 = vmatpush1.xpose.msra.mxu0 0.0
    %2497 = vmatprep.subr.mxu0 0.0
    %2498 = vmatpush1.xpose.msra.mxu0 0.0
    %2499 = vmatprep.subr.mxu0 0.0
    %2500 = vmatpush1.xpose.msra.mxu0 0.0
    %2501 = vmatprep.subr.mxu0 0.0
    %2502 = vmatpush1.xpose.msra.mxu0 0.0
    %2503 = vmatprep.subr.mxu0 0.0
    %2504 = vmatpush1.xpose.msra.mxu0 0.0
    %2505 = vmatprep.subr.mxu0 0.0
    %2506 = vmatpush1.xpose.msra.mxu0 0.0
    %2507 = vmatprep.subr.mxu0 0.0
    %2508 = vmatpush1.xpose.msra.mxu0 0.0
    %2509 = vmatprep.subr.mxu0 0.0
    %2510 = vmatpush1.xpose.msra.mxu0 0.0
    %2511 = vmatprep.subr.mxu0 0.0
    %2512 = vmatpush1.xpose.msra.mxu0 0.0
    %2513 = vmatprep.mubr.f32.mxu0 0.0
    %v2514 = vand.u32 %v2263, 4294901760
    %v2515 = vsub.f32 %v2263, %v2514
    %2516 = vmatmul.mubr.f32.gmra.mrb[0].mxu0 %v2515
    %v2517 = vpop.f32.mrb[0].mxu0
    %v2518 = vadd.f32 %v2436, %v2517
    %v2519 = vpop.f32.mrb[0].mxu0
    %2520 = vmatprep.mubr.f32.mxu0 0.0
    %v2521 = vand.u32 %v2265, 4294901760
    %v2522 = vsub.f32 %v2265, %v2521
    %2523 = vmatmul.mubr.f32.gmra.mrb[0].mxu0 %v2522
    %v2524 = vpop.f32.mrb[0].mxu0
    %v2525 = vadd.f32 %v2442, %v2524
    %v2526 = vpop.f32.mrb[0].mxu0
    %2527 = vdwg.mxu0
    %2528 = vmatprep.subr.mxu0 0.0
    %v2529 = vand.u32 %v2267, 4294901760
    %2530 = vmatpush1.xpose.msra.mxu0 %v2529
    %2531 = vmatprep.subr.mxu0 0.0
    %v2532 = vand.u32 %v2269, 4294901760
    %2533 = vmatpush1.xpose.msra.mxu0 %v2532
    %2534 = vmatprep.subr.mxu0 0.0
    %2535 = vmatpush1.xpose.msra.mxu0 0.0
    %2536 = vmatprep.subr.mxu0 0.0
    %2537 = vmatpush1.xpose.msra.mxu0 0.0
    %2538 = vmatprep.subr.mxu0 0.0
    %2539 = vmatpush1.xpose.msra.mxu0 0.0
    %2540 = vmatprep.subr.mxu0 0.0
    %2541 = vmatpush1.xpose.msra.mxu0 0.0
    %2542 = vmatprep.subr.mxu0 0.0
    %2543 = vmatpush1.xpose.msra.mxu0 0.0
    %2544 = vmatprep.subr.mxu0 0.0
    %2545 = vmatpush1.xpose.msra.mxu0 0.0
    %2546 = vmatprep.subr.mxu0 0.0
    %2547 = vmatpush1.xpose.msra.mxu0 0.0
    %2548 = vmatprep.subr.mxu0 0.0
    %2549 = vmatpush1.xpose.msra.mxu0 0.0
    %2550 = vmatprep.subr.mxu0 0.0
    %2551 = vmatpush1.xpose.msra.mxu0 0.0
    %2552 = vmatprep.subr.mxu0 0.0
    %2553 = vmatpush1.xpose.msra.mxu0 0.0
    %2554 = vmatprep.subr.mxu0 0.0
    %2555 = vmatpush1.xpose.msra.mxu0 0.0
    %2556 = vmatprep.subr.mxu0 0.0
    %2557 = vmatpush1.xpose.msra.mxu0 0.0
    %2558 = vmatprep.subr.mxu0 0.0
    %2559 = vmatpush1.xpose.msra.mxu0 0.0
    %2560 = vmatprep.subr.mxu0 0.0
    %2561 = vmatpush1.xpose.msra.mxu0 0.0
    %2562 = vmatprep.subr.mxu0 0.0
    %2563 = vmatpush1.xpose.msra.mxu0 0.0
    %2564 = vmatprep.subr.mxu0 0.0
    %2565 = vmatpush1.xpose.msra.mxu0 0.0
    %2566 = vmatprep.subr.mxu0 0.0
    %2567 = vmatpush1.xpose.msra.mxu0 0.0
    %2568 = vmatprep.subr.mxu0 0.0
    %2569 = vmatpush1.xpose.msra.mxu0 0.0
    %2570 = vmatprep.subr.mxu0 0.0
    %2571 = vmatpush1.xpose.msra.mxu0 0.0
    %2572 = vmatprep.subr.mxu0 0.0
    %2573 = vmatpush1.xpose.msra.mxu0 0.0
    %2574 = vmatprep.subr.mxu0 0.0
    %2575 = vmatpush1.xpose.msra.mxu0 0.0
    %2576 = vmatprep.subr.mxu0 0.0
    %2577 = vmatpush1.xpose.msra.mxu0 0.0
    %2578 = vmatprep.subr.mxu0 0.0
    %2579 = vmatpush1.xpose.msra.mxu0 0.0
    %2580 = vmatprep.subr.mxu0 0.0
    %2581 = vmatpush1.xpose.msra.mxu0 0.0
    %2582 = vmatprep.subr.mxu0 0.0
    %2583 = vmatpush1.xpose.msra.mxu0 0.0
    %2584 = vmatprep.subr.mxu0 0.0
    %2585 = vmatpush1.xpose.msra.mxu0 0.0
    %2586 = vmatprep.subr.mxu0 0.0
    %2587 = vmatpush1.xpose.msra.mxu0 0.0
    %2588 = vmatprep.subr.mxu0 0.0
    %2589 = vmatpush1.xpose.msra.mxu0 0.0
    %2590 = vmatprep.subr.mxu0 0.0
    %2591 = vmatpush1.xpose.msra.mxu0 0.0
    %2592 = vmatprep.subr.mxu0 0.0
    %2593 = vmatpush1.xpose.msra.mxu0 0.0
    %2594 = vmatprep.mubr.f32.mxu0 0.0
    %v2595 = vand.u32 %v2263, 4294901760
    %v2596 = vsub.f32 %v2263, %v2595
    %v2597 = vand.u32 %v2596, 4294901760
    %2598 = vmatmul.mubr.f32.gmra.mrb[0].mxu0 %v2597
    %v2599 = vpop.f32.mrb[0].mxu0
    %v2600 = vadd.f32 %v2518, %v2599
    %v2601 = vpop.f32.mrb[0].mxu0
    %2602 = vmatprep.mubr.f32.mxu0 0.0
    %v2603 = vand.u32 %v2265, 4294901760
    %v2604 = vsub.f32 %v2265, %v2603
    %v2605 = vand.u32 %v2604, 4294901760
    %2606 = vmatmul.mubr.f32.gmra.mrb[0].mxu0 %v2605
    %v2607 = vpop.f32.mrb[0].mxu0
    %v2608 = vadd.f32 %v2525, %v2607
    %v2609 = vpop.f32.mrb[0].mxu0
    %2610 = vdwg.mxu0
    %2611 = vmatprep.subr.mxu0 0.0
    %v2612 = vand.u32 %v2267, 4294901760
    %v2613 = vsub.f32 %v2267, %v2612
    %v2614 = vand.u32 %v2613, 4294901760
    %2615 = vmatpush1.xpose.msra.mxu0 %v2614
    %2616 = vmatprep.subr.mxu0 0.0
    %v2617 = vand.u32 %v2269, 4294901760
    %v2618 = vsub.f32 %v2269, %v2617
    %v2619 = vand.u32 %v2618, 4294901760
    %2620 = vmatpush1.xpose.msra.mxu0 %v2619
    %2621 = vmatprep.subr.mxu0 0.0
    %2622 = vmatpush1.xpose.msra.mxu0 0.0
    %2623 = vmatprep.subr.mxu0 0.0
    %2624 = vmatpush1.xpose.msra.mxu0 0.0
    %2625 = vmatprep.subr.mxu0 0.0
    %2626 = vmatpush1.xpose.msra.mxu0 0.0
    %2627 = vmatprep.subr.mxu0 0.0
    %2628 = vmatpush1.xpose.msra.mxu0 0.0
    %2629 = vmatprep.subr.mxu0 0.0
    %2630 = vmatpush1.xpose.msra.mxu0 0.0
    %2631 = vmatprep.subr.mxu0 0.0
    %2632 = vmatpush1.xpose.msra.mxu0 0.0
    %2633 = vmatprep.subr.mxu0 0.0
    %2634 = vmatpush1.xpose.msra.mxu0 0.0
    %2635 = vmatprep.subr.mxu0 0.0
    %2636 = vmatpush1.xpose.msra.mxu0 0.0
    %2637 = vmatprep.subr.mxu0 0.0
    %2638 = vmatpush1.xpose.msra.mxu0 0.0
    %2639 = vmatprep.subr.mxu0 0.0
    %2640 = vmatpush1.xpose.msra.mxu0 0.0
    %2641 = vmatprep.subr.mxu0 0.0
    %2642 = vmatpush1.xpose.msra.mxu0 0.0
    %2643 = vmatprep.subr.mxu0 0.0
    %2644 = vmatpush1.xpose.msra.mxu0 0.0
    %2645 = vmatprep.subr.mxu0 0.0
    %2646 = vmatpush1.xpose.msra.mxu0 0.0
    %2647 = vmatprep.subr.mxu0 0.0
    %2648 = vmatpush1.xpose.msra.mxu0 0.0
    %2649 = vmatprep.subr.mxu0 0.0
    %2650 = vmatpush1.xpose.msra.mxu0 0.0
    %2651 = vmatprep.subr.mxu0 0.0
    %2652 = vmatpush1.xpose.msra.mxu0 0.0
    %2653 = vmatprep.subr.mxu0 0.0
    %2654 = vmatpush1.xpose.msra.mxu0 0.0
    %2655 = vmatprep.subr.mxu0 0.0
    %2656 = vmatpush1.xpose.msra.mxu0 0.0
    %2657 = vmatprep.subr.mxu0 0.0
    %2658 = vmatpush1.xpose.msra.mxu0 0.0
    %2659 = vmatprep.subr.mxu0 0.0
    %2660 = vmatpush1.xpose.msra.mxu0 0.0
    %2661 = vmatprep.subr.mxu0 0.0
    %2662 = vmatpush1.xpose.msra.mxu0 0.0
    %2663 = vmatprep.subr.mxu0 0.0
    %2664 = vmatpush1.xpose.msra.mxu0 0.0
    %2665 = vmatprep.subr.mxu0 0.0
    %2666 = vmatpush1.xpose.msra.mxu0 0.0
    %2667 = vmatprep.subr.mxu0 0.0
    %2668 = vmatpush1.xpose.msra.mxu0 0.0
    %2669 = vmatprep.subr.mxu0 0.0
    %2670 = vmatpush1.xpose.msra.mxu0 0.0
    %2671 = vmatprep.subr.mxu0 0.0
    %2672 = vmatpush1.xpose.msra.mxu0 0.0
    %2673 = vmatprep.subr.mxu0 0.0
    %2674 = vmatpush1.xpose.msra.mxu0 0.0
    %2675 = vmatprep.subr.mxu0 0.0
    %2676 = vmatpush1.xpose.msra.mxu0 0.0
    %2677 = vmatprep.subr.mxu0 0.0
    %2678 = vmatpush1.xpose.msra.mxu0 0.0
    %2679 = vmatprep.subr.mxu0 0.0
    %2680 = vmatpush1.xpose.msra.mxu0 0.0
    %2681 = vmatprep.mubr.f32.mxu0 0.0
    %v2682 = vand.u32 %v2263, 4294901760
    %2683 = vmatmul.mubr.f32.gmra.mrb[0].mxu0 %v2682
    %v2684 = vpop.f32.mrb[0].mxu0
    %v2685 = vadd.f32 %v2600, %v2684
    %v2686 = vpop.f32.mrb[0].mxu0
    %2687 = vmatprep.mubr.f32.mxu0 0.0
    %v2688 = vand.u32 %v2265, 4294901760
    %2689 = vmatmul.mubr.f32.gmra.mrb[0].mxu0 %v2688
    %v2690 = vpop.f32.mrb[0].mxu0
    %v2691 = vadd.f32 %v2608, %v2690
    %v2692 = vpop.f32.mrb[0].mxu0
    %2693 = vdwg.mxu0
    %2694 = vmatprep.subr.mxu0 0.0
    %v2695 = vand.u32 %v2267, 4294901760
    %2696 = vmatpush1.xpose.msra.mxu0 %v2695
    %2697 = vmatprep.subr.mxu0 0.0
    %v2698 = vand.u32 %v2269, 4294901760
    %2699 = vmatpush1.xpose.msra.mxu0 %v2698
    %2700 = vmatprep.subr.mxu0 0.0
    %2701 = vmatpush1.xpose.msra.mxu0 0.0
    %2702 = vmatprep.subr.mxu0 0.0
    %2703 = vmatpush1.xpose.msra.mxu0 0.0
    %2704 = vmatprep.subr.mxu0 0.0
    %2705 = vmatpush1.xpose.msra.mxu0 0.0
    %2706 = vmatprep.subr.mxu0 0.0
    %2707 = vmatpush1.xpose.msra.mxu0 0.0
    %2708 = vmatprep.subr.mxu0 0.0
    %2709 = vmatpush1.xpose.msra.mxu0 0.0
    %2710 = vmatprep.subr.mxu0 0.0
    %2711 = vmatpush1.xpose.msra.mxu0 0.0
    %2712 = vmatprep.subr.mxu0 0.0
    %2713 = vmatpush1.xpose.msra.mxu0 0.0
    %2714 = vmatprep.subr.mxu0 0.0
    %2715 = vmatpush1.xpose.msra.mxu0 0.0
    %2716 = vmatprep.subr.mxu0 0.0
    %2717 = vmatpush1.xpose.msra.mxu0 0.0
    %2718 = vmatprep.subr.mxu0 0.0
    %2719 = vmatpush1.xpose.msra.mxu0 0.0
    %2720 = vmatprep.subr.mxu0 0.0
    %2721 = vmatpush1.xpose.msra.mxu0 0.0
    %2722 = vmatprep.subr.mxu0 0.0
    %2723 = vmatpush1.xpose.msra.mxu0 0.0
    %2724 = vmatprep.subr.mxu0 0.0
    %2725 = vmatpush1.xpose.msra.mxu0 0.0
    %2726 = vmatprep.subr.mxu0 0.0
    %2727 = vmatpush1.xpose.msra.mxu0 0.0
    %2728 = vmatprep.subr.mxu0 0.0
    %2729 = vmatpush1.xpose.msra.mxu0 0.0
    %2730 = vmatprep.subr.mxu0 0.0
    %2731 = vmatpush1.xpose.msra.mxu0 0.0
    %2732 = vmatprep.subr.mxu0 0.0
    %2733 = vmatpush1.xpose.msra.mxu0 0.0
    %2734 = vmatprep.subr.mxu0 0.0
    %2735 = vmatpush1.xpose.msra.mxu0 0.0
    %2736 = vmatprep.subr.mxu0 0.0
    %2737 = vmatpush1.xpose.msra.mxu0 0.0
    %2738 = vmatprep.subr.mxu0 0.0
    %2739 = vmatpush1.xpose.msra.mxu0 0.0
    %2740 = vmatprep.subr.mxu0 0.0
    %2741 = vmatpush1.xpose.msra.mxu0 0.0
    %2742 = vmatprep.subr.mxu0 0.0
    %2743 = vmatpush1.xpose.msra.mxu0 0.0
    %2744 = vmatprep.subr.mxu0 0.0
    %2745 = vmatpush1.xpose.msra.mxu0 0.0
    %2746 = vmatprep.subr.mxu0 0.0
    %2747 = vmatpush1.xpose.msra.mxu0 0.0
    %2748 = vmatprep.subr.mxu0 0.0
    %2749 = vmatpush1.xpose.msra.mxu0 0.0
    %2750 = vmatprep.subr.mxu0 0.0
    %2751 = vmatpush1.xpose.msra.mxu0 0.0
    %2752 = vmatprep.subr.mxu0 0.0
    %2753 = vmatpush1.xpose.msra.mxu0 0.0
    %2754 = vmatprep.subr.mxu0 0.0
    %2755 = vmatpush1.xpose.msra.mxu0 0.0
    %2756 = vmatprep.subr.mxu0 0.0
    %2757 = vmatpush1.xpose.msra.mxu0 0.0
    %2758 = vmatprep.subr.mxu0 0.0
    %2759 = vmatpush1.xpose.msra.mxu0 0.0
    %2760 = vmatprep.mubr.f32.mxu0 0.0
    %v2761 = vand.u32 %v2263, 4294901760
    %2762 = vmatmul.mubr.f32.gmra.mrb[0].mxu0 %v2761
    %v2763 = vpop.f32.mrb[0].mxu0
    %v2764 = vadd.f32 %v2685, %v2763
    %v2765 = vpop.f32.mrb[0].mxu0
    %2766 = vmatprep.mubr.f32.mxu0 0.0
    %v2767 = vand.u32 %v2265, 4294901760
    %2768 = vmatmul.mubr.f32.gmra.mrb[0].mxu0 %v2767
    %v2769 = vpop.f32.mrb[0].mxu0
    %v2770 = vadd.f32 %v2691, %v2769
    %v2771 = vpop.f32.mrb[0].mxu0
    %2772 = vdwg.mxu0
    %2773 = vrot.lane.b32.xlu0 %v701, 96
    %v2774 = vpop.permute.xlu0 %2773
    %2775 = vrot.lane.b32.xlu0 %v703, 96
    %v2776 = vpop.permute.xlu0 %2775
    %v2777 = vsel %vm720, %v701, 0
    %v2779 = vsel %vm720, %v703, 0
    %v2781 = vsel %vm720, %v2774, 0
    %v2783 = vsel %vm720, %v2776, 0
    %2785 = vmatprep.subr.mxu0 0.0
    %v2786 = vand.u32 %v2781, 4294901760
    %2787 = vmatpush1.xpose.msra.mxu0 %v2786
    %2788 = vmatprep.subr.mxu0 0.0
    %v2789 = vand.u32 %v2783, 4294901760
    %2790 = vmatpush1.xpose.msra.mxu0 %v2789
    %2791 = vmatprep.subr.mxu0 0.0
    %2792 = vmatpush1.xpose.msra.mxu0 0.0
    %2793 = vmatprep.subr.mxu0 0.0
    %2794 = vmatpush1.xpose.msra.mxu0 0.0
    %2795 = vmatprep.subr.mxu0 0.0
    %2796 = vmatpush1.xpose.msra.mxu0 0.0
    %2797 = vmatprep.subr.mxu0 0.0
    %2798 = vmatpush1.xpose.msra.mxu0 0.0
    %2799 = vmatprep.subr.mxu0 0.0
    %2800 = vmatpush1.xpose.msra.mxu0 0.0
    %2801 = vmatprep.subr.mxu0 0.0
    %2802 = vmatpush1.xpose.msra.mxu0 0.0
    %2803 = vmatprep.subr.mxu0 0.0
    %2804 = vmatpush1.xpose.msra.mxu0 0.0
    %2805 = vmatprep.subr.mxu0 0.0
    %2806 = vmatpush1.xpose.msra.mxu0 0.0
    %2807 = vmatprep.subr.mxu0 0.0
    %2808 = vmatpush1.xpose.msra.mxu0 0.0
    %2809 = vmatprep.subr.mxu0 0.0
    %2810 = vmatpush1.xpose.msra.mxu0 0.0
    %2811 = vmatprep.subr.mxu0 0.0
    %2812 = vmatpush1.xpose.msra.mxu0 0.0
    %2813 = vmatprep.subr.mxu0 0.0
    %2814 = vmatpush1.xpose.msra.mxu0 0.0
    %2815 = vmatprep.subr.mxu0 0.0
    %2816 = vmatpush1.xpose.msra.mxu0 0.0
    %2817 = vmatprep.subr.mxu0 0.0
    %2818 = vmatpush1.xpose.msra.mxu0 0.0
    %2819 = vmatprep.subr.mxu0 0.0
    %2820 = vmatpush1.xpose.msra.mxu0 0.0
    %2821 = vmatprep.subr.mxu0 0.0
    %2822 = vmatpush1.xpose.msra.mxu0 0.0
    %2823 = vmatprep.subr.mxu0 0.0
    %2824 = vmatpush1.xpose.msra.mxu0 0.0
    %2825 = vmatprep.subr.mxu0 0.0
    %2826 = vmatpush1.xpose.msra.mxu0 0.0
    %2827 = vmatprep.subr.mxu0 0.0
    %2828 = vmatpush1.xpose.msra.mxu0 0.0
    %2829 = vmatprep.subr.mxu0 0.0
    %2830 = vmatpush1.xpose.msra.mxu0 0.0
    %2831 = vmatprep.subr.mxu0 0.0
    %2832 = vmatpush1.xpose.msra.mxu0 0.0
    %2833 = vmatprep.subr.mxu0 0.0
    %2834 = vmatpush1.xpose.msra.mxu0 0.0
    %2835 = vmatprep.subr.mxu0 0.0
    %2836 = vmatpush1.xpose.msra.mxu0 0.0
    %2837 = vmatprep.subr.mxu0 0.0
    %2838 = vmatpush1.xpose.msra.mxu0 0.0
    %2839 = vmatprep.subr.mxu0 0.0
    %2840 = vmatpush1.xpose.msra.mxu0 0.0
    %2841 = vmatprep.subr.mxu0 0.0
    %2842 = vmatpush1.xpose.msra.mxu0 0.0
    %2843 = vmatprep.subr.mxu0 0.0
    %2844 = vmatpush1.xpose.msra.mxu0 0.0
    %2845 = vmatprep.subr.mxu0 0.0
    %2846 = vmatpush1.xpose.msra.mxu0 0.0
    %2847 = vmatprep.subr.mxu0 0.0
    %2848 = vmatpush1.xpose.msra.mxu0 0.0
    %2849 = vmatprep.subr.mxu0 0.0
    %2850 = vmatpush1.xpose.msra.mxu0 0.0
    %2851 = vmatprep.mubr.f32.mxu0 0.0
    %v2852 = vand.u32 %v2777, 4294901760
    %v2853 = vsub.f32 %v2777, %v2852
    %v2854 = vand.u32 %v2853, 4294901760
    %v2855 = vsub.f32 %v2853, %v2854
    %v2856 = vand.u32 %v2855, 4294901760
    %2857 = vmatmul.mubr.f32.gmra.mrb[0].mxu0 %v2856
    %v2858 = vpop.f32.mrb[0].mxu0
    %v2859 = vadd.f32 0.0, %v2858
    %v2860 = vpop.f32.mrb[0].mxu0
    %2861 = vmatprep.mubr.f32.mxu0 0.0
    %v2862 = vand.u32 %v2779, 4294901760
    %v2863 = vsub.f32 %v2779, %v2862
    %v2864 = vand.u32 %v2863, 4294901760
    %v2865 = vsub.f32 %v2863, %v2864
    %v2866 = vand.u32 %v2865, 4294901760
    %2867 = vmatmul.mubr.f32.gmra.mrb[0].mxu0 %v2866
    %v2868 = vpop.f32.mrb[0].mxu0
    %v2869 = vadd.f32 0.0, %v2868
    %v2870 = vpop.f32.mrb[0].mxu0
    %2871 = vdwg.mxu0
    %2872 = vmatprep.subr.mxu0 0.0
    %v2873 = vand.u32 %v2781, 4294901760
    %v2874 = vsub.f32 %v2781, %v2873
    %v2875 = vand.u32 %v2874, 4294901760
    %v2876 = vsub.f32 %v2874, %v2875
    %v2877 = vand.u32 %v2876, 4294901760
    %2878 = vmatpush1.xpose.msra.mxu0 %v2877
    %2879 = vmatprep.subr.mxu0 0.0
    %v2880 = vand.u32 %v2783, 4294901760
    %v2881 = vsub.f32 %v2783, %v2880
    %v2882 = vand.u32 %v2881, 4294901760
    %v2883 = vsub.f32 %v2881, %v2882
    %v2884 = vand.u32 %v2883, 4294901760
    %2885 = vmatpush1.xpose.msra.mxu0 %v2884
    %2886 = vmatprep.subr.mxu0 0.0
    %2887 = vmatpush1.xpose.msra.mxu0 0.0
    %2888 = vmatprep.subr.mxu0 0.0
    %2889 = vmatpush1.xpose.msra.mxu0 0.0
    %2890 = vmatprep.subr.mxu0 0.0
    %2891 = vmatpush1.xpose.msra.mxu0 0.0
    %2892 = vmatprep.subr.mxu0 0.0
    %2893 = vmatpush1.xpose.msra.mxu0 0.0
    %2894 = vmatprep.subr.mxu0 0.0
    %2895 = vmatpush1.xpose.msra.mxu0 0.0
    %2896 = vmatprep.subr.mxu0 0.0
    %2897 = vmatpush1.xpose.msra.mxu0 0.0
    %2898 = vmatprep.subr.mxu0 0.0
    %2899 = vmatpush1.xpose.msra.mxu0 0.0
    %2900 = vmatprep.subr.mxu0 0.0
    %2901 = vmatpush1.xpose.msra.mxu0 0.0
    %2902 = vmatprep.subr.mxu0 0.0
    %2903 = vmatpush1.xpose.msra.mxu0 0.0
    %2904 = vmatprep.subr.mxu0 0.0
    %2905 = vmatpush1.xpose.msra.mxu0 0.0
    %2906 = vmatprep.subr.mxu0 0.0
    %2907 = vmatpush1.xpose.msra.mxu0 0.0
    %2908 = vmatprep.subr.mxu0 0.0
    %2909 = vmatpush1.xpose.msra.mxu0 0.0
    %2910 = vmatprep.subr.mxu0 0.0
    %2911 = vmatpush1.xpose.msra.mxu0 0.0
    %2912 = vmatprep.subr.mxu0 0.0
    %2913 = vmatpush1.xpose.msra.mxu0 0.0
    %2914 = vmatprep.subr.mxu0 0.0
    %2915 = vmatpush1.xpose.msra.mxu0 0.0
    %2916 = vmatprep.subr.mxu0 0.0
    %2917 = vmatpush1.xpose.msra.mxu0 0.0
    %2918 = vmatprep.subr.mxu0 0.0
    %2919 = vmatpush1.xpose.msra.mxu0 0.0
    %2920 = vmatprep.subr.mxu0 0.0
    %2921 = vmatpush1.xpose.msra.mxu0 0.0
    %2922 = vmatprep.subr.mxu0 0.0
    %2923 = vmatpush1.xpose.msra.mxu0 0.0
    %2924 = vmatprep.subr.mxu0 0.0
    %2925 = vmatpush1.xpose.msra.mxu0 0.0
    %2926 = vmatprep.subr.mxu0 0.0
    %2927 = vmatpush1.xpose.msra.mxu0 0.0
    %2928 = vmatprep.subr.mxu0 0.0
    %2929 = vmatpush1.xpose.msra.mxu0 0.0
    %2930 = vmatprep.subr.mxu0 0.0
    %2931 = vmatpush1.xpose.msra.mxu0 0.0
    %2932 = vmatprep.subr.mxu0 0.0
    %2933 = vmatpush1.xpose.msra.mxu0 0.0
    %2934 = vmatprep.subr.mxu0 0.0
    %2935 = vmatpush1.xpose.msra.mxu0 0.0
    %2936 = vmatprep.subr.mxu0 0.0
    %2937 = vmatpush1.xpose.msra.mxu0 0.0
    %2938 = vmatprep.subr.mxu0 0.0
    %2939 = vmatpush1.xpose.msra.mxu0 0.0
    %2940 = vmatprep.subr.mxu0 0.0
    %2941 = vmatpush1.xpose.msra.mxu0 0.0
    %2942 = vmatprep.subr.mxu0 0.0
    %2943 = vmatpush1.xpose.msra.mxu0 0.0
    %2944 = vmatprep.subr.mxu0 0.0
    %2945 = vmatpush1.xpose.msra.mxu0 0.0
    %2946 = vmatprep.mubr.f32.mxu0 0.0
    %v2947 = vand.u32 %v2777, 4294901760
    %2948 = vmatmul.mubr.f32.gmra.mrb[0].mxu0 %v2947
    %v2949 = vpop.f32.mrb[0].mxu0
    %v2950 = vadd.f32 %v2859, %v2949
    %v2951 = vpop.f32.mrb[0].mxu0
    %2952 = vmatprep.mubr.f32.mxu0 0.0
    %v2953 = vand.u32 %v2779, 4294901760
    %2954 = vmatmul.mubr.f32.gmra.mrb[0].mxu0 %v2953
    %v2955 = vpop.f32.mrb[0].mxu0
    %v2956 = vadd.f32 %v2869, %v2955
    %v2957 = vpop.f32.mrb[0].mxu0
    %2958 = vdwg.mxu0
    %2959 = vmatprep.subr.mxu0 0.0
    %v2960 = vand.u32 %v2781, 4294901760
    %v2961 = vsub.f32 %v2781, %v2960
    %2962 = vmatpush1.xpose.msra.mxu0 %v2961
    %2963 = vmatprep.subr.mxu0 0.0
    %v2964 = vand.u32 %v2783, 4294901760
    %v2965 = vsub.f32 %v2783, %v2964
    %2966 = vmatpush1.xpose.msra.mxu0 %v2965
    %2967 = vmatprep.subr.mxu0 0.0
    %2968 = vmatpush1.xpose.msra.mxu0 0.0
    %2969 = vmatprep.subr.mxu0 0.0
    %2970 = vmatpush1.xpose.msra.mxu0 0.0
    %2971 = vmatprep.subr.mxu0 0.0
    %2972 = vmatpush1.xpose.msra.mxu0 0.0
    %2973 = vmatprep.subr.mxu0 0.0
    %2974 = vmatpush1.xpose.msra.mxu0 0.0
    %2975 = vmatprep.subr.mxu0 0.0
    %2976 = vmatpush1.xpose.msra.mxu0 0.0
    %2977 = vmatprep.subr.mxu0 0.0
    %2978 = vmatpush1.xpose.msra.mxu0 0.0
    %2979 = vmatprep.subr.mxu0 0.0
    %2980 = vmatpush1.xpose.msra.mxu0 0.0
    %2981 = vmatprep.subr.mxu0 0.0
    %2982 = vmatpush1.xpose.msra.mxu0 0.0
    %2983 = vmatprep.subr.mxu0 0.0
    %2984 = vmatpush1.xpose.msra.mxu0 0.0
    %2985 = vmatprep.subr.mxu0 0.0
    %2986 = vmatpush1.xpose.msra.mxu0 0.0
    %2987 = vmatprep.subr.mxu0 0.0
    %2988 = vmatpush1.xpose.msra.mxu0 0.0
    %2989 = vmatprep.subr.mxu0 0.0
    %2990 = vmatpush1.xpose.msra.mxu0 0.0
    %2991 = vmatprep.subr.mxu0 0.0
    %2992 = vmatpush1.xpose.msra.mxu0 0.0
    %2993 = vmatprep.subr.mxu0 0.0
    %2994 = vmatpush1.xpose.msra.mxu0 0.0
    %2995 = vmatprep.subr.mxu0 0.0
    %2996 = vmatpush1.xpose.msra.mxu0 0.0
    %2997 = vmatprep.subr.mxu0 0.0
    %2998 = vmatpush1.xpose.msra.mxu0 0.0
    %2999 = vmatprep.subr.mxu0 0.0
    %3000 = vmatpush1.xpose.msra.mxu0 0.0
    %3001 = vmatprep.subr.mxu0 0.0
    %3002 = vmatpush1.xpose.msra.mxu0 0.0
    %3003 = vmatprep.subr.mxu0 0.0
    %3004 = vmatpush1.xpose.msra.mxu0 0.0
    %3005 = vmatprep.subr.mxu0 0.0
    %3006 = vmatpush1.xpose.msra.mxu0 0.0
    %3007 = vmatprep.subr.mxu0 0.0
    %3008 = vmatpush1.xpose.msra.mxu0 0.0
    %3009 = vmatprep.subr.mxu0 0.0
    %3010 = vmatpush1.xpose.msra.mxu0 0.0
    %3011 = vmatprep.subr.mxu0 0.0
    %3012 = vmatpush1.xpose.msra.mxu0 0.0
    %3013 = vmatprep.subr.mxu0 0.0
    %3014 = vmatpush1.xpose.msra.mxu0 0.0
    %3015 = vmatprep.subr.mxu0 0.0
    %3016 = vmatpush1.xpose.msra.mxu0 0.0
    %3017 = vmatprep.subr.mxu0 0.0
    %3018 = vmatpush1.xpose.msra.mxu0 0.0
    %3019 = vmatprep.subr.mxu0 0.0
    %3020 = vmatpush1.xpose.msra.mxu0 0.0
    %3021 = vmatprep.subr.mxu0 0.0
    %3022 = vmatpush1.xpose.msra.mxu0 0.0
    %3023 = vmatprep.subr.mxu0 0.0
    %3024 = vmatpush1.xpose.msra.mxu0 0.0
    %3025 = vmatprep.subr.mxu0 0.0
    %3026 = vmatpush1.xpose.msra.mxu0 0.0
    %3027 = vmatprep.mubr.f32.mxu0 0.0
    %v3028 = vand.u32 %v2777, 4294901760
    %v3029 = vsub.f32 %v2777, %v3028
    %3030 = vmatmul.mubr.f32.gmra.mrb[0].mxu0 %v3029
    %v3031 = vpop.f32.mrb[0].mxu0
    %v3032 = vadd.f32 %v2950, %v3031
    %v3033 = vpop.f32.mrb[0].mxu0
    %3034 = vmatprep.mubr.f32.mxu0 0.0
    %v3035 = vand.u32 %v2779, 4294901760
    %v3036 = vsub.f32 %v2779, %v3035
    %3037 = vmatmul.mubr.f32.gmra.mrb[0].mxu0 %v3036
    %v3038 = vpop.f32.mrb[0].mxu0
    %v3039 = vadd.f32 %v2956, %v3038
    %v3040 = vpop.f32.mrb[0].mxu0
    %3041 = vdwg.mxu0
    %3042 = vmatprep.subr.mxu0 0.0
    %v3043 = vand.u32 %v2781, 4294901760
    %3044 = vmatpush1.xpose.msra.mxu0 %v3043
    %3045 = vmatprep.subr.mxu0 0.0
    %v3046 = vand.u32 %v2783, 4294901760
    %3047 = vmatpush1.xpose.msra.mxu0 %v3046
    %3048 = vmatprep.subr.mxu0 0.0
    %3049 = vmatpush1.xpose.msra.mxu0 0.0
    %3050 = vmatprep.subr.mxu0 0.0
    %3051 = vmatpush1.xpose.msra.mxu0 0.0
    %3052 = vmatprep.subr.mxu0 0.0
    %3053 = vmatpush1.xpose.msra.mxu0 0.0
    %3054 = vmatprep.subr.mxu0 0.0
    %3055 = vmatpush1.xpose.msra.mxu0 0.0
    %3056 = vmatprep.subr.mxu0 0.0
    %3057 = vmatpush1.xpose.msra.mxu0 0.0
    %3058 = vmatprep.subr.mxu0 0.0
    %3059 = vmatpush1.xpose.msra.mxu0 0.0
    %3060 = vmatprep.subr.mxu0 0.0
    %3061 = vmatpush1.xpose.msra.mxu0 0.0
    %3062 = vmatprep.subr.mxu0 0.0
    %3063 = vmatpush1.xpose.msra.mxu0 0.0
    %3064 = vmatprep.subr.mxu0 0.0
    %3065 = vmatpush1.xpose.msra.mxu0 0.0
    %3066 = vmatprep.subr.mxu0 0.0
    %3067 = vmatpush1.xpose.msra.mxu0 0.0
    %3068 = vmatprep.subr.mxu0 0.0
    %3069 = vmatpush1.xpose.msra.mxu0 0.0
    %3070 = vmatprep.subr.mxu0 0.0
    %3071 = vmatpush1.xpose.msra.mxu0 0.0
    %3072 = vmatprep.subr.mxu0 0.0
    %3073 = vmatpush1.xpose.msra.mxu0 0.0
    %3074 = vmatprep.subr.mxu0 0.0
    %3075 = vmatpush1.xpose.msra.mxu0 0.0
    %3076 = vmatprep.subr.mxu0 0.0
    %3077 = vmatpush1.xpose.msra.mxu0 0.0
    %3078 = vmatprep.subr.mxu0 0.0
    %3079 = vmatpush1.xpose.msra.mxu0 0.0
    %3080 = vmatprep.subr.mxu0 0.0
    %3081 = vmatpush1.xpose.msra.mxu0 0.0
    %3082 = vmatprep.subr.mxu0 0.0
    %3083 = vmatpush1.xpose.msra.mxu0 0.0
    %3084 = vmatprep.subr.mxu0 0.0
    %3085 = vmatpush1.xpose.msra.mxu0 0.0
    %3086 = vmatprep.subr.mxu0 0.0
    %3087 = vmatpush1.xpose.msra.mxu0 0.0
    %3088 = vmatprep.subr.mxu0 0.0
    %3089 = vmatpush1.xpose.msra.mxu0 0.0
    %3090 = vmatprep.subr.mxu0 0.0
    %3091 = vmatpush1.xpose.msra.mxu0 0.0
    %3092 = vmatprep.subr.mxu0 0.0
    %3093 = vmatpush1.xpose.msra.mxu0 0.0
    %3094 = vmatprep.subr.mxu0 0.0
    %3095 = vmatpush1.xpose.msra.mxu0 0.0
    %3096 = vmatprep.subr.mxu0 0.0
    %3097 = vmatpush1.xpose.msra.mxu0 0.0
    %3098 = vmatprep.subr.mxu0 0.0
    %3099 = vmatpush1.xpose.msra.mxu0 0.0
    %3100 = vmatprep.subr.mxu0 0.0
    %3101 = vmatpush1.xpose.msra.mxu0 0.0
    %3102 = vmatprep.subr.mxu0 0.0
    %3103 = vmatpush1.xpose.msra.mxu0 0.0
    %3104 = vmatprep.subr.mxu0 0.0
    %3105 = vmatpush1.xpose.msra.mxu0 0.0
    %3106 = vmatprep.subr.mxu0 0.0
    %3107 = vmatpush1.xpose.msra.mxu0 0.0
    %3108 = vmatprep.mubr.f32.mxu0 0.0
    %v3109 = vand.u32 %v2777, 4294901760
    %v3110 = vsub.f32 %v2777, %v3109
    %v3111 = vand.u32 %v3110, 4294901760
    %3112 = vmatmul.mubr.f32.gmra.mrb[0].mxu0 %v3111
    %v3113 = vpop.f32.mrb[0].mxu0
    %v3114 = vadd.f32 %v3032, %v3113
    %v3115 = vpop.f32.mrb[0].mxu0
    %3116 = vmatprep.mubr.f32.mxu0 0.0
    %v3117 = vand.u32 %v2779, 4294901760
    %v3118 = vsub.f32 %v2779, %v3117
    %v3119 = vand.u32 %v3118, 4294901760
    %3120 = vmatmul.mubr.f32.gmra.mrb[0].mxu0 %v3119
    %v3121 = vpop.f32.mrb[0].mxu0
    %v3122 = vadd.f32 %v3039, %v3121
    %v3123 = vpop.f32.mrb[0].mxu0
    %3124 = vdwg.mxu0
    %3125 = vmatprep.subr.mxu0 0.0
    %v3126 = vand.u32 %v2781, 4294901760
    %v3127 = vsub.f32 %v2781, %v3126
    %v3128 = vand.u32 %v3127, 4294901760
    %3129 = vmatpush1.xpose.msra.mxu0 %v3128
    %3130 = vmatprep.subr.mxu0 0.0
    %v3131 = vand.u32 %v2783, 4294901760
    %v3132 = vsub.f32 %v2783, %v3131
    %v3133 = vand.u32 %v3132, 4294901760
    %3134 = vmatpush1.xpose.msra.mxu0 %v3133
    %3135 = vmatprep.subr.mxu0 0.0
    %3136 = vmatpush1.xpose.msra.mxu0 0.0
    %3137 = vmatprep.subr.mxu0 0.0
    %3138 = vmatpush1.xpose.msra.mxu0 0.0
    %3139 = vmatprep.subr.mxu0 0.0
    %3140 = vmatpush1.xpose.msra.mxu0 0.0
    %3141 = vmatprep.subr.mxu0 0.0
    %3142 = vmatpush1.xpose.msra.mxu0 0.0
    %3143 = vmatprep.subr.mxu0 0.0
    %3144 = vmatpush1.xpose.msra.mxu0 0.0
    %3145 = vmatprep.subr.mxu0 0.0
    %3146 = vmatpush1.xpose.msra.mxu0 0.0
    %3147 = vmatprep.subr.mxu0 0.0
    %3148 = vmatpush1.xpose.msra.mxu0 0.0
    %3149 = vmatprep.subr.mxu0 0.0
    %3150 = vmatpush1.xpose.msra.mxu0 0.0
    %3151 = vmatprep.subr.mxu0 0.0
    %3152 = vmatpush1.xpose.msra.mxu0 0.0
    %3153 = vmatprep.subr.mxu0 0.0
    %3154 = vmatpush1.xpose.msra.mxu0 0.0
    %3155 = vmatprep.subr.mxu0 0.0
    %3156 = vmatpush1.xpose.msra.mxu0 0.0
    %3157 = vmatprep.subr.mxu0 0.0
    %3158 = vmatpush1.xpose.msra.mxu0 0.0
    %3159 = vmatprep.subr.mxu0 0.0
    %3160 = vmatpush1.xpose.msra.mxu0 0.0
    %3161 = vmatprep.subr.mxu0 0.0
    %3162 = vmatpush1.xpose.msra.mxu0 0.0
    %3163 = vmatprep.subr.mxu0 0.0
    %3164 = vmatpush1.xpose.msra.mxu0 0.0
    %3165 = vmatprep.subr.mxu0 0.0
    %3166 = vmatpush1.xpose.msra.mxu0 0.0
    %3167 = vmatprep.subr.mxu0 0.0
    %3168 = vmatpush1.xpose.msra.mxu0 0.0
    %3169 = vmatprep.subr.mxu0 0.0
    %3170 = vmatpush1.xpose.msra.mxu0 0.0
    %3171 = vmatprep.subr.mxu0 0.0
    %3172 = vmatpush1.xpose.msra.mxu0 0.0
    %3173 = vmatprep.subr.mxu0 0.0
    %3174 = vmatpush1.xpose.msra.mxu0 0.0
    %3175 = vmatprep.subr.mxu0 0.0
    %3176 = vmatpush1.xpose.msra.mxu0 0.0
    %3177 = vmatprep.subr.mxu0 0.0
    %3178 = vmatpush1.xpose.msra.mxu0 0.0
    %3179 = vmatprep.subr.mxu0 0.0
    %3180 = vmatpush1.xpose.msra.mxu0 0.0
    %3181 = vmatprep.subr.mxu0 0.0
    %3182 = vmatpush1.xpose.msra.mxu0 0.0
    %3183 = vmatprep.subr.mxu0 0.0
    %3184 = vmatpush1.xpose.msra.mxu0 0.0
    %3185 = vmatprep.subr.mxu0 0.0
    %3186 = vmatpush1.xpose.msra.mxu0 0.0
    %3187 = vmatprep.subr.mxu0 0.0
    %3188 = vmatpush1.xpose.msra.mxu0 0.0
    %3189 = vmatprep.subr.mxu0 0.0
    %3190 = vmatpush1.xpose.msra.mxu0 0.0
    %3191 = vmatprep.subr.mxu0 0.0
    %3192 = vmatpush1.xpose.msra.mxu0 0.0
    %3193 = vmatprep.subr.mxu0 0.0
    %3194 = vmatpush1.xpose.msra.mxu0 0.0
    %3195 = vmatprep.mubr.f32.mxu0 0.0
    %v3196 = vand.u32 %v2777, 4294901760
    %3197 = vmatmul.mubr.f32.gmra.mrb[0].mxu0 %v3196
    %v3198 = vpop.f32.mrb[0].mxu0
    %v3199 = vadd.f32 %v3114, %v3198
    %v3200 = vpop.f32.mrb[0].mxu0
    %3201 = vmatprep.mubr.f32.mxu0 0.0
    %v3202 = vand.u32 %v2779, 4294901760
    %3203 = vmatmul.mubr.f32.gmra.mrb[0].mxu0 %v3202
    %v3204 = vpop.f32.mrb[0].mxu0
    %v3205 = vadd.f32 %v3122, %v3204
    %v3206 = vpop.f32.mrb[0].mxu0
    %3207 = vdwg.mxu0
    %3208 = vmatprep.subr.mxu0 0.0
    %v3209 = vand.u32 %v2781, 4294901760
    %3210 = vmatpush1.xpose.msra.mxu0 %v3209
    %3211 = vmatprep.subr.mxu0 0.0
    %v3212 = vand.u32 %v2783, 4294901760
    %3213 = vmatpush1.xpose.msra.mxu0 %v3212
    %3214 = vmatprep.subr.mxu0 0.0
    %3215 = vmatpush1.xpose.msra.mxu0 0.0
    %3216 = vmatprep.subr.mxu0 0.0
    %3217 = vmatpush1.xpose.msra.mxu0 0.0
    %3218 = vmatprep.subr.mxu0 0.0
    %3219 = vmatpush1.xpose.msra.mxu0 0.0
    %3220 = vmatprep.subr.mxu0 0.0
    %3221 = vmatpush1.xpose.msra.mxu0 0.0
    %3222 = vmatprep.subr.mxu0 0.0
    %3223 = vmatpush1.xpose.msra.mxu0 0.0
    %3224 = vmatprep.subr.mxu0 0.0
    %3225 = vmatpush1.xpose.msra.mxu0 0.0
    %3226 = vmatprep.subr.mxu0 0.0
    %3227 = vmatpush1.xpose.msra.mxu0 0.0
    %3228 = vmatprep.subr.mxu0 0.0
    %3229 = vmatpush1.xpose.msra.mxu0 0.0
    %3230 = vmatprep.subr.mxu0 0.0
    %3231 = vmatpush1.xpose.msra.mxu0 0.0
    %3232 = vmatprep.subr.mxu0 0.0
    %3233 = vmatpush1.xpose.msra.mxu0 0.0
    %3234 = vmatprep.subr.mxu0 0.0
    %3235 = vmatpush1.xpose.msra.mxu0 0.0
    %3236 = vmatprep.subr.mxu0 0.0
    %3237 = vmatpush1.xpose.msra.mxu0 0.0
    %3238 = vmatprep.subr.mxu0 0.0
    %3239 = vmatpush1.xpose.msra.mxu0 0.0
    %3240 = vmatprep.subr.mxu0 0.0
    %3241 = vmatpush1.xpose.msra.mxu0 0.0
    %3242 = vmatprep.subr.mxu0 0.0
    %3243 = vmatpush1.xpose.msra.mxu0 0.0
    %3244 = vmatprep.subr.mxu0 0.0
    %3245 = vmatpush1.xpose.msra.mxu0 0.0
    %3246 = vmatprep.subr.mxu0 0.0
    %3247 = vmatpush1.xpose.msra.mxu0 0.0
    %3248 = vmatprep.subr.mxu0 0.0
    %3249 = vmatpush1.xpose.msra.mxu0 0.0
    %3250 = vmatprep.subr.mxu0 0.0
    %3251 = vmatpush1.xpose.msra.mxu0 0.0
    %3252 = vmatprep.subr.mxu0 0.0
    %3253 = vmatpush1.xpose.msra.mxu0 0.0
    %3254 = vmatprep.subr.mxu0 0.0
    %3255 = vmatpush1.xpose.msra.mxu0 0.0
    %3256 = vmatprep.subr.mxu0 0.0
    %3257 = vmatpush1.xpose.msra.mxu0 0.0
    %3258 = vmatprep.subr.mxu0 0.0
    %3259 = vmatpush1.xpose.msra.mxu0 0.0
    %3260 = vmatprep.subr.mxu0 0.0
    %3261 = vmatpush1.xpose.msra.mxu0 0.0
    %3262 = vmatprep.subr.mxu0 0.0
    %3263 = vmatpush1.xpose.msra.mxu0 0.0
    %3264 = vmatprep.subr.mxu0 0.0
    %3265 = vmatpush1.xpose.msra.mxu0 0.0
    %3266 = vmatprep.subr.mxu0 0.0
    %3267 = vmatpush1.xpose.msra.mxu0 0.0
    %3268 = vmatprep.subr.mxu0 0.0
    %3269 = vmatpush1.xpose.msra.mxu0 0.0
    %3270 = vmatprep.subr.mxu0 0.0
    %3271 = vmatpush1.xpose.msra.mxu0 0.0
    %3272 = vmatprep.subr.mxu0 0.0
    %3273 = vmatpush1.xpose.msra.mxu0 0.0
    %3274 = vmatprep.mubr.f32.mxu0 0.0
    %v3275 = vand.u32 %v2777, 4294901760
    %3276 = vmatmul.mubr.f32.gmra.mrb[0].mxu0 %v3275
    %v3277 = vpop.f32.mrb[0].mxu0
    %v3278 = vadd.f32 %v3199, %v3277
    %v3279 = vpop.f32.mrb[0].mxu0
    %3280 = vmatprep.mubr.f32.mxu0 0.0
    %v3281 = vand.u32 %v2779, 4294901760
    %3282 = vmatmul.mubr.f32.gmra.mrb[0].mxu0 %v3281
    %v3283 = vpop.f32.mrb[0].mxu0
    %v3284 = vadd.f32 %v3205, %v3283
    %v3285 = vpop.f32.mrb[0].mxu0
    %3286 = vdwg.mxu0
    %3287 = vrot.lane.b32.xlu0 %v705, 96
    %v3288 = vpop.permute.xlu0 %3287
    %3289 = vrot.lane.b32.xlu0 %v707, 96
    %v3290 = vpop.permute.xlu0 %3289
    %v3291 = vsel %vm720, %v705, 0
    %v3293 = vsel %vm720, %v707, 0
    %v3295 = vsel %vm720, %v3288, 0
    %v3297 = vsel %vm720, %v3290, 0
    %3299 = vmatprep.subr.mxu0 0.0
    %v3300 = vand.u32 %v3295, 4294901760
    %3301 = vmatpush1.xpose.msra.mxu0 %v3300
    %3302 = vmatprep.subr.mxu0 0.0
    %v3303 = vand.u32 %v3297, 4294901760
    %3304 = vmatpush1.xpose.msra.mxu0 %v3303
    %3305 = vmatprep.subr.mxu0 0.0
    %3306 = vmatpush1.xpose.msra.mxu0 0.0
    %3307 = vmatprep.subr.mxu0 0.0
    %3308 = vmatpush1.xpose.msra.mxu0 0.0
    %3309 = vmatprep.subr.mxu0 0.0
    %3310 = vmatpush1.xpose.msra.mxu0 0.0
    %3311 = vmatprep.subr.mxu0 0.0
    %3312 = vmatpush1.xpose.msra.mxu0 0.0
    %3313 = vmatprep.subr.mxu0 0.0
    %3314 = vmatpush1.xpose.msra.mxu0 0.0
    %3315 = vmatprep.subr.mxu0 0.0
    %3316 = vmatpush1.xpose.msra.mxu0 0.0
    %3317 = vmatprep.subr.mxu0 0.0
    %3318 = vmatpush1.xpose.msra.mxu0 0.0
    %3319 = vmatprep.subr.mxu0 0.0
    %3320 = vmatpush1.xpose.msra.mxu0 0.0
    %3321 = vmatprep.subr.mxu0 0.0
    %3322 = vmatpush1.xpose.msra.mxu0 0.0
    %3323 = vmatprep.subr.mxu0 0.0
    %3324 = vmatpush1.xpose.msra.mxu0 0.0
    %3325 = vmatprep.subr.mxu0 0.0
    %3326 = vmatpush1.xpose.msra.mxu0 0.0
    %3327 = vmatprep.subr.mxu0 0.0
    %3328 = vmatpush1.xpose.msra.mxu0 0.0
    %3329 = vmatprep.subr.mxu0 0.0
    %3330 = vmatpush1.xpose.msra.mxu0 0.0
    %3331 = vmatprep.subr.mxu0 0.0
    %3332 = vmatpush1.xpose.msra.mxu0 0.0
    %3333 = vmatprep.subr.mxu0 0.0
    %3334 = vmatpush1.xpose.msra.mxu0 0.0
    %3335 = vmatprep.subr.mxu0 0.0
    %3336 = vmatpush1.xpose.msra.mxu0 0.0
    %3337 = vmatprep.subr.mxu0 0.0
    %3338 = vmatpush1.xpose.msra.mxu0 0.0
    %3339 = vmatprep.subr.mxu0 0.0
    %3340 = vmatpush1.xpose.msra.mxu0 0.0
    %3341 = vmatprep.subr.mxu0 0.0
    %3342 = vmatpush1.xpose.msra.mxu0 0.0
    %3343 = vmatprep.subr.mxu0 0.0
    %3344 = vmatpush1.xpose.msra.mxu0 0.0
    %3345 = vmatprep.subr.mxu0 0.0
    %3346 = vmatpush1.xpose.msra.mxu0 0.0
    %3347 = vmatprep.subr.mxu0 0.0
    %3348 = vmatpush1.xpose.msra.mxu0 0.0
    %3349 = vmatprep.subr.mxu0 0.0
    %3350 = vmatpush1.xpose.msra.mxu0 0.0
    %3351 = vmatprep.subr.mxu0 0.0
    %3352 = vmatpush1.xpose.msra.mxu0 0.0
    %3353 = vmatprep.subr.mxu0 0.0
    %3354 = vmatpush1.xpose.msra.mxu0 0.0
    %3355 = vmatprep.subr.mxu0 0.0
    %3356 = vmatpush1.xpose.msra.mxu0 0.0
    %3357 = vmatprep.subr.mxu0 0.0
    %3358 = vmatpush1.xpose.msra.mxu0 0.0
    %3359 = vmatprep.subr.mxu0 0.0
    %3360 = vmatpush1.xpose.msra.mxu0 0.0
    %3361 = vmatprep.subr.mxu0 0.0
    %3362 = vmatpush1.xpose.msra.mxu0 0.0
    %3363 = vmatprep.subr.mxu0 0.0
    %3364 = vmatpush1.xpose.msra.mxu0 0.0
    %3365 = vmatprep.mubr.f32.mxu0 0.0
    %v3366 = vand.u32 %v3291, 4294901760
    %v3367 = vsub.f32 %v3291, %v3366
    %v3368 = vand.u32 %v3367, 4294901760
    %v3369 = vsub.f32 %v3367, %v3368
    %v3370 = vand.u32 %v3369, 4294901760
    %3371 = vmatmul.mubr.f32.gmra.mrb[0].mxu0 %v3370
    %v3372 = vpop.f32.mrb[0].mxu0
    %v3373 = vadd.f32 0.0, %v3372
    %v3374 = vpop.f32.mrb[0].mxu0
    %3375 = vmatprep.mubr.f32.mxu0 0.0
    %v3376 = vand.u32 %v3293, 4294901760
    %v3377 = vsub.f32 %v3293, %v3376
    %v3378 = vand.u32 %v3377, 4294901760
    %v3379 = vsub.f32 %v3377, %v3378
    %v3380 = vand.u32 %v3379, 4294901760
    %3381 = vmatmul.mubr.f32.gmra.mrb[0].mxu0 %v3380
    %v3382 = vpop.f32.mrb[0].mxu0
    %v3383 = vadd.f32 0.0, %v3382
    %v3384 = vpop.f32.mrb[0].mxu0
    %3385 = vdwg.mxu0
    %3386 = vmatprep.subr.mxu0 0.0
    %v3387 = vand.u32 %v3295, 4294901760
    %v3388 = vsub.f32 %v3295, %v3387
    %v3389 = vand.u32 %v3388, 4294901760
    %v3390 = vsub.f32 %v3388, %v3389
    %v3391 = vand.u32 %v3390, 4294901760
    %3392 = vmatpush1.xpose.msra.mxu0 %v3391
    %3393 = vmatprep.subr.mxu0 0.0
    %v3394 = vand.u32 %v3297, 4294901760
    %v3395 = vsub.f32 %v3297, %v3394
    %v3396 = vand.u32 %v3395, 4294901760
    %v3397 = vsub.f32 %v3395, %v3396
    %v3398 = vand.u32 %v3397, 4294901760
    %3399 = vmatpush1.xpose.msra.mxu0 %v3398
    %3400 = vmatprep.subr.mxu0 0.0
    %3401 = vmatpush1.xpose.msra.mxu0 0.0
    %3402 = vmatprep.subr.mxu0 0.0
    %3403 = vmatpush1.xpose.msra.mxu0 0.0
    %3404 = vmatprep.subr.mxu0 0.0
    %3405 = vmatpush1.xpose.msra.mxu0 0.0
    %3406 = vmatprep.subr.mxu0 0.0
    %3407 = vmatpush1.xpose.msra.mxu0 0.0
    %3408 = vmatprep.subr.mxu0 0.0
    %3409 = vmatpush1.xpose.msra.mxu0 0.0
    %3410 = vmatprep.subr.mxu0 0.0
    %3411 = vmatpush1.xpose.msra.mxu0 0.0
    %3412 = vmatprep.subr.mxu0 0.0
    %3413 = vmatpush1.xpose.msra.mxu0 0.0
    %3414 = vmatprep.subr.mxu0 0.0
    %3415 = vmatpush1.xpose.msra.mxu0 0.0
    %3416 = vmatprep.subr.mxu0 0.0
    %3417 = vmatpush1.xpose.msra.mxu0 0.0
    %3418 = vmatprep.subr.mxu0 0.0
    %3419 = vmatpush1.xpose.msra.mxu0 0.0
    %3420 = vmatprep.subr.mxu0 0.0
    %3421 = vmatpush1.xpose.msra.mxu0 0.0
    %3422 = vmatprep.subr.mxu0 0.0
    %3423 = vmatpush1.xpose.msra.mxu0 0.0
    %3424 = vmatprep.subr.mxu0 0.0
    %3425 = vmatpush1.xpose.msra.mxu0 0.0
    %3426 = vmatprep.subr.mxu0 0.0
    %3427 = vmatpush1.xpose.msra.mxu0 0.0
    %3428 = vmatprep.subr.mxu0 0.0
    %3429 = vmatpush1.xpose.msra.mxu0 0.0
    %3430 = vmatprep.subr.mxu0 0.0
    %3431 = vmatpush1.xpose.msra.mxu0 0.0
    %3432 = vmatprep.subr.mxu0 0.0
    %3433 = vmatpush1.xpose.msra.mxu0 0.0
    %3434 = vmatprep.subr.mxu0 0.0
    %3435 = vmatpush1.xpose.msra.mxu0 0.0
    %3436 = vmatprep.subr.mxu0 0.0
    %3437 = vmatpush1.xpose.msra.mxu0 0.0
    %3438 = vmatprep.subr.mxu0 0.0
    %3439 = vmatpush1.xpose.msra.mxu0 0.0
    %3440 = vmatprep.subr.mxu0 0.0
    %3441 = vmatpush1.xpose.msra.mxu0 0.0
    %3442 = vmatprep.subr.mxu0 0.0
    %3443 = vmatpush1.xpose.msra.mxu0 0.0
    %3444 = vmatprep.subr.mxu0 0.0
    %3445 = vmatpush1.xpose.msra.mxu0 0.0
    %3446 = vmatprep.subr.mxu0 0.0
    %3447 = vmatpush1.xpose.msra.mxu0 0.0
    %3448 = vmatprep.subr.mxu0 0.0
    %3449 = vmatpush1.xpose.msra.mxu0 0.0
    %3450 = vmatprep.subr.mxu0 0.0
    %3451 = vmatpush1.xpose.msra.mxu0 0.0
    %3452 = vmatprep.subr.mxu0 0.0
    %3453 = vmatpush1.xpose.msra.mxu0 0.0
    %3454 = vmatprep.subr.mxu0 0.0
    %3455 = vmatpush1.xpose.msra.mxu0 0.0
    %3456 = vmatprep.subr.mxu0 0.0
    %3457 = vmatpush1.xpose.msra.mxu0 0.0
    %3458 = vmatprep.subr.mxu0 0.0
    %3459 = vmatpush1.xpose.msra.mxu0 0.0
    %3460 = vmatprep.mubr.f32.mxu0 0.0
    %v3461 = vand.u32 %v3291, 4294901760
    %3462 = vmatmul.mubr.f32.gmra.mrb[0].mxu0 %v3461
    %v3463 = vpop.f32.mrb[0].mxu0
    %v3464 = vadd.f32 %v3373, %v3463
    %v3465 = vpop.f32.mrb[0].mxu0
    %3466 = vmatprep.mubr.f32.mxu0 0.0
    %v3467 = vand.u32 %v3293, 4294901760
    %3468 = vmatmul.mubr.f32.gmra.mrb[0].mxu0 %v3467
    %v3469 = vpop.f32.mrb[0].mxu0
    %v3470 = vadd.f32 %v3383, %v3469
    %v3471 = vpop.f32.mrb[0].mxu0
    %3472 = vdwg.mxu0
    %3473 = vmatprep.subr.mxu0 0.0
    %v3474 = vand.u32 %v3295, 4294901760
    %v3475 = vsub.f32 %v3295, %v3474
    %3476 = vmatpush1.xpose.msra.mxu0 %v3475
    %3477 = vmatprep.subr.mxu0 0.0
    %v3478 = vand.u32 %v3297, 4294901760
    %v3479 = vsub.f32 %v3297, %v3478
    %3480 = vmatpush1.xpose.msra.mxu0 %v3479
    %3481 = vmatprep.subr.mxu0 0.0
    %3482 = vmatpush1.xpose.msra.mxu0 0.0
    %3483 = vmatprep.subr.mxu0 0.0
    %3484 = vmatpush1.xpose.msra.mxu0 0.0
    %3485 = vmatprep.subr.mxu0 0.0
    %3486 = vmatpush1.xpose.msra.mxu0 0.0
    %3487 = vmatprep.subr.mxu0 0.0
    %3488 = vmatpush1.xpose.msra.mxu0 0.0
    %3489 = vmatprep.subr.mxu0 0.0
    %3490 = vmatpush1.xpose.msra.mxu0 0.0
    %3491 = vmatprep.subr.mxu0 0.0
    %3492 = vmatpush1.xpose.msra.mxu0 0.0
    %3493 = vmatprep.subr.mxu0 0.0
    %3494 = vmatpush1.xpose.msra.mxu0 0.0
    %3495 = vmatprep.subr.mxu0 0.0
    %3496 = vmatpush1.xpose.msra.mxu0 0.0
    %3497 = vmatprep.subr.mxu0 0.0
    %3498 = vmatpush1.xpose.msra.mxu0 0.0
    %3499 = vmatprep.subr.mxu0 0.0
    %3500 = vmatpush1.xpose.msra.mxu0 0.0
    %3501 = vmatprep.subr.mxu0 0.0
    %3502 = vmatpush1.xpose.msra.mxu0 0.0
    %3503 = vmatprep.subr.mxu0 0.0
    %3504 = vmatpush1.xpose.msra.mxu0 0.0
    %3505 = vmatprep.subr.mxu0 0.0
    %3506 = vmatpush1.xpose.msra.mxu0 0.0
    %3507 = vmatprep.subr.mxu0 0.0
    %3508 = vmatpush1.xpose.msra.mxu0 0.0
    %3509 = vmatprep.subr.mxu0 0.0
    %3510 = vmatpush1.xpose.msra.mxu0 0.0
    %3511 = vmatprep.subr.mxu0 0.0
    %3512 = vmatpush1.xpose.msra.mxu0 0.0
    %3513 = vmatprep.subr.mxu0 0.0
    %3514 = vmatpush1.xpose.msra.mxu0 0.0
    %3515 = vmatprep.subr.mxu0 0.0
    %3516 = vmatpush1.xpose.msra.mxu0 0.0
    %3517 = vmatprep.subr.mxu0 0.0
    %3518 = vmatpush1.xpose.msra.mxu0 0.0
    %3519 = vmatprep.subr.mxu0 0.0
    %3520 = vmatpush1.xpose.msra.mxu0 0.0
    %3521 = vmatprep.subr.mxu0 0.0
    %3522 = vmatpush1.xpose.msra.mxu0 0.0
    %3523 = vmatprep.subr.mxu0 0.0
    %3524 = vmatpush1.xpose.msra.mxu0 0.0
    %3525 = vmatprep.subr.mxu0 0.0
    %3526 = vmatpush1.xpose.msra.mxu0 0.0
    %3527 = vmatprep.subr.mxu0 0.0
    %3528 = vmatpush1.xpose.msra.mxu0 0.0
    %3529 = vmatprep.subr.mxu0 0.0
    %3530 = vmatpush1.xpose.msra.mxu0 0.0
    %3531 = vmatprep.subr.mxu0 0.0
    %3532 = vmatpush1.xpose.msra.mxu0 0.0
    %3533 = vmatprep.subr.mxu0 0.0
    %3534 = vmatpush1.xpose.msra.mxu0 0.0
    %3535 = vmatprep.subr.mxu0 0.0
    %3536 = vmatpush1.xpose.msra.mxu0 0.0
    %3537 = vmatprep.subr.mxu0 0.0
    %3538 = vmatpush1.xpose.msra.mxu0 0.0
    %3539 = vmatprep.subr.mxu0 0.0
    %3540 = vmatpush1.xpose.msra.mxu0 0.0
    %3541 = vmatprep.mubr.f32.mxu0 0.0
    %v3542 = vand.u32 %v3291, 4294901760
    %v3543 = vsub.f32 %v3291, %v3542
    %3544 = vmatmul.mubr.f32.gmra.mrb[0].mxu0 %v3543
    %v3545 = vpop.f32.mrb[0].mxu0
    %v3546 = vadd.f32 %v3464, %v3545
    %v3547 = vpop.f32.mrb[0].mxu0
    %3548 = vmatprep.mubr.f32.mxu0 0.0
    %v3549 = vand.u32 %v3293, 4294901760
    %v3550 = vsub.f32 %v3293, %v3549
    %3551 = vmatmul.mubr.f32.gmra.mrb[0].mxu0 %v3550
    %v3552 = vpop.f32.mrb[0].mxu0
    %v3553 = vadd.f32 %v3470, %v3552
    %v3554 = vpop.f32.mrb[0].mxu0
    %3555 = vdwg.mxu0
    %3556 = vmatprep.subr.mxu0 0.0
    %v3557 = vand.u32 %v3295, 4294901760
    %3558 = vmatpush1.xpose.msra.mxu0 %v3557
    %3559 = vmatprep.subr.mxu0 0.0
    %v3560 = vand.u32 %v3297, 4294901760
    %3561 = vmatpush1.xpose.msra.mxu0 %v3560
    %3562 = vmatprep.subr.mxu0 0.0
    %3563 = vmatpush1.xpose.msra.mxu0 0.0
    %3564 = vmatprep.subr.mxu0 0.0
    %3565 = vmatpush1.xpose.msra.mxu0 0.0
    %3566 = vmatprep.subr.mxu0 0.0
    %3567 = vmatpush1.xpose.msra.mxu0 0.0
    %3568 = vmatprep.subr.mxu0 0.0
    %3569 = vmatpush1.xpose.msra.mxu0 0.0
    %3570 = vmatprep.subr.mxu0 0.0
    %3571 = vmatpush1.xpose.msra.mxu0 0.0
    %3572 = vmatprep.subr.mxu0 0.0
    %3573 = vmatpush1.xpose.msra.mxu0 0.0
    %3574 = vmatprep.subr.mxu0 0.0
    %3575 = vmatpush1.xpose.msra.mxu0 0.0
    %3576 = vmatprep.subr.mxu0 0.0
    %3577 = vmatpush1.xpose.msra.mxu0 0.0
    %3578 = vmatprep.subr.mxu0 0.0
    %3579 = vmatpush1.xpose.msra.mxu0 0.0
    %3580 = vmatprep.subr.mxu0 0.0
    %3581 = vmatpush1.xpose.msra.mxu0 0.0
    %3582 = vmatprep.subr.mxu0 0.0
    %3583 = vmatpush1.xpose.msra.mxu0 0.0
    %3584 = vmatprep.subr.mxu0 0.0
    %3585 = vmatpush1.xpose.msra.mxu0 0.0
    %3586 = vmatprep.subr.mxu0 0.0
    %3587 = vmatpush1.xpose.msra.mxu0 0.0
    %3588 = vmatprep.subr.mxu0 0.0
    %3589 = vmatpush1.xpose.msra.mxu0 0.0
    %3590 = vmatprep.subr.mxu0 0.0
    %3591 = vmatpush1.xpose.msra.mxu0 0.0
    %3592 = vmatprep.subr.mxu0 0.0
    %3593 = vmatpush1.xpose.msra.mxu0 0.0
    %3594 = vmatprep.subr.mxu0 0.0
    %3595 = vmatpush1.xpose.msra.mxu0 0.0
    %3596 = vmatprep.subr.mxu0 0.0
    %3597 = vmatpush1.xpose.msra.mxu0 0.0
    %3598 = vmatprep.subr.mxu0 0.0
    %3599 = vmatpush1.xpose.msra.mxu0 0.0
    %3600 = vmatprep.subr.mxu0 0.0
    %3601 = vmatpush1.xpose.msra.mxu0 0.0
    %3602 = vmatprep.subr.mxu0 0.0
    %3603 = vmatpush1.xpose.msra.mxu0 0.0
    %3604 = vmatprep.subr.mxu0 0.0
    %3605 = vmatpush1.xpose.msra.mxu0 0.0
    %3606 = vmatprep.subr.mxu0 0.0
    %3607 = vmatpush1.xpose.msra.mxu0 0.0
    %3608 = vmatprep.subr.mxu0 0.0
    %3609 = vmatpush1.xpose.msra.mxu0 0.0
    %3610 = vmatprep.subr.mxu0 0.0
    %3611 = vmatpush1.xpose.msra.mxu0 0.0
    %3612 = vmatprep.subr.mxu0 0.0
    %3613 = vmatpush1.xpose.msra.mxu0 0.0
    %3614 = vmatprep.subr.mxu0 0.0
    %3615 = vmatpush1.xpose.msra.mxu0 0.0
    %3616 = vmatprep.subr.mxu0 0.0
    %3617 = vmatpush1.xpose.msra.mxu0 0.0
    %3618 = vmatprep.subr.mxu0 0.0
    %3619 = vmatpush1.xpose.msra.mxu0 0.0
    %3620 = vmatprep.subr.mxu0 0.0
    %3621 = vmatpush1.xpose.msra.mxu0 0.0
    %3622 = vmatprep.mubr.f32.mxu0 0.0
    %v3623 = vand.u32 %v3291, 4294901760
    %v3624 = vsub.f32 %v3291, %v3623
    %v3625 = vand.u32 %v3624, 4294901760
    %3626 = vmatmul.mubr.f32.gmra.mrb[0].mxu0 %v3625
    %v3627 = vpop.f32.mrb[0].mxu0
    %v3628 = vadd.f32 %v3546, %v3627
    %v3629 = vpop.f32.mrb[0].mxu0
    %3630 = vmatprep.mubr.f32.mxu0 0.0
    %v3631 = vand.u32 %v3293, 4294901760
    %v3632 = vsub.f32 %v3293, %v3631
    %v3633 = vand.u32 %v3632, 4294901760
    %3634 = vmatmul.mubr.f32.gmra.mrb[0].mxu0 %v3633
    %v3635 = vpop.f32.mrb[0].mxu0
    %v3636 = vadd.f32 %v3553, %v3635
    %v3637 = vpop.f32.mrb[0].mxu0
    %3638 = vdwg.mxu0
    %3639 = vmatprep.subr.mxu0 0.0
    %v3640 = vand.u32 %v3295, 4294901760
    %v3641 = vsub.f32 %v3295, %v3640
    %v3642 = vand.u32 %v3641, 4294901760
    %3643 = vmatpush1.xpose.msra.mxu0 %v3642
    %3644 = vmatprep.subr.mxu0 0.0
    %v3645 = vand.u32 %v3297, 4294901760
    %v3646 = vsub.f32 %v3297, %v3645
    %v3647 = vand.u32 %v3646, 4294901760
    %3648 = vmatpush1.xpose.msra.mxu0 %v3647
    %3649 = vmatprep.subr.mxu0 0.0
    %3650 = vmatpush1.xpose.msra.mxu0 0.0
    %3651 = vmatprep.subr.mxu0 0.0
    %3652 = vmatpush1.xpose.msra.mxu0 0.0
    %3653 = vmatprep.subr.mxu0 0.0
    %3654 = vmatpush1.xpose.msra.mxu0 0.0
    %3655 = vmatprep.subr.mxu0 0.0
    %3656 = vmatpush1.xpose.msra.mxu0 0.0
    %3657 = vmatprep.subr.mxu0 0.0
    %3658 = vmatpush1.xpose.msra.mxu0 0.0
    %3659 = vmatprep.subr.mxu0 0.0
    %3660 = vmatpush1.xpose.msra.mxu0 0.0
    %3661 = vmatprep.subr.mxu0 0.0
    %3662 = vmatpush1.xpose.msra.mxu0 0.0
    %3663 = vmatprep.subr.mxu0 0.0
    %3664 = vmatpush1.xpose.msra.mxu0 0.0
    %3665 = vmatprep.subr.mxu0 0.0
    %3666 = vmatpush1.xpose.msra.mxu0 0.0
    %3667 = vmatprep.subr.mxu0 0.0
    %3668 = vmatpush1.xpose.msra.mxu0 0.0
    %3669 = vmatprep.subr.mxu0 0.0
    %3670 = vmatpush1.xpose.msra.mxu0 0.0
    %3671 = vmatprep.subr.mxu0 0.0
    %3672 = vmatpush1.xpose.msra.mxu0 0.0
    %3673 = vmatprep.subr.mxu0 0.0
    %3674 = vmatpush1.xpose.msra.mxu0 0.0
    %3675 = vmatprep.subr.mxu0 0.0
    %3676 = vmatpush1.xpose.msra.mxu0 0.0
    %3677 = vmatprep.subr.mxu0 0.0
    %3678 = vmatpush1.xpose.msra.mxu0 0.0
    %3679 = vmatprep.subr.mxu0 0.0
    %3680 = vmatpush1.xpose.msra.mxu0 0.0
    %3681 = vmatprep.subr.mxu0 0.0
    %3682 = vmatpush1.xpose.msra.mxu0 0.0
    %3683 = vmatprep.subr.mxu0 0.0
    %3684 = vmatpush1.xpose.msra.mxu0 0.0
    %3685 = vmatprep.subr.mxu0 0.0
    %3686 = vmatpush1.xpose.msra.mxu0 0.0
    %3687 = vmatprep.subr.mxu0 0.0
    %3688 = vmatpush1.xpose.msra.mxu0 0.0
    %3689 = vmatprep.subr.mxu0 0.0
    %3690 = vmatpush1.xpose.msra.mxu0 0.0
    %3691 = vmatprep.subr.mxu0 0.0
    %3692 = vmatpush1.xpose.msra.mxu0 0.0
    %3693 = vmatprep.subr.mxu0 0.0
    %3694 = vmatpush1.xpose.msra.mxu0 0.0
    %3695 = vmatprep.subr.mxu0 0.0
    %3696 = vmatpush1.xpose.msra.mxu0 0.0
    %3697 = vmatprep.subr.mxu0 0.0
    %3698 = vmatpush1.xpose.msra.mxu0 0.0
    %3699 = vmatprep.subr.mxu0 0.0
    %3700 = vmatpush1.xpose.msra.mxu0 0.0
    %3701 = vmatprep.subr.mxu0 0.0
    %3702 = vmatpush1.xpose.msra.mxu0 0.0
    %3703 = vmatprep.subr.mxu0 0.0
    %3704 = vmatpush1.xpose.msra.mxu0 0.0
    %3705 = vmatprep.subr.mxu0 0.0
    %3706 = vmatpush1.xpose.msra.mxu0 0.0
    %3707 = vmatprep.subr.mxu0 0.0
    %3708 = vmatpush1.xpose.msra.mxu0 0.0
    %3709 = vmatprep.mubr.f32.mxu0 0.0
    %v3710 = vand.u32 %v3291, 4294901760
    %3711 = vmatmul.mubr.f32.gmra.mrb[0].mxu0 %v3710
    %v3712 = vpop.f32.mrb[0].mxu0
    %v3713 = vadd.f32 %v3628, %v3712
    %v3714 = vpop.f32.mrb[0].mxu0
    %3715 = vmatprep.mubr.f32.mxu0 0.0
    %v3716 = vand.u32 %v3293, 4294901760
    %3717 = vmatmul.mubr.f32.gmra.mrb[0].mxu0 %v3716
    %v3718 = vpop.f32.mrb[0].mxu0
    %v3719 = vadd.f32 %v3636, %v3718
    %v3720 = vpop.f32.mrb[0].mxu0
    %3721 = vdwg.mxu0
    %3722 = vmatprep.subr.mxu0 0.0
    %v3723 = vand.u32 %v3295, 4294901760
    %3724 = vmatpush1.xpose.msra.mxu0 %v3723
    %3725 = vmatprep.subr.mxu0 0.0
    %v3726 = vand.u32 %v3297, 4294901760
    %3727 = vmatpush1.xpose.msra.mxu0 %v3726
    %3728 = vmatprep.subr.mxu0 0.0
    %3729 = vmatpush1.xpose.msra.mxu0 0.0
    %3730 = vmatprep.subr.mxu0 0.0
    %3731 = vmatpush1.xpose.msra.mxu0 0.0
    %3732 = vmatprep.subr.mxu0 0.0
    %3733 = vmatpush1.xpose.msra.mxu0 0.0
    %3734 = vmatprep.subr.mxu0 0.0
    %3735 = vmatpush1.xpose.msra.mxu0 0.0
    %3736 = vmatprep.subr.mxu0 0.0
    %3737 = vmatpush1.xpose.msra.mxu0 0.0
    %3738 = vmatprep.subr.mxu0 0.0
    %3739 = vmatpush1.xpose.msra.mxu0 0.0
    %3740 = vmatprep.subr.mxu0 0.0
    %3741 = vmatpush1.xpose.msra.mxu0 0.0
    %3742 = vmatprep.subr.mxu0 0.0
    %3743 = vmatpush1.xpose.msra.mxu0 0.0
    %3744 = vmatprep.subr.mxu0 0.0
    %3745 = vmatpush1.xpose.msra.mxu0 0.0
    %3746 = vmatprep.subr.mxu0 0.0
    %3747 = vmatpush1.xpose.msra.mxu0 0.0
    %3748 = vmatprep.subr.mxu0 0.0
    %3749 = vmatpush1.xpose.msra.mxu0 0.0
    %3750 = vmatprep.subr.mxu0 0.0
    %3751 = vmatpush1.xpose.msra.mxu0 0.0
    %3752 = vmatprep.subr.mxu0 0.0
    %3753 = vmatpush1.xpose.msra.mxu0 0.0
    %3754 = vmatprep.subr.mxu0 0.0
    %3755 = vmatpush1.xpose.msra.mxu0 0.0
    %3756 = vmatprep.subr.mxu0 0.0
    %3757 = vmatpush1.xpose.msra.mxu0 0.0
    %3758 = vmatprep.subr.mxu0 0.0
    %3759 = vmatpush1.xpose.msra.mxu0 0.0
    %3760 = vmatprep.subr.mxu0 0.0
    %3761 = vmatpush1.xpose.msra.mxu0 0.0
    %3762 = vmatprep.subr.mxu0 0.0
    %3763 = vmatpush1.xpose.msra.mxu0 0.0
    %3764 = vmatprep.subr.mxu0 0.0
    %3765 = vmatpush1.xpose.msra.mxu0 0.0
    %3766 = vmatprep.subr.mxu0 0.0
    %3767 = vmatpush1.xpose.msra.mxu0 0.0
    %3768 = vmatprep.subr.mxu0 0.0
    %3769 = vmatpush1.xpose.msra.mxu0 0.0
    %3770 = vmatprep.subr.mxu0 0.0
    %3771 = vmatpush1.xpose.msra.mxu0 0.0
    %3772 = vmatprep.subr.mxu0 0.0
    %3773 = vmatpush1.xpose.msra.mxu0 0.0
    %3774 = vmatprep.subr.mxu0 0.0
    %3775 = vmatpush1.xpose.msra.mxu0 0.0
    %3776 = vmatprep.subr.mxu0 0.0
    %3777 = vmatpush1.xpose.msra.mxu0 0.0
    %3778 = vmatprep.subr.mxu0 0.0
    %3779 = vmatpush1.xpose.msra.mxu0 0.0
    %3780 = vmatprep.subr.mxu0 0.0
    %3781 = vmatpush1.xpose.msra.mxu0 0.0
    %3782 = vmatprep.subr.mxu0 0.0
    %3783 = vmatpush1.xpose.msra.mxu0 0.0
    %3784 = vmatprep.subr.mxu0 0.0
    %3785 = vmatpush1.xpose.msra.mxu0 0.0
    %3786 = vmatprep.subr.mxu0 0.0
    %3787 = vmatpush1.xpose.msra.mxu0 0.0
    %3788 = vmatprep.mubr.f32.mxu0 0.0
    %v3789 = vand.u32 %v3291, 4294901760
    %3790 = vmatmul.mubr.f32.gmra.mrb[0].mxu0 %v3789
    %v3791 = vpop.f32.mrb[0].mxu0
    %v3792 = vadd.f32 %v3713, %v3791
    %v3793 = vpop.f32.mrb[0].mxu0
    %3794 = vmatprep.mubr.f32.mxu0 0.0
    %v3795 = vand.u32 %v3293, 4294901760
    %3796 = vmatmul.mubr.f32.gmra.mrb[0].mxu0 %v3795
    %v3797 = vpop.f32.mrb[0].mxu0
    %v3798 = vadd.f32 %v3719, %v3797
    %v3799 = vpop.f32.mrb[0].mxu0
    %3800 = vdwg.mxu0
    %3801 = vrot.lane.b32.xlu0 %v709, 96
    %v3802 = vpop.permute.xlu0 %3801
    %3803 = vrot.lane.b32.xlu0 %v711, 96
    %v3804 = vpop.permute.xlu0 %3803
    %v3805 = vsel %vm720, %v709, 0
    %v3807 = vsel %vm720, %v711, 0
    %v3809 = vsel %vm720, %v3802, 0
    %v3811 = vsel %vm720, %v3804, 0
    %3813 = vmatprep.subr.mxu0 0.0
    %v3814 = vand.u32 %v3809, 4294901760
    %3815 = vmatpush1.xpose.msra.mxu0 %v3814
    %3816 = vmatprep.subr.mxu0 0.0
    %v3817 = vand.u32 %v3811, 4294901760
    %3818 = vmatpush1.xpose.msra.mxu0 %v3817
    %3819 = vmatprep.subr.mxu0 0.0
    %3820 = vmatpush1.xpose.msra.mxu0 0.0
    %3821 = vmatprep.subr.mxu0 0.0
    %3822 = vmatpush1.xpose.msra.mxu0 0.0
    %3823 = vmatprep.subr.mxu0 0.0
    %3824 = vmatpush1.xpose.msra.mxu0 0.0
    %3825 = vmatprep.subr.mxu0 0.0
    %3826 = vmatpush1.xpose.msra.mxu0 0.0
    %3827 = vmatprep.subr.mxu0 0.0
    %3828 = vmatpush1.xpose.msra.mxu0 0.0
    %3829 = vmatprep.subr.mxu0 0.0
    %3830 = vmatpush1.xpose.msra.mxu0 0.0
    %3831 = vmatprep.subr.mxu0 0.0
    %3832 = vmatpush1.xpose.msra.mxu0 0.0
    %3833 = vmatprep.subr.mxu0 0.0
    %3834 = vmatpush1.xpose.msra.mxu0 0.0
    %3835 = vmatprep.subr.mxu0 0.0
    %3836 = vmatpush1.xpose.msra.mxu0 0.0
    %3837 = vmatprep.subr.mxu0 0.0
    %3838 = vmatpush1.xpose.msra.mxu0 0.0
    %3839 = vmatprep.subr.mxu0 0.0
    %3840 = vmatpush1.xpose.msra.mxu0 0.0
    %3841 = vmatprep.subr.mxu0 0.0
    %3842 = vmatpush1.xpose.msra.mxu0 0.0
    %3843 = vmatprep.subr.mxu0 0.0
    %3844 = vmatpush1.xpose.msra.mxu0 0.0
    %3845 = vmatprep.subr.mxu0 0.0
    %3846 = vmatpush1.xpose.msra.mxu0 0.0
    %3847 = vmatprep.subr.mxu0 0.0
    %3848 = vmatpush1.xpose.msra.mxu0 0.0
    %3849 = vmatprep.subr.mxu0 0.0
    %3850 = vmatpush1.xpose.msra.mxu0 0.0
    %3851 = vmatprep.subr.mxu0 0.0
    %3852 = vmatpush1.xpose.msra.mxu0 0.0
    %3853 = vmatprep.subr.mxu0 0.0
    %3854 = vmatpush1.xpose.msra.mxu0 0.0
    %3855 = vmatprep.subr.mxu0 0.0
    %3856 = vmatpush1.xpose.msra.mxu0 0.0
    %3857 = vmatprep.subr.mxu0 0.0
    %3858 = vmatpush1.xpose.msra.mxu0 0.0
    %3859 = vmatprep.subr.mxu0 0.0
    %3860 = vmatpush1.xpose.msra.mxu0 0.0
    %3861 = vmatprep.subr.mxu0 0.0
    %3862 = vmatpush1.xpose.msra.mxu0 0.0
    %3863 = vmatprep.subr.mxu0 0.0
    %3864 = vmatpush1.xpose.msra.mxu0 0.0
    %3865 = vmatprep.subr.mxu0 0.0
    %3866 = vmatpush1.xpose.msra.mxu0 0.0
    %3867 = vmatprep.subr.mxu0 0.0
    %3868 = vmatpush1.xpose.msra.mxu0 0.0
    %3869 = vmatprep.subr.mxu0 0.0
    %3870 = vmatpush1.xpose.msra.mxu0 0.0
    %3871 = vmatprep.subr.mxu0 0.0
    %3872 = vmatpush1.xpose.msra.mxu0 0.0
    %3873 = vmatprep.subr.mxu0 0.0
    %3874 = vmatpush1.xpose.msra.mxu0 0.0
    %3875 = vmatprep.subr.mxu0 0.0
    %3876 = vmatpush1.xpose.msra.mxu0 0.0
    %3877 = vmatprep.subr.mxu0 0.0
    %3878 = vmatpush1.xpose.msra.mxu0 0.0
    %3879 = vmatprep.mubr.f32.mxu0 0.0
    %v3880 = vand.u32 %v3805, 4294901760
    %v3881 = vsub.f32 %v3805, %v3880
    %v3882 = vand.u32 %v3881, 4294901760
    %v3883 = vsub.f32 %v3881, %v3882
    %v3884 = vand.u32 %v3883, 4294901760
    %3885 = vmatmul.mubr.f32.gmra.mrb[0].mxu0 %v3884
    %v3886 = vpop.f32.mrb[0].mxu0
    %v3887 = vadd.f32 0.0, %v3886
    %v3888 = vpop.f32.mrb[0].mxu0
    %3889 = vmatprep.mubr.f32.mxu0 0.0
    %v3890 = vand.u32 %v3807, 4294901760
    %v3891 = vsub.f32 %v3807, %v3890
    %v3892 = vand.u32 %v3891, 4294901760
    %v3893 = vsub.f32 %v3891, %v3892
    %v3894 = vand.u32 %v3893, 4294901760
    %3895 = vmatmul.mubr.f32.gmra.mrb[0].mxu0 %v3894
    %v3896 = vpop.f32.mrb[0].mxu0
    %v3897 = vadd.f32 0.0, %v3896
    %v3898 = vpop.f32.mrb[0].mxu0
    %3899 = vdwg.mxu0
    %3900 = vmatprep.subr.mxu0 0.0
    %v3901 = vand.u32 %v3809, 4294901760
    %v3902 = vsub.f32 %v3809, %v3901
    %v3903 = vand.u32 %v3902, 4294901760
    %v3904 = vsub.f32 %v3902, %v3903
    %v3905 = vand.u32 %v3904, 4294901760
    %3906 = vmatpush1.xpose.msra.mxu0 %v3905
    %3907 = vmatprep.subr.mxu0 0.0
    %v3908 = vand.u32 %v3811, 4294901760
    %v3909 = vsub.f32 %v3811, %v3908
    %v3910 = vand.u32 %v3909, 4294901760
    %v3911 = vsub.f32 %v3909, %v3910
    %v3912 = vand.u32 %v3911, 4294901760
    %3913 = vmatpush1.xpose.msra.mxu0 %v3912
    %3914 = vmatprep.subr.mxu0 0.0
    %3915 = vmatpush1.xpose.msra.mxu0 0.0
    %3916 = vmatprep.subr.mxu0 0.0
    %3917 = vmatpush1.xpose.msra.mxu0 0.0
    %3918 = vmatprep.subr.mxu0 0.0
    %3919 = vmatpush1.xpose.msra.mxu0 0.0
    %3920 = vmatprep.subr.mxu0 0.0
    %3921 = vmatpush1.xpose.msra.mxu0 0.0
    %3922 = vmatprep.subr.mxu0 0.0
    %3923 = vmatpush1.xpose.msra.mxu0 0.0
    %3924 = vmatprep.subr.mxu0 0.0
    %3925 = vmatpush1.xpose.msra.mxu0 0.0
    %3926 = vmatprep.subr.mxu0 0.0
    %3927 = vmatpush1.xpose.msra.mxu0 0.0
    %3928 = vmatprep.subr.mxu0 0.0
    %3929 = vmatpush1.xpose.msra.mxu0 0.0
    %3930 = vmatprep.subr.mxu0 0.0
    %3931 = vmatpush1.xpose.msra.mxu0 0.0
    %3932 = vmatprep.subr.mxu0 0.0
    %3933 = vmatpush1.xpose.msra.mxu0 0.0
    %3934 = vmatprep.subr.mxu0 0.0
    %3935 = vmatpush1.xpose.msra.mxu0 0.0
    %3936 = vmatprep.subr.mxu0 0.0
    %3937 = vmatpush1.xpose.msra.mxu0 0.0
    %3938 = vmatprep.subr.mxu0 0.0
    %3939 = vmatpush1.xpose.msra.mxu0 0.0
    %3940 = vmatprep.subr.mxu0 0.0
    %3941 = vmatpush1.xpose.msra.mxu0 0.0
    %3942 = vmatprep.subr.mxu0 0.0
    %3943 = vmatpush1.xpose.msra.mxu0 0.0
    %3944 = vmatprep.subr.mxu0 0.0
    %3945 = vmatpush1.xpose.msra.mxu0 0.0
    %3946 = vmatprep.subr.mxu0 0.0
    %3947 = vmatpush1.xpose.msra.mxu0 0.0
    %3948 = vmatprep.subr.mxu0 0.0
    %3949 = vmatpush1.xpose.msra.mxu0 0.0
    %3950 = vmatprep.subr.mxu0 0.0
    %3951 = vmatpush1.xpose.msra.mxu0 0.0
    %3952 = vmatprep.subr.mxu0 0.0
    %3953 = vmatpush1.xpose.msra.mxu0 0.0
    %3954 = vmatprep.subr.mxu0 0.0
    %3955 = vmatpush1.xpose.msra.mxu0 0.0
    %3956 = vmatprep.subr.mxu0 0.0
    %3957 = vmatpush1.xpose.msra.mxu0 0.0
    %3958 = vmatprep.subr.mxu0 0.0
    %3959 = vmatpush1.xpose.msra.mxu0 0.0
    %3960 = vmatprep.subr.mxu0 0.0
    %3961 = vmatpush1.xpose.msra.mxu0 0.0
    %3962 = vmatprep.subr.mxu0 0.0
    %3963 = vmatpush1.xpose.msra.mxu0 0.0
    %3964 = vmatprep.subr.mxu0 0.0
    %3965 = vmatpush1.xpose.msra.mxu0 0.0
    %3966 = vmatprep.subr.mxu0 0.0
    %3967 = vmatpush1.xpose.msra.mxu0 0.0
    %3968 = vmatprep.subr.mxu0 0.0
    %3969 = vmatpush1.xpose.msra.mxu0 0.0
    %3970 = vmatprep.subr.mxu0 0.0
    %3971 = vmatpush1.xpose.msra.mxu0 0.0
    %3972 = vmatprep.subr.mxu0 0.0
    %3973 = vmatpush1.xpose.msra.mxu0 0.0
    %3974 = vmatprep.mubr.f32.mxu0 0.0
    %v3975 = vand.u32 %v3805, 4294901760
    %3976 = vmatmul.mubr.f32.gmra.mrb[0].mxu0 %v3975
    %v3977 = vpop.f32.mrb[0].mxu0
    %v3978 = vadd.f32 %v3887, %v3977
    %v3979 = vpop.f32.mrb[0].mxu0
    %3980 = vmatprep.mubr.f32.mxu0 0.0
    %v3981 = vand.u32 %v3807, 4294901760
    %3982 = vmatmul.mubr.f32.gmra.mrb[0].mxu0 %v3981
    %v3983 = vpop.f32.mrb[0].mxu0
    %v3984 = vadd.f32 %v3897, %v3983
    %v3985 = vpop.f32.mrb[0].mxu0
    %3986 = vdwg.mxu0
    %3987 = vmatprep.subr.mxu0 0.0
    %v3988 = vand.u32 %v3809, 4294901760
    %v3989 = vsub.f32 %v3809, %v3988
    %3990 = vmatpush1.xpose.msra.mxu0 %v3989
    %3991 = vmatprep.subr.mxu0 0.0
    %v3992 = vand.u32 %v3811, 4294901760
    %v3993 = vsub.f32 %v3811, %v3992
    %3994 = vmatpush1.xpose.msra.mxu0 %v3993
    %3995 = vmatprep.subr.mxu0 0.0
    %3996 = vmatpush1.xpose.msra.mxu0 0.0
    %3997 = vmatprep.subr.mxu0 0.0
    %3998 = vmatpush1.xpose.msra.mxu0 0.0
    %3999 = vmatprep.subr.mxu0 0.0
    %4000 = vmatpush1.xpose.msra.mxu0 0.0
    %4001 = vmatprep.subr.mxu0 0.0
    %4002 = vmatpush1.xpose.msra.mxu0 0.0
    %4003 = vmatprep.subr.mxu0 0.0
    %4004 = vmatpush1.xpose.msra.mxu0 0.0
    %4005 = vmatprep.subr.mxu0 0.0
    %4006 = vmatpush1.xpose.msra.mxu0 0.0
    %4007 = vmatprep.subr.mxu0 0.0
    %4008 = vmatpush1.xpose.msra.mxu0 0.0
    %4009 = vmatprep.subr.mxu0 0.0
    %4010 = vmatpush1.xpose.msra.mxu0 0.0
    %4011 = vmatprep.subr.mxu0 0.0
    %4012 = vmatpush1.xpose.msra.mxu0 0.0
    %4013 = vmatprep.subr.mxu0 0.0
    %4014 = vmatpush1.xpose.msra.mxu0 0.0
    %4015 = vmatprep.subr.mxu0 0.0
    %4016 = vmatpush1.xpose.msra.mxu0 0.0
    %4017 = vmatprep.subr.mxu0 0.0
    %4018 = vmatpush1.xpose.msra.mxu0 0.0
    %4019 = vmatprep.subr.mxu0 0.0
    %4020 = vmatpush1.xpose.msra.mxu0 0.0
    %4021 = vmatprep.subr.mxu0 0.0
    %4022 = vmatpush1.xpose.msra.mxu0 0.0
    %4023 = vmatprep.subr.mxu0 0.0
    %4024 = vmatpush1.xpose.msra.mxu0 0.0
    %4025 = vmatprep.subr.mxu0 0.0
    %4026 = vmatpush1.xpose.msra.mxu0 0.0
    %4027 = vmatprep.subr.mxu0 0.0
    %4028 = vmatpush1.xpose.msra.mxu0 0.0
    %4029 = vmatprep.subr.mxu0 0.0
    %4030 = vmatpush1.xpose.msra.mxu0 0.0
    %4031 = vmatprep.subr.mxu0 0.0
    %4032 = vmatpush1.xpose.msra.mxu0 0.0
    %4033 = vmatprep.subr.mxu0 0.0
    %4034 = vmatpush1.xpose.msra.mxu0 0.0
    %4035 = vmatprep.subr.mxu0 0.0
    %4036 = vmatpush1.xpose.msra.mxu0 0.0
    %4037 = vmatprep.subr.mxu0 0.0
    %4038 = vmatpush1.xpose.msra.mxu0 0.0
    %4039 = vmatprep.subr.mxu0 0.0
    %4040 = vmatpush1.xpose.msra.mxu0 0.0
    %4041 = vmatprep.subr.mxu0 0.0
    %4042 = vmatpush1.xpose.msra.mxu0 0.0
    %4043 = vmatprep.subr.mxu0 0.0
    %4044 = vmatpush1.xpose.msra.mxu0 0.0
    %4045 = vmatprep.subr.mxu0 0.0
    %4046 = vmatpush1.xpose.msra.mxu0 0.0
    %4047 = vmatprep.subr.mxu0 0.0
    %4048 = vmatpush1.xpose.msra.mxu0 0.0
    %4049 = vmatprep.subr.mxu0 0.0
    %4050 = vmatpush1.xpose.msra.mxu0 0.0
    %4051 = vmatprep.subr.mxu0 0.0
    %4052 = vmatpush1.xpose.msra.mxu0 0.0
    %4053 = vmatprep.subr.mxu0 0.0
    %4054 = vmatpush1.xpose.msra.mxu0 0.0
    %4055 = vmatprep.mubr.f32.mxu0 0.0
    %v4056 = vand.u32 %v3805, 4294901760
    %v4057 = vsub.f32 %v3805, %v4056
    %4058 = vmatmul.mubr.f32.gmra.mrb[0].mxu0 %v4057
    %v4059 = vpop.f32.mrb[0].mxu0
    %v4060 = vadd.f32 %v3978, %v4059
    %v4061 = vpop.f32.mrb[0].mxu0
    %4062 = vmatprep.mubr.f32.mxu0 0.0
    %v4063 = vand.u32 %v3807, 4294901760
    %v4064 = vsub.f32 %v3807, %v4063
    %4065 = vmatmul.mubr.f32.gmra.mrb[0].mxu0 %v4064
    %v4066 = vpop.f32.mrb[0].mxu0
    %v4067 = vadd.f32 %v3984, %v4066
    %v4068 = vpop.f32.mrb[0].mxu0
    %4069 = vdwg.mxu0
    %4070 = vmatprep.subr.mxu0 0.0
    %v4071 = vand.u32 %v3809, 4294901760
    %4072 = vmatpush1.xpose.msra.mxu0 %v4071
    %4073 = vmatprep.subr.mxu0 0.0
    %v4074 = vand.u32 %v3811, 4294901760
    %4075 = vmatpush1.xpose.msra.mxu0 %v4074
    %4076 = vmatprep.subr.mxu0 0.0
    %4077 = vmatpush1.xpose.msra.mxu0 0.0
    %4078 = vmatprep.subr.mxu0 0.0
    %4079 = vmatpush1.xpose.msra.mxu0 0.0
    %4080 = vmatprep.subr.mxu0 0.0
    %4081 = vmatpush1.xpose.msra.mxu0 0.0
    %4082 = vmatprep.subr.mxu0 0.0
    %4083 = vmatpush1.xpose.msra.mxu0 0.0
    %4084 = vmatprep.subr.mxu0 0.0
    %4085 = vmatpush1.xpose.msra.mxu0 0.0
    %4086 = vmatprep.subr.mxu0 0.0
    %4087 = vmatpush1.xpose.msra.mxu0 0.0
    %4088 = vmatprep.subr.mxu0 0.0
    %4089 = vmatpush1.xpose.msra.mxu0 0.0
    %4090 = vmatprep.subr.mxu0 0.0
    %4091 = vmatpush1.xpose.msra.mxu0 0.0
    %4092 = vmatprep.subr.mxu0 0.0
    %4093 = vmatpush1.xpose.msra.mxu0 0.0
    %4094 = vmatprep.subr.mxu0 0.0
    %4095 = vmatpush1.xpose.msra.mxu0 0.0
    %4096 = vmatprep.subr.mxu0 0.0
    %4097 = vmatpush1.xpose.msra.mxu0 0.0
    %4098 = vmatprep.subr.mxu0 0.0
    %4099 = vmatpush1.xpose.msra.mxu0 0.0
    %4100 = vmatprep.subr.mxu0 0.0
    %4101 = vmatpush1.xpose.msra.mxu0 0.0
    %4102 = vmatprep.subr.mxu0 0.0
    %4103 = vmatpush1.xpose.msra.mxu0 0.0
    %4104 = vmatprep.subr.mxu0 0.0
    %4105 = vmatpush1.xpose.msra.mxu0 0.0
    %4106 = vmatprep.subr.mxu0 0.0
    %4107 = vmatpush1.xpose.msra.mxu0 0.0
    %4108 = vmatprep.subr.mxu0 0.0
    %4109 = vmatpush1.xpose.msra.mxu0 0.0
    %4110 = vmatprep.subr.mxu0 0.0
    %4111 = vmatpush1.xpose.msra.mxu0 0.0
    %4112 = vmatprep.subr.mxu0 0.0
    %4113 = vmatpush1.xpose.msra.mxu0 0.0
    %4114 = vmatprep.subr.mxu0 0.0
    %4115 = vmatpush1.xpose.msra.mxu0 0.0
    %4116 = vmatprep.subr.mxu0 0.0
    %4117 = vmatpush1.xpose.msra.mxu0 0.0
    %4118 = vmatprep.subr.mxu0 0.0
    %4119 = vmatpush1.xpose.msra.mxu0 0.0
    %4120 = vmatprep.subr.mxu0 0.0
    %4121 = vmatpush1.xpose.msra.mxu0 0.0
    %4122 = vmatprep.subr.mxu0 0.0
    %4123 = vmatpush1.xpose.msra.mxu0 0.0
    %4124 = vmatprep.subr.mxu0 0.0
    %4125 = vmatpush1.xpose.msra.mxu0 0.0
    %4126 = vmatprep.subr.mxu0 0.0
    %4127 = vmatpush1.xpose.msra.mxu0 0.0
    %4128 = vmatprep.subr.mxu0 0.0
    %4129 = vmatpush1.xpose.msra.mxu0 0.0
    %4130 = vmatprep.subr.mxu0 0.0
    %4131 = vmatpush1.xpose.msra.mxu0 0.0
    %4132 = vmatprep.subr.mxu0 0.0
    %4133 = vmatpush1.xpose.msra.mxu0 0.0
    %4134 = vmatprep.subr.mxu0 0.0
    %4135 = vmatpush1.xpose.msra.mxu0 0.0
    %4136 = vmatprep.mubr.f32.mxu0 0.0
    %v4137 = vand.u32 %v3805, 4294901760
    %v4138 = vsub.f32 %v3805, %v4137
    %v4139 = vand.u32 %v4138, 4294901760
    %4140 = vmatmul.mubr.f32.gmra.mrb[0].mxu0 %v4139
    %v4141 = vpop.f32.mrb[0].mxu0
    %v4142 = vadd.f32 %v4060, %v4141
    %v4143 = vpop.f32.mrb[0].mxu0
    %4144 = vmatprep.mubr.f32.mxu0 0.0
    %v4145 = vand.u32 %v3807, 4294901760
    %v4146 = vsub.f32 %v3807, %v4145
    %v4147 = vand.u32 %v4146, 4294901760
    %4148 = vmatmul.mubr.f32.gmra.mrb[0].mxu0 %v4147
    %v4149 = vpop.f32.mrb[0].mxu0
    %v4150 = vadd.f32 %v4067, %v4149
    %v4151 = vpop.f32.mrb[0].mxu0
    %4152 = vdwg.mxu0
    %4153 = vmatprep.subr.mxu0 0.0
    %v4154 = vand.u32 %v3809, 4294901760
    %v4155 = vsub.f32 %v3809, %v4154
    %v4156 = vand.u32 %v4155, 4294901760
    %4157 = vmatpush1.xpose.msra.mxu0 %v4156
    %4158 = vmatprep.subr.mxu0 0.0
    %v4159 = vand.u32 %v3811, 4294901760
    %v4160 = vsub.f32 %v3811, %v4159
    %v4161 = vand.u32 %v4160, 4294901760
    %4162 = vmatpush1.xpose.msra.mxu0 %v4161
    %4163 = vmatprep.subr.mxu0 0.0
    %4164 = vmatpush1.xpose.msra.mxu0 0.0
    %4165 = vmatprep.subr.mxu0 0.0
    %4166 = vmatpush1.xpose.msra.mxu0 0.0
    %4167 = vmatprep.subr.mxu0 0.0
    %4168 = vmatpush1.xpose.msra.mxu0 0.0
    %4169 = vmatprep.subr.mxu0 0.0
    %4170 = vmatpush1.xpose.msra.mxu0 0.0
    %4171 = vmatprep.subr.mxu0 0.0
    %4172 = vmatpush1.xpose.msra.mxu0 0.0
    %4173 = vmatprep.subr.mxu0 0.0
    %4174 = vmatpush1.xpose.msra.mxu0 0.0
    %4175 = vmatprep.subr.mxu0 0.0
    %4176 = vmatpush1.xpose.msra.mxu0 0.0
    %4177 = vmatprep.subr.mxu0 0.0
    %4178 = vmatpush1.xpose.msra.mxu0 0.0
    %4179 = vmatprep.subr.mxu0 0.0
    %4180 = vmatpush1.xpose.msra.mxu0 0.0
    %4181 = vmatprep.subr.mxu0 0.0
    %4182 = vmatpush1.xpose.msra.mxu0 0.0
    %4183 = vmatprep.subr.mxu0 0.0
    %4184 = vmatpush1.xpose.msra.mxu0 0.0
    %4185 = vmatprep.subr.mxu0 0.0
    %4186 = vmatpush1.xpose.msra.mxu0 0.0
    %4187 = vmatprep.subr.mxu0 0.0
    %4188 = vmatpush1.xpose.msra.mxu0 0.0
    %4189 = vmatprep.subr.mxu0 0.0
    %4190 = vmatpush1.xpose.msra.mxu0 0.0
    %4191 = vmatprep.subr.mxu0 0.0
    %4192 = vmatpush1.xpose.msra.mxu0 0.0
    %4193 = vmatprep.subr.mxu0 0.0
    %4194 = vmatpush1.xpose.msra.mxu0 0.0
    %4195 = vmatprep.subr.mxu0 0.0
    %4196 = vmatpush1.xpose.msra.mxu0 0.0
    %4197 = vmatprep.subr.mxu0 0.0
    %4198 = vmatpush1.xpose.msra.mxu0 0.0
    %4199 = vmatprep.subr.mxu0 0.0
    %4200 = vmatpush1.xpose.msra.mxu0 0.0
    %4201 = vmatprep.subr.mxu0 0.0
    %4202 = vmatpush1.xpose.msra.mxu0 0.0
    %4203 = vmatprep.subr.mxu0 0.0
    %4204 = vmatpush1.xpose.msra.mxu0 0.0
    %4205 = vmatprep.subr.mxu0 0.0
    %4206 = vmatpush1.xpose.msra.mxu0 0.0
    %4207 = vmatprep.subr.mxu0 0.0
    %4208 = vmatpush1.xpose.msra.mxu0 0.0
    %4209 = vmatprep.subr.mxu0 0.0
    %4210 = vmatpush1.xpose.msra.mxu0 0.0
    %4211 = vmatprep.subr.mxu0 0.0
    %4212 = vmatpush1.xpose.msra.mxu0 0.0
    %4213 = vmatprep.subr.mxu0 0.0
    %4214 = vmatpush1.xpose.msra.mxu0 0.0
    %4215 = vmatprep.subr.mxu0 0.0
    %4216 = vmatpush1.xpose.msra.mxu0 0.0
    %4217 = vmatprep.subr.mxu0 0.0
    %4218 = vmatpush1.xpose.msra.mxu0 0.0
    %4219 = vmatprep.subr.mxu0 0.0
    %4220 = vmatpush1.xpose.msra.mxu0 0.0
    %4221 = vmatprep.subr.mxu0 0.0
    %4222 = vmatpush1.xpose.msra.mxu0 0.0
    %4223 = vmatprep.mubr.f32.mxu0 0.0
    %v4224 = vand.u32 %v3805, 4294901760
    %4225 = vmatmul.mubr.f32.gmra.mrb[0].mxu0 %v4224
    %v4226 = vpop.f32.mrb[0].mxu0
    %v4227 = vadd.f32 %v4142, %v4226
    %v4228 = vpop.f32.mrb[0].mxu0
    %4229 = vmatprep.mubr.f32.mxu0 0.0
    %v4230 = vand.u32 %v3807, 4294901760
    %4231 = vmatmul.mubr.f32.gmra.mrb[0].mxu0 %v4230
    %v4232 = vpop.f32.mrb[0].mxu0
    %v4233 = vadd.f32 %v4150, %v4232
    %v4234 = vpop.f32.mrb[0].mxu0
    %4235 = vdwg.mxu0
    %4236 = vmatprep.subr.mxu0 0.0
    %v4237 = vand.u32 %v3809, 4294901760
    %4238 = vmatpush1.xpose.msra.mxu0 %v4237
    %4239 = vmatprep.subr.mxu0 0.0
    %v4240 = vand.u32 %v3811, 4294901760
    %4241 = vmatpush1.xpose.msra.mxu0 %v4240
    %4242 = vmatprep.subr.mxu0 0.0
    %4243 = vmatpush1.xpose.msra.mxu0 0.0
    %4244 = vmatprep.subr.mxu0 0.0
    %4245 = vmatpush1.xpose.msra.mxu0 0.0
    %4246 = vmatprep.subr.mxu0 0.0
    %4247 = vmatpush1.xpose.msra.mxu0 0.0
    %4248 = vmatprep.subr.mxu0 0.0
    %4249 = vmatpush1.xpose.msra.mxu0 0.0
    %4250 = vmatprep.subr.mxu0 0.0
    %4251 = vmatpush1.xpose.msra.mxu0 0.0
    %4252 = vmatprep.subr.mxu0 0.0
    %4253 = vmatpush1.xpose.msra.mxu0 0.0
    %4254 = vmatprep.subr.mxu0 0.0
    %4255 = vmatpush1.xpose.msra.mxu0 0.0
    %4256 = vmatprep.subr.mxu0 0.0
    %4257 = vmatpush1.xpose.msra.mxu0 0.0
    %4258 = vmatprep.subr.mxu0 0.0
    %4259 = vmatpush1.xpose.msra.mxu0 0.0
    %4260 = vmatprep.subr.mxu0 0.0
    %4261 = vmatpush1.xpose.msra.mxu0 0.0
    %4262 = vmatprep.subr.mxu0 0.0
    %4263 = vmatpush1.xpose.msra.mxu0 0.0
    %4264 = vmatprep.subr.mxu0 0.0
    %4265 = vmatpush1.xpose.msra.mxu0 0.0
    %4266 = vmatprep.subr.mxu0 0.0
    %4267 = vmatpush1.xpose.msra.mxu0 0.0
    %4268 = vmatprep.subr.mxu0 0.0
    %4269 = vmatpush1.xpose.msra.mxu0 0.0
    %4270 = vmatprep.subr.mxu0 0.0
    %4271 = vmatpush1.xpose.msra.mxu0 0.0
    %4272 = vmatprep.subr.mxu0 0.0
    %4273 = vmatpush1.xpose.msra.mxu0 0.0
    %4274 = vmatprep.subr.mxu0 0.0
    %4275 = vmatpush1.xpose.msra.mxu0 0.0
    %4276 = vmatprep.subr.mxu0 0.0
    %4277 = vmatpush1.xpose.msra.mxu0 0.0
    %4278 = vmatprep.subr.mxu0 0.0
    %4279 = vmatpush1.xpose.msra.mxu0 0.0
    %4280 = vmatprep.subr.mxu0 0.0
    %4281 = vmatpush1.xpose.msra.mxu0 0.0
    %4282 = vmatprep.subr.mxu0 0.0
    %4283 = vmatpush1.xpose.msra.mxu0 0.0
    %4284 = vmatprep.subr.mxu0 0.0
    %4285 = vmatpush1.xpose.msra.mxu0 0.0
    %4286 = vmatprep.subr.mxu0 0.0
    %4287 = vmatpush1.xpose.msra.mxu0 0.0
    %4288 = vmatprep.subr.mxu0 0.0
    %4289 = vmatpush1.xpose.msra.mxu0 0.0
    %4290 = vmatprep.subr.mxu0 0.0
    %4291 = vmatpush1.xpose.msra.mxu0 0.0
    %4292 = vmatprep.subr.mxu0 0.0
    %4293 = vmatpush1.xpose.msra.mxu0 0.0
    %4294 = vmatprep.subr.mxu0 0.0
    %4295 = vmatpush1.xpose.msra.mxu0 0.0
    %4296 = vmatprep.subr.mxu0 0.0
    %4297 = vmatpush1.xpose.msra.mxu0 0.0
    %4298 = vmatprep.subr.mxu0 0.0
    %4299 = vmatpush1.xpose.msra.mxu0 0.0
    %4300 = vmatprep.subr.mxu0 0.0
    %4301 = vmatpush1.xpose.msra.mxu0 0.0
    %4302 = vmatprep.mubr.f32.mxu0 0.0
    %v4303 = vand.u32 %v3805, 4294901760
    %4304 = vmatmul.mubr.f32.gmra.mrb[0].mxu0 %v4303
    %v4305 = vpop.f32.mrb[0].mxu0
    %v4306 = vadd.f32 %v4227, %v4305
    %v4307 = vpop.f32.mrb[0].mxu0
    %4308 = vmatprep.mubr.f32.mxu0 0.0
    %v4309 = vand.u32 %v3807, 4294901760
    %4310 = vmatmul.mubr.f32.gmra.mrb[0].mxu0 %v4309
    %v4311 = vpop.f32.mrb[0].mxu0
    %v4312 = vadd.f32 %v4233, %v4311
    %v4313 = vpop.f32.mrb[0].mxu0
    %4314 = vdwg.mxu0
    %4315 = vrot.lane.b32.xlu0 %v713, 96
    %v4316 = vpop.permute.xlu0 %4315
    %4317 = vrot.lane.b32.xlu0 %v715, 96
    %v4318 = vpop.permute.xlu0 %4317
    %v4319 = vsel %vm720, %v713, 0
    %v4321 = vsel %vm720, %v715, 0
    %v4323 = vsel %vm720, %v4316, 0
    %v4325 = vsel %vm720, %v4318, 0
    %4327 = vmatprep.subr.mxu0 0.0
    %v4328 = vand.u32 %v4323, 4294901760
    %4329 = vmatpush1.xpose.msra.mxu0 %v4328
    %4330 = vmatprep.subr.mxu0 0.0
    %v4331 = vand.u32 %v4325, 4294901760
    %4332 = vmatpush1.xpose.msra.mxu0 %v4331
    %4333 = vmatprep.subr.mxu0 0.0
    %4334 = vmatpush1.xpose.msra.mxu0 0.0
    %4335 = vmatprep.subr.mxu0 0.0
    %4336 = vmatpush1.xpose.msra.mxu0 0.0
    %4337 = vmatprep.subr.mxu0 0.0
    %4338 = vmatpush1.xpose.msra.mxu0 0.0
    %4339 = vmatprep.subr.mxu0 0.0
    %4340 = vmatpush1.xpose.msra.mxu0 0.0
    %4341 = vmatprep.subr.mxu0 0.0
    %4342 = vmatpush1.xpose.msra.mxu0 0.0
    %4343 = vmatprep.subr.mxu0 0.0
    %4344 = vmatpush1.xpose.msra.mxu0 0.0
    %4345 = vmatprep.subr.mxu0 0.0
    %4346 = vmatpush1.xpose.msra.mxu0 0.0
    %4347 = vmatprep.subr.mxu0 0.0
    %4348 = vmatpush1.xpose.msra.mxu0 0.0
    %4349 = vmatprep.subr.mxu0 0.0
    %4350 = vmatpush1.xpose.msra.mxu0 0.0
    %4351 = vmatprep.subr.mxu0 0.0
    %4352 = vmatpush1.xpose.msra.mxu0 0.0
    %4353 = vmatprep.subr.mxu0 0.0
    %4354 = vmatpush1.xpose.msra.mxu0 0.0
    %4355 = vmatprep.subr.mxu0 0.0
    %4356 = vmatpush1.xpose.msra.mxu0 0.0
    %4357 = vmatprep.subr.mxu0 0.0
    %4358 = vmatpush1.xpose.msra.mxu0 0.0
    %4359 = vmatprep.subr.mxu0 0.0
    %4360 = vmatpush1.xpose.msra.mxu0 0.0
    %4361 = vmatprep.subr.mxu0 0.0
    %4362 = vmatpush1.xpose.msra.mxu0 0.0
    %4363 = vmatprep.subr.mxu0 0.0
    %4364 = vmatpush1.xpose.msra.mxu0 0.0
    %4365 = vmatprep.subr.mxu0 0.0
    %4366 = vmatpush1.xpose.msra.mxu0 0.0
    %4367 = vmatprep.subr.mxu0 0.0
    %4368 = vmatpush1.xpose.msra.mxu0 0.0
    %4369 = vmatprep.subr.mxu0 0.0
    %4370 = vmatpush1.xpose.msra.mxu0 0.0
    %4371 = vmatprep.subr.mxu0 0.0
    %4372 = vmatpush1.xpose.msra.mxu0 0.0
    %4373 = vmatprep.subr.mxu0 0.0
    %4374 = vmatpush1.xpose.msra.mxu0 0.0
    %4375 = vmatprep.subr.mxu0 0.0
    %4376 = vmatpush1.xpose.msra.mxu0 0.0
    %4377 = vmatprep.subr.mxu0 0.0
    %4378 = vmatpush1.xpose.msra.mxu0 0.0
    %4379 = vmatprep.subr.mxu0 0.0
    %4380 = vmatpush1.xpose.msra.mxu0 0.0
    %4381 = vmatprep.subr.mxu0 0.0
    %4382 = vmatpush1.xpose.msra.mxu0 0.0
    %4383 = vmatprep.subr.mxu0 0.0
    %4384 = vmatpush1.xpose.msra.mxu0 0.0
    %4385 = vmatprep.subr.mxu0 0.0
    %4386 = vmatpush1.xpose.msra.mxu0 0.0
    %4387 = vmatprep.subr.mxu0 0.0
    %4388 = vmatpush1.xpose.msra.mxu0 0.0
    %4389 = vmatprep.subr.mxu0 0.0
    %4390 = vmatpush1.xpose.msra.mxu0 0.0
    %4391 = vmatprep.subr.mxu0 0.0
    %4392 = vmatpush1.xpose.msra.mxu0 0.0
    %4393 = vmatprep.mubr.f32.mxu0 0.0
    %v4394 = vand.u32 %v4319, 4294901760
    %v4395 = vsub.f32 %v4319, %v4394
    %v4396 = vand.u32 %v4395, 4294901760
    %v4397 = vsub.f32 %v4395, %v4396
    %v4398 = vand.u32 %v4397, 4294901760
    %4399 = vmatmul.mubr.f32.gmra.mrb[0].mxu0 %v4398
    %v4400 = vpop.f32.mrb[0].mxu0
    %v4401 = vadd.f32 0.0, %v4400
    %v4402 = vpop.f32.mrb[0].mxu0
    %4403 = vmatprep.mubr.f32.mxu0 0.0
    %v4404 = vand.u32 %v4321, 4294901760
    %v4405 = vsub.f32 %v4321, %v4404
    %v4406 = vand.u32 %v4405, 4294901760
    %v4407 = vsub.f32 %v4405, %v4406
    %v4408 = vand.u32 %v4407, 4294901760
    %4409 = vmatmul.mubr.f32.gmra.mrb[0].mxu0 %v4408
    %v4410 = vpop.f32.mrb[0].mxu0
    %v4411 = vadd.f32 0.0, %v4410
    %v4412 = vpop.f32.mrb[0].mxu0
    %4413 = vdwg.mxu0
    %4414 = vmatprep.subr.mxu0 0.0
    %v4415 = vand.u32 %v4323, 4294901760
    %v4416 = vsub.f32 %v4323, %v4415
    %v4417 = vand.u32 %v4416, 4294901760
    %v4418 = vsub.f32 %v4416, %v4417
    %v4419 = vand.u32 %v4418, 4294901760
    %4420 = vmatpush1.xpose.msra.mxu0 %v4419
    %4421 = vmatprep.subr.mxu0 0.0
    %v4422 = vand.u32 %v4325, 4294901760
    %v4423 = vsub.f32 %v4325, %v4422
    %v4424 = vand.u32 %v4423, 4294901760
    %v4425 = vsub.f32 %v4423, %v4424
    %v4426 = vand.u32 %v4425, 4294901760
    %4427 = vmatpush1.xpose.msra.mxu0 %v4426
    %4428 = vmatprep.subr.mxu0 0.0
    %4429 = vmatpush1.xpose.msra.mxu0 0.0
    %4430 = vmatprep.subr.mxu0 0.0
    %4431 = vmatpush1.xpose.msra.mxu0 0.0
    %4432 = vmatprep.subr.mxu0 0.0
    %4433 = vmatpush1.xpose.msra.mxu0 0.0
    %4434 = vmatprep.subr.mxu0 0.0
    %4435 = vmatpush1.xpose.msra.mxu0 0.0
    %4436 = vmatprep.subr.mxu0 0.0
    %4437 = vmatpush1.xpose.msra.mxu0 0.0
    %4438 = vmatprep.subr.mxu0 0.0
    %4439 = vmatpush1.xpose.msra.mxu0 0.0
    %4440 = vmatprep.subr.mxu0 0.0
    %4441 = vmatpush1.xpose.msra.mxu0 0.0
    %4442 = vmatprep.subr.mxu0 0.0
    %4443 = vmatpush1.xpose.msra.mxu0 0.0
    %4444 = vmatprep.subr.mxu0 0.0
    %4445 = vmatpush1.xpose.msra.mxu0 0.0
    %4446 = vmatprep.subr.mxu0 0.0
    %4447 = vmatpush1.xpose.msra.mxu0 0.0
    %4448 = vmatprep.subr.mxu0 0.0
    %4449 = vmatpush1.xpose.msra.mxu0 0.0
    %4450 = vmatprep.subr.mxu0 0.0
    %4451 = vmatpush1.xpose.msra.mxu0 0.0
    %4452 = vmatprep.subr.mxu0 0.0
    %4453 = vmatpush1.xpose.msra.mxu0 0.0
    %4454 = vmatprep.subr.mxu0 0.0
    %4455 = vmatpush1.xpose.msra.mxu0 0.0
    %4456 = vmatprep.subr.mxu0 0.0
    %4457 = vmatpush1.xpose.msra.mxu0 0.0
    %4458 = vmatprep.subr.mxu0 0.0
    %4459 = vmatpush1.xpose.msra.mxu0 0.0
    %4460 = vmatprep.subr.mxu0 0.0
    %4461 = vmatpush1.xpose.msra.mxu0 0.0
    %4462 = vmatprep.subr.mxu0 0.0
    %4463 = vmatpush1.xpose.msra.mxu0 0.0
    %4464 = vmatprep.subr.mxu0 0.0
    %4465 = vmatpush1.xpose.msra.mxu0 0.0
    %4466 = vmatprep.subr.mxu0 0.0
    %4467 = vmatpush1.xpose.msra.mxu0 0.0
    %4468 = vmatprep.subr.mxu0 0.0
    %4469 = vmatpush1.xpose.msra.mxu0 0.0
    %4470 = vmatprep.subr.mxu0 0.0
    %4471 = vmatpush1.xpose.msra.mxu0 0.0
    %4472 = vmatprep.subr.mxu0 0.0
    %4473 = vmatpush1.xpose.msra.mxu0 0.0
    %4474 = vmatprep.subr.mxu0 0.0
    %4475 = vmatpush1.xpose.msra.mxu0 0.0
    %4476 = vmatprep.subr.mxu0 0.0
    %4477 = vmatpush1.xpose.msra.mxu0 0.0
    %4478 = vmatprep.subr.mxu0 0.0
    %4479 = vmatpush1.xpose.msra.mxu0 0.0
    %4480 = vmatprep.subr.mxu0 0.0
    %4481 = vmatpush1.xpose.msra.mxu0 0.0
    %4482 = vmatprep.subr.mxu0 0.0
    %4483 = vmatpush1.xpose.msra.mxu0 0.0
    %4484 = vmatprep.subr.mxu0 0.0
    %4485 = vmatpush1.xpose.msra.mxu0 0.0
    %4486 = vmatprep.subr.mxu0 0.0
    %4487 = vmatpush1.xpose.msra.mxu0 0.0
    %4488 = vmatprep.mubr.f32.mxu0 0.0
    %v4489 = vand.u32 %v4319, 4294901760
    %4490 = vmatmul.mubr.f32.gmra.mrb[0].mxu0 %v4489
    %v4491 = vpop.f32.mrb[0].mxu0
    %v4492 = vadd.f32 %v4401, %v4491
    %v4493 = vpop.f32.mrb[0].mxu0
    %4494 = vmatprep.mubr.f32.mxu0 0.0
    %v4495 = vand.u32 %v4321, 4294901760
    %4496 = vmatmul.mubr.f32.gmra.mrb[0].mxu0 %v4495
    %v4497 = vpop.f32.mrb[0].mxu0
    %v4498 = vadd.f32 %v4411, %v4497
    %v4499 = vpop.f32.mrb[0].mxu0
    %4500 = vdwg.mxu0
    %4501 = vmatprep.subr.mxu0 0.0
    %v4502 = vand.u32 %v4323, 4294901760
    %v4503 = vsub.f32 %v4323, %v4502
    %4504 = vmatpush1.xpose.msra.mxu0 %v4503
    %4505 = vmatprep.subr.mxu0 0.0
    %v4506 = vand.u32 %v4325, 4294901760
    %v4507 = vsub.f32 %v4325, %v4506
    %4508 = vmatpush1.xpose.msra.mxu0 %v4507
    %4509 = vmatprep.subr.mxu0 0.0
    %4510 = vmatpush1.xpose.msra.mxu0 0.0
    %4511 = vmatprep.subr.mxu0 0.0
    %4512 = vmatpush1.xpose.msra.mxu0 0.0
    %4513 = vmatprep.subr.mxu0 0.0
    %4514 = vmatpush1.xpose.msra.mxu0 0.0
    %4515 = vmatprep.subr.mxu0 0.0
    %4516 = vmatpush1.xpose.msra.mxu0 0.0
    %4517 = vmatprep.subr.mxu0 0.0
    %4518 = vmatpush1.xpose.msra.mxu0 0.0
    %4519 = vmatprep.subr.mxu0 0.0
    %4520 = vmatpush1.xpose.msra.mxu0 0.0
    %4521 = vmatprep.subr.mxu0 0.0
    %4522 = vmatpush1.xpose.msra.mxu0 0.0
    %4523 = vmatprep.subr.mxu0 0.0
    %4524 = vmatpush1.xpose.msra.mxu0 0.0
    %4525 = vmatprep.subr.mxu0 0.0
    %4526 = vmatpush1.xpose.msra.mxu0 0.0
    %4527 = vmatprep.subr.mxu0 0.0
    %4528 = vmatpush1.xpose.msra.mxu0 0.0
    %4529 = vmatprep.subr.mxu0 0.0
    %4530 = vmatpush1.xpose.msra.mxu0 0.0
    %4531 = vmatprep.subr.mxu0 0.0
    %4532 = vmatpush1.xpose.msra.mxu0 0.0
    %4533 = vmatprep.subr.mxu0 0.0
    %4534 = vmatpush1.xpose.msra.mxu0 0.0
    %4535 = vmatprep.subr.mxu0 0.0
    %4536 = vmatpush1.xpose.msra.mxu0 0.0
    %4537 = vmatprep.subr.mxu0 0.0
    %4538 = vmatpush1.xpose.msra.mxu0 0.0
    %4539 = vmatprep.subr.mxu0 0.0
    %4540 = vmatpush1.xpose.msra.mxu0 0.0
    %4541 = vmatprep.subr.mxu0 0.0
    %4542 = vmatpush1.xpose.msra.mxu0 0.0
    %4543 = vmatprep.subr.mxu0 0.0
    %4544 = vmatpush1.xpose.msra.mxu0 0.0
    %4545 = vmatprep.subr.mxu0 0.0
    %4546 = vmatpush1.xpose.msra.mxu0 0.0
    %4547 = vmatprep.subr.mxu0 0.0
    %4548 = vmatpush1.xpose.msra.mxu0 0.0
    %4549 = vmatprep.subr.mxu0 0.0
    %4550 = vmatpush1.xpose.msra.mxu0 0.0
    %4551 = vmatprep.subr.mxu0 0.0
    %4552 = vmatpush1.xpose.msra.mxu0 0.0
    %4553 = vmatprep.subr.mxu0 0.0
    %4554 = vmatpush1.xpose.msra.mxu0 0.0
    %4555 = vmatprep.subr.mxu0 0.0
    %4556 = vmatpush1.xpose.msra.mxu0 0.0
    %4557 = vmatprep.subr.mxu0 0.0
    %4558 = vmatpush1.xpose.msra.mxu0 0.0
    %4559 = vmatprep.subr.mxu0 0.0
    %4560 = vmatpush1.xpose.msra.mxu0 0.0
    %4561 = vmatprep.subr.mxu0 0.0
    %4562 = vmatpush1.xpose.msra.mxu0 0.0
    %4563 = vmatprep.subr.mxu0 0.0
    %4564 = vmatpush1.xpose.msra.mxu0 0.0
    %4565 = vmatprep.subr.mxu0 0.0
    %4566 = vmatpush1.xpose.msra.mxu0 0.0
    %4567 = vmatprep.subr.mxu0 0.0
    %4568 = vmatpush1.xpose.msra.mxu0 0.0
    %4569 = vmatprep.mubr.f32.mxu0 0.0
    %v4570 = vand.u32 %v4319, 4294901760
    %v4571 = vsub.f32 %v4319, %v4570
    %4572 = vmatmul.mubr.f32.gmra.mrb[0].mxu0 %v4571
    %v4573 = vpop.f32.mrb[0].mxu0
    %v4574 = vadd.f32 %v4492, %v4573
    %v4575 = vpop.f32.mrb[0].mxu0
    %4576 = vmatprep.mubr.f32.mxu0 0.0
    %v4577 = vand.u32 %v4321, 4294901760
    %v4578 = vsub.f32 %v4321, %v4577
    %4579 = vmatmul.mubr.f32.gmra.mrb[0].mxu0 %v4578
    %v4580 = vpop.f32.mrb[0].mxu0
    %v4581 = vadd.f32 %v4498, %v4580
    %v4582 = vpop.f32.mrb[0].mxu0
    %4583 = vdwg.mxu0
    %4584 = vmatprep.subr.mxu0 0.0
    %v4585 = vand.u32 %v4323, 4294901760
    %4586 = vmatpush1.xpose.msra.mxu0 %v4585
    %4587 = vmatprep.subr.mxu0 0.0
    %v4588 = vand.u32 %v4325, 4294901760
    %4589 = vmatpush1.xpose.msra.mxu0 %v4588
    %4590 = vmatprep.subr.mxu0 0.0
    %4591 = vmatpush1.xpose.msra.mxu0 0.0
    %4592 = vmatprep.subr.mxu0 0.0
    %4593 = vmatpush1.xpose.msra.mxu0 0.0
    %4594 = vmatprep.subr.mxu0 0.0
    %4595 = vmatpush1.xpose.msra.mxu0 0.0
    %4596 = vmatprep.subr.mxu0 0.0
    %4597 = vmatpush1.xpose.msra.mxu0 0.0
    %4598 = vmatprep.subr.mxu0 0.0
    %4599 = vmatpush1.xpose.msra.mxu0 0.0
    %4600 = vmatprep.subr.mxu0 0.0
    %4601 = vmatpush1.xpose.msra.mxu0 0.0
    %4602 = vmatprep.subr.mxu0 0.0
    %4603 = vmatpush1.xpose.msra.mxu0 0.0
    %4604 = vmatprep.subr.mxu0 0.0
    %4605 = vmatpush1.xpose.msra.mxu0 0.0
    %4606 = vmatprep.subr.mxu0 0.0
    %4607 = vmatpush1.xpose.msra.mxu0 0.0
    %4608 = vmatprep.subr.mxu0 0.0
    %4609 = vmatpush1.xpose.msra.mxu0 0.0
    %4610 = vmatprep.subr.mxu0 0.0
    %4611 = vmatpush1.xpose.msra.mxu0 0.0
    %4612 = vmatprep.subr.mxu0 0.0
    %4613 = vmatpush1.xpose.msra.mxu0 0.0
    %4614 = vmatprep.subr.mxu0 0.0
    %4615 = vmatpush1.xpose.msra.mxu0 0.0
    %4616 = vmatprep.subr.mxu0 0.0
    %4617 = vmatpush1.xpose.msra.mxu0 0.0
    %4618 = vmatprep.subr.mxu0 0.0
    %4619 = vmatpush1.xpose.msra.mxu0 0.0
    %4620 = vmatprep.subr.mxu0 0.0
    %4621 = vmatpush1.xpose.msra.mxu0 0.0
    %4622 = vmatprep.subr.mxu0 0.0
    %4623 = vmatpush1.xpose.msra.mxu0 0.0
    %4624 = vmatprep.subr.mxu0 0.0
    %4625 = vmatpush1.xpose.msra.mxu0 0.0
    %4626 = vmatprep.subr.mxu0 0.0
    %4627 = vmatpush1.xpose.msra.mxu0 0.0
    %4628 = vmatprep.subr.mxu0 0.0
    %4629 = vmatpush1.xpose.msra.mxu0 0.0
    %4630 = vmatprep.subr.mxu0 0.0
    %4631 = vmatpush1.xpose.msra.mxu0 0.0
    %4632 = vmatprep.subr.mxu0 0.0
    %4633 = vmatpush1.xpose.msra.mxu0 0.0
    %4634 = vmatprep.subr.mxu0 0.0
    %4635 = vmatpush1.xpose.msra.mxu0 0.0
    %4636 = vmatprep.subr.mxu0 0.0
    %4637 = vmatpush1.xpose.msra.mxu0 0.0
    %4638 = vmatprep.subr.mxu0 0.0
    %4639 = vmatpush1.xpose.msra.mxu0 0.0
    %4640 = vmatprep.subr.mxu0 0.0
    %4641 = vmatpush1.xpose.msra.mxu0 0.0
    %4642 = vmatprep.subr.mxu0 0.0
    %4643 = vmatpush1.xpose.msra.mxu0 0.0
    %4644 = vmatprep.subr.mxu0 0.0
    %4645 = vmatpush1.xpose.msra.mxu0 0.0
    %4646 = vmatprep.subr.mxu0 0.0
    %4647 = vmatpush1.xpose.msra.mxu0 0.0
    %4648 = vmatprep.subr.mxu0 0.0
    %4649 = vmatpush1.xpose.msra.mxu0 0.0
    %4650 = vmatprep.mubr.f32.mxu0 0.0
    %v4651 = vand.u32 %v4319, 4294901760
    %v4652 = vsub.f32 %v4319, %v4651
    %v4653 = vand.u32 %v4652, 4294901760
    %4654 = vmatmul.mubr.f32.gmra.mrb[0].mxu0 %v4653
    %v4655 = vpop.f32.mrb[0].mxu0
    %v4656 = vadd.f32 %v4574, %v4655
    %v4657 = vpop.f32.mrb[0].mxu0
    %4658 = vmatprep.mubr.f32.mxu0 0.0
    %v4659 = vand.u32 %v4321, 4294901760
    %v4660 = vsub.f32 %v4321, %v4659
    %v4661 = vand.u32 %v4660, 4294901760
    %4662 = vmatmul.mubr.f32.gmra.mrb[0].mxu0 %v4661
    %v4663 = vpop.f32.mrb[0].mxu0
    %v4664 = vadd.f32 %v4581, %v4663
    %v4665 = vpop.f32.mrb[0].mxu0
    %4666 = vdwg.mxu0
    %4667 = vmatprep.subr.mxu0 0.0
    %v4668 = vand.u32 %v4323, 4294901760
    %v4669 = vsub.f32 %v4323, %v4668
    %v4670 = vand.u32 %v4669, 4294901760
    %4671 = vmatpush1.xpose.msra.mxu0 %v4670
    %4672 = vmatprep.subr.mxu0 0.0
    %v4673 = vand.u32 %v4325, 4294901760
    %v4674 = vsub.f32 %v4325, %v4673
    %v4675 = vand.u32 %v4674, 4294901760
    %4676 = vmatpush1.xpose.msra.mxu0 %v4675
    %4677 = vmatprep.subr.mxu0 0.0
    %4678 = vmatpush1.xpose.msra.mxu0 0.0
    %4679 = vmatprep.subr.mxu0 0.0
    %4680 = vmatpush1.xpose.msra.mxu0 0.0
    %4681 = vmatprep.subr.mxu0 0.0
    %4682 = vmatpush1.xpose.msra.mxu0 0.0
    %4683 = vmatprep.subr.mxu0 0.0
    %4684 = vmatpush1.xpose.msra.mxu0 0.0
    %4685 = vmatprep.subr.mxu0 0.0
    %4686 = vmatpush1.xpose.msra.mxu0 0.0
    %4687 = vmatprep.subr.mxu0 0.0
    %4688 = vmatpush1.xpose.msra.mxu0 0.0
    %4689 = vmatprep.subr.mxu0 0.0
    %4690 = vmatpush1.xpose.msra.mxu0 0.0
    %4691 = vmatprep.subr.mxu0 0.0
    %4692 = vmatpush1.xpose.msra.mxu0 0.0
    %4693 = vmatprep.subr.mxu0 0.0
    %4694 = vmatpush1.xpose.msra.mxu0 0.0
    %4695 = vmatprep.subr.mxu0 0.0
    %4696 = vmatpush1.xpose.msra.mxu0 0.0
    %4697 = vmatprep.subr.mxu0 0.0
    %4698 = vmatpush1.xpose.msra.mxu0 0.0
    %4699 = vmatprep.subr.mxu0 0.0
    %4700 = vmatpush1.xpose.msra.mxu0 0.0
    %4701 = vmatprep.subr.mxu0 0.0
    %4702 = vmatpush1.xpose.msra.mxu0 0.0
    %4703 = vmatprep.subr.mxu0 0.0
    %4704 = vmatpush1.xpose.msra.mxu0 0.0
    %4705 = vmatprep.subr.mxu0 0.0
    %4706 = vmatpush1.xpose.msra.mxu0 0.0
    %4707 = vmatprep.subr.mxu0 0.0
    %4708 = vmatpush1.xpose.msra.mxu0 0.0
    %4709 = vmatprep.subr.mxu0 0.0
    %4710 = vmatpush1.xpose.msra.mxu0 0.0
    %4711 = vmatprep.subr.mxu0 0.0
    %4712 = vmatpush1.xpose.msra.mxu0 0.0
    %4713 = vmatprep.subr.mxu0 0.0
    %4714 = vmatpush1.xpose.msra.mxu0 0.0
    %4715 = vmatprep.subr.mxu0 0.0
    %4716 = vmatpush1.xpose.msra.mxu0 0.0
    %4717 = vmatprep.subr.mxu0 0.0
    %4718 = vmatpush1.xpose.msra.mxu0 0.0
    %4719 = vmatprep.subr.mxu0 0.0
    %4720 = vmatpush1.xpose.msra.mxu0 0.0
    %4721 = vmatprep.subr.mxu0 0.0
    %4722 = vmatpush1.xpose.msra.mxu0 0.0
    %4723 = vmatprep.subr.mxu0 0.0
    %4724 = vmatpush1.xpose.msra.mxu0 0.0
    %4725 = vmatprep.subr.mxu0 0.0
    %4726 = vmatpush1.xpose.msra.mxu0 0.0
    %4727 = vmatprep.subr.mxu0 0.0
    %4728 = vmatpush1.xpose.msra.mxu0 0.0
    %4729 = vmatprep.subr.mxu0 0.0
    %4730 = vmatpush1.xpose.msra.mxu0 0.0
    %4731 = vmatprep.subr.mxu0 0.0
    %4732 = vmatpush1.xpose.msra.mxu0 0.0
    %4733 = vmatprep.subr.mxu0 0.0
    %4734 = vmatpush1.xpose.msra.mxu0 0.0
    %4735 = vmatprep.subr.mxu0 0.0
    %4736 = vmatpush1.xpose.msra.mxu0 0.0
    %4737 = vmatprep.mubr.f32.mxu0 0.0
    %v4738 = vand.u32 %v4319, 4294901760
    %4739 = vmatmul.mubr.f32.gmra.mrb[0].mxu0 %v4738
    %v4740 = vpop.f32.mrb[0].mxu0
    %v4741 = vadd.f32 %v4656, %v4740
    %v4742 = vpop.f32.mrb[0].mxu0
    %4743 = vmatprep.mubr.f32.mxu0 0.0
    %v4744 = vand.u32 %v4321, 4294901760
    %4745 = vmatmul.mubr.f32.gmra.mrb[0].mxu0 %v4744
    %v4746 = vpop.f32.mrb[0].mxu0
    %v4747 = vadd.f32 %v4664, %v4746
    %v4748 = vpop.f32.mrb[0].mxu0
    %4749 = vdwg.mxu0
    %4750 = vmatprep.subr.mxu0 0.0
    %v4751 = vand.u32 %v4323, 4294901760
    %4752 = vmatpush1.xpose.msra.mxu0 %v4751
    %4753 = vmatprep.subr.mxu0 0.0
    %v4754 = vand.u32 %v4325, 4294901760
    %4755 = vmatpush1.xpose.msra.mxu0 %v4754
    %4756 = vmatprep.subr.mxu0 0.0
    %4757 = vmatpush1.xpose.msra.mxu0 0.0
    %4758 = vmatprep.subr.mxu0 0.0
    %4759 = vmatpush1.xpose.msra.mxu0 0.0
    %4760 = vmatprep.subr.mxu0 0.0
    %4761 = vmatpush1.xpose.msra.mxu0 0.0
    %4762 = vmatprep.subr.mxu0 0.0
    %4763 = vmatpush1.xpose.msra.mxu0 0.0
    %4764 = vmatprep.subr.mxu0 0.0
    %4765 = vmatpush1.xpose.msra.mxu0 0.0
    %4766 = vmatprep.subr.mxu0 0.0
    %4767 = vmatpush1.xpose.msra.mxu0 0.0
    %4768 = vmatprep.subr.mxu0 0.0
    %4769 = vmatpush1.xpose.msra.mxu0 0.0
    %4770 = vmatprep.subr.mxu0 0.0
    %4771 = vmatpush1.xpose.msra.mxu0 0.0
    %4772 = vmatprep.subr.mxu0 0.0
    %4773 = vmatpush1.xpose.msra.mxu0 0.0
    %4774 = vmatprep.subr.mxu0 0.0
    %4775 = vmatpush1.xpose.msra.mxu0 0.0
    %4776 = vmatprep.subr.mxu0 0.0
    %4777 = vmatpush1.xpose.msra.mxu0 0.0
    %4778 = vmatprep.subr.mxu0 0.0
    %4779 = vmatpush1.xpose.msra.mxu0 0.0
    %4780 = vmatprep.subr.mxu0 0.0
    %4781 = vmatpush1.xpose.msra.mxu0 0.0
    %4782 = vmatprep.subr.mxu0 0.0
    %4783 = vmatpush1.xpose.msra.mxu0 0.0
    %4784 = vmatprep.subr.mxu0 0.0
    %4785 = vmatpush1.xpose.msra.mxu0 0.0
    %4786 = vmatprep.subr.mxu0 0.0
    %4787 = vmatpush1.xpose.msra.mxu0 0.0
    %4788 = vmatprep.subr.mxu0 0.0
    %4789 = vmatpush1.xpose.msra.mxu0 0.0
    %4790 = vmatprep.subr.mxu0 0.0
    %4791 = vmatpush1.xpose.msra.mxu0 0.0
    %4792 = vmatprep.subr.mxu0 0.0
    %4793 = vmatpush1.xpose.msra.mxu0 0.0
    %4794 = vmatprep.subr.mxu0 0.0
    %4795 = vmatpush1.xpose.msra.mxu0 0.0
    %4796 = vmatprep.subr.mxu0 0.0
    %4797 = vmatpush1.xpose.msra.mxu0 0.0
    %4798 = vmatprep.subr.mxu0 0.0
    %4799 = vmatpush1.xpose.msra.mxu0 0.0
    %4800 = vmatprep.subr.mxu0 0.0
    %4801 = vmatpush1.xpose.msra.mxu0 0.0
    %4802 = vmatprep.subr.mxu0 0.0
    %4803 = vmatpush1.xpose.msra.mxu0 0.0
    %4804 = vmatprep.subr.mxu0 0.0
    %4805 = vmatpush1.xpose.msra.mxu0 0.0
    %4806 = vmatprep.subr.mxu0 0.0
    %4807 = vmatpush1.xpose.msra.mxu0 0.0
    %4808 = vmatprep.subr.mxu0 0.0
    %4809 = vmatpush1.xpose.msra.mxu0 0.0
    %4810 = vmatprep.subr.mxu0 0.0
    %4811 = vmatpush1.xpose.msra.mxu0 0.0
    %4812 = vmatprep.subr.mxu0 0.0
    %4813 = vmatpush1.xpose.msra.mxu0 0.0
    %4814 = vmatprep.subr.mxu0 0.0
    %4815 = vmatpush1.xpose.msra.mxu0 0.0
    %4816 = vmatprep.mubr.f32.mxu0 0.0
    %v4817 = vand.u32 %v4319, 4294901760
    %4818 = vmatmul.mubr.f32.gmra.mrb[0].mxu0 %v4817
    %v4819 = vpop.f32.mrb[0].mxu0
    %v4820 = vadd.f32 %v4741, %v4819
    %v4821 = vpop.f32.mrb[0].mxu0
    %4822 = vmatprep.mubr.f32.mxu0 0.0
    %v4823 = vand.u32 %v4321, 4294901760
    %4824 = vmatmul.mubr.f32.gmra.mrb[0].mxu0 %v4823
    %v4825 = vpop.f32.mrb[0].mxu0
    %v4826 = vadd.f32 %v4747, %v4825
    %v4827 = vpop.f32.mrb[0].mxu0
    %4828 = vdwg.mxu0
    %v4829 = vmul.f32 %v1222, 0.35355338
    %v4830 = vmul.f32 %v1228, 0.35355338
    %v4831 = vmul.f32 %v1736, 0.35355338
    %v4832 = vmul.f32 %v1742, 0.35355338
    %v4833 = vmul.f32 %v2250, 0.35355338
    %v4834 = vmul.f32 %v2256, 0.35355338
    %v4835 = vmul.f32 %v2764, 0.35355338
    %v4836 = vmul.f32 %v2770, 0.35355338
    %v4837 = vmul.f32 %v3278, 0.35355338
    %v4838 = vmul.f32 %v3284, 0.35355338
    %v4839 = vmul.f32 %v3792, 0.35355338
    %v4840 = vmul.f32 %v3798, 0.35355338
    %v4841 = vmul.f32 %v4306, 0.35355338
    %v4842 = vmul.f32 %v4312, 0.35355338
    %v4843 = vmul.f32 %v4820, 0.35355338
    %v4844 = vmul.f32 %v4826, 0.35355338
    %vm4845 = vcmask 130048
    %v4846 = vsel %vm4845, %v4829, -inf
    %4847 = vmax.xlane.f32.xlu0 %v4846
    %v4848 = vpop.xlane.xlu0 %4847
    %v4849 = vsel %vm4845, %v4830, -inf
    %4850 = vmax.xlane.f32.xlu0 %v4849
    %v4851 = vpop.xlane.xlu0 %4850
    %v4852 = vsel %vm4845, %v4831, -inf
    %4853 = vmax.xlane.f32.xlu0 %v4852
    %v4854 = vpop.xlane.xlu0 %4853
    %v4855 = vsel %vm4845, %v4832, -inf
    %4856 = vmax.xlane.f32.xlu0 %v4855
    %v4857 = vpop.xlane.xlu0 %4856
    %v4858 = vsel %vm4845, %v4833, -inf
    %4859 = vmax.xlane.f32.xlu0 %v4858
    %v4860 = vpop.xlane.xlu0 %4859
    %v4861 = vsel %vm4845, %v4834, -inf
    %4862 = vmax.xlane.f32.xlu0 %v4861
    %v4863 = vpop.xlane.xlu0 %4862
    %v4864 = vsel %vm4845, %v4835, -inf
    %4865 = vmax.xlane.f32.xlu0 %v4864
    %v4866 = vpop.xlane.xlu0 %4865
    %v4867 = vsel %vm4845, %v4836, -inf
    %4868 = vmax.xlane.f32.xlu0 %v4867
    %v4869 = vpop.xlane.xlu0 %4868
    %v4870 = vsel %vm4845, %v4837, -inf
    %4871 = vmax.xlane.f32.xlu0 %v4870
    %v4872 = vpop.xlane.xlu0 %4871
    %v4873 = vsel %vm4845, %v4838, -inf
    %4874 = vmax.xlane.f32.xlu0 %v4873
    %v4875 = vpop.xlane.xlu0 %4874
    %v4876 = vsel %vm4845, %v4839, -inf
    %4877 = vmax.xlane.f32.xlu0 %v4876
    %v4878 = vpop.xlane.xlu0 %4877
    %v4879 = vsel %vm4845, %v4840, -inf
    %4880 = vmax.xlane.f32.xlu0 %v4879
    %v4881 = vpop.xlane.xlu0 %4880
    %v4882 = vsel %vm4845, %v4841, -inf
    %4883 = vmax.xlane.f32.xlu0 %v4882
    %v4884 = vpop.xlane.xlu0 %4883
    %v4885 = vsel %vm4845, %v4842, -inf
    %4886 = vmax.xlane.f32.xlu0 %v4885
    %v4887 = vpop.xlane.xlu0 %4886
    %v4888 = vsel %vm4845, %v4843, -inf
    %4889 = vmax.xlane.f32.xlu0 %v4888
    %v4890 = vpop.xlane.xlu0 %4889
    %v4891 = vsel %vm4845, %v4844, -inf
    %4892 = vmax.xlane.f32.xlu0 %v4891
    %v4893 = vpop.xlane.xlu0 %4892
    %v4894 = vsub.f32 %v4829, %v4848
    %v4895 = vsub.f32 %v4830, %v4851
    %v4896 = vsub.f32 %v4831, %v4854
    %v4897 = vsub.f32 %v4832, %v4857
    %v4898 = vsub.f32 %v4833, %v4860
    %v4899 = vsub.f32 %v4834, %v4863
    %v4900 = vsub.f32 %v4835, %v4866
    %v4901 = vsub.f32 %v4836, %v4869
    %v4902 = vsub.f32 %v4837, %v4872
    %v4903 = vsub.f32 %v4838, %v4875
    %v4904 = vsub.f32 %v4839, %v4878
    %v4905 = vsub.f32 %v4840, %v4881
    %v4906 = vsub.f32 %v4841, %v4884
    %v4907 = vsub.f32 %v4842, %v4887
    %v4908 = vsub.f32 %v4843, %v4890
    %v4909 = vsub.f32 %v4844, %v4893
    %v4910 = vmul.f32 %v4894, 1.442695
    %v4911 = vpow.pop %v4910
    %v4912 = vmul.f32 %v4895, 1.442695
    %v4913 = vpow.pop %v4912
    %v4914 = vmul.f32 %v4896, 1.442695
    %v4915 = vpow.pop %v4914
    %v4916 = vmul.f32 %v4897, 1.442695
    %v4917 = vpow.pop %v4916
    %v4918 = vmul.f32 %v4898, 1.442695
    %v4919 = vpow.pop %v4918
    %v4920 = vmul.f32 %v4899, 1.442695
    %v4921 = vpow.pop %v4920
    %v4922 = vmul.f32 %v4900, 1.442695
    %v4923 = vpow.pop %v4922
    %v4924 = vmul.f32 %v4901, 1.442695
    %v4925 = vpow.pop %v4924
    %v4926 = vmul.f32 %v4902, 1.442695
    %v4927 = vpow.pop %v4926
    %v4928 = vmul.f32 %v4903, 1.442695
    %v4929 = vpow.pop %v4928
    %v4930 = vmul.f32 %v4904, 1.442695
    %v4931 = vpow.pop %v4930
    %v4932 = vmul.f32 %v4905, 1.442695
    %v4933 = vpow.pop %v4932
    %v4934 = vmul.f32 %v4906, 1.442695
    %v4935 = vpow.pop %v4934
    %v4936 = vmul.f32 %v4907, 1.442695
    %v4937 = vpow.pop %v4936
    %v4938 = vmul.f32 %v4908, 1.442695
    %v4939 = vpow.pop %v4938
    %v4940 = vmul.f32 %v4909, 1.442695
    %v4941 = vpow.pop %v4940
    %v4942 = vsel %vm4845, %v4911, 0.0
    %4943 = vadd.xlane.f32.xlu0 %v4942
    %v4944 = vpop.xlane.xlu0 %4943
    %v4945 = vsel %vm4845, %v4913, 0.0
    %4946 = vadd.xlane.f32.xlu0 %v4945
    %v4947 = vpop.xlane.xlu0 %4946
    %v4948 = vsel %vm4845, %v4915, 0.0
    %4949 = vadd.xlane.f32.xlu0 %v4948
    %v4950 = vpop.xlane.xlu0 %4949
    %v4951 = vsel %vm4845, %v4917, 0.0
    %4952 = vadd.xlane.f32.xlu0 %v4951
    %v4953 = vpop.xlane.xlu0 %4952
    %v4954 = vsel %vm4845, %v4919, 0.0
    %4955 = vadd.xlane.f32.xlu0 %v4954
    %v4956 = vpop.xlane.xlu0 %4955
    %v4957 = vsel %vm4845, %v4921, 0.0
    %4958 = vadd.xlane.f32.xlu0 %v4957
    %v4959 = vpop.xlane.xlu0 %4958
    %v4960 = vsel %vm4845, %v4923, 0.0
    %4961 = vadd.xlane.f32.xlu0 %v4960
    %v4962 = vpop.xlane.xlu0 %4961
    %v4963 = vsel %vm4845, %v4925, 0.0
    %4964 = vadd.xlane.f32.xlu0 %v4963
    %v4965 = vpop.xlane.xlu0 %4964
    %v4966 = vsel %vm4845, %v4927, 0.0
    %4967 = vadd.xlane.f32.xlu0 %v4966
    %v4968 = vpop.xlane.xlu0 %4967
    %v4969 = vsel %vm4845, %v4929, 0.0
    %4970 = vadd.xlane.f32.xlu0 %v4969
    %v4971 = vpop.xlane.xlu0 %4970
    %v4972 = vsel %vm4845, %v4931, 0.0
    %4973 = vadd.xlane.f32.xlu0 %v4972
    %v4974 = vpop.xlane.xlu0 %4973
    %v4975 = vsel %vm4845, %v4933, 0.0
    %4976 = vadd.xlane.f32.xlu0 %v4975
    %v4977 = vpop.xlane.xlu0 %4976
    %v4978 = vsel %vm4845, %v4935, 0.0
    %4979 = vadd.xlane.f32.xlu0 %v4978
    %v4980 = vpop.xlane.xlu0 %4979
    %v4981 = vsel %vm4845, %v4937, 0.0
    %4982 = vadd.xlane.f32.xlu0 %v4981
    %v4983 = vpop.xlane.xlu0 %4982
    %v4984 = vsel %vm4845, %v4939, 0.0
    %4985 = vadd.xlane.f32.xlu0 %v4984
    %v4986 = vpop.xlane.xlu0 %4985
    %v4987 = vsel %vm4845, %v4941, 0.0
    %4988 = vadd.xlane.f32.xlu0 %v4987
    %v4989 = vpop.xlane.xlu0 %4988
    %v4990 = vrcp.pop %v4944
    %v4991 = vmul.f32 %v4911, %v4990
    %v4992 = vrcp.pop %v4947
    %v4993 = vmul.f32 %v4913, %v4992
    %v4994 = vrcp.pop %v4950
    %v4995 = vmul.f32 %v4915, %v4994
    %v4996 = vrcp.pop %v4953
    %v4997 = vmul.f32 %v4917, %v4996
    %v4998 = vrcp.pop %v4956
    %v4999 = vmul.f32 %v4919, %v4998
    %v5000 = vrcp.pop %v4959
    %v5001 = vmul.f32 %v4921, %v5000
    %v5002 = vrcp.pop %v4962
    %v5003 = vmul.f32 %v4923, %v5002
    %v5004 = vrcp.pop %v4965
    %v5005 = vmul.f32 %v4925, %v5004
    %v5006 = vrcp.pop %v4968
    %v5007 = vmul.f32 %v4927, %v5006
    %v5008 = vrcp.pop %v4971
    %v5009 = vmul.f32 %v4929, %v5008
    %v5010 = vrcp.pop %v4974
    %v5011 = vmul.f32 %v4931, %v5010
    %v5012 = vrcp.pop %v4977
    %v5013 = vmul.f32 %v4933, %v5012
    %v5014 = vrcp.pop %v4980
    %v5015 = vmul.f32 %v4935, %v5014
    %v5016 = vrcp.pop %v4983
    %v5017 = vmul.f32 %v4937, %v5016
    %v5018 = vrcp.pop %v4986
    %v5019 = vmul.f32 %v4939, %v5018
    %v5020 = vrcp.pop %v4989
    %v5021 = vmul.f32 %v4941, %v5020
    %5022 = vrot.lane.b32.xlu0 %v667, 64
    %v5023 = vpop.permute.xlu0 %5022
    %5024 = vrot.lane.b32.xlu0 %v673, 64
    %v5025 = vpop.permute.xlu0 %5024
    %v5029 = vsel %vm4845, %v4991, 0
    %v5032 = vsel %vm4845, %v4993, 0
    %5034 = vmatprep.subr.mxu0 0.0
    %v5035 = vand.u32 %v5023, 4294901760
    %5036 = vmatpush1.msra.mxu0 %v5035
    %5037 = vmatprep.subr.mxu0 0.0
    %v5038 = vand.u32 %v5025, 4294901760
    %5039 = vmatpush1.msra.mxu0 %v5038
    %5040 = vmatprep.subr.mxu0 0.0
    %5041 = vmatpush1.msra.mxu0 0.0
    %5042 = vmatprep.subr.mxu0 0.0
    %5043 = vmatpush1.msra.mxu0 0.0
    %5044 = vmatprep.subr.mxu0 0.0
    %5045 = vmatpush1.msra.mxu0 0.0
    %5046 = vmatprep.subr.mxu0 0.0
    %5047 = vmatpush1.msra.mxu0 0.0
    %5048 = vmatprep.subr.mxu0 0.0
    %5049 = vmatpush1.msra.mxu0 0.0
    %5050 = vmatprep.subr.mxu0 0.0
    %5051 = vmatpush1.msra.mxu0 0.0
    %5052 = vmatprep.subr.mxu0 0.0
    %5053 = vmatpush1.msra.mxu0 0.0
    %5054 = vmatprep.subr.mxu0 0.0
    %5055 = vmatpush1.msra.mxu0 0.0
    %5056 = vmatprep.subr.mxu0 0.0
    %5057 = vmatpush1.msra.mxu0 0.0
    %5058 = vmatprep.subr.mxu0 0.0
    %5059 = vmatpush1.msra.mxu0 0.0
    %5060 = vmatprep.subr.mxu0 0.0
    %5061 = vmatpush1.msra.mxu0 0.0
    %5062 = vmatprep.subr.mxu0 0.0
    %5063 = vmatpush1.msra.mxu0 0.0
    %5064 = vmatprep.subr.mxu0 0.0
    %5065 = vmatpush1.msra.mxu0 0.0
    %5066 = vmatprep.subr.mxu0 0.0
    %5067 = vmatpush1.msra.mxu0 0.0
    %5068 = vmatprep.subr.mxu0 0.0
    %5069 = vmatpush1.msra.mxu0 0.0
    %5070 = vmatprep.subr.mxu0 0.0
    %5071 = vmatpush1.msra.mxu0 0.0
    %5072 = vmatprep.subr.mxu0 0.0
    %5073 = vmatpush1.msra.mxu0 0.0
    %5074 = vmatprep.subr.mxu0 0.0
    %5075 = vmatpush1.msra.mxu0 0.0
    %5076 = vmatprep.subr.mxu0 0.0
    %5077 = vmatpush1.msra.mxu0 0.0
    %5078 = vmatprep.subr.mxu0 0.0
    %5079 = vmatpush1.msra.mxu0 0.0
    %5080 = vmatprep.subr.mxu0 0.0
    %5081 = vmatpush1.msra.mxu0 0.0
    %5082 = vmatprep.subr.mxu0 0.0
    %5083 = vmatpush1.msra.mxu0 0.0
    %5084 = vmatprep.subr.mxu0 0.0
    %5085 = vmatpush1.msra.mxu0 0.0
    %5086 = vmatprep.subr.mxu0 0.0
    %5087 = vmatpush1.msra.mxu0 0.0
    %5088 = vmatprep.subr.mxu0 0.0
    %5089 = vmatpush1.msra.mxu0 0.0
    %5090 = vmatprep.subr.mxu0 0.0
    %5091 = vmatpush1.msra.mxu0 0.0
    %5092 = vmatprep.subr.mxu0 0.0
    %5093 = vmatpush1.msra.mxu0 0.0
    %5094 = vmatprep.subr.mxu0 0.0
    %5095 = vmatpush1.msra.mxu0 0.0
    %5096 = vmatprep.subr.mxu0 0.0
    %5097 = vmatpush1.msra.mxu0 0.0
    %5098 = vmatprep.subr.mxu0 0.0
    %5099 = vmatpush1.msra.mxu0 0.0
    %5100 = vmatprep.mubr.f32.mxu0 0.0
    %v5101 = vand.u32 %v5029, 4294901760
    %v5102 = vsub.f32 %v5029, %v5101
    %v5103 = vand.u32 %v5102, 4294901760
    %v5104 = vsub.f32 %v5102, %v5103
    %v5105 = vand.u32 %v5104, 4294901760
    %5106 = vmatmul.mubr.f32.gmra.mrb[0].mxu0 %v5105
    %v5107 = vpop.f32.mrb[0].mxu0
    %v5108 = vadd.f32 0.0, %v5107
    %v5109 = vpop.f32.mrb[0].mxu0
    %5110 = vmatprep.mubr.f32.mxu0 0.0
    %v5111 = vand.u32 %v5032, 4294901760
    %v5112 = vsub.f32 %v5032, %v5111
    %v5113 = vand.u32 %v5112, 4294901760
    %v5114 = vsub.f32 %v5112, %v5113
    %v5115 = vand.u32 %v5114, 4294901760
    %5116 = vmatmul.mubr.f32.gmra.mrb[0].mxu0 %v5115
    %v5117 = vpop.f32.mrb[0].mxu0
    %v5118 = vadd.f32 0.0, %v5117
    %v5119 = vpop.f32.mrb[0].mxu0
    %5120 = vdwg.mxu0
    %5121 = vmatprep.subr.mxu0 0.0
    %v5122 = vand.u32 %v5023, 4294901760
    %v5123 = vsub.f32 %v5023, %v5122
    %v5124 = vand.u32 %v5123, 4294901760
    %v5125 = vsub.f32 %v5123, %v5124
    %v5126 = vand.u32 %v5125, 4294901760
    %5127 = vmatpush1.msra.mxu0 %v5126
    %5128 = vmatprep.subr.mxu0 0.0
    %v5129 = vand.u32 %v5025, 4294901760
    %v5130 = vsub.f32 %v5025, %v5129
    %v5131 = vand.u32 %v5130, 4294901760
    %v5132 = vsub.f32 %v5130, %v5131
    %v5133 = vand.u32 %v5132, 4294901760
    %5134 = vmatpush1.msra.mxu0 %v5133
    %5135 = vmatprep.subr.mxu0 0.0
    %5136 = vmatpush1.msra.mxu0 0.0
    %5137 = vmatprep.subr.mxu0 0.0
    %5138 = vmatpush1.msra.mxu0 0.0
    %5139 = vmatprep.subr.mxu0 0.0
    %5140 = vmatpush1.msra.mxu0 0.0
    %5141 = vmatprep.subr.mxu0 0.0
    %5142 = vmatpush1.msra.mxu0 0.0
    %5143 = vmatprep.subr.mxu0 0.0
    %5144 = vmatpush1.msra.mxu0 0.0
    %5145 = vmatprep.subr.mxu0 0.0
    %5146 = vmatpush1.msra.mxu0 0.0
    %5147 = vmatprep.subr.mxu0 0.0
    %5148 = vmatpush1.msra.mxu0 0.0
    %5149 = vmatprep.subr.mxu0 0.0
    %5150 = vmatpush1.msra.mxu0 0.0
    %5151 = vmatprep.subr.mxu0 0.0
    %5152 = vmatpush1.msra.mxu0 0.0
    %5153 = vmatprep.subr.mxu0 0.0
    %5154 = vmatpush1.msra.mxu0 0.0
    %5155 = vmatprep.subr.mxu0 0.0
    %5156 = vmatpush1.msra.mxu0 0.0
    %5157 = vmatprep.subr.mxu0 0.0
    %5158 = vmatpush1.msra.mxu0 0.0
    %5159 = vmatprep.subr.mxu0 0.0
    %5160 = vmatpush1.msra.mxu0 0.0
    %5161 = vmatprep.subr.mxu0 0.0
    %5162 = vmatpush1.msra.mxu0 0.0
    %5163 = vmatprep.subr.mxu0 0.0
    %5164 = vmatpush1.msra.mxu0 0.0
    %5165 = vmatprep.subr.mxu0 0.0
    %5166 = vmatpush1.msra.mxu0 0.0
    %5167 = vmatprep.subr.mxu0 0.0
    %5168 = vmatpush1.msra.mxu0 0.0
    %5169 = vmatprep.subr.mxu0 0.0
    %5170 = vmatpush1.msra.mxu0 0.0
    %5171 = vmatprep.subr.mxu0 0.0
    %5172 = vmatpush1.msra.mxu0 0.0
    %5173 = vmatprep.subr.mxu0 0.0
    %5174 = vmatpush1.msra.mxu0 0.0
    %5175 = vmatprep.subr.mxu0 0.0
    %5176 = vmatpush1.msra.mxu0 0.0
    %5177 = vmatprep.subr.mxu0 0.0
    %5178 = vmatpush1.msra.mxu0 0.0
    %5179 = vmatprep.subr.mxu0 0.0
    %5180 = vmatpush1.msra.mxu0 0.0
    %5181 = vmatprep.subr.mxu0 0.0
    %5182 = vmatpush1.msra.mxu0 0.0
    %5183 = vmatprep.subr.mxu0 0.0
    %5184 = vmatpush1.msra.mxu0 0.0
    %5185 = vmatprep.subr.mxu0 0.0
    %5186 = vmatpush1.msra.mxu0 0.0
    %5187 = vmatprep.subr.mxu0 0.0
    %5188 = vmatpush1.msra.mxu0 0.0
    %5189 = vmatprep.subr.mxu0 0.0
    %5190 = vmatpush1.msra.mxu0 0.0
    %5191 = vmatprep.subr.mxu0 0.0
    %5192 = vmatpush1.msra.mxu0 0.0
    %5193 = vmatprep.subr.mxu0 0.0
    %5194 = vmatpush1.msra.mxu0 0.0
    %5195 = vmatprep.mubr.f32.mxu0 0.0
    %v5196 = vand.u32 %v5029, 4294901760
    %5197 = vmatmul.mubr.f32.gmra.mrb[0].mxu0 %v5196
    %v5198 = vpop.f32.mrb[0].mxu0
    %v5199 = vadd.f32 %v5108, %v5198
    %v5200 = vpop.f32.mrb[0].mxu0
    %5201 = vmatprep.mubr.f32.mxu0 0.0
    %v5202 = vand.u32 %v5032, 4294901760
    %5203 = vmatmul.mubr.f32.gmra.mrb[0].mxu0 %v5202
    %v5204 = vpop.f32.mrb[0].mxu0
    %v5205 = vadd.f32 %v5118, %v5204
    %v5206 = vpop.f32.mrb[0].mxu0
    %5207 = vdwg.mxu0
    %5208 = vmatprep.subr.mxu0 0.0
    %v5209 = vand.u32 %v5023, 4294901760
    %v5210 = vsub.f32 %v5023, %v5209
    %5211 = vmatpush1.msra.mxu0 %v5210
    %5212 = vmatprep.subr.mxu0 0.0
    %v5213 = vand.u32 %v5025, 4294901760
    %v5214 = vsub.f32 %v5025, %v5213
    %5215 = vmatpush1.msra.mxu0 %v5214
    %5216 = vmatprep.subr.mxu0 0.0
    %5217 = vmatpush1.msra.mxu0 0.0
    %5218 = vmatprep.subr.mxu0 0.0
    %5219 = vmatpush1.msra.mxu0 0.0
    %5220 = vmatprep.subr.mxu0 0.0
    %5221 = vmatpush1.msra.mxu0 0.0
    %5222 = vmatprep.subr.mxu0 0.0
    %5223 = vmatpush1.msra.mxu0 0.0
    %5224 = vmatprep.subr.mxu0 0.0
    %5225 = vmatpush1.msra.mxu0 0.0
    %5226 = vmatprep.subr.mxu0 0.0
    %5227 = vmatpush1.msra.mxu0 0.0
    %5228 = vmatprep.subr.mxu0 0.0
    %5229 = vmatpush1.msra.mxu0 0.0
    %5230 = vmatprep.subr.mxu0 0.0
    %5231 = vmatpush1.msra.mxu0 0.0
    %5232 = vmatprep.subr.mxu0 0.0
    %5233 = vmatpush1.msra.mxu0 0.0
    %5234 = vmatprep.subr.mxu0 0.0
    %5235 = vmatpush1.msra.mxu0 0.0
    %5236 = vmatprep.subr.mxu0 0.0
    %5237 = vmatpush1.msra.mxu0 0.0
    %5238 = vmatprep.subr.mxu0 0.0
    %5239 = vmatpush1.msra.mxu0 0.0
    %5240 = vmatprep.subr.mxu0 0.0
    %5241 = vmatpush1.msra.mxu0 0.0
    %5242 = vmatprep.subr.mxu0 0.0
    %5243 = vmatpush1.msra.mxu0 0.0
    %5244 = vmatprep.subr.mxu0 0.0
    %5245 = vmatpush1.msra.mxu0 0.0
    %5246 = vmatprep.subr.mxu0 0.0
    %5247 = vmatpush1.msra.mxu0 0.0
    %5248 = vmatprep.subr.mxu0 0.0
    %5249 = vmatpush1.msra.mxu0 0.0
    %5250 = vmatprep.subr.mxu0 0.0
    %5251 = vmatpush1.msra.mxu0 0.0
    %5252 = vmatprep.subr.mxu0 0.0
    %5253 = vmatpush1.msra.mxu0 0.0
    %5254 = vmatprep.subr.mxu0 0.0
    %5255 = vmatpush1.msra.mxu0 0.0
    %5256 = vmatprep.subr.mxu0 0.0
    %5257 = vmatpush1.msra.mxu0 0.0
    %5258 = vmatprep.subr.mxu0 0.0
    %5259 = vmatpush1.msra.mxu0 0.0
    %5260 = vmatprep.subr.mxu0 0.0
    %5261 = vmatpush1.msra.mxu0 0.0
    %5262 = vmatprep.subr.mxu0 0.0
    %5263 = vmatpush1.msra.mxu0 0.0
    %5264 = vmatprep.subr.mxu0 0.0
    %5265 = vmatpush1.msra.mxu0 0.0
    %5266 = vmatprep.subr.mxu0 0.0
    %5267 = vmatpush1.msra.mxu0 0.0
    %5268 = vmatprep.subr.mxu0 0.0
    %5269 = vmatpush1.msra.mxu0 0.0
    %5270 = vmatprep.subr.mxu0 0.0
    %5271 = vmatpush1.msra.mxu0 0.0
    %5272 = vmatprep.subr.mxu0 0.0
    %5273 = vmatpush1.msra.mxu0 0.0
    %5274 = vmatprep.subr.mxu0 0.0
    %5275 = vmatpush1.msra.mxu0 0.0
    %5276 = vmatprep.mubr.f32.mxu0 0.0
    %v5277 = vand.u32 %v5029, 4294901760
    %v5278 = vsub.f32 %v5029, %v5277
    %5279 = vmatmul.mubr.f32.gmra.mrb[0].mxu0 %v5278
    %v5280 = vpop.f32.mrb[0].mxu0
    %v5281 = vadd.f32 %v5199, %v5280
    %v5282 = vpop.f32.mrb[0].mxu0
    %5283 = vmatprep.mubr.f32.mxu0 0.0
    %v5284 = vand.u32 %v5032, 4294901760
    %v5285 = vsub.f32 %v5032, %v5284
    %5286 = vmatmul.mubr.f32.gmra.mrb[0].mxu0 %v5285
    %v5287 = vpop.f32.mrb[0].mxu0
    %v5288 = vadd.f32 %v5205, %v5287
    %v5289 = vpop.f32.mrb[0].mxu0
    %5290 = vdwg.mxu0
    %5291 = vmatprep.subr.mxu0 0.0
    %v5292 = vand.u32 %v5023, 4294901760
    %5293 = vmatpush1.msra.mxu0 %v5292
    %5294 = vmatprep.subr.mxu0 0.0
    %v5295 = vand.u32 %v5025, 4294901760
    %5296 = vmatpush1.msra.mxu0 %v5295
    %5297 = vmatprep.subr.mxu0 0.0
    %5298 = vmatpush1.msra.mxu0 0.0
    %5299 = vmatprep.subr.mxu0 0.0
    %5300 = vmatpush1.msra.mxu0 0.0
    %5301 = vmatprep.subr.mxu0 0.0
    %5302 = vmatpush1.msra.mxu0 0.0
    %5303 = vmatprep.subr.mxu0 0.0
    %5304 = vmatpush1.msra.mxu0 0.0
    %5305 = vmatprep.subr.mxu0 0.0
    %5306 = vmatpush1.msra.mxu0 0.0
    %5307 = vmatprep.subr.mxu0 0.0
    %5308 = vmatpush1.msra.mxu0 0.0
    %5309 = vmatprep.subr.mxu0 0.0
    %5310 = vmatpush1.msra.mxu0 0.0
    %5311 = vmatprep.subr.mxu0 0.0
    %5312 = vmatpush1.msra.mxu0 0.0
    %5313 = vmatprep.subr.mxu0 0.0
    %5314 = vmatpush1.msra.mxu0 0.0
    %5315 = vmatprep.subr.mxu0 0.0
    %5316 = vmatpush1.msra.mxu0 0.0
    %5317 = vmatprep.subr.mxu0 0.0
    %5318 = vmatpush1.msra.mxu0 0.0
    %5319 = vmatprep.subr.mxu0 0.0
    %5320 = vmatpush1.msra.mxu0 0.0
    %5321 = vmatprep.subr.mxu0 0.0
    %5322 = vmatpush1.msra.mxu0 0.0
    %5323 = vmatprep.subr.mxu0 0.0
    %5324 = vmatpush1.msra.mxu0 0.0
    %5325 = vmatprep.subr.mxu0 0.0
    %5326 = vmatpush1.msra.mxu0 0.0
    %5327 = vmatprep.subr.mxu0 0.0
    %5328 = vmatpush1.msra.mxu0 0.0
    %5329 = vmatprep.subr.mxu0 0.0
    %5330 = vmatpush1.msra.mxu0 0.0
    %5331 = vmatprep.subr.mxu0 0.0
    %5332 = vmatpush1.msra.mxu0 0.0
    %5333 = vmatprep.subr.mxu0 0.0
    %5334 = vmatpush1.msra.mxu0 0.0
    %5335 = vmatprep.subr.mxu0 0.0
    %5336 = vmatpush1.msra.mxu0 0.0
    %5337 = vmatprep.subr.mxu0 0.0
    %5338 = vmatpush1.msra.mxu0 0.0
    %5339 = vmatprep.subr.mxu0 0.0
    %5340 = vmatpush1.msra.mxu0 0.0
    %5341 = vmatprep.subr.mxu0 0.0
    %5342 = vmatpush1.msra.mxu0 0.0
    %5343 = vmatprep.subr.mxu0 0.0
    %5344 = vmatpush1.msra.mxu0 0.0
    %5345 = vmatprep.subr.mxu0 0.0
    %5346 = vmatpush1.msra.mxu0 0.0
    %5347 = vmatprep.subr.mxu0 0.0
    %5348 = vmatpush1.msra.mxu0 0.0
    %5349 = vmatprep.subr.mxu0 0.0
    %5350 = vmatpush1.msra.mxu0 0.0
    %5351 = vmatprep.subr.mxu0 0.0
    %5352 = vmatpush1.msra.mxu0 0.0
    %5353 = vmatprep.subr.mxu0 0.0
    %5354 = vmatpush1.msra.mxu0 0.0
    %5355 = vmatprep.subr.mxu0 0.0
    %5356 = vmatpush1.msra.mxu0 0.0
    %5357 = vmatprep.mubr.f32.mxu0 0.0
    %v5358 = vand.u32 %v5029, 4294901760
    %v5359 = vsub.f32 %v5029, %v5358
    %v5360 = vand.u32 %v5359, 4294901760
    %5361 = vmatmul.mubr.f32.gmra.mrb[0].mxu0 %v5360
    %v5362 = vpop.f32.mrb[0].mxu0
    %v5363 = vadd.f32 %v5281, %v5362
    %v5364 = vpop.f32.mrb[0].mxu0
    %5365 = vmatprep.mubr.f32.mxu0 0.0
    %v5366 = vand.u32 %v5032, 4294901760
    %v5367 = vsub.f32 %v5032, %v5366
    %v5368 = vand.u32 %v5367, 4294901760
    %5369 = vmatmul.mubr.f32.gmra.mrb[0].mxu0 %v5368
    %v5370 = vpop.f32.mrb[0].mxu0
    %v5371 = vadd.f32 %v5288, %v5370
    %v5372 = vpop.f32.mrb[0].mxu0
    %5373 = vdwg.mxu0
    %5374 = vmatprep.subr.mxu0 0.0
    %v5375 = vand.u32 %v5023, 4294901760
    %v5376 = vsub.f32 %v5023, %v5375
    %v5377 = vand.u32 %v5376, 4294901760
    %5378 = vmatpush1.msra.mxu0 %v5377
    %5379 = vmatprep.subr.mxu0 0.0
    %v5380 = vand.u32 %v5025, 4294901760
    %v5381 = vsub.f32 %v5025, %v5380
    %v5382 = vand.u32 %v5381, 4294901760
    %5383 = vmatpush1.msra.mxu0 %v5382
    %5384 = vmatprep.subr.mxu0 0.0
    %5385 = vmatpush1.msra.mxu0 0.0
    %5386 = vmatprep.subr.mxu0 0.0
    %5387 = vmatpush1.msra.mxu0 0.0
    %5388 = vmatprep.subr.mxu0 0.0
    %5389 = vmatpush1.msra.mxu0 0.0
    %5390 = vmatprep.subr.mxu0 0.0
    %5391 = vmatpush1.msra.mxu0 0.0
    %5392 = vmatprep.subr.mxu0 0.0
    %5393 = vmatpush1.msra.mxu0 0.0
    %5394 = vmatprep.subr.mxu0 0.0
    %5395 = vmatpush1.msra.mxu0 0.0
    %5396 = vmatprep.subr.mxu0 0.0
    %5397 = vmatpush1.msra.mxu0 0.0
    %5398 = vmatprep.subr.mxu0 0.0
    %5399 = vmatpush1.msra.mxu0 0.0
    %5400 = vmatprep.subr.mxu0 0.0
    %5401 = vmatpush1.msra.mxu0 0.0
    %5402 = vmatprep.subr.mxu0 0.0
    %5403 = vmatpush1.msra.mxu0 0.0
    %5404 = vmatprep.subr.mxu0 0.0
    %5405 = vmatpush1.msra.mxu0 0.0
    %5406 = vmatprep.subr.mxu0 0.0
    %5407 = vmatpush1.msra.mxu0 0.0
    %5408 = vmatprep.subr.mxu0 0.0
    %5409 = vmatpush1.msra.mxu0 0.0
    %5410 = vmatprep.subr.mxu0 0.0
    %5411 = vmatpush1.msra.mxu0 0.0
    %5412 = vmatprep.subr.mxu0 0.0
    %5413 = vmatpush1.msra.mxu0 0.0
    %5414 = vmatprep.subr.mxu0 0.0
    %5415 = vmatpush1.msra.mxu0 0.0
    %5416 = vmatprep.subr.mxu0 0.0
    %5417 = vmatpush1.msra.mxu0 0.0
    %5418 = vmatprep.subr.mxu0 0.0
    %5419 = vmatpush1.msra.mxu0 0.0
    %5420 = vmatprep.subr.mxu0 0.0
    %5421 = vmatpush1.msra.mxu0 0.0
    %5422 = vmatprep.subr.mxu0 0.0
    %5423 = vmatpush1.msra.mxu0 0.0
    %5424 = vmatprep.subr.mxu0 0.0
    %5425 = vmatpush1.msra.mxu0 0.0
    %5426 = vmatprep.subr.mxu0 0.0
    %5427 = vmatpush1.msra.mxu0 0.0
    %5428 = vmatprep.subr.mxu0 0.0
    %5429 = vmatpush1.msra.mxu0 0.0
    %5430 = vmatprep.subr.mxu0 0.0
    %5431 = vmatpush1.msra.mxu0 0.0
    %5432 = vmatprep.subr.mxu0 0.0
    %5433 = vmatpush1.msra.mxu0 0.0
    %5434 = vmatprep.subr.mxu0 0.0
    %5435 = vmatpush1.msra.mxu0 0.0
    %5436 = vmatprep.subr.mxu0 0.0
    %5437 = vmatpush1.msra.mxu0 0.0
    %5438 = vmatprep.subr.mxu0 0.0
    %5439 = vmatpush1.msra.mxu0 0.0
    %5440 = vmatprep.subr.mxu0 0.0
    %5441 = vmatpush1.msra.mxu0 0.0
    %5442 = vmatprep.subr.mxu0 0.0
    %5443 = vmatpush1.msra.mxu0 0.0
    %5444 = vmatprep.mubr.f32.mxu0 0.0
    %v5445 = vand.u32 %v5029, 4294901760
    %5446 = vmatmul.mubr.f32.gmra.mrb[0].mxu0 %v5445
    %v5447 = vpop.f32.mrb[0].mxu0
    %v5448 = vadd.f32 %v5363, %v5447
    %v5449 = vpop.f32.mrb[0].mxu0
    %5450 = vmatprep.mubr.f32.mxu0 0.0
    %v5451 = vand.u32 %v5032, 4294901760
    %5452 = vmatmul.mubr.f32.gmra.mrb[0].mxu0 %v5451
    %v5453 = vpop.f32.mrb[0].mxu0
    %v5454 = vadd.f32 %v5371, %v5453
    %v5455 = vpop.f32.mrb[0].mxu0
    %5456 = vdwg.mxu0
    %5457 = vmatprep.subr.mxu0 0.0
    %v5458 = vand.u32 %v5023, 4294901760
    %5459 = vmatpush1.msra.mxu0 %v5458
    %5460 = vmatprep.subr.mxu0 0.0
    %v5461 = vand.u32 %v5025, 4294901760
    %5462 = vmatpush1.msra.mxu0 %v5461
    %5463 = vmatprep.subr.mxu0 0.0
    %5464 = vmatpush1.msra.mxu0 0.0
    %5465 = vmatprep.subr.mxu0 0.0
    %5466 = vmatpush1.msra.mxu0 0.0
    %5467 = vmatprep.subr.mxu0 0.0
    %5468 = vmatpush1.msra.mxu0 0.0
    %5469 = vmatprep.subr.mxu0 0.0
    %5470 = vmatpush1.msra.mxu0 0.0
    %5471 = vmatprep.subr.mxu0 0.0
    %5472 = vmatpush1.msra.mxu0 0.0
    %5473 = vmatprep.subr.mxu0 0.0
    %5474 = vmatpush1.msra.mxu0 0.0
    %5475 = vmatprep.subr.mxu0 0.0
    %5476 = vmatpush1.msra.mxu0 0.0
    %5477 = vmatprep.subr.mxu0 0.0
    %5478 = vmatpush1.msra.mxu0 0.0
    %5479 = vmatprep.subr.mxu0 0.0
    %5480 = vmatpush1.msra.mxu0 0.0
    %5481 = vmatprep.subr.mxu0 0.0
    %5482 = vmatpush1.msra.mxu0 0.0
    %5483 = vmatprep.subr.mxu0 0.0
    %5484 = vmatpush1.msra.mxu0 0.0
    %5485 = vmatprep.subr.mxu0 0.0
    %5486 = vmatpush1.msra.mxu0 0.0
    %5487 = vmatprep.subr.mxu0 0.0
    %5488 = vmatpush1.msra.mxu0 0.0
    %5489 = vmatprep.subr.mxu0 0.0
    %5490 = vmatpush1.msra.mxu0 0.0
    %5491 = vmatprep.subr.mxu0 0.0
    %5492 = vmatpush1.msra.mxu0 0.0
    %5493 = vmatprep.subr.mxu0 0.0
    %5494 = vmatpush1.msra.mxu0 0.0
    %5495 = vmatprep.subr.mxu0 0.0
    %5496 = vmatpush1.msra.mxu0 0.0
    %5497 = vmatprep.subr.mxu0 0.0
    %5498 = vmatpush1.msra.mxu0 0.0
    %5499 = vmatprep.subr.mxu0 0.0
    %5500 = vmatpush1.msra.mxu0 0.0
    %5501 = vmatprep.subr.mxu0 0.0
    %5502 = vmatpush1.msra.mxu0 0.0
    %5503 = vmatprep.subr.mxu0 0.0
    %5504 = vmatpush1.msra.mxu0 0.0
    %5505 = vmatprep.subr.mxu0 0.0
    %5506 = vmatpush1.msra.mxu0 0.0
    %5507 = vmatprep.subr.mxu0 0.0
    %5508 = vmatpush1.msra.mxu0 0.0
    %5509 = vmatprep.subr.mxu0 0.0
    %5510 = vmatpush1.msra.mxu0 0.0
    %5511 = vmatprep.subr.mxu0 0.0
    %5512 = vmatpush1.msra.mxu0 0.0
    %5513 = vmatprep.subr.mxu0 0.0
    %5514 = vmatpush1.msra.mxu0 0.0
    %5515 = vmatprep.subr.mxu0 0.0
    %5516 = vmatpush1.msra.mxu0 0.0
    %5517 = vmatprep.subr.mxu0 0.0
    %5518 = vmatpush1.msra.mxu0 0.0
    %5519 = vmatprep.subr.mxu0 0.0
    %5520 = vmatpush1.msra.mxu0 0.0
    %5521 = vmatprep.subr.mxu0 0.0
    %5522 = vmatpush1.msra.mxu0 0.0
    %5523 = vmatprep.mubr.f32.mxu0 0.0
    %v5524 = vand.u32 %v5029, 4294901760
    %5525 = vmatmul.mubr.f32.gmra.mrb[0].mxu0 %v5524
    %v5526 = vpop.f32.mrb[0].mxu0
    %v5527 = vadd.f32 %v5448, %v5526
    %v5528 = vpop.f32.mrb[0].mxu0
    %5529 = vmatprep.mubr.f32.mxu0 0.0
    %v5530 = vand.u32 %v5032, 4294901760
    %5531 = vmatmul.mubr.f32.gmra.mrb[0].mxu0 %v5530
    %v5532 = vpop.f32.mrb[0].mxu0
    %v5533 = vadd.f32 %v5454, %v5532
    %v5534 = vpop.f32.mrb[0].mxu0
    %5535 = vdwg.mxu0
    %5536 = vrot.lane.b32.xlu0 %v679, 64
    %v5537 = vpop.permute.xlu0 %5536
    %5538 = vrot.lane.b32.xlu0 %v685, 64
    %v5539 = vpop.permute.xlu0 %5538
    %v5543 = vsel %vm4845, %v4995, 0
    %v5546 = vsel %vm4845, %v4997, 0
    %5548 = vmatprep.subr.mxu0 0.0
    %v5549 = vand.u32 %v5537, 4294901760
    %5550 = vmatpush1.msra.mxu0 %v5549
    %5551 = vmatprep.subr.mxu0 0.0
    %v5552 = vand.u32 %v5539, 4294901760
    %5553 = vmatpush1.msra.mxu0 %v5552
    %5554 = vmatprep.subr.mxu0 0.0
    %5555 = vmatpush1.msra.mxu0 0.0
    %5556 = vmatprep.subr.mxu0 0.0
    %5557 = vmatpush1.msra.mxu0 0.0
    %5558 = vmatprep.subr.mxu0 0.0
    %5559 = vmatpush1.msra.mxu0 0.0
    %5560 = vmatprep.subr.mxu0 0.0
    %5561 = vmatpush1.msra.mxu0 0.0
    %5562 = vmatprep.subr.mxu0 0.0
    %5563 = vmatpush1.msra.mxu0 0.0
    %5564 = vmatprep.subr.mxu0 0.0
    %5565 = vmatpush1.msra.mxu0 0.0
    %5566 = vmatprep.subr.mxu0 0.0
    %5567 = vmatpush1.msra.mxu0 0.0
    %5568 = vmatprep.subr.mxu0 0.0
    %5569 = vmatpush1.msra.mxu0 0.0
    %5570 = vmatprep.subr.mxu0 0.0
    %5571 = vmatpush1.msra.mxu0 0.0
    %5572 = vmatprep.subr.mxu0 0.0
    %5573 = vmatpush1.msra.mxu0 0.0
    %5574 = vmatprep.subr.mxu0 0.0
    %5575 = vmatpush1.msra.mxu0 0.0
    %5576 = vmatprep.subr.mxu0 0.0
    %5577 = vmatpush1.msra.mxu0 0.0
    %5578 = vmatprep.subr.mxu0 0.0
    %5579 = vmatpush1.msra.mxu0 0.0
    %5580 = vmatprep.subr.mxu0 0.0
    %5581 = vmatpush1.msra.mxu0 0.0
    %5582 = vmatprep.subr.mxu0 0.0
    %5583 = vmatpush1.msra.mxu0 0.0
    %5584 = vmatprep.subr.mxu0 0.0
    %5585 = vmatpush1.msra.mxu0 0.0
    %5586 = vmatprep.subr.mxu0 0.0
    %5587 = vmatpush1.msra.mxu0 0.0
    %5588 = vmatprep.subr.mxu0 0.0
    %5589 = vmatpush1.msra.mxu0 0.0
    %5590 = vmatprep.subr.mxu0 0.0
    %5591 = vmatpush1.msra.mxu0 0.0
    %5592 = vmatprep.subr.mxu0 0.0
    %5593 = vmatpush1.msra.mxu0 0.0
    %5594 = vmatprep.subr.mxu0 0.0
    %5595 = vmatpush1.msra.mxu0 0.0
    %5596 = vmatprep.subr.mxu0 0.0
    %5597 = vmatpush1.msra.mxu0 0.0
    %5598 = vmatprep.subr.mxu0 0.0
    %5599 = vmatpush1.msra.mxu0 0.0
    %5600 = vmatprep.subr.mxu0 0.0
    %5601 = vmatpush1.msra.mxu0 0.0
    %5602 = vmatprep.subr.mxu0 0.0
    %5603 = vmatpush1.msra.mxu0 0.0
    %5604 = vmatprep.subr.mxu0 0.0
    %5605 = vmatpush1.msra.mxu0 0.0
    %5606 = vmatprep.subr.mxu0 0.0
    %5607 = vmatpush1.msra.mxu0 0.0
    %5608 = vmatprep.subr.mxu0 0.0
    %5609 = vmatpush1.msra.mxu0 0.0
    %5610 = vmatprep.subr.mxu0 0.0
    %5611 = vmatpush1.msra.mxu0 0.0
    %5612 = vmatprep.subr.mxu0 0.0
    %5613 = vmatpush1.msra.mxu0 0.0
    %5614 = vmatprep.mubr.f32.mxu0 0.0
    %v5615 = vand.u32 %v5543, 4294901760
    %v5616 = vsub.f32 %v5543, %v5615
    %v5617 = vand.u32 %v5616, 4294901760
    %v5618 = vsub.f32 %v5616, %v5617
    %v5619 = vand.u32 %v5618, 4294901760
    %5620 = vmatmul.mubr.f32.gmra.mrb[0].mxu0 %v5619
    %v5621 = vpop.f32.mrb[0].mxu0
    %v5622 = vadd.f32 0.0, %v5621
    %v5623 = vpop.f32.mrb[0].mxu0
    %5624 = vmatprep.mubr.f32.mxu0 0.0
    %v5625 = vand.u32 %v5546, 4294901760
    %v5626 = vsub.f32 %v5546, %v5625
    %v5627 = vand.u32 %v5626, 4294901760
    %v5628 = vsub.f32 %v5626, %v5627
    %v5629 = vand.u32 %v5628, 4294901760
    %5630 = vmatmul.mubr.f32.gmra.mrb[0].mxu0 %v5629
    %v5631 = vpop.f32.mrb[0].mxu0
    %v5632 = vadd.f32 0.0, %v5631
    %v5633 = vpop.f32.mrb[0].mxu0
    %5634 = vdwg.mxu0
    %5635 = vmatprep.subr.mxu0 0.0
    %v5636 = vand.u32 %v5537, 4294901760
    %v5637 = vsub.f32 %v5537, %v5636
    %v5638 = vand.u32 %v5637, 4294901760
    %v5639 = vsub.f32 %v5637, %v5638
    %v5640 = vand.u32 %v5639, 4294901760
    %5641 = vmatpush1.msra.mxu0 %v5640
    %5642 = vmatprep.subr.mxu0 0.0
    %v5643 = vand.u32 %v5539, 4294901760
    %v5644 = vsub.f32 %v5539, %v5643
    %v5645 = vand.u32 %v5644, 4294901760
    %v5646 = vsub.f32 %v5644, %v5645
    %v5647 = vand.u32 %v5646, 4294901760
    %5648 = vmatpush1.msra.mxu0 %v5647
    %5649 = vmatprep.subr.mxu0 0.0
    %5650 = vmatpush1.msra.mxu0 0.0
    %5651 = vmatprep.subr.mxu0 0.0
    %5652 = vmatpush1.msra.mxu0 0.0
    %5653 = vmatprep.subr.mxu0 0.0
    %5654 = vmatpush1.msra.mxu0 0.0
    %5655 = vmatprep.subr.mxu0 0.0
    %5656 = vmatpush1.msra.mxu0 0.0
    %5657 = vmatprep.subr.mxu0 0.0
    %5658 = vmatpush1.msra.mxu0 0.0
    %5659 = vmatprep.subr.mxu0 0.0
    %5660 = vmatpush1.msra.mxu0 0.0
    %5661 = vmatprep.subr.mxu0 0.0
    %5662 = vmatpush1.msra.mxu0 0.0
    %5663 = vmatprep.subr.mxu0 0.0
    %5664 = vmatpush1.msra.mxu0 0.0
    %5665 = vmatprep.subr.mxu0 0.0
    %5666 = vmatpush1.msra.mxu0 0.0
    %5667 = vmatprep.subr.mxu0 0.0
    %5668 = vmatpush1.msra.mxu0 0.0
    %5669 = vmatprep.subr.mxu0 0.0
    %5670 = vmatpush1.msra.mxu0 0.0
    %5671 = vmatprep.subr.mxu0 0.0
    %5672 = vmatpush1.msra.mxu0 0.0
    %5673 = vmatprep.subr.mxu0 0.0
    %5674 = vmatpush1.msra.mxu0 0.0
    %5675 = vmatprep.subr.mxu0 0.0
    %5676 = vmatpush1.msra.mxu0 0.0
    %5677 = vmatprep.subr.mxu0 0.0
    %5678 = vmatpush1.msra.mxu0 0.0
    %5679 = vmatprep.subr.mxu0 0.0
    %5680 = vmatpush1.msra.mxu0 0.0
    %5681 = vmatprep.subr.mxu0 0.0
    %5682 = vmatpush1.msra.mxu0 0.0
    %5683 = vmatprep.subr.mxu0 0.0
    %5684 = vmatpush1.msra.mxu0 0.0
    %5685 = vmatprep.subr.mxu0 0.0
    %5686 = vmatpush1.msra.mxu0 0.0
    %5687 = vmatprep.subr.mxu0 0.0
    %5688 = vmatpush1.msra.mxu0 0.0
    %5689 = vmatprep.subr.mxu0 0.0
    %5690 = vmatpush1.msra.mxu0 0.0
    %5691 = vmatprep.subr.mxu0 0.0
    %5692 = vmatpush1.msra.mxu0 0.0
    %5693 = vmatprep.subr.mxu0 0.0
    %5694 = vmatpush1.msra.mxu0 0.0
    %5695 = vmatprep.subr.mxu0 0.0
    %5696 = vmatpush1.msra.mxu0 0.0
    %5697 = vmatprep.subr.mxu0 0.0
    %5698 = vmatpush1.msra.mxu0 0.0
    %5699 = vmatprep.subr.mxu0 0.0
    %5700 = vmatpush1.msra.mxu0 0.0
    %5701 = vmatprep.subr.mxu0 0.0
    %5702 = vmatpush1.msra.mxu0 0.0
    %5703 = vmatprep.subr.mxu0 0.0
    %5704 = vmatpush1.msra.mxu0 0.0
    %5705 = vmatprep.subr.mxu0 0.0
    %5706 = vmatpush1.msra.mxu0 0.0
    %5707 = vmatprep.subr.mxu0 0.0
    %5708 = vmatpush1.msra.mxu0 0.0
    %5709 = vmatprep.mubr.f32.mxu0 0.0
    %v5710 = vand.u32 %v5543, 4294901760
    %5711 = vmatmul.mubr.f32.gmra.mrb[0].mxu0 %v5710
    %v5712 = vpop.f32.mrb[0].mxu0
    %v5713 = vadd.f32 %v5622, %v5712
    %v5714 = vpop.f32.mrb[0].mxu0
    %5715 = vmatprep.mubr.f32.mxu0 0.0
    %v5716 = vand.u32 %v5546, 4294901760
    %5717 = vmatmul.mubr.f32.gmra.mrb[0].mxu0 %v5716
    %v5718 = vpop.f32.mrb[0].mxu0
    %v5719 = vadd.f32 %v5632, %v5718
    %v5720 = vpop.f32.mrb[0].mxu0
    %5721 = vdwg.mxu0
    %5722 = vmatprep.subr.mxu0 0.0
    %v5723 = vand.u32 %v5537, 4294901760
    %v5724 = vsub.f32 %v5537, %v5723
    %5725 = vmatpush1.msra.mxu0 %v5724
    %5726 = vmatprep.subr.mxu0 0.0
    %v5727 = vand.u32 %v5539, 4294901760
    %v5728 = vsub.f32 %v5539, %v5727
    %5729 = vmatpush1.msra.mxu0 %v5728
    %5730 = vmatprep.subr.mxu0 0.0
    %5731 = vmatpush1.msra.mxu0 0.0
    %5732 = vmatprep.subr.mxu0 0.0
    %5733 = vmatpush1.msra.mxu0 0.0
    %5734 = vmatprep.subr.mxu0 0.0
    %5735 = vmatpush1.msra.mxu0 0.0
    %5736 = vmatprep.subr.mxu0 0.0
    %5737 = vmatpush1.msra.mxu0 0.0
    %5738 = vmatprep.subr.mxu0 0.0
    %5739 = vmatpush1.msra.mxu0 0.0
    %5740 = vmatprep.subr.mxu0 0.0
    %5741 = vmatpush1.msra.mxu0 0.0
    %5742 = vmatprep.subr.mxu0 0.0
    %5743 = vmatpush1.msra.mxu0 0.0
    %5744 = vmatprep.subr.mxu0 0.0
    %5745 = vmatpush1.msra.mxu0 0.0
    %5746 = vmatprep.subr.mxu0 0.0
    %5747 = vmatpush1.msra.mxu0 0.0
    %5748 = vmatprep.subr.mxu0 0.0
    %5749 = vmatpush1.msra.mxu0 0.0
    %5750 = vmatprep.subr.mxu0 0.0
    %5751 = vmatpush1.msra.mxu0 0.0
    %5752 = vmatprep.subr.mxu0 0.0
    %5753 = vmatpush1.msra.mxu0 0.0
    %5754 = vmatprep.subr.mxu0 0.0
    %5755 = vmatpush1.msra.mxu0 0.0
    %5756 = vmatprep.subr.mxu0 0.0
    %5757 = vmatpush1.msra.mxu0 0.0
    %5758 = vmatprep.subr.mxu0 0.0
    %5759 = vmatpush1.msra.mxu0 0.0
    %5760 = vmatprep.subr.mxu0 0.0
    %5761 = vmatpush1.msra.mxu0 0.0
    %5762 = vmatprep.subr.mxu0 0.0
    %5763 = vmatpush1.msra.mxu0 0.0
    %5764 = vmatprep.subr.mxu0 0.0
    %5765 = vmatpush1.msra.mxu0 0.0
    %5766 = vmatprep.subr.mxu0 0.0
    %5767 = vmatpush1.msra.mxu0 0.0
    %5768 = vmatprep.subr.mxu0 0.0
    %5769 = vmatpush1.msra.mxu0 0.0
    %5770 = vmatprep.subr.mxu0 0.0
    %5771 = vmatpush1.msra.mxu0 0.0
    %5772 = vmatprep.subr.mxu0 0.0
    %5773 = vmatpush1.msra.mxu0 0.0
    %5774 = vmatprep.subr.mxu0 0.0
    %5775 = vmatpush1.msra.mxu0 0.0
    %5776 = vmatprep.subr.mxu0 0.0
    %5777 = vmatpush1.msra.mxu0 0.0
    %5778 = vmatprep.subr.mxu0 0.0
    %5779 = vmatpush1.msra.mxu0 0.0
    %5780 = vmatprep.subr.mxu0 0.0
    %5781 = vmatpush1.msra.mxu0 0.0
    %5782 = vmatprep.subr.mxu0 0.0
    %5783 = vmatpush1.msra.mxu0 0.0
    %5784 = vmatprep.subr.mxu0 0.0
    %5785 = vmatpush1.msra.mxu0 0.0
    %5786 = vmatprep.subr.mxu0 0.0
    %5787 = vmatpush1.msra.mxu0 0.0
    %5788 = vmatprep.subr.mxu0 0.0
    %5789 = vmatpush1.msra.mxu0 0.0
    %5790 = vmatprep.mubr.f32.mxu0 0.0
    %v5791 = vand.u32 %v5543, 4294901760
    %v5792 = vsub.f32 %v5543, %v5791
    %5793 = vmatmul.mubr.f32.gmra.mrb[0].mxu0 %v5792
    %v5794 = vpop.f32.mrb[0].mxu0
    %v5795 = vadd.f32 %v5713, %v5794
    %v5796 = vpop.f32.mrb[0].mxu0
    %5797 = vmatprep.mubr.f32.mxu0 0.0
    %v5798 = vand.u32 %v5546, 4294901760
    %v5799 = vsub.f32 %v5546, %v5798
    %5800 = vmatmul.mubr.f32.gmra.mrb[0].mxu0 %v5799
    %v5801 = vpop.f32.mrb[0].mxu0
    %v5802 = vadd.f32 %v5719, %v5801
    %v5803 = vpop.f32.mrb[0].mxu0
    %5804 = vdwg.mxu0
    %5805 = vmatprep.subr.mxu0 0.0
    %v5806 = vand.u32 %v5537, 4294901760
    %5807 = vmatpush1.msra.mxu0 %v5806
    %5808 = vmatprep.subr.mxu0 0.0
    %v5809 = vand.u32 %v5539, 4294901760
    %5810 = vmatpush1.msra.mxu0 %v5809
    %5811 = vmatprep.subr.mxu0 0.0
    %5812 = vmatpush1.msra.mxu0 0.0
    %5813 = vmatprep.subr.mxu0 0.0
    %5814 = vmatpush1.msra.mxu0 0.0
    %5815 = vmatprep.subr.mxu0 0.0
    %5816 = vmatpush1.msra.mxu0 0.0
    %5817 = vmatprep.subr.mxu0 0.0
    %5818 = vmatpush1.msra.mxu0 0.0
    %5819 = vmatprep.subr.mxu0 0.0
    %5820 = vmatpush1.msra.mxu0 0.0
    %5821 = vmatprep.subr.mxu0 0.0
    %5822 = vmatpush1.msra.mxu0 0.0
    %5823 = vmatprep.subr.mxu0 0.0
    %5824 = vmatpush1.msra.mxu0 0.0
    %5825 = vmatprep.subr.mxu0 0.0
    %5826 = vmatpush1.msra.mxu0 0.0
    %5827 = vmatprep.subr.mxu0 0.0
    %5828 = vmatpush1.msra.mxu0 0.0
    %5829 = vmatprep.subr.mxu0 0.0
    %5830 = vmatpush1.msra.mxu0 0.0
    %5831 = vmatprep.subr.mxu0 0.0
    %5832 = vmatpush1.msra.mxu0 0.0
    %5833 = vmatprep.subr.mxu0 0.0
    %5834 = vmatpush1.msra.mxu0 0.0
    %5835 = vmatprep.subr.mxu0 0.0
    %5836 = vmatpush1.msra.mxu0 0.0
    %5837 = vmatprep.subr.mxu0 0.0
    %5838 = vmatpush1.msra.mxu0 0.0
    %5839 = vmatprep.subr.mxu0 0.0
    %5840 = vmatpush1.msra.mxu0 0.0
    %5841 = vmatprep.subr.mxu0 0.0
    %5842 = vmatpush1.msra.mxu0 0.0
    %5843 = vmatprep.subr.mxu0 0.0
    %5844 = vmatpush1.msra.mxu0 0.0
    %5845 = vmatprep.subr.mxu0 0.0
    %5846 = vmatpush1.msra.mxu0 0.0
    %5847 = vmatprep.subr.mxu0 0.0
    %5848 = vmatpush1.msra.mxu0 0.0
    %5849 = vmatprep.subr.mxu0 0.0
    %5850 = vmatpush1.msra.mxu0 0.0
    %5851 = vmatprep.subr.mxu0 0.0
    %5852 = vmatpush1.msra.mxu0 0.0
    %5853 = vmatprep.subr.mxu0 0.0
    %5854 = vmatpush1.msra.mxu0 0.0
    %5855 = vmatprep.subr.mxu0 0.0
    %5856 = vmatpush1.msra.mxu0 0.0
    %5857 = vmatprep.subr.mxu0 0.0
    %5858 = vmatpush1.msra.mxu0 0.0
    %5859 = vmatprep.subr.mxu0 0.0
    %5860 = vmatpush1.msra.mxu0 0.0
    %5861 = vmatprep.subr.mxu0 0.0
    %5862 = vmatpush1.msra.mxu0 0.0
    %5863 = vmatprep.subr.mxu0 0.0
    %5864 = vmatpush1.msra.mxu0 0.0
    %5865 = vmatprep.subr.mxu0 0.0
    %5866 = vmatpush1.msra.mxu0 0.0
    %5867 = vmatprep.subr.mxu0 0.0
    %5868 = vmatpush1.msra.mxu0 0.0
    %5869 = vmatprep.subr.mxu0 0.0
    %5870 = vmatpush1.msra.mxu0 0.0
    %5871 = vmatprep.mubr.f32.mxu0 0.0
    %v5872 = vand.u32 %v5543, 4294901760
    %v5873 = vsub.f32 %v5543, %v5872
    %v5874 = vand.u32 %v5873, 4294901760
    %5875 = vmatmul.mubr.f32.gmra.mrb[0].mxu0 %v5874
    %v5876 = vpop.f32.mrb[0].mxu0
    %v5877 = vadd.f32 %v5795, %v5876
    %v5878 = vpop.f32.mrb[0].mxu0
    %5879 = vmatprep.mubr.f32.mxu0 0.0
    %v5880 = vand.u32 %v5546, 4294901760
    %v5881 = vsub.f32 %v5546, %v5880
    %v5882 = vand.u32 %v5881, 4294901760
    %5883 = vmatmul.mubr.f32.gmra.mrb[0].mxu0 %v5882
    %v5884 = vpop.f32.mrb[0].mxu0
    %v5885 = vadd.f32 %v5802, %v5884
    %v5886 = vpop.f32.mrb[0].mxu0
    %5887 = vdwg.mxu0
    %5888 = vmatprep.subr.mxu0 0.0
    %v5889 = vand.u32 %v5537, 4294901760
    %v5890 = vsub.f32 %v5537, %v5889
    %v5891 = vand.u32 %v5890, 4294901760
    %5892 = vmatpush1.msra.mxu0 %v5891
    %5893 = vmatprep.subr.mxu0 0.0
    %v5894 = vand.u32 %v5539, 4294901760
    %v5895 = vsub.f32 %v5539, %v5894
    %v5896 = vand.u32 %v5895, 4294901760
    %5897 = vmatpush1.msra.mxu0 %v5896
    %5898 = vmatprep.subr.mxu0 0.0
    %5899 = vmatpush1.msra.mxu0 0.0
    %5900 = vmatprep.subr.mxu0 0.0
    %5901 = vmatpush1.msra.mxu0 0.0
    %5902 = vmatprep.subr.mxu0 0.0
    %5903 = vmatpush1.msra.mxu0 0.0
    %5904 = vmatprep.subr.mxu0 0.0
    %5905 = vmatpush1.msra.mxu0 0.0
    %5906 = vmatprep.subr.mxu0 0.0
    %5907 = vmatpush1.msra.mxu0 0.0
    %5908 = vmatprep.subr.mxu0 0.0
    %5909 = vmatpush1.msra.mxu0 0.0
    %5910 = vmatprep.subr.mxu0 0.0
    %5911 = vmatpush1.msra.mxu0 0.0
    %5912 = vmatprep.subr.mxu0 0.0
    %5913 = vmatpush1.msra.mxu0 0.0
    %5914 = vmatprep.subr.mxu0 0.0
    %5915 = vmatpush1.msra.mxu0 0.0
    %5916 = vmatprep.subr.mxu0 0.0
    %5917 = vmatpush1.msra.mxu0 0.0
    %5918 = vmatprep.subr.mxu0 0.0
    %5919 = vmatpush1.msra.mxu0 0.0
    %5920 = vmatprep.subr.mxu0 0.0
    %5921 = vmatpush1.msra.mxu0 0.0
    %5922 = vmatprep.subr.mxu0 0.0
    %5923 = vmatpush1.msra.mxu0 0.0
    %5924 = vmatprep.subr.mxu0 0.0
    %5925 = vmatpush1.msra.mxu0 0.0
    %5926 = vmatprep.subr.mxu0 0.0
    %5927 = vmatpush1.msra.mxu0 0.0
    %5928 = vmatprep.subr.mxu0 0.0
    %5929 = vmatpush1.msra.mxu0 0.0
    %5930 = vmatprep.subr.mxu0 0.0
    %5931 = vmatpush1.msra.mxu0 0.0
    %5932 = vmatprep.subr.mxu0 0.0
    %5933 = vmatpush1.msra.mxu0 0.0
    %5934 = vmatprep.subr.mxu0 0.0
    %5935 = vmatpush1.msra.mxu0 0.0
    %5936 = vmatprep.subr.mxu0 0.0
    %5937 = vmatpush1.msra.mxu0 0.0
    %5938 = vmatprep.subr.mxu0 0.0
    %5939 = vmatpush1.msra.mxu0 0.0
    %5940 = vmatprep.subr.mxu0 0.0
    %5941 = vmatpush1.msra.mxu0 0.0
    %5942 = vmatprep.subr.mxu0 0.0
    %5943 = vmatpush1.msra.mxu0 0.0
    %5944 = vmatprep.subr.mxu0 0.0
    %5945 = vmatpush1.msra.mxu0 0.0
    %5946 = vmatprep.subr.mxu0 0.0
    %5947 = vmatpush1.msra.mxu0 0.0
    %5948 = vmatprep.subr.mxu0 0.0
    %5949 = vmatpush1.msra.mxu0 0.0
    %5950 = vmatprep.subr.mxu0 0.0
    %5951 = vmatpush1.msra.mxu0 0.0
    %5952 = vmatprep.subr.mxu0 0.0
    %5953 = vmatpush1.msra.mxu0 0.0
    %5954 = vmatprep.subr.mxu0 0.0
    %5955 = vmatpush1.msra.mxu0 0.0
    %5956 = vmatprep.subr.mxu0 0.0
    %5957 = vmatpush1.msra.mxu0 0.0
    %5958 = vmatprep.mubr.f32.mxu0 0.0
    %v5959 = vand.u32 %v5543, 4294901760
    %5960 = vmatmul.mubr.f32.gmra.mrb[0].mxu0 %v5959
    %v5961 = vpop.f32.mrb[0].mxu0
    %v5962 = vadd.f32 %v5877, %v5961
    %v5963 = vpop.f32.mrb[0].mxu0
    %5964 = vmatprep.mubr.f32.mxu0 0.0
    %v5965 = vand.u32 %v5546, 4294901760
    %5966 = vmatmul.mubr.f32.gmra.mrb[0].mxu0 %v5965
    %v5967 = vpop.f32.mrb[0].mxu0
    %v5968 = vadd.f32 %v5885, %v5967
    %v5969 = vpop.f32.mrb[0].mxu0
    %5970 = vdwg.mxu0
    %5971 = vmatprep.subr.mxu0 0.0
    %v5972 = vand.u32 %v5537, 4294901760
    %5973 = vmatpush1.msra.mxu0 %v5972
    %5974 = vmatprep.subr.mxu0 0.0
    %v5975 = vand.u32 %v5539, 4294901760
    %5976 = vmatpush1.msra.mxu0 %v5975
    %5977 = vmatprep.subr.mxu0 0.0
    %5978 = vmatpush1.msra.mxu0 0.0
    %5979 = vmatprep.subr.mxu0 0.0
    %5980 = vmatpush1.msra.mxu0 0.0
    %5981 = vmatprep.subr.mxu0 0.0
    %5982 = vmatpush1.msra.mxu0 0.0
    %5983 = vmatprep.subr.mxu0 0.0
    %5984 = vmatpush1.msra.mxu0 0.0
    %5985 = vmatprep.subr.mxu0 0.0
    %5986 = vmatpush1.msra.mxu0 0.0
    %5987 = vmatprep.subr.mxu0 0.0
    %5988 = vmatpush1.msra.mxu0 0.0
    %5989 = vmatprep.subr.mxu0 0.0
    %5990 = vmatpush1.msra.mxu0 0.0
    %5991 = vmatprep.subr.mxu0 0.0
    %5992 = vmatpush1.msra.mxu0 0.0
    %5993 = vmatprep.subr.mxu0 0.0
    %5994 = vmatpush1.msra.mxu0 0.0
    %5995 = vmatprep.subr.mxu0 0.0
    %5996 = vmatpush1.msra.mxu0 0.0
    %5997 = vmatprep.subr.mxu0 0.0
    %5998 = vmatpush1.msra.mxu0 0.0
    %5999 = vmatprep.subr.mxu0 0.0
    %6000 = vmatpush1.msra.mxu0 0.0
    %6001 = vmatprep.subr.mxu0 0.0
    %6002 = vmatpush1.msra.mxu0 0.0
    %6003 = vmatprep.subr.mxu0 0.0
    %6004 = vmatpush1.msra.mxu0 0.0
    %6005 = vmatprep.subr.mxu0 0.0
    %6006 = vmatpush1.msra.mxu0 0.0
    %6007 = vmatprep.subr.mxu0 0.0
    %6008 = vmatpush1.msra.mxu0 0.0
    %6009 = vmatprep.subr.mxu0 0.0
    %6010 = vmatpush1.msra.mxu0 0.0
    %6011 = vmatprep.subr.mxu0 0.0
    %6012 = vmatpush1.msra.mxu0 0.0
    %6013 = vmatprep.subr.mxu0 0.0
    %6014 = vmatpush1.msra.mxu0 0.0
    %6015 = vmatprep.subr.mxu0 0.0
    %6016 = vmatpush1.msra.mxu0 0.0
    %6017 = vmatprep.subr.mxu0 0.0
    %6018 = vmatpush1.msra.mxu0 0.0
    %6019 = vmatprep.subr.mxu0 0.0
    %6020 = vmatpush1.msra.mxu0 0.0
    %6021 = vmatprep.subr.mxu0 0.0
    %6022 = vmatpush1.msra.mxu0 0.0
    %6023 = vmatprep.subr.mxu0 0.0
    %6024 = vmatpush1.msra.mxu0 0.0
    %6025 = vmatprep.subr.mxu0 0.0
    %6026 = vmatpush1.msra.mxu0 0.0
    %6027 = vmatprep.subr.mxu0 0.0
    %6028 = vmatpush1.msra.mxu0 0.0
    %6029 = vmatprep.subr.mxu0 0.0
    %6030 = vmatpush1.msra.mxu0 0.0
    %6031 = vmatprep.subr.mxu0 0.0
    %6032 = vmatpush1.msra.mxu0 0.0
    %6033 = vmatprep.subr.mxu0 0.0
    %6034 = vmatpush1.msra.mxu0 0.0
    %6035 = vmatprep.subr.mxu0 0.0
    %6036 = vmatpush1.msra.mxu0 0.0
    %6037 = vmatprep.mubr.f32.mxu0 0.0
    %v6038 = vand.u32 %v5543, 4294901760
    %6039 = vmatmul.mubr.f32.gmra.mrb[0].mxu0 %v6038
    %v6040 = vpop.f32.mrb[0].mxu0
    %v6041 = vadd.f32 %v5962, %v6040
    %v6042 = vpop.f32.mrb[0].mxu0
    %6043 = vmatprep.mubr.f32.mxu0 0.0
    %v6044 = vand.u32 %v5546, 4294901760
    %6045 = vmatmul.mubr.f32.gmra.mrb[0].mxu0 %v6044
    %v6046 = vpop.f32.mrb[0].mxu0
    %v6047 = vadd.f32 %v5968, %v6046
    %v6048 = vpop.f32.mrb[0].mxu0
    %6049 = vdwg.mxu0
    %6050 = vrot.lane.b32.xlu0 %v693, 64
    %v6051 = vpop.permute.xlu0 %6050
    %6052 = vrot.lane.b32.xlu0 %v695, 64
    %v6053 = vpop.permute.xlu0 %6052
    %v6057 = vsel %vm4845, %v4999, 0
    %v6060 = vsel %vm4845, %v5001, 0
    %6062 = vmatprep.subr.mxu0 0.0
    %v6063 = vand.u32 %v6051, 4294901760
    %6064 = vmatpush1.msra.mxu0 %v6063
    %6065 = vmatprep.subr.mxu0 0.0
    %v6066 = vand.u32 %v6053, 4294901760
    %6067 = vmatpush1.msra.mxu0 %v6066
    %6068 = vmatprep.subr.mxu0 0.0
    %6069 = vmatpush1.msra.mxu0 0.0
    %6070 = vmatprep.subr.mxu0 0.0
    %6071 = vmatpush1.msra.mxu0 0.0
    %6072 = vmatprep.subr.mxu0 0.0
    %6073 = vmatpush1.msra.mxu0 0.0
    %6074 = vmatprep.subr.mxu0 0.0
    %6075 = vmatpush1.msra.mxu0 0.0
    %6076 = vmatprep.subr.mxu0 0.0
    %6077 = vmatpush1.msra.mxu0 0.0
    %6078 = vmatprep.subr.mxu0 0.0
    %6079 = vmatpush1.msra.mxu0 0.0
    %6080 = vmatprep.subr.mxu0 0.0
    %6081 = vmatpush1.msra.mxu0 0.0
    %6082 = vmatprep.subr.mxu0 0.0
    %6083 = vmatpush1.msra.mxu0 0.0
    %6084 = vmatprep.subr.mxu0 0.0
    %6085 = vmatpush1.msra.mxu0 0.0
    %6086 = vmatprep.subr.mxu0 0.0
    %6087 = vmatpush1.msra.mxu0 0.0
    %6088 = vmatprep.subr.mxu0 0.0
    %6089 = vmatpush1.msra.mxu0 0.0
    %6090 = vmatprep.subr.mxu0 0.0
    %6091 = vmatpush1.msra.mxu0 0.0
    %6092 = vmatprep.subr.mxu0 0.0
    %6093 = vmatpush1.msra.mxu0 0.0
    %6094 = vmatprep.subr.mxu0 0.0
    %6095 = vmatpush1.msra.mxu0 0.0
    %6096 = vmatprep.subr.mxu0 0.0
    %6097 = vmatpush1.msra.mxu0 0.0
    %6098 = vmatprep.subr.mxu0 0.0
    %6099 = vmatpush1.msra.mxu0 0.0
    %6100 = vmatprep.subr.mxu0 0.0
    %6101 = vmatpush1.msra.mxu0 0.0
    %6102 = vmatprep.subr.mxu0 0.0
    %6103 = vmatpush1.msra.mxu0 0.0
    %6104 = vmatprep.subr.mxu0 0.0
    %6105 = vmatpush1.msra.mxu0 0.0
    %6106 = vmatprep.subr.mxu0 0.0
    %6107 = vmatpush1.msra.mxu0 0.0
    %6108 = vmatprep.subr.mxu0 0.0
    %6109 = vmatpush1.msra.mxu0 0.0
    %6110 = vmatprep.subr.mxu0 0.0
    %6111 = vmatpush1.msra.mxu0 0.0
    %6112 = vmatprep.subr.mxu0 0.0
    %6113 = vmatpush1.msra.mxu0 0.0
    %6114 = vmatprep.subr.mxu0 0.0
    %6115 = vmatpush1.msra.mxu0 0.0
    %6116 = vmatprep.subr.mxu0 0.0
    %6117 = vmatpush1.msra.mxu0 0.0
    %6118 = vmatprep.subr.mxu0 0.0
    %6119 = vmatpush1.msra.mxu0 0.0
    %6120 = vmatprep.subr.mxu0 0.0
    %6121 = vmatpush1.msra.mxu0 0.0
    %6122 = vmatprep.subr.mxu0 0.0
    %6123 = vmatpush1.msra.mxu0 0.0
    %6124 = vmatprep.subr.mxu0 0.0
    %6125 = vmatpush1.msra.mxu0 0.0
    %6126 = vmatprep.subr.mxu0 0.0
    %6127 = vmatpush1.msra.mxu0 0.0
    %6128 = vmatprep.mubr.f32.mxu0 0.0
    %v6129 = vand.u32 %v6057, 4294901760
    %v6130 = vsub.f32 %v6057, %v6129
    %v6131 = vand.u32 %v6130, 4294901760
    %v6132 = vsub.f32 %v6130, %v6131
    %v6133 = vand.u32 %v6132, 4294901760
    %6134 = vmatmul.mubr.f32.gmra.mrb[0].mxu0 %v6133
    %v6135 = vpop.f32.mrb[0].mxu0
    %v6136 = vadd.f32 0.0, %v6135
    %v6137 = vpop.f32.mrb[0].mxu0
    %6138 = vmatprep.mubr.f32.mxu0 0.0
    %v6139 = vand.u32 %v6060, 4294901760
    %v6140 = vsub.f32 %v6060, %v6139
    %v6141 = vand.u32 %v6140, 4294901760
    %v6142 = vsub.f32 %v6140, %v6141
    %v6143 = vand.u32 %v6142, 4294901760
    %6144 = vmatmul.mubr.f32.gmra.mrb[0].mxu0 %v6143
    %v6145 = vpop.f32.mrb[0].mxu0
    %v6146 = vadd.f32 0.0, %v6145
    %v6147 = vpop.f32.mrb[0].mxu0
    %6148 = vdwg.mxu0
    %6149 = vmatprep.subr.mxu0 0.0
    %v6150 = vand.u32 %v6051, 4294901760
    %v6151 = vsub.f32 %v6051, %v6150
    %v6152 = vand.u32 %v6151, 4294901760
    %v6153 = vsub.f32 %v6151, %v6152
    %v6154 = vand.u32 %v6153, 4294901760
    %6155 = vmatpush1.msra.mxu0 %v6154
    %6156 = vmatprep.subr.mxu0 0.0
    %v6157 = vand.u32 %v6053, 4294901760
    %v6158 = vsub.f32 %v6053, %v6157
    %v6159 = vand.u32 %v6158, 4294901760
    %v6160 = vsub.f32 %v6158, %v6159
    %v6161 = vand.u32 %v6160, 4294901760
    %6162 = vmatpush1.msra.mxu0 %v6161
    %6163 = vmatprep.subr.mxu0 0.0
    %6164 = vmatpush1.msra.mxu0 0.0
    %6165 = vmatprep.subr.mxu0 0.0
    %6166 = vmatpush1.msra.mxu0 0.0
    %6167 = vmatprep.subr.mxu0 0.0
    %6168 = vmatpush1.msra.mxu0 0.0
    %6169 = vmatprep.subr.mxu0 0.0
    %6170 = vmatpush1.msra.mxu0 0.0
    %6171 = vmatprep.subr.mxu0 0.0
    %6172 = vmatpush1.msra.mxu0 0.0
    %6173 = vmatprep.subr.mxu0 0.0
    %6174 = vmatpush1.msra.mxu0 0.0
    %6175 = vmatprep.subr.mxu0 0.0
    %6176 = vmatpush1.msra.mxu0 0.0
    %6177 = vmatprep.subr.mxu0 0.0
    %6178 = vmatpush1.msra.mxu0 0.0
    %6179 = vmatprep.subr.mxu0 0.0
    %6180 = vmatpush1.msra.mxu0 0.0
    %6181 = vmatprep.subr.mxu0 0.0
    %6182 = vmatpush1.msra.mxu0 0.0
    %6183 = vmatprep.subr.mxu0 0.0
    %6184 = vmatpush1.msra.mxu0 0.0
    %6185 = vmatprep.subr.mxu0 0.0
    %6186 = vmatpush1.msra.mxu0 0.0
    %6187 = vmatprep.subr.mxu0 0.0
    %6188 = vmatpush1.msra.mxu0 0.0
    %6189 = vmatprep.subr.mxu0 0.0
    %6190 = vmatpush1.msra.mxu0 0.0
    %6191 = vmatprep.subr.mxu0 0.0
    %6192 = vmatpush1.msra.mxu0 0.0
    %6193 = vmatprep.subr.mxu0 0.0
    %6194 = vmatpush1.msra.mxu0 0.0
    %6195 = vmatprep.subr.mxu0 0.0
    %6196 = vmatpush1.msra.mxu0 0.0
    %6197 = vmatprep.subr.mxu0 0.0
    %6198 = vmatpush1.msra.mxu0 0.0
    %6199 = vmatprep.subr.mxu0 0.0
    %6200 = vmatpush1.msra.mxu0 0.0
    %6201 = vmatprep.subr.mxu0 0.0
    %6202 = vmatpush1.msra.mxu0 0.0
    %6203 = vmatprep.subr.mxu0 0.0
    %6204 = vmatpush1.msra.mxu0 0.0
    %6205 = vmatprep.subr.mxu0 0.0
    %6206 = vmatpush1.msra.mxu0 0.0
    %6207 = vmatprep.subr.mxu0 0.0
    %6208 = vmatpush1.msra.mxu0 0.0
    %6209 = vmatprep.subr.mxu0 0.0
    %6210 = vmatpush1.msra.mxu0 0.0
    %6211 = vmatprep.subr.mxu0 0.0
    %6212 = vmatpush1.msra.mxu0 0.0
    %6213 = vmatprep.subr.mxu0 0.0
    %6214 = vmatpush1.msra.mxu0 0.0
    %6215 = vmatprep.subr.mxu0 0.0
    %6216 = vmatpush1.msra.mxu0 0.0
    %6217 = vmatprep.subr.mxu0 0.0
    %6218 = vmatpush1.msra.mxu0 0.0
    %6219 = vmatprep.subr.mxu0 0.0
    %6220 = vmatpush1.msra.mxu0 0.0
    %6221 = vmatprep.subr.mxu0 0.0
    %6222 = vmatpush1.msra.mxu0 0.0
    %6223 = vmatprep.mubr.f32.mxu0 0.0
    %v6224 = vand.u32 %v6057, 4294901760
    %6225 = vmatmul.mubr.f32.gmra.mrb[0].mxu0 %v6224
    %v6226 = vpop.f32.mrb[0].mxu0
    %v6227 = vadd.f32 %v6136, %v6226
    %v6228 = vpop.f32.mrb[0].mxu0
    %6229 = vmatprep.mubr.f32.mxu0 0.0
    %v6230 = vand.u32 %v6060, 4294901760
    %6231 = vmatmul.mubr.f32.gmra.mrb[0].mxu0 %v6230
    %v6232 = vpop.f32.mrb[0].mxu0
    %v6233 = vadd.f32 %v6146, %v6232
    %v6234 = vpop.f32.mrb[0].mxu0
    %6235 = vdwg.mxu0
    %6236 = vmatprep.subr.mxu0 0.0
    %v6237 = vand.u32 %v6051, 4294901760
    %v6238 = vsub.f32 %v6051, %v6237
    %6239 = vmatpush1.msra.mxu0 %v6238
    %6240 = vmatprep.subr.mxu0 0.0
    %v6241 = vand.u32 %v6053, 4294901760
    %v6242 = vsub.f32 %v6053, %v6241
    %6243 = vmatpush1.msra.mxu0 %v6242
    %6244 = vmatprep.subr.mxu0 0.0
    %6245 = vmatpush1.msra.mxu0 0.0
    %6246 = vmatprep.subr.mxu0 0.0
    %6247 = vmatpush1.msra.mxu0 0.0
    %6248 = vmatprep.subr.mxu0 0.0
    %6249 = vmatpush1.msra.mxu0 0.0
    %6250 = vmatprep.subr.mxu0 0.0
    %6251 = vmatpush1.msra.mxu0 0.0
    %6252 = vmatprep.subr.mxu0 0.0
    %6253 = vmatpush1.msra.mxu0 0.0
    %6254 = vmatprep.subr.mxu0 0.0
    %6255 = vmatpush1.msra.mxu0 0.0
    %6256 = vmatprep.subr.mxu0 0.0
    %6257 = vmatpush1.msra.mxu0 0.0
    %6258 = vmatprep.subr.mxu0 0.0
    %6259 = vmatpush1.msra.mxu0 0.0
    %6260 = vmatprep.subr.mxu0 0.0
    %6261 = vmatpush1.msra.mxu0 0.0
    %6262 = vmatprep.subr.mxu0 0.0
    %6263 = vmatpush1.msra.mxu0 0.0
    %6264 = vmatprep.subr.mxu0 0.0
    %6265 = vmatpush1.msra.mxu0 0.0
    %6266 = vmatprep.subr.mxu0 0.0
    %6267 = vmatpush1.msra.mxu0 0.0
    %6268 = vmatprep.subr.mxu0 0.0
    %6269 = vmatpush1.msra.mxu0 0.0
    %6270 = vmatprep.subr.mxu0 0.0
    %6271 = vmatpush1.msra.mxu0 0.0
    %6272 = vmatprep.subr.mxu0 0.0
    %6273 = vmatpush1.msra.mxu0 0.0
    %6274 = vmatprep.subr.mxu0 0.0
    %6275 = vmatpush1.msra.mxu0 0.0
    %6276 = vmatprep.subr.mxu0 0.0
    %6277 = vmatpush1.msra.mxu0 0.0
    %6278 = vmatprep.subr.mxu0 0.0
    %6279 = vmatpush1.msra.mxu0 0.0
    %6280 = vmatprep.subr.mxu0 0.0
    %6281 = vmatpush1.msra.mxu0 0.0
    %6282 = vmatprep.subr.mxu0 0.0
    %6283 = vmatpush1.msra.mxu0 0.0
    %6284 = vmatprep.subr.mxu0 0.0
    %6285 = vmatpush1.msra.mxu0 0.0
    %6286 = vmatprep.subr.mxu0 0.0
    %6287 = vmatpush1.msra.mxu0 0.0
    %6288 = vmatprep.subr.mxu0 0.0
    %6289 = vmatpush1.msra.mxu0 0.0
    %6290 = vmatprep.subr.mxu0 0.0
    %6291 = vmatpush1.msra.mxu0 0.0
    %6292 = vmatprep.subr.mxu0 0.0
    %6293 = vmatpush1.msra.mxu0 0.0
    %6294 = vmatprep.subr.mxu0 0.0
    %6295 = vmatpush1.msra.mxu0 0.0
    %6296 = vmatprep.subr.mxu0 0.0
    %6297 = vmatpush1.msra.mxu0 0.0
    %6298 = vmatprep.subr.mxu0 0.0
    %6299 = vmatpush1.msra.mxu0 0.0
    %6300 = vmatprep.subr.mxu0 0.0
    %6301 = vmatpush1.msra.mxu0 0.0
    %6302 = vmatprep.subr.mxu0 0.0
    %6303 = vmatpush1.msra.mxu0 0.0
    %6304 = vmatprep.mubr.f32.mxu0 0.0
    %v6305 = vand.u32 %v6057, 4294901760
    %v6306 = vsub.f32 %v6057, %v6305
    %6307 = vmatmul.mubr.f32.gmra.mrb[0].mxu0 %v6306
    %v6308 = vpop.f32.mrb[0].mxu0
    %v6309 = vadd.f32 %v6227, %v6308
    %v6310 = vpop.f32.mrb[0].mxu0
    %6311 = vmatprep.mubr.f32.mxu0 0.0
    %v6312 = vand.u32 %v6060, 4294901760
    %v6313 = vsub.f32 %v6060, %v6312
    %6314 = vmatmul.mubr.f32.gmra.mrb[0].mxu0 %v6313
    %v6315 = vpop.f32.mrb[0].mxu0
    %v6316 = vadd.f32 %v6233, %v6315
    %v6317 = vpop.f32.mrb[0].mxu0
    %6318 = vdwg.mxu0
    %6319 = vmatprep.subr.mxu0 0.0
    %v6320 = vand.u32 %v6051, 4294901760
    %6321 = vmatpush1.msra.mxu0 %v6320
    %6322 = vmatprep.subr.mxu0 0.0
    %v6323 = vand.u32 %v6053, 4294901760
    %6324 = vmatpush1.msra.mxu0 %v6323
    %6325 = vmatprep.subr.mxu0 0.0
    %6326 = vmatpush1.msra.mxu0 0.0
    %6327 = vmatprep.subr.mxu0 0.0
    %6328 = vmatpush1.msra.mxu0 0.0
    %6329 = vmatprep.subr.mxu0 0.0
    %6330 = vmatpush1.msra.mxu0 0.0
    %6331 = vmatprep.subr.mxu0 0.0
    %6332 = vmatpush1.msra.mxu0 0.0
    %6333 = vmatprep.subr.mxu0 0.0
    %6334 = vmatpush1.msra.mxu0 0.0
    %6335 = vmatprep.subr.mxu0 0.0
    %6336 = vmatpush1.msra.mxu0 0.0
    %6337 = vmatprep.subr.mxu0 0.0
    %6338 = vmatpush1.msra.mxu0 0.0
    %6339 = vmatprep.subr.mxu0 0.0
    %6340 = vmatpush1.msra.mxu0 0.0
    %6341 = vmatprep.subr.mxu0 0.0
    %6342 = vmatpush1.msra.mxu0 0.0
    %6343 = vmatprep.subr.mxu0 0.0
    %6344 = vmatpush1.msra.mxu0 0.0
    %6345 = vmatprep.subr.mxu0 0.0
    %6346 = vmatpush1.msra.mxu0 0.0
    %6347 = vmatprep.subr.mxu0 0.0
    %6348 = vmatpush1.msra.mxu0 0.0
    %6349 = vmatprep.subr.mxu0 0.0
    %6350 = vmatpush1.msra.mxu0 0.0
    %6351 = vmatprep.subr.mxu0 0.0
    %6352 = vmatpush1.msra.mxu0 0.0
    %6353 = vmatprep.subr.mxu0 0.0
    %6354 = vmatpush1.msra.mxu0 0.0
    %6355 = vmatprep.subr.mxu0 0.0
    %6356 = vmatpush1.msra.mxu0 0.0
    %6357 = vmatprep.subr.mxu0 0.0
    %6358 = vmatpush1.msra.mxu0 0.0
    %6359 = vmatprep.subr.mxu0 0.0
    %6360 = vmatpush1.msra.mxu0 0.0
    %6361 = vmatprep.subr.mxu0 0.0
    %6362 = vmatpush1.msra.mxu0 0.0
    %6363 = vmatprep.subr.mxu0 0.0
    %6364 = vmatpush1.msra.mxu0 0.0
    %6365 = vmatprep.subr.mxu0 0.0
    %6366 = vmatpush1.msra.mxu0 0.0
    %6367 = vmatprep.subr.mxu0 0.0
    %6368 = vmatpush1.msra.mxu0 0.0
    %6369 = vmatprep.subr.mxu0 0.0
    %6370 = vmatpush1.msra.mxu0 0.0
    %6371 = vmatprep.subr.mxu0 0.0
    %6372 = vmatpush1.msra.mxu0 0.0
    %6373 = vmatprep.subr.mxu0 0.0
    %6374 = vmatpush1.msra.mxu0 0.0
    %6375 = vmatprep.subr.mxu0 0.0
    %6376 = vmatpush1.msra.mxu0 0.0
    %6377 = vmatprep.subr.mxu0 0.0
    %6378 = vmatpush1.msra.mxu0 0.0
    %6379 = vmatprep.subr.mxu0 0.0
    %6380 = vmatpush1.msra.mxu0 0.0
    %6381 = vmatprep.subr.mxu0 0.0
    %6382 = vmatpush1.msra.mxu0 0.0
    %6383 = vmatprep.subr.mxu0 0.0
    %6384 = vmatpush1.msra.mxu0 0.0
    %6385 = vmatprep.mubr.f32.mxu0 0.0
    %v6386 = vand.u32 %v6057, 4294901760
    %v6387 = vsub.f32 %v6057, %v6386
    %v6388 = vand.u32 %v6387, 4294901760
    %6389 = vmatmul.mubr.f32.gmra.mrb[0].mxu0 %v6388
    %v6390 = vpop.f32.mrb[0].mxu0
    %v6391 = vadd.f32 %v6309, %v6390
    %v6392 = vpop.f32.mrb[0].mxu0
    %6393 = vmatprep.mubr.f32.mxu0 0.0
    %v6394 = vand.u32 %v6060, 4294901760
    %v6395 = vsub.f32 %v6060, %v6394
    %v6396 = vand.u32 %v6395, 4294901760
    %6397 = vmatmul.mubr.f32.gmra.mrb[0].mxu0 %v6396
    %v6398 = vpop.f32.mrb[0].mxu0
    %v6399 = vadd.f32 %v6316, %v6398
    %v6400 = vpop.f32.mrb[0].mxu0
    %6401 = vdwg.mxu0
    %6402 = vmatprep.subr.mxu0 0.0
    %v6403 = vand.u32 %v6051, 4294901760
    %v6404 = vsub.f32 %v6051, %v6403
    %v6405 = vand.u32 %v6404, 4294901760
    %6406 = vmatpush1.msra.mxu0 %v6405
    %6407 = vmatprep.subr.mxu0 0.0
    %v6408 = vand.u32 %v6053, 4294901760
    %v6409 = vsub.f32 %v6053, %v6408
    %v6410 = vand.u32 %v6409, 4294901760
    %6411 = vmatpush1.msra.mxu0 %v6410
    %6412 = vmatprep.subr.mxu0 0.0
    %6413 = vmatpush1.msra.mxu0 0.0
    %6414 = vmatprep.subr.mxu0 0.0
    %6415 = vmatpush1.msra.mxu0 0.0
    %6416 = vmatprep.subr.mxu0 0.0
    %6417 = vmatpush1.msra.mxu0 0.0
    %6418 = vmatprep.subr.mxu0 0.0
    %6419 = vmatpush1.msra.mxu0 0.0
    %6420 = vmatprep.subr.mxu0 0.0
    %6421 = vmatpush1.msra.mxu0 0.0
    %6422 = vmatprep.subr.mxu0 0.0
    %6423 = vmatpush1.msra.mxu0 0.0
    %6424 = vmatprep.subr.mxu0 0.0
    %6425 = vmatpush1.msra.mxu0 0.0
    %6426 = vmatprep.subr.mxu0 0.0
    %6427 = vmatpush1.msra.mxu0 0.0
    %6428 = vmatprep.subr.mxu0 0.0
    %6429 = vmatpush1.msra.mxu0 0.0
    %6430 = vmatprep.subr.mxu0 0.0
    %6431 = vmatpush1.msra.mxu0 0.0
    %6432 = vmatprep.subr.mxu0 0.0
    %6433 = vmatpush1.msra.mxu0 0.0
    %6434 = vmatprep.subr.mxu0 0.0
    %6435 = vmatpush1.msra.mxu0 0.0
    %6436 = vmatprep.subr.mxu0 0.0
    %6437 = vmatpush1.msra.mxu0 0.0
    %6438 = vmatprep.subr.mxu0 0.0
    %6439 = vmatpush1.msra.mxu0 0.0
    %6440 = vmatprep.subr.mxu0 0.0
    %6441 = vmatpush1.msra.mxu0 0.0
    %6442 = vmatprep.subr.mxu0 0.0
    %6443 = vmatpush1.msra.mxu0 0.0
    %6444 = vmatprep.subr.mxu0 0.0
    %6445 = vmatpush1.msra.mxu0 0.0
    %6446 = vmatprep.subr.mxu0 0.0
    %6447 = vmatpush1.msra.mxu0 0.0
    %6448 = vmatprep.subr.mxu0 0.0
    %6449 = vmatpush1.msra.mxu0 0.0
    %6450 = vmatprep.subr.mxu0 0.0
    %6451 = vmatpush1.msra.mxu0 0.0
    %6452 = vmatprep.subr.mxu0 0.0
    %6453 = vmatpush1.msra.mxu0 0.0
    %6454 = vmatprep.subr.mxu0 0.0
    %6455 = vmatpush1.msra.mxu0 0.0
    %6456 = vmatprep.subr.mxu0 0.0
    %6457 = vmatpush1.msra.mxu0 0.0
    %6458 = vmatprep.subr.mxu0 0.0
    %6459 = vmatpush1.msra.mxu0 0.0
    %6460 = vmatprep.subr.mxu0 0.0
    %6461 = vmatpush1.msra.mxu0 0.0
    %6462 = vmatprep.subr.mxu0 0.0
    %6463 = vmatpush1.msra.mxu0 0.0
    %6464 = vmatprep.subr.mxu0 0.0
    %6465 = vmatpush1.msra.mxu0 0.0
    %6466 = vmatprep.subr.mxu0 0.0
    %6467 = vmatpush1.msra.mxu0 0.0
    %6468 = vmatprep.subr.mxu0 0.0
    %6469 = vmatpush1.msra.mxu0 0.0
    %6470 = vmatprep.subr.mxu0 0.0
    %6471 = vmatpush1.msra.mxu0 0.0
    %6472 = vmatprep.mubr.f32.mxu0 0.0
    %v6473 = vand.u32 %v6057, 4294901760
    %6474 = vmatmul.mubr.f32.gmra.mrb[0].mxu0 %v6473
    %v6475 = vpop.f32.mrb[0].mxu0
    %v6476 = vadd.f32 %v6391, %v6475
    %v6477 = vpop.f32.mrb[0].mxu0
    %6478 = vmatprep.mubr.f32.mxu0 0.0
    %v6479 = vand.u32 %v6060, 4294901760
    %6480 = vmatmul.mubr.f32.gmra.mrb[0].mxu0 %v6479
    %v6481 = vpop.f32.mrb[0].mxu0
    %v6482 = vadd.f32 %v6399, %v6481
    %v6483 = vpop.f32.mrb[0].mxu0
    %6484 = vdwg.mxu0
    %6485 = vmatprep.subr.mxu0 0.0
    %v6486 = vand.u32 %v6051, 4294901760
    %6487 = vmatpush1.msra.mxu0 %v6486
    %6488 = vmatprep.subr.mxu0 0.0
    %v6489 = vand.u32 %v6053, 4294901760
    %6490 = vmatpush1.msra.mxu0 %v6489
    %6491 = vmatprep.subr.mxu0 0.0
    %6492 = vmatpush1.msra.mxu0 0.0
    %6493 = vmatprep.subr.mxu0 0.0
    %6494 = vmatpush1.msra.mxu0 0.0
    %6495 = vmatprep.subr.mxu0 0.0
    %6496 = vmatpush1.msra.mxu0 0.0
    %6497 = vmatprep.subr.mxu0 0.0
    %6498 = vmatpush1.msra.mxu0 0.0
    %6499 = vmatprep.subr.mxu0 0.0
    %6500 = vmatpush1.msra.mxu0 0.0
    %6501 = vmatprep.subr.mxu0 0.0
    %6502 = vmatpush1.msra.mxu0 0.0
    %6503 = vmatprep.subr.mxu0 0.0
    %6504 = vmatpush1.msra.mxu0 0.0
    %6505 = vmatprep.subr.mxu0 0.0
    %6506 = vmatpush1.msra.mxu0 0.0
    %6507 = vmatprep.subr.mxu0 0.0
    %6508 = vmatpush1.msra.mxu0 0.0
    %6509 = vmatprep.subr.mxu0 0.0
    %6510 = vmatpush1.msra.mxu0 0.0
    %6511 = vmatprep.subr.mxu0 0.0
    %6512 = vmatpush1.msra.mxu0 0.0
    %6513 = vmatprep.subr.mxu0 0.0
    %6514 = vmatpush1.msra.mxu0 0.0
    %6515 = vmatprep.subr.mxu0 0.0
    %6516 = vmatpush1.msra.mxu0 0.0
    %6517 = vmatprep.subr.mxu0 0.0
    %6518 = vmatpush1.msra.mxu0 0.0
    %6519 = vmatprep.subr.mxu0 0.0
    %6520 = vmatpush1.msra.mxu0 0.0
    %6521 = vmatprep.subr.mxu0 0.0
    %6522 = vmatpush1.msra.mxu0 0.0
    %6523 = vmatprep.subr.mxu0 0.0
    %6524 = vmatpush1.msra.mxu0 0.0
    %6525 = vmatprep.subr.mxu0 0.0
    %6526 = vmatpush1.msra.mxu0 0.0
    %6527 = vmatprep.subr.mxu0 0.0
    %6528 = vmatpush1.msra.mxu0 0.0
    %6529 = vmatprep.subr.mxu0 0.0
    %6530 = vmatpush1.msra.mxu0 0.0
    %6531 = vmatprep.subr.mxu0 0.0
    %6532 = vmatpush1.msra.mxu0 0.0
    %6533 = vmatprep.subr.mxu0 0.0
    %6534 = vmatpush1.msra.mxu0 0.0
    %6535 = vmatprep.subr.mxu0 0.0
    %6536 = vmatpush1.msra.mxu0 0.0
    %6537 = vmatprep.subr.mxu0 0.0
    %6538 = vmatpush1.msra.mxu0 0.0
    %6539 = vmatprep.subr.mxu0 0.0
    %6540 = vmatpush1.msra.mxu0 0.0
    %6541 = vmatprep.subr.mxu0 0.0
    %6542 = vmatpush1.msra.mxu0 0.0
    %6543 = vmatprep.subr.mxu0 0.0
    %6544 = vmatpush1.msra.mxu0 0.0
    %6545 = vmatprep.subr.mxu0 0.0
    %6546 = vmatpush1.msra.mxu0 0.0
    %6547 = vmatprep.subr.mxu0 0.0
    %6548 = vmatpush1.msra.mxu0 0.0
    %6549 = vmatprep.subr.mxu0 0.0
    %6550 = vmatpush1.msra.mxu0 0.0
    %6551 = vmatprep.mubr.f32.mxu0 0.0
    %v6552 = vand.u32 %v6057, 4294901760
    %6553 = vmatmul.mubr.f32.gmra.mrb[0].mxu0 %v6552
    %v6554 = vpop.f32.mrb[0].mxu0
    %v6555 = vadd.f32 %v6476, %v6554
    %v6556 = vpop.f32.mrb[0].mxu0
    %6557 = vmatprep.mubr.f32.mxu0 0.0
    %v6558 = vand.u32 %v6060, 4294901760
    %6559 = vmatmul.mubr.f32.gmra.mrb[0].mxu0 %v6558
    %v6560 = vpop.f32.mrb[0].mxu0
    %v6561 = vadd.f32 %v6482, %v6560
    %v6562 = vpop.f32.mrb[0].mxu0
    %6563 = vdwg.mxu0
    %6564 = vrot.lane.b32.xlu0 %v697, 64
    %v6565 = vpop.permute.xlu0 %6564
    %6566 = vrot.lane.b32.xlu0 %v699, 64
    %v6567 = vpop.permute.xlu0 %6566
    %v6571 = vsel %vm4845, %v5003, 0
    %v6574 = vsel %vm4845, %v5005, 0
    %6576 = vmatprep.subr.mxu0 0.0
    %v6577 = vand.u32 %v6565, 4294901760
    %6578 = vmatpush1.msra.mxu0 %v6577
    %6579 = vmatprep.subr.mxu0 0.0
    %v6580 = vand.u32 %v6567, 4294901760
    %6581 = vmatpush1.msra.mxu0 %v6580
    %6582 = vmatprep.subr.mxu0 0.0
    %6583 = vmatpush1.msra.mxu0 0.0
    %6584 = vmatprep.subr.mxu0 0.0
    %6585 = vmatpush1.msra.mxu0 0.0
    %6586 = vmatprep.subr.mxu0 0.0
    %6587 = vmatpush1.msra.mxu0 0.0
    %6588 = vmatprep.subr.mxu0 0.0
    %6589 = vmatpush1.msra.mxu0 0.0
    %6590 = vmatprep.subr.mxu0 0.0
    %6591 = vmatpush1.msra.mxu0 0.0
    %6592 = vmatprep.subr.mxu0 0.0
    %6593 = vmatpush1.msra.mxu0 0.0
    %6594 = vmatprep.subr.mxu0 0.0
    %6595 = vmatpush1.msra.mxu0 0.0
    %6596 = vmatprep.subr.mxu0 0.0
    %6597 = vmatpush1.msra.mxu0 0.0
    %6598 = vmatprep.subr.mxu0 0.0
    %6599 = vmatpush1.msra.mxu0 0.0
    %6600 = vmatprep.subr.mxu0 0.0
    %6601 = vmatpush1.msra.mxu0 0.0
    %6602 = vmatprep.subr.mxu0 0.0
    %6603 = vmatpush1.msra.mxu0 0.0
    %6604 = vmatprep.subr.mxu0 0.0
    %6605 = vmatpush1.msra.mxu0 0.0
    %6606 = vmatprep.subr.mxu0 0.0
    %6607 = vmatpush1.msra.mxu0 0.0
    %6608 = vmatprep.subr.mxu0 0.0
    %6609 = vmatpush1.msra.mxu0 0.0
    %6610 = vmatprep.subr.mxu0 0.0
    %6611 = vmatpush1.msra.mxu0 0.0
    %6612 = vmatprep.subr.mxu0 0.0
    %6613 = vmatpush1.msra.mxu0 0.0
    %6614 = vmatprep.subr.mxu0 0.0
    %6615 = vmatpush1.msra.mxu0 0.0
    %6616 = vmatprep.subr.mxu0 0.0
    %6617 = vmatpush1.msra.mxu0 0.0
    %6618 = vmatprep.subr.mxu0 0.0
    %6619 = vmatpush1.msra.mxu0 0.0
    %6620 = vmatprep.subr.mxu0 0.0
    %6621 = vmatpush1.msra.mxu0 0.0
    %6622 = vmatprep.subr.mxu0 0.0
    %6623 = vmatpush1.msra.mxu0 0.0
    %6624 = vmatprep.subr.mxu0 0.0
    %6625 = vmatpush1.msra.mxu0 0.0
    %6626 = vmatprep.subr.mxu0 0.0
    %6627 = vmatpush1.msra.mxu0 0.0
    %6628 = vmatprep.subr.mxu0 0.0
    %6629 = vmatpush1.msra.mxu0 0.0
    %6630 = vmatprep.subr.mxu0 0.0
    %6631 = vmatpush1.msra.mxu0 0.0
    %6632 = vmatprep.subr.mxu0 0.0
    %6633 = vmatpush1.msra.mxu0 0.0
    %6634 = vmatprep.subr.mxu0 0.0
    %6635 = vmatpush1.msra.mxu0 0.0
    %6636 = vmatprep.subr.mxu0 0.0
    %6637 = vmatpush1.msra.mxu0 0.0
    %6638 = vmatprep.subr.mxu0 0.0
    %6639 = vmatpush1.msra.mxu0 0.0
    %6640 = vmatprep.subr.mxu0 0.0
    %6641 = vmatpush1.msra.mxu0 0.0
    %6642 = vmatprep.mubr.f32.mxu0 0.0
    %v6643 = vand.u32 %v6571, 4294901760
    %v6644 = vsub.f32 %v6571, %v6643
    %v6645 = vand.u32 %v6644, 4294901760
    %v6646 = vsub.f32 %v6644, %v6645
    %v6647 = vand.u32 %v6646, 4294901760
    %6648 = vmatmul.mubr.f32.gmra.mrb[0].mxu0 %v6647
    %v6649 = vpop.f32.mrb[0].mxu0
    %v6650 = vadd.f32 0.0, %v6649
    %v6651 = vpop.f32.mrb[0].mxu0
    %6652 = vmatprep.mubr.f32.mxu0 0.0
    %v6653 = vand.u32 %v6574, 4294901760
    %v6654 = vsub.f32 %v6574, %v6653
    %v6655 = vand.u32 %v6654, 4294901760
    %v6656 = vsub.f32 %v6654, %v6655
    %v6657 = vand.u32 %v6656, 4294901760
    %6658 = vmatmul.mubr.f32.gmra.mrb[0].mxu0 %v6657
    %v6659 = vpop.f32.mrb[0].mxu0
    %v6660 = vadd.f32 0.0, %v6659
    %v6661 = vpop.f32.mrb[0].mxu0
    %6662 = vdwg.mxu0
    %6663 = vmatprep.subr.mxu0 0.0
    %v6664 = vand.u32 %v6565, 4294901760
    %v6665 = vsub.f32 %v6565, %v6664
    %v6666 = vand.u32 %v6665, 4294901760
    %v6667 = vsub.f32 %v6665, %v6666
    %v6668 = vand.u32 %v6667, 4294901760
    %6669 = vmatpush1.msra.mxu0 %v6668
    %6670 = vmatprep.subr.mxu0 0.0
    %v6671 = vand.u32 %v6567, 4294901760
    %v6672 = vsub.f32 %v6567, %v6671
    %v6673 = vand.u32 %v6672, 4294901760
    %v6674 = vsub.f32 %v6672, %v6673
    %v6675 = vand.u32 %v6674, 4294901760
    %6676 = vmatpush1.msra.mxu0 %v6675
    %6677 = vmatprep.subr.mxu0 0.0
    %6678 = vmatpush1.msra.mxu0 0.0
    %6679 = vmatprep.subr.mxu0 0.0
    %6680 = vmatpush1.msra.mxu0 0.0
    %6681 = vmatprep.subr.mxu0 0.0
    %6682 = vmatpush1.msra.mxu0 0.0
    %6683 = vmatprep.subr.mxu0 0.0
    %6684 = vmatpush1.msra.mxu0 0.0
    %6685 = vmatprep.subr.mxu0 0.0
    %6686 = vmatpush1.msra.mxu0 0.0
    %6687 = vmatprep.subr.mxu0 0.0
    %6688 = vmatpush1.msra.mxu0 0.0
    %6689 = vmatprep.subr.mxu0 0.0
    %6690 = vmatpush1.msra.mxu0 0.0
    %6691 = vmatprep.subr.mxu0 0.0
    %6692 = vmatpush1.msra.mxu0 0.0
    %6693 = vmatprep.subr.mxu0 0.0
    %6694 = vmatpush1.msra.mxu0 0.0
    %6695 = vmatprep.subr.mxu0 0.0
    %6696 = vmatpush1.msra.mxu0 0.0
    %6697 = vmatprep.subr.mxu0 0.0
    %6698 = vmatpush1.msra.mxu0 0.0
    %6699 = vmatprep.subr.mxu0 0.0
    %6700 = vmatpush1.msra.mxu0 0.0
    %6701 = vmatprep.subr.mxu0 0.0
    %6702 = vmatpush1.msra.mxu0 0.0
    %6703 = vmatprep.subr.mxu0 0.0
    %6704 = vmatpush1.msra.mxu0 0.0
    %6705 = vmatprep.subr.mxu0 0.0
    %6706 = vmatpush1.msra.mxu0 0.0
    %6707 = vmatprep.subr.mxu0 0.0
    %6708 = vmatpush1.msra.mxu0 0.0
    %6709 = vmatprep.subr.mxu0 0.0
    %6710 = vmatpush1.msra.mxu0 0.0
    %6711 = vmatprep.subr.mxu0 0.0
    %6712 = vmatpush1.msra.mxu0 0.0
    %6713 = vmatprep.subr.mxu0 0.0
    %6714 = vmatpush1.msra.mxu0 0.0
    %6715 = vmatprep.subr.mxu0 0.0
    %6716 = vmatpush1.msra.mxu0 0.0
    %6717 = vmatprep.subr.mxu0 0.0
    %6718 = vmatpush1.msra.mxu0 0.0
    %6719 = vmatprep.subr.mxu0 0.0
    %6720 = vmatpush1.msra.mxu0 0.0
    %6721 = vmatprep.subr.mxu0 0.0
    %6722 = vmatpush1.msra.mxu0 0.0
    %6723 = vmatprep.subr.mxu0 0.0
    %6724 = vmatpush1.msra.mxu0 0.0
    %6725 = vmatprep.subr.mxu0 0.0
    %6726 = vmatpush1.msra.mxu0 0.0
    %6727 = vmatprep.subr.mxu0 0.0
    %6728 = vmatpush1.msra.mxu0 0.0
    %6729 = vmatprep.subr.mxu0 0.0
    %6730 = vmatpush1.msra.mxu0 0.0
    %6731 = vmatprep.subr.mxu0 0.0
    %6732 = vmatpush1.msra.mxu0 0.0
    %6733 = vmatprep.subr.mxu0 0.0
    %6734 = vmatpush1.msra.mxu0 0.0
    %6735 = vmatprep.subr.mxu0 0.0
    %6736 = vmatpush1.msra.mxu0 0.0
    %6737 = vmatprep.mubr.f32.mxu0 0.0
    %v6738 = vand.u32 %v6571, 4294901760
    %6739 = vmatmul.mubr.f32.gmra.mrb[0].mxu0 %v6738
    %v6740 = vpop.f32.mrb[0].mxu0
    %v6741 = vadd.f32 %v6650, %v6740
    %v6742 = vpop.f32.mrb[0].mxu0
    %6743 = vmatprep.mubr.f32.mxu0 0.0
    %v6744 = vand.u32 %v6574, 4294901760
    %6745 = vmatmul.mubr.f32.gmra.mrb[0].mxu0 %v6744
    %v6746 = vpop.f32.mrb[0].mxu0
    %v6747 = vadd.f32 %v6660, %v6746
    %v6748 = vpop.f32.mrb[0].mxu0
    %6749 = vdwg.mxu0
    %6750 = vmatprep.subr.mxu0 0.0
    %v6751 = vand.u32 %v6565, 4294901760
    %v6752 = vsub.f32 %v6565, %v6751
    %6753 = vmatpush1.msra.mxu0 %v6752
    %6754 = vmatprep.subr.mxu0 0.0
    %v6755 = vand.u32 %v6567, 4294901760
    %v6756 = vsub.f32 %v6567, %v6755
    %6757 = vmatpush1.msra.mxu0 %v6756
    %6758 = vmatprep.subr.mxu0 0.0
    %6759 = vmatpush1.msra.mxu0 0.0
    %6760 = vmatprep.subr.mxu0 0.0
    %6761 = vmatpush1.msra.mxu0 0.0
    %6762 = vmatprep.subr.mxu0 0.0
    %6763 = vmatpush1.msra.mxu0 0.0
    %6764 = vmatprep.subr.mxu0 0.0
    %6765 = vmatpush1.msra.mxu0 0.0
    %6766 = vmatprep.subr.mxu0 0.0
    %6767 = vmatpush1.msra.mxu0 0.0
    %6768 = vmatprep.subr.mxu0 0.0
    %6769 = vmatpush1.msra.mxu0 0.0
    %6770 = vmatprep.subr.mxu0 0.0
    %6771 = vmatpush1.msra.mxu0 0.0
    %6772 = vmatprep.subr.mxu0 0.0
    %6773 = vmatpush1.msra.mxu0 0.0
    %6774 = vmatprep.subr.mxu0 0.0
    %6775 = vmatpush1.msra.mxu0 0.0
    %6776 = vmatprep.subr.mxu0 0.0
    %6777 = vmatpush1.msra.mxu0 0.0
    %6778 = vmatprep.subr.mxu0 0.0
    %6779 = vmatpush1.msra.mxu0 0.0
    %6780 = vmatprep.subr.mxu0 0.0
    %6781 = vmatpush1.msra.mxu0 0.0
    %6782 = vmatprep.subr.mxu0 0.0
    %6783 = vmatpush1.msra.mxu0 0.0
    %6784 = vmatprep.subr.mxu0 0.0
    %6785 = vmatpush1.msra.mxu0 0.0
    %6786 = vmatprep.subr.mxu0 0.0
    %6787 = vmatpush1.msra.mxu0 0.0
    %6788 = vmatprep.subr.mxu0 0.0
    %6789 = vmatpush1.msra.mxu0 0.0
    %6790 = vmatprep.subr.mxu0 0.0
    %6791 = vmatpush1.msra.mxu0 0.0
    %6792 = vmatprep.subr.mxu0 0.0
    %6793 = vmatpush1.msra.mxu0 0.0
    %6794 = vmatprep.subr.mxu0 0.0
    %6795 = vmatpush1.msra.mxu0 0.0
    %6796 = vmatprep.subr.mxu0 0.0
    %6797 = vmatpush1.msra.mxu0 0.0
    %6798 = vmatprep.subr.mxu0 0.0
    %6799 = vmatpush1.msra.mxu0 0.0
    %6800 = vmatprep.subr.mxu0 0.0
    %6801 = vmatpush1.msra.mxu0 0.0
    %6802 = vmatprep.subr.mxu0 0.0
    %6803 = vmatpush1.msra.mxu0 0.0
    %6804 = vmatprep.subr.mxu0 0.0
    %6805 = vmatpush1.msra.mxu0 0.0
    %6806 = vmatprep.subr.mxu0 0.0
    %6807 = vmatpush1.msra.mxu0 0.0
    %6808 = vmatprep.subr.mxu0 0.0
    %6809 = vmatpush1.msra.mxu0 0.0
    %6810 = vmatprep.subr.mxu0 0.0
    %6811 = vmatpush1.msra.mxu0 0.0
    %6812 = vmatprep.subr.mxu0 0.0
    %6813 = vmatpush1.msra.mxu0 0.0
    %6814 = vmatprep.subr.mxu0 0.0
    %6815 = vmatpush1.msra.mxu0 0.0
    %6816 = vmatprep.subr.mxu0 0.0
    %6817 = vmatpush1.msra.mxu0 0.0
    %6818 = vmatprep.mubr.f32.mxu0 0.0
    %v6819 = vand.u32 %v6571, 4294901760
    %v6820 = vsub.f32 %v6571, %v6819
    %6821 = vmatmul.mubr.f32.gmra.mrb[0].mxu0 %v6820
    %v6822 = vpop.f32.mrb[0].mxu0
    %v6823 = vadd.f32 %v6741, %v6822
    %v6824 = vpop.f32.mrb[0].mxu0
    %6825 = vmatprep.mubr.f32.mxu0 0.0
    %v6826 = vand.u32 %v6574, 4294901760
    %v6827 = vsub.f32 %v6574, %v6826
    %6828 = vmatmul.mubr.f32.gmra.mrb[0].mxu0 %v6827
    %v6829 = vpop.f32.mrb[0].mxu0
    %v6830 = vadd.f32 %v6747, %v6829
    %v6831 = vpop.f32.mrb[0].mxu0
    %6832 = vdwg.mxu0
    %6833 = vmatprep.subr.mxu0 0.0
    %v6834 = vand.u32 %v6565, 4294901760
    %6835 = vmatpush1.msra.mxu0 %v6834
    %6836 = vmatprep.subr.mxu0 0.0
    %v6837 = vand.u32 %v6567, 4294901760
    %6838 = vmatpush1.msra.mxu0 %v6837
    %6839 = vmatprep.subr.mxu0 0.0
    %6840 = vmatpush1.msra.mxu0 0.0
    %6841 = vmatprep.subr.mxu0 0.0
    %6842 = vmatpush1.msra.mxu0 0.0
    %6843 = vmatprep.subr.mxu0 0.0
    %6844 = vmatpush1.msra.mxu0 0.0
    %6845 = vmatprep.subr.mxu0 0.0
    %6846 = vmatpush1.msra.mxu0 0.0
    %6847 = vmatprep.subr.mxu0 0.0
    %6848 = vmatpush1.msra.mxu0 0.0
    %6849 = vmatprep.subr.mxu0 0.0
    %6850 = vmatpush1.msra.mxu0 0.0
    %6851 = vmatprep.subr.mxu0 0.0
    %6852 = vmatpush1.msra.mxu0 0.0
    %6853 = vmatprep.subr.mxu0 0.0
    %6854 = vmatpush1.msra.mxu0 0.0
    %6855 = vmatprep.subr.mxu0 0.0
    %6856 = vmatpush1.msra.mxu0 0.0
    %6857 = vmatprep.subr.mxu0 0.0
    %6858 = vmatpush1.msra.mxu0 0.0
    %6859 = vmatprep.subr.mxu0 0.0
    %6860 = vmatpush1.msra.mxu0 0.0
    %6861 = vmatprep.subr.mxu0 0.0
    %6862 = vmatpush1.msra.mxu0 0.0
    %6863 = vmatprep.subr.mxu0 0.0
    %6864 = vmatpush1.msra.mxu0 0.0
    %6865 = vmatprep.subr.mxu0 0.0
    %6866 = vmatpush1.msra.mxu0 0.0
    %6867 = vmatprep.subr.mxu0 0.0
    %6868 = vmatpush1.msra.mxu0 0.0
    %6869 = vmatprep.subr.mxu0 0.0
    %6870 = vmatpush1.msra.mxu0 0.0
    %6871 = vmatprep.subr.mxu0 0.0
    %6872 = vmatpush1.msra.mxu0 0.0
    %6873 = vmatprep.subr.mxu0 0.0
    %6874 = vmatpush1.msra.mxu0 0.0
    %6875 = vmatprep.subr.mxu0 0.0
    %6876 = vmatpush1.msra.mxu0 0.0
    %6877 = vmatprep.subr.mxu0 0.0
    %6878 = vmatpush1.msra.mxu0 0.0
    %6879 = vmatprep.subr.mxu0 0.0
    %6880 = vmatpush1.msra.mxu0 0.0
    %6881 = vmatprep.subr.mxu0 0.0
    %6882 = vmatpush1.msra.mxu0 0.0
    %6883 = vmatprep.subr.mxu0 0.0
    %6884 = vmatpush1.msra.mxu0 0.0
    %6885 = vmatprep.subr.mxu0 0.0
    %6886 = vmatpush1.msra.mxu0 0.0
    %6887 = vmatprep.subr.mxu0 0.0
    %6888 = vmatpush1.msra.mxu0 0.0
    %6889 = vmatprep.subr.mxu0 0.0
    %6890 = vmatpush1.msra.mxu0 0.0
    %6891 = vmatprep.subr.mxu0 0.0
    %6892 = vmatpush1.msra.mxu0 0.0
    %6893 = vmatprep.subr.mxu0 0.0
    %6894 = vmatpush1.msra.mxu0 0.0
    %6895 = vmatprep.subr.mxu0 0.0
    %6896 = vmatpush1.msra.mxu0 0.0
    %6897 = vmatprep.subr.mxu0 0.0
    %6898 = vmatpush1.msra.mxu0 0.0
    %6899 = vmatprep.mubr.f32.mxu0 0.0
    %v6900 = vand.u32 %v6571, 4294901760
    %v6901 = vsub.f32 %v6571, %v6900
    %v6902 = vand.u32 %v6901, 4294901760
    %6903 = vmatmul.mubr.f32.gmra.mrb[0].mxu0 %v6902
    %v6904 = vpop.f32.mrb[0].mxu0
    %v6905 = vadd.f32 %v6823, %v6904
    %v6906 = vpop.f32.mrb[0].mxu0
    %6907 = vmatprep.mubr.f32.mxu0 0.0
    %v6908 = vand.u32 %v6574, 4294901760
    %v6909 = vsub.f32 %v6574, %v6908
    %v6910 = vand.u32 %v6909, 4294901760
    %6911 = vmatmul.mubr.f32.gmra.mrb[0].mxu0 %v6910
    %v6912 = vpop.f32.mrb[0].mxu0
    %v6913 = vadd.f32 %v6830, %v6912
    %v6914 = vpop.f32.mrb[0].mxu0
    %6915 = vdwg.mxu0
    %6916 = vmatprep.subr.mxu0 0.0
    %v6917 = vand.u32 %v6565, 4294901760
    %v6918 = vsub.f32 %v6565, %v6917
    %v6919 = vand.u32 %v6918, 4294901760
    %6920 = vmatpush1.msra.mxu0 %v6919
    %6921 = vmatprep.subr.mxu0 0.0
    %v6922 = vand.u32 %v6567, 4294901760
    %v6923 = vsub.f32 %v6567, %v6922
    %v6924 = vand.u32 %v6923, 4294901760
    %6925 = vmatpush1.msra.mxu0 %v6924
    %6926 = vmatprep.subr.mxu0 0.0
    %6927 = vmatpush1.msra.mxu0 0.0
    %6928 = vmatprep.subr.mxu0 0.0
    %6929 = vmatpush1.msra.mxu0 0.0
    %6930 = vmatprep.subr.mxu0 0.0
    %6931 = vmatpush1.msra.mxu0 0.0
    %6932 = vmatprep.subr.mxu0 0.0
    %6933 = vmatpush1.msra.mxu0 0.0
    %6934 = vmatprep.subr.mxu0 0.0
    %6935 = vmatpush1.msra.mxu0 0.0
    %6936 = vmatprep.subr.mxu0 0.0
    %6937 = vmatpush1.msra.mxu0 0.0
    %6938 = vmatprep.subr.mxu0 0.0
    %6939 = vmatpush1.msra.mxu0 0.0
    %6940 = vmatprep.subr.mxu0 0.0
    %6941 = vmatpush1.msra.mxu0 0.0
    %6942 = vmatprep.subr.mxu0 0.0
    %6943 = vmatpush1.msra.mxu0 0.0
    %6944 = vmatprep.subr.mxu0 0.0
    %6945 = vmatpush1.msra.mxu0 0.0
    %6946 = vmatprep.subr.mxu0 0.0
    %6947 = vmatpush1.msra.mxu0 0.0
    %6948 = vmatprep.subr.mxu0 0.0
    %6949 = vmatpush1.msra.mxu0 0.0
    %6950 = vmatprep.subr.mxu0 0.0
    %6951 = vmatpush1.msra.mxu0 0.0
    %6952 = vmatprep.subr.mxu0 0.0
    %6953 = vmatpush1.msra.mxu0 0.0
    %6954 = vmatprep.subr.mxu0 0.0
    %6955 = vmatpush1.msra.mxu0 0.0
    %6956 = vmatprep.subr.mxu0 0.0
    %6957 = vmatpush1.msra.mxu0 0.0
    %6958 = vmatprep.subr.mxu0 0.0
    %6959 = vmatpush1.msra.mxu0 0.0
    %6960 = vmatprep.subr.mxu0 0.0
    %6961 = vmatpush1.msra.mxu0 0.0
    %6962 = vmatprep.subr.mxu0 0.0
    %6963 = vmatpush1.msra.mxu0 0.0
    %6964 = vmatprep.subr.mxu0 0.0
    %6965 = vmatpush1.msra.mxu0 0.0
    %6966 = vmatprep.subr.mxu0 0.0
    %6967 = vmatpush1.msra.mxu0 0.0
    %6968 = vmatprep.subr.mxu0 0.0
    %6969 = vmatpush1.msra.mxu0 0.0
    %6970 = vmatprep.subr.mxu0 0.0
    %6971 = vmatpush1.msra.mxu0 0.0
    %6972 = vmatprep.subr.mxu0 0.0
    %6973 = vmatpush1.msra.mxu0 0.0
    %6974 = vmatprep.subr.mxu0 0.0
    %6975 = vmatpush1.msra.mxu0 0.0
    %6976 = vmatprep.subr.mxu0 0.0
    %6977 = vmatpush1.msra.mxu0 0.0
    %6978 = vmatprep.subr.mxu0 0.0
    %6979 = vmatpush1.msra.mxu0 0.0
    %6980 = vmatprep.subr.mxu0 0.0
    %6981 = vmatpush1.msra.mxu0 0.0
    %6982 = vmatprep.subr.mxu0 0.0
    %6983 = vmatpush1.msra.mxu0 0.0
    %6984 = vmatprep.subr.mxu0 0.0
    %6985 = vmatpush1.msra.mxu0 0.0
    %6986 = vmatprep.mubr.f32.mxu0 0.0
    %v6987 = vand.u32 %v6571, 4294901760
    %6988 = vmatmul.mubr.f32.gmra.mrb[0].mxu0 %v6987
    %v6989 = vpop.f32.mrb[0].mxu0
    %v6990 = vadd.f32 %v6905, %v6989
    %v6991 = vpop.f32.mrb[0].mxu0
    %6992 = vmatprep.mubr.f32.mxu0 0.0
    %v6993 = vand.u32 %v6574, 4294901760
    %6994 = vmatmul.mubr.f32.gmra.mrb[0].mxu0 %v6993
    %v6995 = vpop.f32.mrb[0].mxu0
    %v6996 = vadd.f32 %v6913, %v6995
    %v6997 = vpop.f32.mrb[0].mxu0
    %6998 = vdwg.mxu0
    %6999 = vmatprep.subr.mxu0 0.0
    %v7000 = vand.u32 %v6565, 4294901760
    %7001 = vmatpush1.msra.mxu0 %v7000
    %7002 = vmatprep.subr.mxu0 0.0
    %v7003 = vand.u32 %v6567, 4294901760
    %7004 = vmatpush1.msra.mxu0 %v7003
    %7005 = vmatprep.subr.mxu0 0.0
    %7006 = vmatpush1.msra.mxu0 0.0
    %7007 = vmatprep.subr.mxu0 0.0
    %7008 = vmatpush1.msra.mxu0 0.0
    %7009 = vmatprep.subr.mxu0 0.0
    %7010 = vmatpush1.msra.mxu0 0.0
    %7011 = vmatprep.subr.mxu0 0.0
    %7012 = vmatpush1.msra.mxu0 0.0
    %7013 = vmatprep.subr.mxu0 0.0
    %7014 = vmatpush1.msra.mxu0 0.0
    %7015 = vmatprep.subr.mxu0 0.0
    %7016 = vmatpush1.msra.mxu0 0.0
    %7017 = vmatprep.subr.mxu0 0.0
    %7018 = vmatpush1.msra.mxu0 0.0
    %7019 = vmatprep.subr.mxu0 0.0
    %7020 = vmatpush1.msra.mxu0 0.0
    %7021 = vmatprep.subr.mxu0 0.0
    %7022 = vmatpush1.msra.mxu0 0.0
    %7023 = vmatprep.subr.mxu0 0.0
    %7024 = vmatpush1.msra.mxu0 0.0
    %7025 = vmatprep.subr.mxu0 0.0
    %7026 = vmatpush1.msra.mxu0 0.0
    %7027 = vmatprep.subr.mxu0 0.0
    %7028 = vmatpush1.msra.mxu0 0.0
    %7029 = vmatprep.subr.mxu0 0.0
    %7030 = vmatpush1.msra.mxu0 0.0
    %7031 = vmatprep.subr.mxu0 0.0
    %7032 = vmatpush1.msra.mxu0 0.0
    %7033 = vmatprep.subr.mxu0 0.0
    %7034 = vmatpush1.msra.mxu0 0.0
    %7035 = vmatprep.subr.mxu0 0.0
    %7036 = vmatpush1.msra.mxu0 0.0
    %7037 = vmatprep.subr.mxu0 0.0
    %7038 = vmatpush1.msra.mxu0 0.0
    %7039 = vmatprep.subr.mxu0 0.0
    %7040 = vmatpush1.msra.mxu0 0.0
    %7041 = vmatprep.subr.mxu0 0.0
    %7042 = vmatpush1.msra.mxu0 0.0
    %7043 = vmatprep.subr.mxu0 0.0
    %7044 = vmatpush1.msra.mxu0 0.0
    %7045 = vmatprep.subr.mxu0 0.0
    %7046 = vmatpush1.msra.mxu0 0.0
    %7047 = vmatprep.subr.mxu0 0.0
    %7048 = vmatpush1.msra.mxu0 0.0
    %7049 = vmatprep.subr.mxu0 0.0
    %7050 = vmatpush1.msra.mxu0 0.0
    %7051 = vmatprep.subr.mxu0 0.0
    %7052 = vmatpush1.msra.mxu0 0.0
    %7053 = vmatprep.subr.mxu0 0.0
    %7054 = vmatpush1.msra.mxu0 0.0
    %7055 = vmatprep.subr.mxu0 0.0
    %7056 = vmatpush1.msra.mxu0 0.0
    %7057 = vmatprep.subr.mxu0 0.0
    %7058 = vmatpush1.msra.mxu0 0.0
    %7059 = vmatprep.subr.mxu0 0.0
    %7060 = vmatpush1.msra.mxu0 0.0
    %7061 = vmatprep.subr.mxu0 0.0
    %7062 = vmatpush1.msra.mxu0 0.0
    %7063 = vmatprep.subr.mxu0 0.0
    %7064 = vmatpush1.msra.mxu0 0.0
    %7065 = vmatprep.mubr.f32.mxu0 0.0
    %v7066 = vand.u32 %v6571, 4294901760
    %7067 = vmatmul.mubr.f32.gmra.mrb[0].mxu0 %v7066
    %v7068 = vpop.f32.mrb[0].mxu0
    %v7069 = vadd.f32 %v6990, %v7068
    %v7070 = vpop.f32.mrb[0].mxu0
    %7071 = vmatprep.mubr.f32.mxu0 0.0
    %v7072 = vand.u32 %v6574, 4294901760
    %7073 = vmatmul.mubr.f32.gmra.mrb[0].mxu0 %v7072
    %v7074 = vpop.f32.mrb[0].mxu0
    %v7075 = vadd.f32 %v6996, %v7074
    %v7076 = vpop.f32.mrb[0].mxu0
    %7077 = vdwg.mxu0
    %7078 = vrot.lane.b32.xlu0 %v701, 64
    %v7079 = vpop.permute.xlu0 %7078
    %7080 = vrot.lane.b32.xlu0 %v703, 64
    %v7081 = vpop.permute.xlu0 %7080
    %v7085 = vsel %vm4845, %v5007, 0
    %v7088 = vsel %vm4845, %v5009, 0
    %7090 = vmatprep.subr.mxu0 0.0
    %v7091 = vand.u32 %v7079, 4294901760
    %7092 = vmatpush1.msra.mxu0 %v7091
    %7093 = vmatprep.subr.mxu0 0.0
    %v7094 = vand.u32 %v7081, 4294901760
    %7095 = vmatpush1.msra.mxu0 %v7094
    %7096 = vmatprep.subr.mxu0 0.0
    %7097 = vmatpush1.msra.mxu0 0.0
    %7098 = vmatprep.subr.mxu0 0.0
    %7099 = vmatpush1.msra.mxu0 0.0
    %7100 = vmatprep.subr.mxu0 0.0
    %7101 = vmatpush1.msra.mxu0 0.0
    %7102 = vmatprep.subr.mxu0 0.0
    %7103 = vmatpush1.msra.mxu0 0.0
    %7104 = vmatprep.subr.mxu0 0.0
    %7105 = vmatpush1.msra.mxu0 0.0
    %7106 = vmatprep.subr.mxu0 0.0
    %7107 = vmatpush1.msra.mxu0 0.0
    %7108 = vmatprep.subr.mxu0 0.0
    %7109 = vmatpush1.msra.mxu0 0.0
    %7110 = vmatprep.subr.mxu0 0.0
    %7111 = vmatpush1.msra.mxu0 0.0
    %7112 = vmatprep.subr.mxu0 0.0
    %7113 = vmatpush1.msra.mxu0 0.0
    %7114 = vmatprep.subr.mxu0 0.0
    %7115 = vmatpush1.msra.mxu0 0.0
    %7116 = vmatprep.subr.mxu0 0.0
    %7117 = vmatpush1.msra.mxu0 0.0
    %7118 = vmatprep.subr.mxu0 0.0
    %7119 = vmatpush1.msra.mxu0 0.0
    %7120 = vmatprep.subr.mxu0 0.0
    %7121 = vmatpush1.msra.mxu0 0.0
    %7122 = vmatprep.subr.mxu0 0.0
    %7123 = vmatpush1.msra.mxu0 0.0
    %7124 = vmatprep.subr.mxu0 0.0
    %7125 = vmatpush1.msra.mxu0 0.0
    %7126 = vmatprep.subr.mxu0 0.0
    %7127 = vmatpush1.msra.mxu0 0.0
    %7128 = vmatprep.subr.mxu0 0.0
    %7129 = vmatpush1.msra.mxu0 0.0
    %7130 = vmatprep.subr.mxu0 0.0
    %7131 = vmatpush1.msra.mxu0 0.0
    %7132 = vmatprep.subr.mxu0 0.0
    %7133 = vmatpush1.msra.mxu0 0.0
    %7134 = vmatprep.subr.mxu0 0.0
    %7135 = vmatpush1.msra.mxu0 0.0
    %7136 = vmatprep.subr.mxu0 0.0
    %7137 = vmatpush1.msra.mxu0 0.0
    %7138 = vmatprep.subr.mxu0 0.0
    %7139 = vmatpush1.msra.mxu0 0.0
    %7140 = vmatprep.subr.mxu0 0.0
    %7141 = vmatpush1.msra.mxu0 0.0
    %7142 = vmatprep.subr.mxu0 0.0
    %7143 = vmatpush1.msra.mxu0 0.0
    %7144 = vmatprep.subr.mxu0 0.0
    %7145 = vmatpush1.msra.mxu0 0.0
    %7146 = vmatprep.subr.mxu0 0.0
    %7147 = vmatpush1.msra.mxu0 0.0
    %7148 = vmatprep.subr.mxu0 0.0
    %7149 = vmatpush1.msra.mxu0 0.0
    %7150 = vmatprep.subr.mxu0 0.0
    %7151 = vmatpush1.msra.mxu0 0.0
    %7152 = vmatprep.subr.mxu0 0.0
    %7153 = vmatpush1.msra.mxu0 0.0
    %7154 = vmatprep.subr.mxu0 0.0
    %7155 = vmatpush1.msra.mxu0 0.0
    %7156 = vmatprep.mubr.f32.mxu0 0.0
    %v7157 = vand.u32 %v7085, 4294901760
    %v7158 = vsub.f32 %v7085, %v7157
    %v7159 = vand.u32 %v7158, 4294901760
    %v7160 = vsub.f32 %v7158, %v7159
    %v7161 = vand.u32 %v7160, 4294901760
    %7162 = vmatmul.mubr.f32.gmra.mrb[0].mxu0 %v7161
    %v7163 = vpop.f32.mrb[0].mxu0
    %v7164 = vadd.f32 0.0, %v7163
    %v7165 = vpop.f32.mrb[0].mxu0
    %7166 = vmatprep.mubr.f32.mxu0 0.0
    %v7167 = vand.u32 %v7088, 4294901760
    %v7168 = vsub.f32 %v7088, %v7167
    %v7169 = vand.u32 %v7168, 4294901760
    %v7170 = vsub.f32 %v7168, %v7169
    %v7171 = vand.u32 %v7170, 4294901760
    %7172 = vmatmul.mubr.f32.gmra.mrb[0].mxu0 %v7171
    %v7173 = vpop.f32.mrb[0].mxu0
    %v7174 = vadd.f32 0.0, %v7173
    %v7175 = vpop.f32.mrb[0].mxu0
    %7176 = vdwg.mxu0
    %7177 = vmatprep.subr.mxu0 0.0
    %v7178 = vand.u32 %v7079, 4294901760
    %v7179 = vsub.f32 %v7079, %v7178
    %v7180 = vand.u32 %v7179, 4294901760
    %v7181 = vsub.f32 %v7179, %v7180
    %v7182 = vand.u32 %v7181, 4294901760
    %7183 = vmatpush1.msra.mxu0 %v7182
    %7184 = vmatprep.subr.mxu0 0.0
    %v7185 = vand.u32 %v7081, 4294901760
    %v7186 = vsub.f32 %v7081, %v7185
    %v7187 = vand.u32 %v7186, 4294901760
    %v7188 = vsub.f32 %v7186, %v7187
    %v7189 = vand.u32 %v7188, 4294901760
    %7190 = vmatpush1.msra.mxu0 %v7189
    %7191 = vmatprep.subr.mxu0 0.0
    %7192 = vmatpush1.msra.mxu0 0.0
    %7193 = vmatprep.subr.mxu0 0.0
    %7194 = vmatpush1.msra.mxu0 0.0
    %7195 = vmatprep.subr.mxu0 0.0
    %7196 = vmatpush1.msra.mxu0 0.0
    %7197 = vmatprep.subr.mxu0 0.0
    %7198 = vmatpush1.msra.mxu0 0.0
    %7199 = vmatprep.subr.mxu0 0.0
    %7200 = vmatpush1.msra.mxu0 0.0
    %7201 = vmatprep.subr.mxu0 0.0
    %7202 = vmatpush1.msra.mxu0 0.0
    %7203 = vmatprep.subr.mxu0 0.0
    %7204 = vmatpush1.msra.mxu0 0.0
    %7205 = vmatprep.subr.mxu0 0.0
    %7206 = vmatpush1.msra.mxu0 0.0
    %7207 = vmatprep.subr.mxu0 0.0
    %7208 = vmatpush1.msra.mxu0 0.0
    %7209 = vmatprep.subr.mxu0 0.0
    %7210 = vmatpush1.msra.mxu0 0.0
    %7211 = vmatprep.subr.mxu0 0.0
    %7212 = vmatpush1.msra.mxu0 0.0
    %7213 = vmatprep.subr.mxu0 0.0
    %7214 = vmatpush1.msra.mxu0 0.0
    %7215 = vmatprep.subr.mxu0 0.0
    %7216 = vmatpush1.msra.mxu0 0.0
    %7217 = vmatprep.subr.mxu0 0.0
    %7218 = vmatpush1.msra.mxu0 0.0
    %7219 = vmatprep.subr.mxu0 0.0
    %7220 = vmatpush1.msra.mxu0 0.0
    %7221 = vmatprep.subr.mxu0 0.0
    %7222 = vmatpush1.msra.mxu0 0.0
    %7223 = vmatprep.subr.mxu0 0.0
    %7224 = vmatpush1.msra.mxu0 0.0
    %7225 = vmatprep.subr.mxu0 0.0
    %7226 = vmatpush1.msra.mxu0 0.0
    %7227 = vmatprep.subr.mxu0 0.0
    %7228 = vmatpush1.msra.mxu0 0.0
    %7229 = vmatprep.subr.mxu0 0.0
    %7230 = vmatpush1.msra.mxu0 0.0
    %7231 = vmatprep.subr.mxu0 0.0
    %7232 = vmatpush1.msra.mxu0 0.0
    %7233 = vmatprep.subr.mxu0 0.0
    %7234 = vmatpush1.msra.mxu0 0.0
    %7235 = vmatprep.subr.mxu0 0.0
    %7236 = vmatpush1.msra.mxu0 0.0
    %7237 = vmatprep.subr.mxu0 0.0
    %7238 = vmatpush1.msra.mxu0 0.0
    %7239 = vmatprep.subr.mxu0 0.0
    %7240 = vmatpush1.msra.mxu0 0.0
    %7241 = vmatprep.subr.mxu0 0.0
    %7242 = vmatpush1.msra.mxu0 0.0
    %7243 = vmatprep.subr.mxu0 0.0
    %7244 = vmatpush1.msra.mxu0 0.0
    %7245 = vmatprep.subr.mxu0 0.0
    %7246 = vmatpush1.msra.mxu0 0.0
    %7247 = vmatprep.subr.mxu0 0.0
    %7248 = vmatpush1.msra.mxu0 0.0
    %7249 = vmatprep.subr.mxu0 0.0
    %7250 = vmatpush1.msra.mxu0 0.0
    %7251 = vmatprep.mubr.f32.mxu0 0.0
    %v7252 = vand.u32 %v7085, 4294901760
    %7253 = vmatmul.mubr.f32.gmra.mrb[0].mxu0 %v7252
    %v7254 = vpop.f32.mrb[0].mxu0
    %v7255 = vadd.f32 %v7164, %v7254
    %v7256 = vpop.f32.mrb[0].mxu0
    %7257 = vmatprep.mubr.f32.mxu0 0.0
    %v7258 = vand.u32 %v7088, 4294901760
    %7259 = vmatmul.mubr.f32.gmra.mrb[0].mxu0 %v7258
    %v7260 = vpop.f32.mrb[0].mxu0
    %v7261 = vadd.f32 %v7174, %v7260
    %v7262 = vpop.f32.mrb[0].mxu0
    %7263 = vdwg.mxu0
    %7264 = vmatprep.subr.mxu0 0.0
    %v7265 = vand.u32 %v7079, 4294901760
    %v7266 = vsub.f32 %v7079, %v7265
    %7267 = vmatpush1.msra.mxu0 %v7266
    %7268 = vmatprep.subr.mxu0 0.0
    %v7269 = vand.u32 %v7081, 4294901760
    %v7270 = vsub.f32 %v7081, %v7269
    %7271 = vmatpush1.msra.mxu0 %v7270
    %7272 = vmatprep.subr.mxu0 0.0
    %7273 = vmatpush1.msra.mxu0 0.0
    %7274 = vmatprep.subr.mxu0 0.0
    %7275 = vmatpush1.msra.mxu0 0.0
    %7276 = vmatprep.subr.mxu0 0.0
    %7277 = vmatpush1.msra.mxu0 0.0
    %7278 = vmatprep.subr.mxu0 0.0
    %7279 = vmatpush1.msra.mxu0 0.0
    %7280 = vmatprep.subr.mxu0 0.0
    %7281 = vmatpush1.msra.mxu0 0.0
    %7282 = vmatprep.subr.mxu0 0.0
    %7283 = vmatpush1.msra.mxu0 0.0
    %7284 = vmatprep.subr.mxu0 0.0
    %7285 = vmatpush1.msra.mxu0 0.0
    %7286 = vmatprep.subr.mxu0 0.0
    %7287 = vmatpush1.msra.mxu0 0.0
    %7288 = vmatprep.subr.mxu0 0.0
    %7289 = vmatpush1.msra.mxu0 0.0
    %7290 = vmatprep.subr.mxu0 0.0
    %7291 = vmatpush1.msra.mxu0 0.0
    %7292 = vmatprep.subr.mxu0 0.0
    %7293 = vmatpush1.msra.mxu0 0.0
    %7294 = vmatprep.subr.mxu0 0.0
    %7295 = vmatpush1.msra.mxu0 0.0
    %7296 = vmatprep.subr.mxu0 0.0
    %7297 = vmatpush1.msra.mxu0 0.0
    %7298 = vmatprep.subr.mxu0 0.0
    %7299 = vmatpush1.msra.mxu0 0.0
    %7300 = vmatprep.subr.mxu0 0.0
    %7301 = vmatpush1.msra.mxu0 0.0
    %7302 = vmatprep.subr.mxu0 0.0
    %7303 = vmatpush1.msra.mxu0 0.0
    %7304 = vmatprep.subr.mxu0 0.0
    %7305 = vmatpush1.msra.mxu0 0.0
    %7306 = vmatprep.subr.mxu0 0.0
    %7307 = vmatpush1.msra.mxu0 0.0
    %7308 = vmatprep.subr.mxu0 0.0
    %7309 = vmatpush1.msra.mxu0 0.0
    %7310 = vmatprep.subr.mxu0 0.0
    %7311 = vmatpush1.msra.mxu0 0.0
    %7312 = vmatprep.subr.mxu0 0.0
    %7313 = vmatpush1.msra.mxu0 0.0
    %7314 = vmatprep.subr.mxu0 0.0
    %7315 = vmatpush1.msra.mxu0 0.0
    %7316 = vmatprep.subr.mxu0 0.0
    %7317 = vmatpush1.msra.mxu0 0.0
    %7318 = vmatprep.subr.mxu0 0.0
    %7319 = vmatpush1.msra.mxu0 0.0
    %7320 = vmatprep.subr.mxu0 0.0
    %7321 = vmatpush1.msra.mxu0 0.0
    %7322 = vmatprep.subr.mxu0 0.0
    %7323 = vmatpush1.msra.mxu0 0.0
    %7324 = vmatprep.subr.mxu0 0.0
    %7325 = vmatpush1.msra.mxu0 0.0
    %7326 = vmatprep.subr.mxu0 0.0
    %7327 = vmatpush1.msra.mxu0 0.0
    %7328 = vmatprep.subr.mxu0 0.0
    %7329 = vmatpush1.msra.mxu0 0.0
    %7330 = vmatprep.subr.mxu0 0.0
    %7331 = vmatpush1.msra.mxu0 0.0
    %7332 = vmatprep.mubr.f32.mxu0 0.0
    %v7333 = vand.u32 %v7085, 4294901760
    %v7334 = vsub.f32 %v7085, %v7333
    %7335 = vmatmul.mubr.f32.gmra.mrb[0].mxu0 %v7334
    %v7336 = vpop.f32.mrb[0].mxu0
    %v7337 = vadd.f32 %v7255, %v7336
    %v7338 = vpop.f32.mrb[0].mxu0
    %7339 = vmatprep.mubr.f32.mxu0 0.0
    %v7340 = vand.u32 %v7088, 4294901760
    %v7341 = vsub.f32 %v7088, %v7340
    %7342 = vmatmul.mubr.f32.gmra.mrb[0].mxu0 %v7341
    %v7343 = vpop.f32.mrb[0].mxu0
    %v7344 = vadd.f32 %v7261, %v7343
    %v7345 = vpop.f32.mrb[0].mxu0
    %7346 = vdwg.mxu0
    %7347 = vmatprep.subr.mxu0 0.0
    %v7348 = vand.u32 %v7079, 4294901760
    %7349 = vmatpush1.msra.mxu0 %v7348
    %7350 = vmatprep.subr.mxu0 0.0
    %v7351 = vand.u32 %v7081, 4294901760
    %7352 = vmatpush1.msra.mxu0 %v7351
    %7353 = vmatprep.subr.mxu0 0.0
    %7354 = vmatpush1.msra.mxu0 0.0
    %7355 = vmatprep.subr.mxu0 0.0
    %7356 = vmatpush1.msra.mxu0 0.0
    %7357 = vmatprep.subr.mxu0 0.0
    %7358 = vmatpush1.msra.mxu0 0.0
    %7359 = vmatprep.subr.mxu0 0.0
    %7360 = vmatpush1.msra.mxu0 0.0
    %7361 = vmatprep.subr.mxu0 0.0
    %7362 = vmatpush1.msra.mxu0 0.0
    %7363 = vmatprep.subr.mxu0 0.0
    %7364 = vmatpush1.msra.mxu0 0.0
    %7365 = vmatprep.subr.mxu0 0.0
    %7366 = vmatpush1.msra.mxu0 0.0
    %7367 = vmatprep.subr.mxu0 0.0
    %7368 = vmatpush1.msra.mxu0 0.0
    %7369 = vmatprep.subr.mxu0 0.0
    %7370 = vmatpush1.msra.mxu0 0.0
    %7371 = vmatprep.subr.mxu0 0.0
    %7372 = vmatpush1.msra.mxu0 0.0
    %7373 = vmatprep.subr.mxu0 0.0
    %7374 = vmatpush1.msra.mxu0 0.0
    %7375 = vmatprep.subr.mxu0 0.0
    %7376 = vmatpush1.msra.mxu0 0.0
    %7377 = vmatprep.subr.mxu0 0.0
    %7378 = vmatpush1.msra.mxu0 0.0
    %7379 = vmatprep.subr.mxu0 0.0
    %7380 = vmatpush1.msra.mxu0 0.0
    %7381 = vmatprep.subr.mxu0 0.0
    %7382 = vmatpush1.msra.mxu0 0.0
    %7383 = vmatprep.subr.mxu0 0.0
    %7384 = vmatpush1.msra.mxu0 0.0
    %7385 = vmatprep.subr.mxu0 0.0
    %7386 = vmatpush1.msra.mxu0 0.0
    %7387 = vmatprep.subr.mxu0 0.0
    %7388 = vmatpush1.msra.mxu0 0.0
    %7389 = vmatprep.subr.mxu0 0.0
    %7390 = vmatpush1.msra.mxu0 0.0
    %7391 = vmatprep.subr.mxu0 0.0
    %7392 = vmatpush1.msra.mxu0 0.0
    %7393 = vmatprep.subr.mxu0 0.0
    %7394 = vmatpush1.msra.mxu0 0.0
    %7395 = vmatprep.subr.mxu0 0.0
    %7396 = vmatpush1.msra.mxu0 0.0
    %7397 = vmatprep.subr.mxu0 0.0
    %7398 = vmatpush1.msra.mxu0 0.0
    %7399 = vmatprep.subr.mxu0 0.0
    %7400 = vmatpush1.msra.mxu0 0.0
    %7401 = vmatprep.subr.mxu0 0.0
    %7402 = vmatpush1.msra.mxu0 0.0
    %7403 = vmatprep.subr.mxu0 0.0
    %7404 = vmatpush1.msra.mxu0 0.0
    %7405 = vmatprep.subr.mxu0 0.0
    %7406 = vmatpush1.msra.mxu0 0.0
    %7407 = vmatprep.subr.mxu0 0.0
    %7408 = vmatpush1.msra.mxu0 0.0
    %7409 = vmatprep.subr.mxu0 0.0
    %7410 = vmatpush1.msra.mxu0 0.0
    %7411 = vmatprep.subr.mxu0 0.0
    %7412 = vmatpush1.msra.mxu0 0.0
    %7413 = vmatprep.mubr.f32.mxu0 0.0
    %v7414 = vand.u32 %v7085, 4294901760
    %v7415 = vsub.f32 %v7085, %v7414
    %v7416 = vand.u32 %v7415, 4294901760
    %7417 = vmatmul.mubr.f32.gmra.mrb[0].mxu0 %v7416
    %v7418 = vpop.f32.mrb[0].mxu0
    %v7419 = vadd.f32 %v7337, %v7418
    %v7420 = vpop.f32.mrb[0].mxu0
    %7421 = vmatprep.mubr.f32.mxu0 0.0
    %v7422 = vand.u32 %v7088, 4294901760
    %v7423 = vsub.f32 %v7088, %v7422
    %v7424 = vand.u32 %v7423, 4294901760
    %7425 = vmatmul.mubr.f32.gmra.mrb[0].mxu0 %v7424
    %v7426 = vpop.f32.mrb[0].mxu0
    %v7427 = vadd.f32 %v7344, %v7426
    %v7428 = vpop.f32.mrb[0].mxu0
    %7429 = vdwg.mxu0
    %7430 = vmatprep.subr.mxu0 0.0
    %v7431 = vand.u32 %v7079, 4294901760
    %v7432 = vsub.f32 %v7079, %v7431
    %v7433 = vand.u32 %v7432, 4294901760
    %7434 = vmatpush1.msra.mxu0 %v7433
    %7435 = vmatprep.subr.mxu0 0.0
    %v7436 = vand.u32 %v7081, 4294901760
    %v7437 = vsub.f32 %v7081, %v7436
    %v7438 = vand.u32 %v7437, 4294901760
    %7439 = vmatpush1.msra.mxu0 %v7438
    %7440 = vmatprep.subr.mxu0 0.0
    %7441 = vmatpush1.msra.mxu0 0.0
    %7442 = vmatprep.subr.mxu0 0.0
    %7443 = vmatpush1.msra.mxu0 0.0
    %7444 = vmatprep.subr.mxu0 0.0
    %7445 = vmatpush1.msra.mxu0 0.0
    %7446 = vmatprep.subr.mxu0 0.0
    %7447 = vmatpush1.msra.mxu0 0.0
    %7448 = vmatprep.subr.mxu0 0.0
    %7449 = vmatpush1.msra.mxu0 0.0
    %7450 = vmatprep.subr.mxu0 0.0
    %7451 = vmatpush1.msra.mxu0 0.0
    %7452 = vmatprep.subr.mxu0 0.0
    %7453 = vmatpush1.msra.mxu0 0.0
    %7454 = vmatprep.subr.mxu0 0.0
    %7455 = vmatpush1.msra.mxu0 0.0
    %7456 = vmatprep.subr.mxu0 0.0
    %7457 = vmatpush1.msra.mxu0 0.0
    %7458 = vmatprep.subr.mxu0 0.0
    %7459 = vmatpush1.msra.mxu0 0.0
    %7460 = vmatprep.subr.mxu0 0.0
    %7461 = vmatpush1.msra.mxu0 0.0
    %7462 = vmatprep.subr.mxu0 0.0
    %7463 = vmatpush1.msra.mxu0 0.0
    %7464 = vmatprep.subr.mxu0 0.0
    %7465 = vmatpush1.msra.mxu0 0.0
    %7466 = vmatprep.subr.mxu0 0.0
    %7467 = vmatpush1.msra.mxu0 0.0
    %7468 = vmatprep.subr.mxu0 0.0
    %7469 = vmatpush1.msra.mxu0 0.0
    %7470 = vmatprep.subr.mxu0 0.0
    %7471 = vmatpush1.msra.mxu0 0.0
    %7472 = vmatprep.subr.mxu0 0.0
    %7473 = vmatpush1.msra.mxu0 0.0
    %7474 = vmatprep.subr.mxu0 0.0
    %7475 = vmatpush1.msra.mxu0 0.0
    %7476 = vmatprep.subr.mxu0 0.0
    %7477 = vmatpush1.msra.mxu0 0.0
    %7478 = vmatprep.subr.mxu0 0.0
    %7479 = vmatpush1.msra.mxu0 0.0
    %7480 = vmatprep.subr.mxu0 0.0
    %7481 = vmatpush1.msra.mxu0 0.0
    %7482 = vmatprep.subr.mxu0 0.0
    %7483 = vmatpush1.msra.mxu0 0.0
    %7484 = vmatprep.subr.mxu0 0.0
    %7485 = vmatpush1.msra.mxu0 0.0
    %7486 = vmatprep.subr.mxu0 0.0
    %7487 = vmatpush1.msra.mxu0 0.0
    %7488 = vmatprep.subr.mxu0 0.0
    %7489 = vmatpush1.msra.mxu0 0.0
    %7490 = vmatprep.subr.mxu0 0.0
    %7491 = vmatpush1.msra.mxu0 0.0
    %7492 = vmatprep.subr.mxu0 0.0
    %7493 = vmatpush1.msra.mxu0 0.0
    %7494 = vmatprep.subr.mxu0 0.0
    %7495 = vmatpush1.msra.mxu0 0.0
    %7496 = vmatprep.subr.mxu0 0.0
    %7497 = vmatpush1.msra.mxu0 0.0
    %7498 = vmatprep.subr.mxu0 0.0
    %7499 = vmatpush1.msra.mxu0 0.0
    %7500 = vmatprep.mubr.f32.mxu0 0.0
    %v7501 = vand.u32 %v7085, 4294901760
    %7502 = vmatmul.mubr.f32.gmra.mrb[0].mxu0 %v7501
    %v7503 = vpop.f32.mrb[0].mxu0
    %v7504 = vadd.f32 %v7419, %v7503
    %v7505 = vpop.f32.mrb[0].mxu0
    %7506 = vmatprep.mubr.f32.mxu0 0.0
    %v7507 = vand.u32 %v7088, 4294901760
    %7508 = vmatmul.mubr.f32.gmra.mrb[0].mxu0 %v7507
    %v7509 = vpop.f32.mrb[0].mxu0
    %v7510 = vadd.f32 %v7427, %v7509
    %v7511 = vpop.f32.mrb[0].mxu0
    %7512 = vdwg.mxu0
    %7513 = vmatprep.subr.mxu0 0.0
    %v7514 = vand.u32 %v7079, 4294901760
    %7515 = vmatpush1.msra.mxu0 %v7514
    %7516 = vmatprep.subr.mxu0 0.0
    %v7517 = vand.u32 %v7081, 4294901760
    %7518 = vmatpush1.msra.mxu0 %v7517
    %7519 = vmatprep.subr.mxu0 0.0
    %7520 = vmatpush1.msra.mxu0 0.0
    %7521 = vmatprep.subr.mxu0 0.0
    %7522 = vmatpush1.msra.mxu0 0.0
    %7523 = vmatprep.subr.mxu0 0.0
    %7524 = vmatpush1.msra.mxu0 0.0
    %7525 = vmatprep.subr.mxu0 0.0
    %7526 = vmatpush1.msra.mxu0 0.0
    %7527 = vmatprep.subr.mxu0 0.0
    %7528 = vmatpush1.msra.mxu0 0.0
    %7529 = vmatprep.subr.mxu0 0.0
    %7530 = vmatpush1.msra.mxu0 0.0
    %7531 = vmatprep.subr.mxu0 0.0
    %7532 = vmatpush1.msra.mxu0 0.0
    %7533 = vmatprep.subr.mxu0 0.0
    %7534 = vmatpush1.msra.mxu0 0.0
    %7535 = vmatprep.subr.mxu0 0.0
    %7536 = vmatpush1.msra.mxu0 0.0
    %7537 = vmatprep.subr.mxu0 0.0
    %7538 = vmatpush1.msra.mxu0 0.0
    %7539 = vmatprep.subr.mxu0 0.0
    %7540 = vmatpush1.msra.mxu0 0.0
    %7541 = vmatprep.subr.mxu0 0.0
    %7542 = vmatpush1.msra.mxu0 0.0
    %7543 = vmatprep.subr.mxu0 0.0
    %7544 = vmatpush1.msra.mxu0 0.0
    %7545 = vmatprep.subr.mxu0 0.0
    %7546 = vmatpush1.msra.mxu0 0.0
    %7547 = vmatprep.subr.mxu0 0.0
    %7548 = vmatpush1.msra.mxu0 0.0
    %7549 = vmatprep.subr.mxu0 0.0
    %7550 = vmatpush1.msra.mxu0 0.0
    %7551 = vmatprep.subr.mxu0 0.0
    %7552 = vmatpush1.msra.mxu0 0.0
    %7553 = vmatprep.subr.mxu0 0.0
    %7554 = vmatpush1.msra.mxu0 0.0
    %7555 = vmatprep.subr.mxu0 0.0
    %7556 = vmatpush1.msra.mxu0 0.0
    %7557 = vmatprep.subr.mxu0 0.0
    %7558 = vmatpush1.msra.mxu0 0.0
    %7559 = vmatprep.subr.mxu0 0.0
    %7560 = vmatpush1.msra.mxu0 0.0
    %7561 = vmatprep.subr.mxu0 0.0
    %7562 = vmatpush1.msra.mxu0 0.0
    %7563 = vmatprep.subr.mxu0 0.0
    %7564 = vmatpush1.msra.mxu0 0.0
    %7565 = vmatprep.subr.mxu0 0.0
    %7566 = vmatpush1.msra.mxu0 0.0
    %7567 = vmatprep.subr.mxu0 0.0
    %7568 = vmatpush1.msra.mxu0 0.0
    %7569 = vmatprep.subr.mxu0 0.0
    %7570 = vmatpush1.msra.mxu0 0.0
    %7571 = vmatprep.subr.mxu0 0.0
    %7572 = vmatpush1.msra.mxu0 0.0
    %7573 = vmatprep.subr.mxu0 0.0
    %7574 = vmatpush1.msra.mxu0 0.0
    %7575 = vmatprep.subr.mxu0 0.0
    %7576 = vmatpush1.msra.mxu0 0.0
    %7577 = vmatprep.subr.mxu0 0.0
    %7578 = vmatpush1.msra.mxu0 0.0
    %7579 = vmatprep.mubr.f32.mxu0 0.0
    %v7580 = vand.u32 %v7085, 4294901760
    %7581 = vmatmul.mubr.f32.gmra.mrb[0].mxu0 %v7580
    %v7582 = vpop.f32.mrb[0].mxu0
    %v7583 = vadd.f32 %v7504, %v7582
    %v7584 = vpop.f32.mrb[0].mxu0
    %7585 = vmatprep.mubr.f32.mxu0 0.0
    %v7586 = vand.u32 %v7088, 4294901760
    %7587 = vmatmul.mubr.f32.gmra.mrb[0].mxu0 %v7586
    %v7588 = vpop.f32.mrb[0].mxu0
    %v7589 = vadd.f32 %v7510, %v7588
    %v7590 = vpop.f32.mrb[0].mxu0
    %7591 = vdwg.mxu0
    %7592 = vrot.lane.b32.xlu0 %v705, 64
    %v7593 = vpop.permute.xlu0 %7592
    %7594 = vrot.lane.b32.xlu0 %v707, 64
    %v7595 = vpop.permute.xlu0 %7594
    %v7599 = vsel %vm4845, %v5011, 0
    %v7602 = vsel %vm4845, %v5013, 0
    %7604 = vmatprep.subr.mxu0 0.0
    %v7605 = vand.u32 %v7593, 4294901760
    %7606 = vmatpush1.msra.mxu0 %v7605
    %7607 = vmatprep.subr.mxu0 0.0
    %v7608 = vand.u32 %v7595, 4294901760
    %7609 = vmatpush1.msra.mxu0 %v7608
    %7610 = vmatprep.subr.mxu0 0.0
    %7611 = vmatpush1.msra.mxu0 0.0
    %7612 = vmatprep.subr.mxu0 0.0
    %7613 = vmatpush1.msra.mxu0 0.0
    %7614 = vmatprep.subr.mxu0 0.0
    %7615 = vmatpush1.msra.mxu0 0.0
    %7616 = vmatprep.subr.mxu0 0.0
    %7617 = vmatpush1.msra.mxu0 0.0
    %7618 = vmatprep.subr.mxu0 0.0
    %7619 = vmatpush1.msra.mxu0 0.0
    %7620 = vmatprep.subr.mxu0 0.0
    %7621 = vmatpush1.msra.mxu0 0.0
    %7622 = vmatprep.subr.mxu0 0.0
    %7623 = vmatpush1.msra.mxu0 0.0
    %7624 = vmatprep.subr.mxu0 0.0
    %7625 = vmatpush1.msra.mxu0 0.0
    %7626 = vmatprep.subr.mxu0 0.0
    %7627 = vmatpush1.msra.mxu0 0.0
    %7628 = vmatprep.subr.mxu0 0.0
    %7629 = vmatpush1.msra.mxu0 0.0
    %7630 = vmatprep.subr.mxu0 0.0
    %7631 = vmatpush1.msra.mxu0 0.0
    %7632 = vmatprep.subr.mxu0 0.0
    %7633 = vmatpush1.msra.mxu0 0.0
    %7634 = vmatprep.subr.mxu0 0.0
    %7635 = vmatpush1.msra.mxu0 0.0
    %7636 = vmatprep.subr.mxu0 0.0
    %7637 = vmatpush1.msra.mxu0 0.0
    %7638 = vmatprep.subr.mxu0 0.0
    %7639 = vmatpush1.msra.mxu0 0.0
    %7640 = vmatprep.subr.mxu0 0.0
    %7641 = vmatpush1.msra.mxu0 0.0
    %7642 = vmatprep.subr.mxu0 0.0
    %7643 = vmatpush1.msra.mxu0 0.0
    %7644 = vmatprep.subr.mxu0 0.0
    %7645 = vmatpush1.msra.mxu0 0.0
    %7646 = vmatprep.subr.mxu0 0.0
    %7647 = vmatpush1.msra.mxu0 0.0
    %7648 = vmatprep.subr.mxu0 0.0
    %7649 = vmatpush1.msra.mxu0 0.0
    %7650 = vmatprep.subr.mxu0 0.0
    %7651 = vmatpush1.msra.mxu0 0.0
    %7652 = vmatprep.subr.mxu0 0.0
    %7653 = vmatpush1.msra.mxu0 0.0
    %7654 = vmatprep.subr.mxu0 0.0
    %7655 = vmatpush1.msra.mxu0 0.0
    %7656 = vmatprep.subr.mxu0 0.0
    %7657 = vmatpush1.msra.mxu0 0.0
    %7658 = vmatprep.subr.mxu0 0.0
    %7659 = vmatpush1.msra.mxu0 0.0
    %7660 = vmatprep.subr.mxu0 0.0
    %7661 = vmatpush1.msra.mxu0 0.0
    %7662 = vmatprep.subr.mxu0 0.0
    %7663 = vmatpush1.msra.mxu0 0.0
    %7664 = vmatprep.subr.mxu0 0.0
    %7665 = vmatpush1.msra.mxu0 0.0
    %7666 = vmatprep.subr.mxu0 0.0
    %7667 = vmatpush1.msra.mxu0 0.0
    %7668 = vmatprep.subr.mxu0 0.0
    %7669 = vmatpush1.msra.mxu0 0.0
    %7670 = vmatprep.mubr.f32.mxu0 0.0
    %v7671 = vand.u32 %v7599, 4294901760
    %v7672 = vsub.f32 %v7599, %v7671
    %v7673 = vand.u32 %v7672, 4294901760
    %v7674 = vsub.f32 %v7672, %v7673
    %v7675 = vand.u32 %v7674, 4294901760
    %7676 = vmatmul.mubr.f32.gmra.mrb[0].mxu0 %v7675
    %v7677 = vpop.f32.mrb[0].mxu0
    %v7678 = vadd.f32 0.0, %v7677
    %v7679 = vpop.f32.mrb[0].mxu0
    %7680 = vmatprep.mubr.f32.mxu0 0.0
    %v7681 = vand.u32 %v7602, 4294901760
    %v7682 = vsub.f32 %v7602, %v7681
    %v7683 = vand.u32 %v7682, 4294901760
    %v7684 = vsub.f32 %v7682, %v7683
    %v7685 = vand.u32 %v7684, 4294901760
    %7686 = vmatmul.mubr.f32.gmra.mrb[0].mxu0 %v7685
    %v7687 = vpop.f32.mrb[0].mxu0
    %v7688 = vadd.f32 0.0, %v7687
    %v7689 = vpop.f32.mrb[0].mxu0
    %7690 = vdwg.mxu0
    %7691 = vmatprep.subr.mxu0 0.0
    %v7692 = vand.u32 %v7593, 4294901760
    %v7693 = vsub.f32 %v7593, %v7692
    %v7694 = vand.u32 %v7693, 4294901760
    %v7695 = vsub.f32 %v7693, %v7694
    %v7696 = vand.u32 %v7695, 4294901760
    %7697 = vmatpush1.msra.mxu0 %v7696
    %7698 = vmatprep.subr.mxu0 0.0
    %v7699 = vand.u32 %v7595, 4294901760
    %v7700 = vsub.f32 %v7595, %v7699
    %v7701 = vand.u32 %v7700, 4294901760
    %v7702 = vsub.f32 %v7700, %v7701
    %v7703 = vand.u32 %v7702, 4294901760
    %7704 = vmatpush1.msra.mxu0 %v7703
    %7705 = vmatprep.subr.mxu0 0.0
    %7706 = vmatpush1.msra.mxu0 0.0
    %7707 = vmatprep.subr.mxu0 0.0
    %7708 = vmatpush1.msra.mxu0 0.0
    %7709 = vmatprep.subr.mxu0 0.0
    %7710 = vmatpush1.msra.mxu0 0.0
    %7711 = vmatprep.subr.mxu0 0.0
    %7712 = vmatpush1.msra.mxu0 0.0
    %7713 = vmatprep.subr.mxu0 0.0
    %7714 = vmatpush1.msra.mxu0 0.0
    %7715 = vmatprep.subr.mxu0 0.0
    %7716 = vmatpush1.msra.mxu0 0.0
    %7717 = vmatprep.subr.mxu0 0.0
    %7718 = vmatpush1.msra.mxu0 0.0
    %7719 = vmatprep.subr.mxu0 0.0
    %7720 = vmatpush1.msra.mxu0 0.0
    %7721 = vmatprep.subr.mxu0 0.0
    %7722 = vmatpush1.msra.mxu0 0.0
    %7723 = vmatprep.subr.mxu0 0.0
    %7724 = vmatpush1.msra.mxu0 0.0
    %7725 = vmatprep.subr.mxu0 0.0
    %7726 = vmatpush1.msra.mxu0 0.0
    %7727 = vmatprep.subr.mxu0 0.0
    %7728 = vmatpush1.msra.mxu0 0.0
    %7729 = vmatprep.subr.mxu0 0.0
    %7730 = vmatpush1.msra.mxu0 0.0
    %7731 = vmatprep.subr.mxu0 0.0
    %7732 = vmatpush1.msra.mxu0 0.0
    %7733 = vmatprep.subr.mxu0 0.0
    %7734 = vmatpush1.msra.mxu0 0.0
    %7735 = vmatprep.subr.mxu0 0.0
    %7736 = vmatpush1.msra.mxu0 0.0
    %7737 = vmatprep.subr.mxu0 0.0
    %7738 = vmatpush1.msra.mxu0 0.0
    %7739 = vmatprep.subr.mxu0 0.0
    %7740 = vmatpush1.msra.mxu0 0.0
    %7741 = vmatprep.subr.mxu0 0.0
    %7742 = vmatpush1.msra.mxu0 0.0
    %7743 = vmatprep.subr.mxu0 0.0
    %7744 = vmatpush1.msra.mxu0 0.0
    %7745 = vmatprep.subr.mxu0 0.0
    %7746 = vmatpush1.msra.mxu0 0.0
    %7747 = vmatprep.subr.mxu0 0.0
    %7748 = vmatpush1.msra.mxu0 0.0
    %7749 = vmatprep.subr.mxu0 0.0
    %7750 = vmatpush1.msra.mxu0 0.0
    %7751 = vmatprep.subr.mxu0 0.0
    %7752 = vmatpush1.msra.mxu0 0.0
    %7753 = vmatprep.subr.mxu0 0.0
    %7754 = vmatpush1.msra.mxu0 0.0
    %7755 = vmatprep.subr.mxu0 0.0
    %7756 = vmatpush1.msra.mxu0 0.0
    %7757 = vmatprep.subr.mxu0 0.0
    %7758 = vmatpush1.msra.mxu0 0.0
    %7759 = vmatprep.subr.mxu0 0.0
    %7760 = vmatpush1.msra.mxu0 0.0
    %7761 = vmatprep.subr.mxu0 0.0
    %7762 = vmatpush1.msra.mxu0 0.0
    %7763 = vmatprep.subr.mxu0 0.0
    %7764 = vmatpush1.msra.mxu0 0.0
    %7765 = vmatprep.mubr.f32.mxu0 0.0
    %v7766 = vand.u32 %v7599, 4294901760
    %7767 = vmatmul.mubr.f32.gmra.mrb[0].mxu0 %v7766
    %v7768 = vpop.f32.mrb[0].mxu0
    %v7769 = vadd.f32 %v7678, %v7768
    %v7770 = vpop.f32.mrb[0].mxu0
    %7771 = vmatprep.mubr.f32.mxu0 0.0
    %v7772 = vand.u32 %v7602, 4294901760
    %7773 = vmatmul.mubr.f32.gmra.mrb[0].mxu0 %v7772
    %v7774 = vpop.f32.mrb[0].mxu0
    %v7775 = vadd.f32 %v7688, %v7774
    %v7776 = vpop.f32.mrb[0].mxu0
    %7777 = vdwg.mxu0
    %7778 = vmatprep.subr.mxu0 0.0
    %v7779 = vand.u32 %v7593, 4294901760
    %v7780 = vsub.f32 %v7593, %v7779
    %7781 = vmatpush1.msra.mxu0 %v7780
    %7782 = vmatprep.subr.mxu0 0.0
    %v7783 = vand.u32 %v7595, 4294901760
    %v7784 = vsub.f32 %v7595, %v7783
    %7785 = vmatpush1.msra.mxu0 %v7784
    %7786 = vmatprep.subr.mxu0 0.0
    %7787 = vmatpush1.msra.mxu0 0.0
    %7788 = vmatprep.subr.mxu0 0.0
    %7789 = vmatpush1.msra.mxu0 0.0
    %7790 = vmatprep.subr.mxu0 0.0
    %7791 = vmatpush1.msra.mxu0 0.0
    %7792 = vmatprep.subr.mxu0 0.0
    %7793 = vmatpush1.msra.mxu0 0.0
    %7794 = vmatprep.subr.mxu0 0.0
    %7795 = vmatpush1.msra.mxu0 0.0
    %7796 = vmatprep.subr.mxu0 0.0
    %7797 = vmatpush1.msra.mxu0 0.0
    %7798 = vmatprep.subr.mxu0 0.0
    %7799 = vmatpush1.msra.mxu0 0.0
    %7800 = vmatprep.subr.mxu0 0.0
    %7801 = vmatpush1.msra.mxu0 0.0
    %7802 = vmatprep.subr.mxu0 0.0
    %7803 = vmatpush1.msra.mxu0 0.0
    %7804 = vmatprep.subr.mxu0 0.0
    %7805 = vmatpush1.msra.mxu0 0.0
    %7806 = vmatprep.subr.mxu0 0.0
    %7807 = vmatpush1.msra.mxu0 0.0
    %7808 = vmatprep.subr.mxu0 0.0
    %7809 = vmatpush1.msra.mxu0 0.0
    %7810 = vmatprep.subr.mxu0 0.0
    %7811 = vmatpush1.msra.mxu0 0.0
    %7812 = vmatprep.subr.mxu0 0.0
    %7813 = vmatpush1.msra.mxu0 0.0
    %7814 = vmatprep.subr.mxu0 0.0
    %7815 = vmatpush1.msra.mxu0 0.0
    %7816 = vmatprep.subr.mxu0 0.0
    %7817 = vmatpush1.msra.mxu0 0.0
    %7818 = vmatprep.subr.mxu0 0.0
    %7819 = vmatpush1.msra.mxu0 0.0
    %7820 = vmatprep.subr.mxu0 0.0
    %7821 = vmatpush1.msra.mxu0 0.0
    %7822 = vmatprep.subr.mxu0 0.0
    %7823 = vmatpush1.msra.mxu0 0.0
    %7824 = vmatprep.subr.mxu0 0.0
    %7825 = vmatpush1.msra.mxu0 0.0
    %7826 = vmatprep.subr.mxu0 0.0
    %7827 = vmatpush1.msra.mxu0 0.0
    %7828 = vmatprep.subr.mxu0 0.0
    %7829 = vmatpush1.msra.mxu0 0.0
    %7830 = vmatprep.subr.mxu0 0.0
    %7831 = vmatpush1.msra.mxu0 0.0
    %7832 = vmatprep.subr.mxu0 0.0
    %7833 = vmatpush1.msra.mxu0 0.0
    %7834 = vmatprep.subr.mxu0 0.0
    %7835 = vmatpush1.msra.mxu0 0.0
    %7836 = vmatprep.subr.mxu0 0.0
    %7837 = vmatpush1.msra.mxu0 0.0
    %7838 = vmatprep.subr.mxu0 0.0
    %7839 = vmatpush1.msra.mxu0 0.0
    %7840 = vmatprep.subr.mxu0 0.0
    %7841 = vmatpush1.msra.mxu0 0.0
    %7842 = vmatprep.subr.mxu0 0.0
    %7843 = vmatpush1.msra.mxu0 0.0
    %7844 = vmatprep.subr.mxu0 0.0
    %7845 = vmatpush1.msra.mxu0 0.0
    %7846 = vmatprep.mubr.f32.mxu0 0.0
    %v7847 = vand.u32 %v7599, 4294901760
    %v7848 = vsub.f32 %v7599, %v7847
    %7849 = vmatmul.mubr.f32.gmra.mrb[0].mxu0 %v7848
    %v7850 = vpop.f32.mrb[0].mxu0
    %v7851 = vadd.f32 %v7769, %v7850
    %v7852 = vpop.f32.mrb[0].mxu0
    %7853 = vmatprep.mubr.f32.mxu0 0.0
    %v7854 = vand.u32 %v7602, 4294901760
    %v7855 = vsub.f32 %v7602, %v7854
    %7856 = vmatmul.mubr.f32.gmra.mrb[0].mxu0 %v7855
    %v7857 = vpop.f32.mrb[0].mxu0
    %v7858 = vadd.f32 %v7775, %v7857
    %v7859 = vpop.f32.mrb[0].mxu0
    %7860 = vdwg.mxu0
    %7861 = vmatprep.subr.mxu0 0.0
    %v7862 = vand.u32 %v7593, 4294901760
    %7863 = vmatpush1.msra.mxu0 %v7862
    %7864 = vmatprep.subr.mxu0 0.0
    %v7865 = vand.u32 %v7595, 4294901760
    %7866 = vmatpush1.msra.mxu0 %v7865
    %7867 = vmatprep.subr.mxu0 0.0
    %7868 = vmatpush1.msra.mxu0 0.0
    %7869 = vmatprep.subr.mxu0 0.0
    %7870 = vmatpush1.msra.mxu0 0.0
    %7871 = vmatprep.subr.mxu0 0.0
    %7872 = vmatpush1.msra.mxu0 0.0
    %7873 = vmatprep.subr.mxu0 0.0
    %7874 = vmatpush1.msra.mxu0 0.0
    %7875 = vmatprep.subr.mxu0 0.0
    %7876 = vmatpush1.msra.mxu0 0.0
    %7877 = vmatprep.subr.mxu0 0.0
    %7878 = vmatpush1.msra.mxu0 0.0
    %7879 = vmatprep.subr.mxu0 0.0
    %7880 = vmatpush1.msra.mxu0 0.0
    %7881 = vmatprep.subr.mxu0 0.0
    %7882 = vmatpush1.msra.mxu0 0.0
    %7883 = vmatprep.subr.mxu0 0.0
    %7884 = vmatpush1.msra.mxu0 0.0
    %7885 = vmatprep.subr.mxu0 0.0
    %7886 = vmatpush1.msra.mxu0 0.0
    %7887 = vmatprep.subr.mxu0 0.0
    %7888 = vmatpush1.msra.mxu0 0.0
    %7889 = vmatprep.subr.mxu0 0.0
    %7890 = vmatpush1.msra.mxu0 0.0
    %7891 = vmatprep.subr.mxu0 0.0
    %7892 = vmatpush1.msra.mxu0 0.0
    %7893 = vmatprep.subr.mxu0 0.0
    %7894 = vmatpush1.msra.mxu0 0.0
    %7895 = vmatprep.subr.mxu0 0.0
    %7896 = vmatpush1.msra.mxu0 0.0
    %7897 = vmatprep.subr.mxu0 0.0
    %7898 = vmatpush1.msra.mxu0 0.0
    %7899 = vmatprep.subr.mxu0 0.0
    %7900 = vmatpush1.msra.mxu0 0.0
    %7901 = vmatprep.subr.mxu0 0.0
    %7902 = vmatpush1.msra.mxu0 0.0
    %7903 = vmatprep.subr.mxu0 0.0
    %7904 = vmatpush1.msra.mxu0 0.0
    %7905 = vmatprep.subr.mxu0 0.0
    %7906 = vmatpush1.msra.mxu0 0.0
    %7907 = vmatprep.subr.mxu0 0.0
    %7908 = vmatpush1.msra.mxu0 0.0
    %7909 = vmatprep.subr.mxu0 0.0
    %7910 = vmatpush1.msra.mxu0 0.0
    %7911 = vmatprep.subr.mxu0 0.0
    %7912 = vmatpush1.msra.mxu0 0.0
    %7913 = vmatprep.subr.mxu0 0.0
    %7914 = vmatpush1.msra.mxu0 0.0
    %7915 = vmatprep.subr.mxu0 0.0
    %7916 = vmatpush1.msra.mxu0 0.0
    %7917 = vmatprep.subr.mxu0 0.0
    %7918 = vmatpush1.msra.mxu0 0.0
    %7919 = vmatprep.subr.mxu0 0.0
    %7920 = vmatpush1.msra.mxu0 0.0
    %7921 = vmatprep.subr.mxu0 0.0
    %7922 = vmatpush1.msra.mxu0 0.0
    %7923 = vmatprep.subr.mxu0 0.0
    %7924 = vmatpush1.msra.mxu0 0.0
    %7925 = vmatprep.subr.mxu0 0.0
    %7926 = vmatpush1.msra.mxu0 0.0
    %7927 = vmatprep.mubr.f32.mxu0 0.0
    %v7928 = vand.u32 %v7599, 4294901760
    %v7929 = vsub.f32 %v7599, %v7928
    %v7930 = vand.u32 %v7929, 4294901760
    %7931 = vmatmul.mubr.f32.gmra.mrb[0].mxu0 %v7930
    %v7932 = vpop.f32.mrb[0].mxu0
    %v7933 = vadd.f32 %v7851, %v7932
    %v7934 = vpop.f32.mrb[0].mxu0
    %7935 = vmatprep.mubr.f32.mxu0 0.0
    %v7936 = vand.u32 %v7602, 4294901760
    %v7937 = vsub.f32 %v7602, %v7936
    %v7938 = vand.u32 %v7937, 4294901760
    %7939 = vmatmul.mubr.f32.gmra.mrb[0].mxu0 %v7938
    %v7940 = vpop.f32.mrb[0].mxu0
    %v7941 = vadd.f32 %v7858, %v7940
    %v7942 = vpop.f32.mrb[0].mxu0
    %7943 = vdwg.mxu0
    %7944 = vmatprep.subr.mxu0 0.0
    %v7945 = vand.u32 %v7593, 4294901760
    %v7946 = vsub.f32 %v7593, %v7945
    %v7947 = vand.u32 %v7946, 4294901760
    %7948 = vmatpush1.msra.mxu0 %v7947
    %7949 = vmatprep.subr.mxu0 0.0
    %v7950 = vand.u32 %v7595, 4294901760
    %v7951 = vsub.f32 %v7595, %v7950
    %v7952 = vand.u32 %v7951, 4294901760
    %7953 = vmatpush1.msra.mxu0 %v7952
    %7954 = vmatprep.subr.mxu0 0.0
    %7955 = vmatpush1.msra.mxu0 0.0
    %7956 = vmatprep.subr.mxu0 0.0
    %7957 = vmatpush1.msra.mxu0 0.0
    %7958 = vmatprep.subr.mxu0 0.0
    %7959 = vmatpush1.msra.mxu0 0.0
    %7960 = vmatprep.subr.mxu0 0.0
    %7961 = vmatpush1.msra.mxu0 0.0
    %7962 = vmatprep.subr.mxu0 0.0
    %7963 = vmatpush1.msra.mxu0 0.0
    %7964 = vmatprep.subr.mxu0 0.0
    %7965 = vmatpush1.msra.mxu0 0.0
    %7966 = vmatprep.subr.mxu0 0.0
    %7967 = vmatpush1.msra.mxu0 0.0
    %7968 = vmatprep.subr.mxu0 0.0
    %7969 = vmatpush1.msra.mxu0 0.0
    %7970 = vmatprep.subr.mxu0 0.0
    %7971 = vmatpush1.msra.mxu0 0.0
    %7972 = vmatprep.subr.mxu0 0.0
    %7973 = vmatpush1.msra.mxu0 0.0
    %7974 = vmatprep.subr.mxu0 0.0
    %7975 = vmatpush1.msra.mxu0 0.0
    %7976 = vmatprep.subr.mxu0 0.0
    %7977 = vmatpush1.msra.mxu0 0.0
    %7978 = vmatprep.subr.mxu0 0.0
    %7979 = vmatpush1.msra.mxu0 0.0
    %7980 = vmatprep.subr.mxu0 0.0
    %7981 = vmatpush1.msra.mxu0 0.0
    %7982 = vmatprep.subr.mxu0 0.0
    %7983 = vmatpush1.msra.mxu0 0.0
    %7984 = vmatprep.subr.mxu0 0.0
    %7985 = vmatpush1.msra.mxu0 0.0
    %7986 = vmatprep.subr.mxu0 0.0
    %7987 = vmatpush1.msra.mxu0 0.0
    %7988 = vmatprep.subr.mxu0 0.0
    %7989 = vmatpush1.msra.mxu0 0.0
    %7990 = vmatprep.subr.mxu0 0.0
    %7991 = vmatpush1.msra.mxu0 0.0
    %7992 = vmatprep.subr.mxu0 0.0
    %7993 = vmatpush1.msra.mxu0 0.0
    %7994 = vmatprep.subr.mxu0 0.0
    %7995 = vmatpush1.msra.mxu0 0.0
    %7996 = vmatprep.subr.mxu0 0.0
    %7997 = vmatpush1.msra.mxu0 0.0
    %7998 = vmatprep.subr.mxu0 0.0
    %7999 = vmatpush1.msra.mxu0 0.0
    %8000 = vmatprep.subr.mxu0 0.0
    %8001 = vmatpush1.msra.mxu0 0.0
    %8002 = vmatprep.subr.mxu0 0.0
    %8003 = vmatpush1.msra.mxu0 0.0
    %8004 = vmatprep.subr.mxu0 0.0
    %8005 = vmatpush1.msra.mxu0 0.0
    %8006 = vmatprep.subr.mxu0 0.0
    %8007 = vmatpush1.msra.mxu0 0.0
    %8008 = vmatprep.subr.mxu0 0.0
    %8009 = vmatpush1.msra.mxu0 0.0
    %8010 = vmatprep.subr.mxu0 0.0
    %8011 = vmatpush1.msra.mxu0 0.0
    %8012 = vmatprep.subr.mxu0 0.0
    %8013 = vmatpush1.msra.mxu0 0.0
    %8014 = vmatprep.mubr.f32.mxu0 0.0
    %v8015 = vand.u32 %v7599, 4294901760
    %8016 = vmatmul.mubr.f32.gmra.mrb[0].mxu0 %v8015
    %v8017 = vpop.f32.mrb[0].mxu0
    %v8018 = vadd.f32 %v7933, %v8017
    %v8019 = vpop.f32.mrb[0].mxu0
    %8020 = vmatprep.mubr.f32.mxu0 0.0
    %v8021 = vand.u32 %v7602, 4294901760
    %8022 = vmatmul.mubr.f32.gmra.mrb[0].mxu0 %v8021
    %v8023 = vpop.f32.mrb[0].mxu0
    %v8024 = vadd.f32 %v7941, %v8023
    %v8025 = vpop.f32.mrb[0].mxu0
    %8026 = vdwg.mxu0
    %8027 = vmatprep.subr.mxu0 0.0
    %v8028 = vand.u32 %v7593, 4294901760
    %8029 = vmatpush1.msra.mxu0 %v8028
    %8030 = vmatprep.subr.mxu0 0.0
    %v8031 = vand.u32 %v7595, 4294901760
    %8032 = vmatpush1.msra.mxu0 %v8031
    %8033 = vmatprep.subr.mxu0 0.0
    %8034 = vmatpush1.msra.mxu0 0.0
    %8035 = vmatprep.subr.mxu0 0.0
    %8036 = vmatpush1.msra.mxu0 0.0
    %8037 = vmatprep.subr.mxu0 0.0
    %8038 = vmatpush1.msra.mxu0 0.0
    %8039 = vmatprep.subr.mxu0 0.0
    %8040 = vmatpush1.msra.mxu0 0.0
    %8041 = vmatprep.subr.mxu0 0.0
    %8042 = vmatpush1.msra.mxu0 0.0
    %8043 = vmatprep.subr.mxu0 0.0
    %8044 = vmatpush1.msra.mxu0 0.0
    %8045 = vmatprep.subr.mxu0 0.0
    %8046 = vmatpush1.msra.mxu0 0.0
    %8047 = vmatprep.subr.mxu0 0.0
    %8048 = vmatpush1.msra.mxu0 0.0
    %8049 = vmatprep.subr.mxu0 0.0
    %8050 = vmatpush1.msra.mxu0 0.0
    %8051 = vmatprep.subr.mxu0 0.0
    %8052 = vmatpush1.msra.mxu0 0.0
    %8053 = vmatprep.subr.mxu0 0.0
    %8054 = vmatpush1.msra.mxu0 0.0
    %8055 = vmatprep.subr.mxu0 0.0
    %8056 = vmatpush1.msra.mxu0 0.0
    %8057 = vmatprep.subr.mxu0 0.0
    %8058 = vmatpush1.msra.mxu0 0.0
    %8059 = vmatprep.subr.mxu0 0.0
    %8060 = vmatpush1.msra.mxu0 0.0
    %8061 = vmatprep.subr.mxu0 0.0
    %8062 = vmatpush1.msra.mxu0 0.0
    %8063 = vmatprep.subr.mxu0 0.0
    %8064 = vmatpush1.msra.mxu0 0.0
    %8065 = vmatprep.subr.mxu0 0.0
    %8066 = vmatpush1.msra.mxu0 0.0
    %8067 = vmatprep.subr.mxu0 0.0
    %8068 = vmatpush1.msra.mxu0 0.0
    %8069 = vmatprep.subr.mxu0 0.0
    %8070 = vmatpush1.msra.mxu0 0.0
    %8071 = vmatprep.subr.mxu0 0.0
    %8072 = vmatpush1.msra.mxu0 0.0
    %8073 = vmatprep.subr.mxu0 0.0
    %8074 = vmatpush1.msra.mxu0 0.0
    %8075 = vmatprep.subr.mxu0 0.0
    %8076 = vmatpush1.msra.mxu0 0.0
    %8077 = vmatprep.subr.mxu0 0.0
    %8078 = vmatpush1.msra.mxu0 0.0
    %8079 = vmatprep.subr.mxu0 0.0
    %8080 = vmatpush1.msra.mxu0 0.0
    %8081 = vmatprep.subr.mxu0 0.0
    %8082 = vmatpush1.msra.mxu0 0.0
    %8083 = vmatprep.subr.mxu0 0.0
    %8084 = vmatpush1.msra.mxu0 0.0
    %8085 = vmatprep.subr.mxu0 0.0
    %8086 = vmatpush1.msra.mxu0 0.0
    %8087 = vmatprep.subr.mxu0 0.0
    %8088 = vmatpush1.msra.mxu0 0.0
    %8089 = vmatprep.subr.mxu0 0.0
    %8090 = vmatpush1.msra.mxu0 0.0
    %8091 = vmatprep.subr.mxu0 0.0
    %8092 = vmatpush1.msra.mxu0 0.0
    %8093 = vmatprep.mubr.f32.mxu0 0.0
    %v8094 = vand.u32 %v7599, 4294901760
    %8095 = vmatmul.mubr.f32.gmra.mrb[0].mxu0 %v8094
    %v8096 = vpop.f32.mrb[0].mxu0
    %v8097 = vadd.f32 %v8018, %v8096
    %v8098 = vpop.f32.mrb[0].mxu0
    %8099 = vmatprep.mubr.f32.mxu0 0.0
    %v8100 = vand.u32 %v7602, 4294901760
    %8101 = vmatmul.mubr.f32.gmra.mrb[0].mxu0 %v8100
    %v8102 = vpop.f32.mrb[0].mxu0
    %v8103 = vadd.f32 %v8024, %v8102
    %v8104 = vpop.f32.mrb[0].mxu0
    %8105 = vdwg.mxu0
    %8106 = vrot.lane.b32.xlu0 %v709, 64
    %v8107 = vpop.permute.xlu0 %8106
    %8108 = vrot.lane.b32.xlu0 %v711, 64
    %v8109 = vpop.permute.xlu0 %8108
    %v8113 = vsel %vm4845, %v5015, 0
    %v8116 = vsel %vm4845, %v5017, 0
    %8118 = vmatprep.subr.mxu0 0.0
    %v8119 = vand.u32 %v8107, 4294901760
    %8120 = vmatpush1.msra.mxu0 %v8119
    %8121 = vmatprep.subr.mxu0 0.0
    %v8122 = vand.u32 %v8109, 4294901760
    %8123 = vmatpush1.msra.mxu0 %v8122
    %8124 = vmatprep.subr.mxu0 0.0
    %8125 = vmatpush1.msra.mxu0 0.0
    %8126 = vmatprep.subr.mxu0 0.0
    %8127 = vmatpush1.msra.mxu0 0.0
    %8128 = vmatprep.subr.mxu0 0.0
    %8129 = vmatpush1.msra.mxu0 0.0
    %8130 = vmatprep.subr.mxu0 0.0
    %8131 = vmatpush1.msra.mxu0 0.0
    %8132 = vmatprep.subr.mxu0 0.0
    %8133 = vmatpush1.msra.mxu0 0.0
    %8134 = vmatprep.subr.mxu0 0.0
    %8135 = vmatpush1.msra.mxu0 0.0
    %8136 = vmatprep.subr.mxu0 0.0
    %8137 = vmatpush1.msra.mxu0 0.0
    %8138 = vmatprep.subr.mxu0 0.0
    %8139 = vmatpush1.msra.mxu0 0.0
    %8140 = vmatprep.subr.mxu0 0.0
    %8141 = vmatpush1.msra.mxu0 0.0
    %8142 = vmatprep.subr.mxu0 0.0
    %8143 = vmatpush1.msra.mxu0 0.0
    %8144 = vmatprep.subr.mxu0 0.0
    %8145 = vmatpush1.msra.mxu0 0.0
    %8146 = vmatprep.subr.mxu0 0.0
    %8147 = vmatpush1.msra.mxu0 0.0
    %8148 = vmatprep.subr.mxu0 0.0
    %8149 = vmatpush1.msra.mxu0 0.0
    %8150 = vmatprep.subr.mxu0 0.0
    %8151 = vmatpush1.msra.mxu0 0.0
    %8152 = vmatprep.subr.mxu0 0.0
    %8153 = vmatpush1.msra.mxu0 0.0
    %8154 = vmatprep.subr.mxu0 0.0
    %8155 = vmatpush1.msra.mxu0 0.0
    %8156 = vmatprep.subr.mxu0 0.0
    %8157 = vmatpush1.msra.mxu0 0.0
    %8158 = vmatprep.subr.mxu0 0.0
    %8159 = vmatpush1.msra.mxu0 0.0
    %8160 = vmatprep.subr.mxu0 0.0
    %8161 = vmatpush1.msra.mxu0 0.0
    %8162 = vmatprep.subr.mxu0 0.0
    %8163 = vmatpush1.msra.mxu0 0.0
    %8164 = vmatprep.subr.mxu0 0.0
    %8165 = vmatpush1.msra.mxu0 0.0
    %8166 = vmatprep.subr.mxu0 0.0
    %8167 = vmatpush1.msra.mxu0 0.0
    %8168 = vmatprep.subr.mxu0 0.0
    %8169 = vmatpush1.msra.mxu0 0.0
    %8170 = vmatprep.subr.mxu0 0.0
    %8171 = vmatpush1.msra.mxu0 0.0
    %8172 = vmatprep.subr.mxu0 0.0
    %8173 = vmatpush1.msra.mxu0 0.0
    %8174 = vmatprep.subr.mxu0 0.0
    %8175 = vmatpush1.msra.mxu0 0.0
    %8176 = vmatprep.subr.mxu0 0.0
    %8177 = vmatpush1.msra.mxu0 0.0
    %8178 = vmatprep.subr.mxu0 0.0
    %8179 = vmatpush1.msra.mxu0 0.0
    %8180 = vmatprep.subr.mxu0 0.0
    %8181 = vmatpush1.msra.mxu0 0.0
    %8182 = vmatprep.subr.mxu0 0.0
    %8183 = vmatpush1.msra.mxu0 0.0
    %8184 = vmatprep.mubr.f32.mxu0 0.0
    %v8185 = vand.u32 %v8113, 4294901760
    %v8186 = vsub.f32 %v8113, %v8185
    %v8187 = vand.u32 %v8186, 4294901760
    %v8188 = vsub.f32 %v8186, %v8187
    %v8189 = vand.u32 %v8188, 4294901760
    %8190 = vmatmul.mubr.f32.gmra.mrb[0].mxu0 %v8189
    %v8191 = vpop.f32.mrb[0].mxu0
    %v8192 = vadd.f32 0.0, %v8191
    %v8193 = vpop.f32.mrb[0].mxu0
    %8194 = vmatprep.mubr.f32.mxu0 0.0
    %v8195 = vand.u32 %v8116, 4294901760
    %v8196 = vsub.f32 %v8116, %v8195
    %v8197 = vand.u32 %v8196, 4294901760
    %v8198 = vsub.f32 %v8196, %v8197
    %v8199 = vand.u32 %v8198, 4294901760
    %8200 = vmatmul.mubr.f32.gmra.mrb[0].mxu0 %v8199
    %v8201 = vpop.f32.mrb[0].mxu0
    %v8202 = vadd.f32 0.0, %v8201
    %v8203 = vpop.f32.mrb[0].mxu0
    %8204 = vdwg.mxu0
    %8205 = vmatprep.subr.mxu0 0.0
    %v8206 = vand.u32 %v8107, 4294901760
    %v8207 = vsub.f32 %v8107, %v8206
    %v8208 = vand.u32 %v8207, 4294901760
    %v8209 = vsub.f32 %v8207, %v8208
    %v8210 = vand.u32 %v8209, 4294901760
    %8211 = vmatpush1.msra.mxu0 %v8210
    %8212 = vmatprep.subr.mxu0 0.0
    %v8213 = vand.u32 %v8109, 4294901760
    %v8214 = vsub.f32 %v8109, %v8213
    %v8215 = vand.u32 %v8214, 4294901760
    %v8216 = vsub.f32 %v8214, %v8215
    %v8217 = vand.u32 %v8216, 4294901760
    %8218 = vmatpush1.msra.mxu0 %v8217
    %8219 = vmatprep.subr.mxu0 0.0
    %8220 = vmatpush1.msra.mxu0 0.0
    %8221 = vmatprep.subr.mxu0 0.0
    %8222 = vmatpush1.msra.mxu0 0.0
    %8223 = vmatprep.subr.mxu0 0.0
    %8224 = vmatpush1.msra.mxu0 0.0
    %8225 = vmatprep.subr.mxu0 0.0
    %8226 = vmatpush1.msra.mxu0 0.0
    %8227 = vmatprep.subr.mxu0 0.0
    %8228 = vmatpush1.msra.mxu0 0.0
    %8229 = vmatprep.subr.mxu0 0.0
    %8230 = vmatpush1.msra.mxu0 0.0
    %8231 = vmatprep.subr.mxu0 0.0
    %8232 = vmatpush1.msra.mxu0 0.0
    %8233 = vmatprep.subr.mxu0 0.0
    %8234 = vmatpush1.msra.mxu0 0.0
    %8235 = vmatprep.subr.mxu0 0.0
    %8236 = vmatpush1.msra.mxu0 0.0
    %8237 = vmatprep.subr.mxu0 0.0
    %8238 = vmatpush1.msra.mxu0 0.0
    %8239 = vmatprep.subr.mxu0 0.0
    %8240 = vmatpush1.msra.mxu0 0.0
    %8241 = vmatprep.subr.mxu0 0.0
    %8242 = vmatpush1.msra.mxu0 0.0
    %8243 = vmatprep.subr.mxu0 0.0
    %8244 = vmatpush1.msra.mxu0 0.0
    %8245 = vmatprep.subr.mxu0 0.0
    %8246 = vmatpush1.msra.mxu0 0.0
    %8247 = vmatprep.subr.mxu0 0.0
    %8248 = vmatpush1.msra.mxu0 0.0
    %8249 = vmatprep.subr.mxu0 0.0
    %8250 = vmatpush1.msra.mxu0 0.0
    %8251 = vmatprep.subr.mxu0 0.0
    %8252 = vmatpush1.msra.mxu0 0.0
    %8253 = vmatprep.subr.mxu0 0.0
    %8254 = vmatpush1.msra.mxu0 0.0
    %8255 = vmatprep.subr.mxu0 0.0
    %8256 = vmatpush1.msra.mxu0 0.0
    %8257 = vmatprep.subr.mxu0 0.0
    %8258 = vmatpush1.msra.mxu0 0.0
    %8259 = vmatprep.subr.mxu0 0.0
    %8260 = vmatpush1.msra.mxu0 0.0
    %8261 = vmatprep.subr.mxu0 0.0
    %8262 = vmatpush1.msra.mxu0 0.0
    %8263 = vmatprep.subr.mxu0 0.0
    %8264 = vmatpush1.msra.mxu0 0.0
    %8265 = vmatprep.subr.mxu0 0.0
    %8266 = vmatpush1.msra.mxu0 0.0
    %8267 = vmatprep.subr.mxu0 0.0
    %8268 = vmatpush1.msra.mxu0 0.0
    %8269 = vmatprep.subr.mxu0 0.0
    %8270 = vmatpush1.msra.mxu0 0.0
    %8271 = vmatprep.subr.mxu0 0.0
    %8272 = vmatpush1.msra.mxu0 0.0
    %8273 = vmatprep.subr.mxu0 0.0
    %8274 = vmatpush1.msra.mxu0 0.0
    %8275 = vmatprep.subr.mxu0 0.0
    %8276 = vmatpush1.msra.mxu0 0.0
    %8277 = vmatprep.subr.mxu0 0.0
    %8278 = vmatpush1.msra.mxu0 0.0
    %8279 = vmatprep.mubr.f32.mxu0 0.0
    %v8280 = vand.u32 %v8113, 4294901760
    %8281 = vmatmul.mubr.f32.gmra.mrb[0].mxu0 %v8280
    %v8282 = vpop.f32.mrb[0].mxu0
    %v8283 = vadd.f32 %v8192, %v8282
    %v8284 = vpop.f32.mrb[0].mxu0
    %8285 = vmatprep.mubr.f32.mxu0 0.0
    %v8286 = vand.u32 %v8116, 4294901760
    %8287 = vmatmul.mubr.f32.gmra.mrb[0].mxu0 %v8286
    %v8288 = vpop.f32.mrb[0].mxu0
    %v8289 = vadd.f32 %v8202, %v8288
    %v8290 = vpop.f32.mrb[0].mxu0
    %8291 = vdwg.mxu0
    %8292 = vmatprep.subr.mxu0 0.0
    %v8293 = vand.u32 %v8107, 4294901760
    %v8294 = vsub.f32 %v8107, %v8293
    %8295 = vmatpush1.msra.mxu0 %v8294
    %8296 = vmatprep.subr.mxu0 0.0
    %v8297 = vand.u32 %v8109, 4294901760
    %v8298 = vsub.f32 %v8109, %v8297
    %8299 = vmatpush1.msra.mxu0 %v8298
    %8300 = vmatprep.subr.mxu0 0.0
    %8301 = vmatpush1.msra.mxu0 0.0
    %8302 = vmatprep.subr.mxu0 0.0
    %8303 = vmatpush1.msra.mxu0 0.0
    %8304 = vmatprep.subr.mxu0 0.0
    %8305 = vmatpush1.msra.mxu0 0.0
    %8306 = vmatprep.subr.mxu0 0.0
    %8307 = vmatpush1.msra.mxu0 0.0
    %8308 = vmatprep.subr.mxu0 0.0
    %8309 = vmatpush1.msra.mxu0 0.0
    %8310 = vmatprep.subr.mxu0 0.0
    %8311 = vmatpush1.msra.mxu0 0.0
    %8312 = vmatprep.subr.mxu0 0.0
    %8313 = vmatpush1.msra.mxu0 0.0
    %8314 = vmatprep.subr.mxu0 0.0
    %8315 = vmatpush1.msra.mxu0 0.0
    %8316 = vmatprep.subr.mxu0 0.0
    %8317 = vmatpush1.msra.mxu0 0.0
    %8318 = vmatprep.subr.mxu0 0.0
    %8319 = vmatpush1.msra.mxu0 0.0
    %8320 = vmatprep.subr.mxu0 0.0
    %8321 = vmatpush1.msra.mxu0 0.0
    %8322 = vmatprep.subr.mxu0 0.0
    %8323 = vmatpush1.msra.mxu0 0.0
    %8324 = vmatprep.subr.mxu0 0.0
    %8325 = vmatpush1.msra.mxu0 0.0
    %8326 = vmatprep.subr.mxu0 0.0
    %8327 = vmatpush1.msra.mxu0 0.0
    %8328 = vmatprep.subr.mxu0 0.0
    %8329 = vmatpush1.msra.mxu0 0.0
    %8330 = vmatprep.subr.mxu0 0.0
    %8331 = vmatpush1.msra.mxu0 0.0
    %8332 = vmatprep.subr.mxu0 0.0
    %8333 = vmatpush1.msra.mxu0 0.0
    %8334 = vmatprep.subr.mxu0 0.0
    %8335 = vmatpush1.msra.mxu0 0.0
    %8336 = vmatprep.subr.mxu0 0.0
    %8337 = vmatpush1.msra.mxu0 0.0
    %8338 = vmatprep.subr.mxu0 0.0
    %8339 = vmatpush1.msra.mxu0 0.0
    %8340 = vmatprep.subr.mxu0 0.0
    %8341 = vmatpush1.msra.mxu0 0.0
    %8342 = vmatprep.subr.mxu0 0.0
    %8343 = vmatpush1.msra.mxu0 0.0
    %8344 = vmatprep.subr.mxu0 0.0
    %8345 = vmatpush1.msra.mxu0 0.0
    %8346 = vmatprep.subr.mxu0 0.0
    %8347 = vmatpush1.msra.mxu0 0.0
    %8348 = vmatprep.subr.mxu0 0.0
    %8349 = vmatpush1.msra.mxu0 0.0
    %8350 = vmatprep.subr.mxu0 0.0
    %8351 = vmatpush1.msra.mxu0 0.0
    %8352 = vmatprep.subr.mxu0 0.0
    %8353 = vmatpush1.msra.mxu0 0.0
    %8354 = vmatprep.subr.mxu0 0.0
    %8355 = vmatpush1.msra.mxu0 0.0
    %8356 = vmatprep.subr.mxu0 0.0
    %8357 = vmatpush1.msra.mxu0 0.0
    %8358 = vmatprep.subr.mxu0 0.0
    %8359 = vmatpush1.msra.mxu0 0.0
    %8360 = vmatprep.mubr.f32.mxu0 0.0
    %v8361 = vand.u32 %v8113, 4294901760
    %v8362 = vsub.f32 %v8113, %v8361
    %8363 = vmatmul.mubr.f32.gmra.mrb[0].mxu0 %v8362
    %v8364 = vpop.f32.mrb[0].mxu0
    %v8365 = vadd.f32 %v8283, %v8364
    %v8366 = vpop.f32.mrb[0].mxu0
    %8367 = vmatprep.mubr.f32.mxu0 0.0
    %v8368 = vand.u32 %v8116, 4294901760
    %v8369 = vsub.f32 %v8116, %v8368
    %8370 = vmatmul.mubr.f32.gmra.mrb[0].mxu0 %v8369
    %v8371 = vpop.f32.mrb[0].mxu0
    %v8372 = vadd.f32 %v8289, %v8371
    %v8373 = vpop.f32.mrb[0].mxu0
    %8374 = vdwg.mxu0
    %8375 = vmatprep.subr.mxu0 0.0
    %v8376 = vand.u32 %v8107, 4294901760
    %8377 = vmatpush1.msra.mxu0 %v8376
    %8378 = vmatprep.subr.mxu0 0.0
    %v8379 = vand.u32 %v8109, 4294901760
    %8380 = vmatpush1.msra.mxu0 %v8379
    %8381 = vmatprep.subr.mxu0 0.0
    %8382 = vmatpush1.msra.mxu0 0.0
    %8383 = vmatprep.subr.mxu0 0.0
    %8384 = vmatpush1.msra.mxu0 0.0
    %8385 = vmatprep.subr.mxu0 0.0
    %8386 = vmatpush1.msra.mxu0 0.0
    %8387 = vmatprep.subr.mxu0 0.0
    %8388 = vmatpush1.msra.mxu0 0.0
    %8389 = vmatprep.subr.mxu0 0.0
    %8390 = vmatpush1.msra.mxu0 0.0
    %8391 = vmatprep.subr.mxu0 0.0
    %8392 = vmatpush1.msra.mxu0 0.0
    %8393 = vmatprep.subr.mxu0 0.0
    %8394 = vmatpush1.msra.mxu0 0.0
    %8395 = vmatprep.subr.mxu0 0.0
    %8396 = vmatpush1.msra.mxu0 0.0
    %8397 = vmatprep.subr.mxu0 0.0
    %8398 = vmatpush1.msra.mxu0 0.0
    %8399 = vmatprep.subr.mxu0 0.0
    %8400 = vmatpush1.msra.mxu0 0.0
    %8401 = vmatprep.subr.mxu0 0.0
    %8402 = vmatpush1.msra.mxu0 0.0
    %8403 = vmatprep.subr.mxu0 0.0
    %8404 = vmatpush1.msra.mxu0 0.0
    %8405 = vmatprep.subr.mxu0 0.0
    %8406 = vmatpush1.msra.mxu0 0.0
    %8407 = vmatprep.subr.mxu0 0.0
    %8408 = vmatpush1.msra.mxu0 0.0
    %8409 = vmatprep.subr.mxu0 0.0
    %8410 = vmatpush1.msra.mxu0 0.0
    %8411 = vmatprep.subr.mxu0 0.0
    %8412 = vmatpush1.msra.mxu0 0.0
    %8413 = vmatprep.subr.mxu0 0.0
    %8414 = vmatpush1.msra.mxu0 0.0
    %8415 = vmatprep.subr.mxu0 0.0
    %8416 = vmatpush1.msra.mxu0 0.0
    %8417 = vmatprep.subr.mxu0 0.0
    %8418 = vmatpush1.msra.mxu0 0.0
    %8419 = vmatprep.subr.mxu0 0.0
    %8420 = vmatpush1.msra.mxu0 0.0
    %8421 = vmatprep.subr.mxu0 0.0
    %8422 = vmatpush1.msra.mxu0 0.0
    %8423 = vmatprep.subr.mxu0 0.0
    %8424 = vmatpush1.msra.mxu0 0.0
    %8425 = vmatprep.subr.mxu0 0.0
    %8426 = vmatpush1.msra.mxu0 0.0
    %8427 = vmatprep.subr.mxu0 0.0
    %8428 = vmatpush1.msra.mxu0 0.0
    %8429 = vmatprep.subr.mxu0 0.0
    %8430 = vmatpush1.msra.mxu0 0.0
    %8431 = vmatprep.subr.mxu0 0.0
    %8432 = vmatpush1.msra.mxu0 0.0
    %8433 = vmatprep.subr.mxu0 0.0
    %8434 = vmatpush1.msra.mxu0 0.0
    %8435 = vmatprep.subr.mxu0 0.0
    %8436 = vmatpush1.msra.mxu0 0.0
    %8437 = vmatprep.subr.mxu0 0.0
    %8438 = vmatpush1.msra.mxu0 0.0
    %8439 = vmatprep.subr.mxu0 0.0
    %8440 = vmatpush1.msra.mxu0 0.0
    %8441 = vmatprep.mubr.f32.mxu0 0.0
    %v8442 = vand.u32 %v8113, 4294901760
    %v8443 = vsub.f32 %v8113, %v8442
    %v8444 = vand.u32 %v8443, 4294901760
    %8445 = vmatmul.mubr.f32.gmra.mrb[0].mxu0 %v8444
    %v8446 = vpop.f32.mrb[0].mxu0
    %v8447 = vadd.f32 %v8365, %v8446
    %v8448 = vpop.f32.mrb[0].mxu0
    %8449 = vmatprep.mubr.f32.mxu0 0.0
    %v8450 = vand.u32 %v8116, 4294901760
    %v8451 = vsub.f32 %v8116, %v8450
    %v8452 = vand.u32 %v8451, 4294901760
    %8453 = vmatmul.mubr.f32.gmra.mrb[0].mxu0 %v8452
    %v8454 = vpop.f32.mrb[0].mxu0
    %v8455 = vadd.f32 %v8372, %v8454
    %v8456 = vpop.f32.mrb[0].mxu0
    %8457 = vdwg.mxu0
    %8458 = vmatprep.subr.mxu0 0.0
    %v8459 = vand.u32 %v8107, 4294901760
    %v8460 = vsub.f32 %v8107, %v8459
    %v8461 = vand.u32 %v8460, 4294901760
    %8462 = vmatpush1.msra.mxu0 %v8461
    %8463 = vmatprep.subr.mxu0 0.0
    %v8464 = vand.u32 %v8109, 4294901760
    %v8465 = vsub.f32 %v8109, %v8464
    %v8466 = vand.u32 %v8465, 4294901760
    %8467 = vmatpush1.msra.mxu0 %v8466
    %8468 = vmatprep.subr.mxu0 0.0
    %8469 = vmatpush1.msra.mxu0 0.0
    %8470 = vmatprep.subr.mxu0 0.0
    %8471 = vmatpush1.msra.mxu0 0.0
    %8472 = vmatprep.subr.mxu0 0.0
    %8473 = vmatpush1.msra.mxu0 0.0
    %8474 = vmatprep.subr.mxu0 0.0
    %8475 = vmatpush1.msra.mxu0 0.0
    %8476 = vmatprep.subr.mxu0 0.0
    %8477 = vmatpush1.msra.mxu0 0.0
    %8478 = vmatprep.subr.mxu0 0.0
    %8479 = vmatpush1.msra.mxu0 0.0
    %8480 = vmatprep.subr.mxu0 0.0
    %8481 = vmatpush1.msra.mxu0 0.0
    %8482 = vmatprep.subr.mxu0 0.0
    %8483 = vmatpush1.msra.mxu0 0.0
    %8484 = vmatprep.subr.mxu0 0.0
    %8485 = vmatpush1.msra.mxu0 0.0
    %8486 = vmatprep.subr.mxu0 0.0
    %8487 = vmatpush1.msra.mxu0 0.0
    %8488 = vmatprep.subr.mxu0 0.0
    %8489 = vmatpush1.msra.mxu0 0.0
    %8490 = vmatprep.subr.mxu0 0.0
    %8491 = vmatpush1.msra.mxu0 0.0
    %8492 = vmatprep.subr.mxu0 0.0
    %8493 = vmatpush1.msra.mxu0 0.0
    %8494 = vmatprep.subr.mxu0 0.0
    %8495 = vmatpush1.msra.mxu0 0.0
    %8496 = vmatprep.subr.mxu0 0.0
    %8497 = vmatpush1.msra.mxu0 0.0
    %8498 = vmatprep.subr.mxu0 0.0
    %8499 = vmatpush1.msra.mxu0 0.0
    %8500 = vmatprep.subr.mxu0 0.0
    %8501 = vmatpush1.msra.mxu0 0.0
    %8502 = vmatprep.subr.mxu0 0.0
    %8503 = vmatpush1.msra.mxu0 0.0
    %8504 = vmatprep.subr.mxu0 0.0
    %8505 = vmatpush1.msra.mxu0 0.0
    %8506 = vmatprep.subr.mxu0 0.0
    %8507 = vmatpush1.msra.mxu0 0.0
    %8508 = vmatprep.subr.mxu0 0.0
    %8509 = vmatpush1.msra.mxu0 0.0
    %8510 = vmatprep.subr.mxu0 0.0
    %8511 = vmatpush1.msra.mxu0 0.0
    %8512 = vmatprep.subr.mxu0 0.0
    %8513 = vmatpush1.msra.mxu0 0.0
    %8514 = vmatprep.subr.mxu0 0.0
    %8515 = vmatpush1.msra.mxu0 0.0
    %8516 = vmatprep.subr.mxu0 0.0
    %8517 = vmatpush1.msra.mxu0 0.0
    %8518 = vmatprep.subr.mxu0 0.0
    %8519 = vmatpush1.msra.mxu0 0.0
    %8520 = vmatprep.subr.mxu0 0.0
    %8521 = vmatpush1.msra.mxu0 0.0
    %8522 = vmatprep.subr.mxu0 0.0
    %8523 = vmatpush1.msra.mxu0 0.0
    %8524 = vmatprep.subr.mxu0 0.0
    %8525 = vmatpush1.msra.mxu0 0.0
    %8526 = vmatprep.subr.mxu0 0.0
    %8527 = vmatpush1.msra.mxu0 0.0
    %8528 = vmatprep.mubr.f32.mxu0 0.0
    %v8529 = vand.u32 %v8113, 4294901760
    %8530 = vmatmul.mubr.f32.gmra.mrb[0].mxu0 %v8529
    %v8531 = vpop.f32.mrb[0].mxu0
    %v8532 = vadd.f32 %v8447, %v8531
    %v8533 = vpop.f32.mrb[0].mxu0
    %8534 = vmatprep.mubr.f32.mxu0 0.0
    %v8535 = vand.u32 %v8116, 4294901760
    %8536 = vmatmul.mubr.f32.gmra.mrb[0].mxu0 %v8535
    %v8537 = vpop.f32.mrb[0].mxu0
    %v8538 = vadd.f32 %v8455, %v8537
    %v8539 = vpop.f32.mrb[0].mxu0
    %8540 = vdwg.mxu0
    %8541 = vmatprep.subr.mxu0 0.0
    %v8542 = vand.u32 %v8107, 4294901760
    %8543 = vmatpush1.msra.mxu0 %v8542
    %8544 = vmatprep.subr.mxu0 0.0
    %v8545 = vand.u32 %v8109, 4294901760
    %8546 = vmatpush1.msra.mxu0 %v8545
    %8547 = vmatprep.subr.mxu0 0.0
    %8548 = vmatpush1.msra.mxu0 0.0
    %8549 = vmatprep.subr.mxu0 0.0
    %8550 = vmatpush1.msra.mxu0 0.0
    %8551 = vmatprep.subr.mxu0 0.0
    %8552 = vmatpush1.msra.mxu0 0.0
    %8553 = vmatprep.subr.mxu0 0.0
    %8554 = vmatpush1.msra.mxu0 0.0
    %8555 = vmatprep.subr.mxu0 0.0
    %8556 = vmatpush1.msra.mxu0 0.0
    %8557 = vmatprep.subr.mxu0 0.0
    %8558 = vmatpush1.msra.mxu0 0.0
    %8559 = vmatprep.subr.mxu0 0.0
    %8560 = vmatpush1.msra.mxu0 0.0
    %8561 = vmatprep.subr.mxu0 0.0
    %8562 = vmatpush1.msra.mxu0 0.0
    %8563 = vmatprep.subr.mxu0 0.0
    %8564 = vmatpush1.msra.mxu0 0.0
    %8565 = vmatprep.subr.mxu0 0.0
    %8566 = vmatpush1.msra.mxu0 0.0
    %8567 = vmatprep.subr.mxu0 0.0
    %8568 = vmatpush1.msra.mxu0 0.0
    %8569 = vmatprep.subr.mxu0 0.0
    %8570 = vmatpush1.msra.mxu0 0.0
    %8571 = vmatprep.subr.mxu0 0.0
    %8572 = vmatpush1.msra.mxu0 0.0
    %8573 = vmatprep.subr.mxu0 0.0
    %8574 = vmatpush1.msra.mxu0 0.0
    %8575 = vmatprep.subr.mxu0 0.0
    %8576 = vmatpush1.msra.mxu0 0.0
    %8577 = vmatprep.subr.mxu0 0.0
    %8578 = vmatpush1.msra.mxu0 0.0
    %8579 = vmatprep.subr.mxu0 0.0
    %8580 = vmatpush1.msra.mxu0 0.0
    %8581 = vmatprep.subr.mxu0 0.0
    %8582 = vmatpush1.msra.mxu0 0.0
    %8583 = vmatprep.subr.mxu0 0.0
    %8584 = vmatpush1.msra.mxu0 0.0
    %8585 = vmatprep.subr.mxu0 0.0
    %8586 = vmatpush1.msra.mxu0 0.0
    %8587 = vmatprep.subr.mxu0 0.0
    %8588 = vmatpush1.msra.mxu0 0.0
    %8589 = vmatprep.subr.mxu0 0.0
    %8590 = vmatpush1.msra.mxu0 0.0
    %8591 = vmatprep.subr.mxu0 0.0
    %8592 = vmatpush1.msra.mxu0 0.0
    %8593 = vmatprep.subr.mxu0 0.0
    %8594 = vmatpush1.msra.mxu0 0.0
    %8595 = vmatprep.subr.mxu0 0.0
    %8596 = vmatpush1.msra.mxu0 0.0
    %8597 = vmatprep.subr.mxu0 0.0
    %8598 = vmatpush1.msra.mxu0 0.0
    %8599 = vmatprep.subr.mxu0 0.0
    %8600 = vmatpush1.msra.mxu0 0.0
    %8601 = vmatprep.subr.mxu0 0.0
    %8602 = vmatpush1.msra.mxu0 0.0
    %8603 = vmatprep.subr.mxu0 0.0
    %8604 = vmatpush1.msra.mxu0 0.0
    %8605 = vmatprep.subr.mxu0 0.0
    %8606 = vmatpush1.msra.mxu0 0.0
    %8607 = vmatprep.mubr.f32.mxu0 0.0
    %v8608 = vand.u32 %v8113, 4294901760
    %8609 = vmatmul.mubr.f32.gmra.mrb[0].mxu0 %v8608
    %v8610 = vpop.f32.mrb[0].mxu0
    %v8611 = vadd.f32 %v8532, %v8610
    %v8612 = vpop.f32.mrb[0].mxu0
    %8613 = vmatprep.mubr.f32.mxu0 0.0
    %v8614 = vand.u32 %v8116, 4294901760
    %8615 = vmatmul.mubr.f32.gmra.mrb[0].mxu0 %v8614
    %v8616 = vpop.f32.mrb[0].mxu0
    %v8617 = vadd.f32 %v8538, %v8616
    %v8618 = vpop.f32.mrb[0].mxu0
    %8619 = vdwg.mxu0
    %8620 = vrot.lane.b32.xlu0 %v713, 64
    %v8621 = vpop.permute.xlu0 %8620
    %8622 = vrot.lane.b32.xlu0 %v715, 64
    %v8623 = vpop.permute.xlu0 %8622
    %v8627 = vsel %vm4845, %v5019, 0
    %v8630 = vsel %vm4845, %v5021, 0
    %8632 = vmatprep.subr.mxu0 0.0
    %v8633 = vand.u32 %v8621, 4294901760
    %8634 = vmatpush1.msra.mxu0 %v8633
    %8635 = vmatprep.subr.mxu0 0.0
    %v8636 = vand.u32 %v8623, 4294901760
    %8637 = vmatpush1.msra.mxu0 %v8636
    %8638 = vmatprep.subr.mxu0 0.0
    %8639 = vmatpush1.msra.mxu0 0.0
    %8640 = vmatprep.subr.mxu0 0.0
    %8641 = vmatpush1.msra.mxu0 0.0
    %8642 = vmatprep.subr.mxu0 0.0
    %8643 = vmatpush1.msra.mxu0 0.0
    %8644 = vmatprep.subr.mxu0 0.0
    %8645 = vmatpush1.msra.mxu0 0.0
    %8646 = vmatprep.subr.mxu0 0.0
    %8647 = vmatpush1.msra.mxu0 0.0
    %8648 = vmatprep.subr.mxu0 0.0
    %8649 = vmatpush1.msra.mxu0 0.0
    %8650 = vmatprep.subr.mxu0 0.0
    %8651 = vmatpush1.msra.mxu0 0.0
    %8652 = vmatprep.subr.mxu0 0.0
    %8653 = vmatpush1.msra.mxu0 0.0
    %8654 = vmatprep.subr.mxu0 0.0
    %8655 = vmatpush1.msra.mxu0 0.0
    %8656 = vmatprep.subr.mxu0 0.0
    %8657 = vmatpush1.msra.mxu0 0.0
    %8658 = vmatprep.subr.mxu0 0.0
    %8659 = vmatpush1.msra.mxu0 0.0
    %8660 = vmatprep.subr.mxu0 0.0
    %8661 = vmatpush1.msra.mxu0 0.0
    %8662 = vmatprep.subr.mxu0 0.0
    %8663 = vmatpush1.msra.mxu0 0.0
    %8664 = vmatprep.subr.mxu0 0.0
    %8665 = vmatpush1.msra.mxu0 0.0
    %8666 = vmatprep.subr.mxu0 0.0
    %8667 = vmatpush1.msra.mxu0 0.0
    %8668 = vmatprep.subr.mxu0 0.0
    %8669 = vmatpush1.msra.mxu0 0.0
    %8670 = vmatprep.subr.mxu0 0.0
    %8671 = vmatpush1.msra.mxu0 0.0
    %8672 = vmatprep.subr.mxu0 0.0
    %8673 = vmatpush1.msra.mxu0 0.0
    %8674 = vmatprep.subr.mxu0 0.0
    %8675 = vmatpush1.msra.mxu0 0.0
    %8676 = vmatprep.subr.mxu0 0.0
    %8677 = vmatpush1.msra.mxu0 0.0
    %8678 = vmatprep.subr.mxu0 0.0
    %8679 = vmatpush1.msra.mxu0 0.0
    %8680 = vmatprep.subr.mxu0 0.0
    %8681 = vmatpush1.msra.mxu0 0.0
    %8682 = vmatprep.subr.mxu0 0.0
    %8683 = vmatpush1.msra.mxu0 0.0
    %8684 = vmatprep.subr.mxu0 0.0
    %8685 = vmatpush1.msra.mxu0 0.0
    %8686 = vmatprep.subr.mxu0 0.0
    %8687 = vmatpush1.msra.mxu0 0.0
    %8688 = vmatprep.subr.mxu0 0.0
    %8689 = vmatpush1.msra.mxu0 0.0
    %8690 = vmatprep.subr.mxu0 0.0
    %8691 = vmatpush1.msra.mxu0 0.0
    %8692 = vmatprep.subr.mxu0 0.0
    %8693 = vmatpush1.msra.mxu0 0.0
    %8694 = vmatprep.subr.mxu0 0.0
    %8695 = vmatpush1.msra.mxu0 0.0
    %8696 = vmatprep.subr.mxu0 0.0
    %8697 = vmatpush1.msra.mxu0 0.0
    %8698 = vmatprep.mubr.f32.mxu0 0.0
    %v8699 = vand.u32 %v8627, 4294901760
    %v8700 = vsub.f32 %v8627, %v8699
    %v8701 = vand.u32 %v8700, 4294901760
    %v8702 = vsub.f32 %v8700, %v8701
    %v8703 = vand.u32 %v8702, 4294901760
    %8704 = vmatmul.mubr.f32.gmra.mrb[0].mxu0 %v8703
    %v8705 = vpop.f32.mrb[0].mxu0
    %v8706 = vadd.f32 0.0, %v8705
    %v8707 = vpop.f32.mrb[0].mxu0
    %8708 = vmatprep.mubr.f32.mxu0 0.0
    %v8709 = vand.u32 %v8630, 4294901760
    %v8710 = vsub.f32 %v8630, %v8709
    %v8711 = vand.u32 %v8710, 4294901760
    %v8712 = vsub.f32 %v8710, %v8711
    %v8713 = vand.u32 %v8712, 4294901760
    %8714 = vmatmul.mubr.f32.gmra.mrb[0].mxu0 %v8713
    %v8715 = vpop.f32.mrb[0].mxu0
    %v8716 = vadd.f32 0.0, %v8715
    %v8717 = vpop.f32.mrb[0].mxu0
    %8718 = vdwg.mxu0
    %8719 = vmatprep.subr.mxu0 0.0
    %v8720 = vand.u32 %v8621, 4294901760
    %v8721 = vsub.f32 %v8621, %v8720
    %v8722 = vand.u32 %v8721, 4294901760
    %v8723 = vsub.f32 %v8721, %v8722
    %v8724 = vand.u32 %v8723, 4294901760
    %8725 = vmatpush1.msra.mxu0 %v8724
    %8726 = vmatprep.subr.mxu0 0.0
    %v8727 = vand.u32 %v8623, 4294901760
    %v8728 = vsub.f32 %v8623, %v8727
    %v8729 = vand.u32 %v8728, 4294901760
    %v8730 = vsub.f32 %v8728, %v8729
    %v8731 = vand.u32 %v8730, 4294901760
    %8732 = vmatpush1.msra.mxu0 %v8731
    %8733 = vmatprep.subr.mxu0 0.0
    %8734 = vmatpush1.msra.mxu0 0.0
    %8735 = vmatprep.subr.mxu0 0.0
    %8736 = vmatpush1.msra.mxu0 0.0
    %8737 = vmatprep.subr.mxu0 0.0
    %8738 = vmatpush1.msra.mxu0 0.0
    %8739 = vmatprep.subr.mxu0 0.0
    %8740 = vmatpush1.msra.mxu0 0.0
    %8741 = vmatprep.subr.mxu0 0.0
    %8742 = vmatpush1.msra.mxu0 0.0
    %8743 = vmatprep.subr.mxu0 0.0
    %8744 = vmatpush1.msra.mxu0 0.0
    %8745 = vmatprep.subr.mxu0 0.0
    %8746 = vmatpush1.msra.mxu0 0.0
    %8747 = vmatprep.subr.mxu0 0.0
    %8748 = vmatpush1.msra.mxu0 0.0
    %8749 = vmatprep.subr.mxu0 0.0
    %8750 = vmatpush1.msra.mxu0 0.0
    %8751 = vmatprep.subr.mxu0 0.0
    %8752 = vmatpush1.msra.mxu0 0.0
    %8753 = vmatprep.subr.mxu0 0.0
    %8754 = vmatpush1.msra.mxu0 0.0
    %8755 = vmatprep.subr.mxu0 0.0
    %8756 = vmatpush1.msra.mxu0 0.0
    %8757 = vmatprep.subr.mxu0 0.0
    %8758 = vmatpush1.msra.mxu0 0.0
    %8759 = vmatprep.subr.mxu0 0.0
    %8760 = vmatpush1.msra.mxu0 0.0
    %8761 = vmatprep.subr.mxu0 0.0
    %8762 = vmatpush1.msra.mxu0 0.0
    %8763 = vmatprep.subr.mxu0 0.0
    %8764 = vmatpush1.msra.mxu0 0.0
    %8765 = vmatprep.subr.mxu0 0.0
    %8766 = vmatpush1.msra.mxu0 0.0
    %8767 = vmatprep.subr.mxu0 0.0
    %8768 = vmatpush1.msra.mxu0 0.0
    %8769 = vmatprep.subr.mxu0 0.0
    %8770 = vmatpush1.msra.mxu0 0.0
    %8771 = vmatprep.subr.mxu0 0.0
    %8772 = vmatpush1.msra.mxu0 0.0
    %8773 = vmatprep.subr.mxu0 0.0
    %8774 = vmatpush1.msra.mxu0 0.0
    %8775 = vmatprep.subr.mxu0 0.0
    %8776 = vmatpush1.msra.mxu0 0.0
    %8777 = vmatprep.subr.mxu0 0.0
    %8778 = vmatpush1.msra.mxu0 0.0
    %8779 = vmatprep.subr.mxu0 0.0
    %8780 = vmatpush1.msra.mxu0 0.0
    %8781 = vmatprep.subr.mxu0 0.0
    %8782 = vmatpush1.msra.mxu0 0.0
    %8783 = vmatprep.subr.mxu0 0.0
    %8784 = vmatpush1.msra.mxu0 0.0
    %8785 = vmatprep.subr.mxu0 0.0
    %8786 = vmatpush1.msra.mxu0 0.0
    %8787 = vmatprep.subr.mxu0 0.0
    %8788 = vmatpush1.msra.mxu0 0.0
    %8789 = vmatprep.subr.mxu0 0.0
    %8790 = vmatpush1.msra.mxu0 0.0
    %8791 = vmatprep.subr.mxu0 0.0
    %8792 = vmatpush1.msra.mxu0 0.0
    %8793 = vmatprep.mubr.f32.mxu0 0.0
    %v8794 = vand.u32 %v8627, 4294901760
    %8795 = vmatmul.mubr.f32.gmra.mrb[0].mxu0 %v8794
    %v8796 = vpop.f32.mrb[0].mxu0
    %v8797 = vadd.f32 %v8706, %v8796
    %v8798 = vpop.f32.mrb[0].mxu0
    %8799 = vmatprep.mubr.f32.mxu0 0.0
    %v8800 = vand.u32 %v8630, 4294901760
    %8801 = vmatmul.mubr.f32.gmra.mrb[0].mxu0 %v8800
    %v8802 = vpop.f32.mrb[0].mxu0
    %v8803 = vadd.f32 %v8716, %v8802
    %v8804 = vpop.f32.mrb[0].mxu0
    %8805 = vdwg.mxu0
    %8806 = vmatprep.subr.mxu0 0.0
    %v8807 = vand.u32 %v8621, 4294901760
    %v8808 = vsub.f32 %v8621, %v8807
    %8809 = vmatpush1.msra.mxu0 %v8808
    %8810 = vmatprep.subr.mxu0 0.0
    %v8811 = vand.u32 %v8623, 4294901760
    %v8812 = vsub.f32 %v8623, %v8811
    %8813 = vmatpush1.msra.mxu0 %v8812
    %8814 = vmatprep.subr.mxu0 0.0
    %8815 = vmatpush1.msra.mxu0 0.0
    %8816 = vmatprep.subr.mxu0 0.0
    %8817 = vmatpush1.msra.mxu0 0.0
    %8818 = vmatprep.subr.mxu0 0.0
    %8819 = vmatpush1.msra.mxu0 0.0
    %8820 = vmatprep.subr.mxu0 0.0
    %8821 = vmatpush1.msra.mxu0 0.0
    %8822 = vmatprep.subr.mxu0 0.0
    %8823 = vmatpush1.msra.mxu0 0.0
    %8824 = vmatprep.subr.mxu0 0.0
    %8825 = vmatpush1.msra.mxu0 0.0
    %8826 = vmatprep.subr.mxu0 0.0
    %8827 = vmatpush1.msra.mxu0 0.0
    %8828 = vmatprep.subr.mxu0 0.0
    %8829 = vmatpush1.msra.mxu0 0.0
    %8830 = vmatprep.subr.mxu0 0.0
    %8831 = vmatpush1.msra.mxu0 0.0
    %8832 = vmatprep.subr.mxu0 0.0
    %8833 = vmatpush1.msra.mxu0 0.0
    %8834 = vmatprep.subr.mxu0 0.0
    %8835 = vmatpush1.msra.mxu0 0.0
    %8836 = vmatprep.subr.mxu0 0.0
    %8837 = vmatpush1.msra.mxu0 0.0
    %8838 = vmatprep.subr.mxu0 0.0
    %8839 = vmatpush1.msra.mxu0 0.0
    %8840 = vmatprep.subr.mxu0 0.0
    %8841 = vmatpush1.msra.mxu0 0.0
    %8842 = vmatprep.subr.mxu0 0.0
    %8843 = vmatpush1.msra.mxu0 0.0
    %8844 = vmatprep.subr.mxu0 0.0
    %8845 = vmatpush1.msra.mxu0 0.0
    %8846 = vmatprep.subr.mxu0 0.0
    %8847 = vmatpush1.msra.mxu0 0.0
    %8848 = vmatprep.subr.mxu0 0.0
    %8849 = vmatpush1.msra.mxu0 0.0
    %8850 = vmatprep.subr.mxu0 0.0
    %8851 = vmatpush1.msra.mxu0 0.0
    %8852 = vmatprep.subr.mxu0 0.0
    %8853 = vmatpush1.msra.mxu0 0.0
    %8854 = vmatprep.subr.mxu0 0.0
    %8855 = vmatpush1.msra.mxu0 0.0
    %8856 = vmatprep.subr.mxu0 0.0
    %8857 = vmatpush1.msra.mxu0 0.0
    %8858 = vmatprep.subr.mxu0 0.0
    %8859 = vmatpush1.msra.mxu0 0.0
    %8860 = vmatprep.subr.mxu0 0.0
    %8861 = vmatpush1.msra.mxu0 0.0
    %8862 = vmatprep.subr.mxu0 0.0
    %8863 = vmatpush1.msra.mxu0 0.0
    %8864 = vmatprep.subr.mxu0 0.0
    %8865 = vmatpush1.msra.mxu0 0.0
    %8866 = vmatprep.subr.mxu0 0.0
    %8867 = vmatpush1.msra.mxu0 0.0
    %8868 = vmatprep.subr.mxu0 0.0
    %8869 = vmatpush1.msra.mxu0 0.0
    %8870 = vmatprep.subr.mxu0 0.0
    %8871 = vmatpush1.msra.mxu0 0.0
    %8872 = vmatprep.subr.mxu0 0.0
    %8873 = vmatpush1.msra.mxu0 0.0
    %8874 = vmatprep.mubr.f32.mxu0 0.0
    %v8875 = vand.u32 %v8627, 4294901760
    %v8876 = vsub.f32 %v8627, %v8875
    %8877 = vmatmul.mubr.f32.gmra.mrb[0].mxu0 %v8876
    %v8878 = vpop.f32.mrb[0].mxu0
    %v8879 = vadd.f32 %v8797, %v8878
    %v8880 = vpop.f32.mrb[0].mxu0
    %8881 = vmatprep.mubr.f32.mxu0 0.0
    %v8882 = vand.u32 %v8630, 4294901760
    %v8883 = vsub.f32 %v8630, %v8882
    %8884 = vmatmul.mubr.f32.gmra.mrb[0].mxu0 %v8883
    %v8885 = vpop.f32.mrb[0].mxu0
    %v8886 = vadd.f32 %v8803, %v8885
    %v8887 = vpop.f32.mrb[0].mxu0
    %8888 = vdwg.mxu0
    %8889 = vmatprep.subr.mxu0 0.0
    %v8890 = vand.u32 %v8621, 4294901760
    %8891 = vmatpush1.msra.mxu0 %v8890
    %8892 = vmatprep.subr.mxu0 0.0
    %v8893 = vand.u32 %v8623, 4294901760
    %8894 = vmatpush1.msra.mxu0 %v8893
    %8895 = vmatprep.subr.mxu0 0.0
    %8896 = vmatpush1.msra.mxu0 0.0
    %8897 = vmatprep.subr.mxu0 0.0
    %8898 = vmatpush1.msra.mxu0 0.0
    %8899 = vmatprep.subr.mxu0 0.0
    %8900 = vmatpush1.msra.mxu0 0.0
    %8901 = vmatprep.subr.mxu0 0.0
    %8902 = vmatpush1.msra.mxu0 0.0
    %8903 = vmatprep.subr.mxu0 0.0
    %8904 = vmatpush1.msra.mxu0 0.0
    %8905 = vmatprep.subr.mxu0 0.0
    %8906 = vmatpush1.msra.mxu0 0.0
    %8907 = vmatprep.subr.mxu0 0.0
    %8908 = vmatpush1.msra.mxu0 0.0
    %8909 = vmatprep.subr.mxu0 0.0
    %8910 = vmatpush1.msra.mxu0 0.0
    %8911 = vmatprep.subr.mxu0 0.0
    %8912 = vmatpush1.msra.mxu0 0.0
    %8913 = vmatprep.subr.mxu0 0.0
    %8914 = vmatpush1.msra.mxu0 0.0
    %8915 = vmatprep.subr.mxu0 0.0
    %8916 = vmatpush1.msra.mxu0 0.0
    %8917 = vmatprep.subr.mxu0 0.0
    %8918 = vmatpush1.msra.mxu0 0.0
    %8919 = vmatprep.subr.mxu0 0.0
    %8920 = vmatpush1.msra.mxu0 0.0
    %8921 = vmatprep.subr.mxu0 0.0
    %8922 = vmatpush1.msra.mxu0 0.0
    %8923 = vmatprep.subr.mxu0 0.0
    %8924 = vmatpush1.msra.mxu0 0.0
    %8925 = vmatprep.subr.mxu0 0.0
    %8926 = vmatpush1.msra.mxu0 0.0
    %8927 = vmatprep.subr.mxu0 0.0
    %8928 = vmatpush1.msra.mxu0 0.0
    %8929 = vmatprep.subr.mxu0 0.0
    %8930 = vmatpush1.msra.mxu0 0.0
    %8931 = vmatprep.subr.mxu0 0.0
    %8932 = vmatpush1.msra.mxu0 0.0
    %8933 = vmatprep.subr.mxu0 0.0
    %8934 = vmatpush1.msra.mxu0 0.0
    %8935 = vmatprep.subr.mxu0 0.0
    %8936 = vmatpush1.msra.mxu0 0.0
    %8937 = vmatprep.subr.mxu0 0.0
    %8938 = vmatpush1.msra.mxu0 0.0
    %8939 = vmatprep.subr.mxu0 0.0
    %8940 = vmatpush1.msra.mxu0 0.0
    %8941 = vmatprep.subr.mxu0 0.0
    %8942 = vmatpush1.msra.mxu0 0.0
    %8943 = vmatprep.subr.mxu0 0.0
    %8944 = vmatpush1.msra.mxu0 0.0
    %8945 = vmatprep.subr.mxu0 0.0
    %8946 = vmatpush1.msra.mxu0 0.0
    %8947 = vmatprep.subr.mxu0 0.0
    %8948 = vmatpush1.msra.mxu0 0.0
    %8949 = vmatprep.subr.mxu0 0.0
    %8950 = vmatpush1.msra.mxu0 0.0
    %8951 = vmatprep.subr.mxu0 0.0
    %8952 = vmatpush1.msra.mxu0 0.0
    %8953 = vmatprep.subr.mxu0 0.0
    %8954 = vmatpush1.msra.mxu0 0.0
    %8955 = vmatprep.mubr.f32.mxu0 0.0
    %v8956 = vand.u32 %v8627, 4294901760
    %v8957 = vsub.f32 %v8627, %v8956
    %v8958 = vand.u32 %v8957, 4294901760
    %8959 = vmatmul.mubr.f32.gmra.mrb[0].mxu0 %v8958
    %v8960 = vpop.f32.mrb[0].mxu0
    %v8961 = vadd.f32 %v8879, %v8960
    %v8962 = vpop.f32.mrb[0].mxu0
    %8963 = vmatprep.mubr.f32.mxu0 0.0
    %v8964 = vand.u32 %v8630, 4294901760
    %v8965 = vsub.f32 %v8630, %v8964
    %v8966 = vand.u32 %v8965, 4294901760
    %8967 = vmatmul.mubr.f32.gmra.mrb[0].mxu0 %v8966
    %v8968 = vpop.f32.mrb[0].mxu0
    %v8969 = vadd.f32 %v8886, %v8968
    %v8970 = vpop.f32.mrb[0].mxu0
    %8971 = vdwg.mxu0
    %8972 = vmatprep.subr.mxu0 0.0
    %v8973 = vand.u32 %v8621, 4294901760
    %v8974 = vsub.f32 %v8621, %v8973
    %v8975 = vand.u32 %v8974, 4294901760
    %8976 = vmatpush1.msra.mxu0 %v8975
    %8977 = vmatprep.subr.mxu0 0.0
    %v8978 = vand.u32 %v8623, 4294901760
    %v8979 = vsub.f32 %v8623, %v8978
    %v8980 = vand.u32 %v8979, 4294901760
    %8981 = vmatpush1.msra.mxu0 %v8980
    %8982 = vmatprep.subr.mxu0 0.0
    %8983 = vmatpush1.msra.mxu0 0.0
    %8984 = vmatprep.subr.mxu0 0.0
    %8985 = vmatpush1.msra.mxu0 0.0
    %8986 = vmatprep.subr.mxu0 0.0
    %8987 = vmatpush1.msra.mxu0 0.0
    %8988 = vmatprep.subr.mxu0 0.0
    %8989 = vmatpush1.msra.mxu0 0.0
    %8990 = vmatprep.subr.mxu0 0.0
    %8991 = vmatpush1.msra.mxu0 0.0
    %8992 = vmatprep.subr.mxu0 0.0
    %8993 = vmatpush1.msra.mxu0 0.0
    %8994 = vmatprep.subr.mxu0 0.0
    %8995 = vmatpush1.msra.mxu0 0.0
    %8996 = vmatprep.subr.mxu0 0.0
    %8997 = vmatpush1.msra.mxu0 0.0
    %8998 = vmatprep.subr.mxu0 0.0
    %8999 = vmatpush1.msra.mxu0 0.0
    %9000 = vmatprep.subr.mxu0 0.0
    %9001 = vmatpush1.msra.mxu0 0.0
    %9002 = vmatprep.subr.mxu0 0.0
    %9003 = vmatpush1.msra.mxu0 0.0
    %9004 = vmatprep.subr.mxu0 0.0
    %9005 = vmatpush1.msra.mxu0 0.0
    %9006 = vmatprep.subr.mxu0 0.0
    %9007 = vmatpush1.msra.mxu0 0.0
    %9008 = vmatprep.subr.mxu0 0.0
    %9009 = vmatpush1.msra.mxu0 0.0
    %9010 = vmatprep.subr.mxu0 0.0
    %9011 = vmatpush1.msra.mxu0 0.0
    %9012 = vmatprep.subr.mxu0 0.0
    %9013 = vmatpush1.msra.mxu0 0.0
    %9014 = vmatprep.subr.mxu0 0.0
    %9015 = vmatpush1.msra.mxu0 0.0
    %9016 = vmatprep.subr.mxu0 0.0
    %9017 = vmatpush1.msra.mxu0 0.0
    %9018 = vmatprep.subr.mxu0 0.0
    %9019 = vmatpush1.msra.mxu0 0.0
    %9020 = vmatprep.subr.mxu0 0.0
    %9021 = vmatpush1.msra.mxu0 0.0
    %9022 = vmatprep.subr.mxu0 0.0
    %9023 = vmatpush1.msra.mxu0 0.0
    %9024 = vmatprep.subr.mxu0 0.0
    %9025 = vmatpush1.msra.mxu0 0.0
    %9026 = vmatprep.subr.mxu0 0.0
    %9027 = vmatpush1.msra.mxu0 0.0
    %9028 = vmatprep.subr.mxu0 0.0
    %9029 = vmatpush1.msra.mxu0 0.0
    %9030 = vmatprep.subr.mxu0 0.0
    %9031 = vmatpush1.msra.mxu0 0.0
    %9032 = vmatprep.subr.mxu0 0.0
    %9033 = vmatpush1.msra.mxu0 0.0
    %9034 = vmatprep.subr.mxu0 0.0
    %9035 = vmatpush1.msra.mxu0 0.0
    %9036 = vmatprep.subr.mxu0 0.0
    %9037 = vmatpush1.msra.mxu0 0.0
    %9038 = vmatprep.subr.mxu0 0.0
    %9039 = vmatpush1.msra.mxu0 0.0
    %9040 = vmatprep.subr.mxu0 0.0
    %9041 = vmatpush1.msra.mxu0 0.0
    %9042 = vmatprep.mubr.f32.mxu0 0.0
    %v9043 = vand.u32 %v8627, 4294901760
    %9044 = vmatmul.mubr.f32.gmra.mrb[0].mxu0 %v9043
    %v9045 = vpop.f32.mrb[0].mxu0
    %v9046 = vadd.f32 %v8961, %v9045
    %v9047 = vpop.f32.mrb[0].mxu0
    %9048 = vmatprep.mubr.f32.mxu0 0.0
    %v9049 = vand.u32 %v8630, 4294901760
    %9050 = vmatmul.mubr.f32.gmra.mrb[0].mxu0 %v9049
    %v9051 = vpop.f32.mrb[0].mxu0
    %v9052 = vadd.f32 %v8969, %v9051
    %v9053 = vpop.f32.mrb[0].mxu0
    %9054 = vdwg.mxu0
    %9055 = vmatprep.subr.mxu0 0.0
    %v9056 = vand.u32 %v8621, 4294901760
    %9057 = vmatpush1.msra.mxu0 %v9056
    %9058 = vmatprep.subr.mxu0 0.0
    %v9059 = vand.u32 %v8623, 4294901760
    %9060 = vmatpush1.msra.mxu0 %v9059
    %9061 = vmatprep.subr.mxu0 0.0
    %9062 = vmatpush1.msra.mxu0 0.0
    %9063 = vmatprep.subr.mxu0 0.0
    %9064 = vmatpush1.msra.mxu0 0.0
    %9065 = vmatprep.subr.mxu0 0.0
    %9066 = vmatpush1.msra.mxu0 0.0
    %9067 = vmatprep.subr.mxu0 0.0
    %9068 = vmatpush1.msra.mxu0 0.0
    %9069 = vmatprep.subr.mxu0 0.0
    %9070 = vmatpush1.msra.mxu0 0.0
    %9071 = vmatprep.subr.mxu0 0.0
    %9072 = vmatpush1.msra.mxu0 0.0
    %9073 = vmatprep.subr.mxu0 0.0
    %9074 = vmatpush1.msra.mxu0 0.0
    %9075 = vmatprep.subr.mxu0 0.0
    %9076 = vmatpush1.msra.mxu0 0.0
    %9077 = vmatprep.subr.mxu0 0.0
    %9078 = vmatpush1.msra.mxu0 0.0
    %9079 = vmatprep.subr.mxu0 0.0
    %9080 = vmatpush1.msra.mxu0 0.0
    %9081 = vmatprep.subr.mxu0 0.0
    %9082 = vmatpush1.msra.mxu0 0.0
    %9083 = vmatprep.subr.mxu0 0.0
    %9084 = vmatpush1.msra.mxu0 0.0
    %9085 = vmatprep.subr.mxu0 0.0
    %9086 = vmatpush1.msra.mxu0 0.0
    %9087 = vmatprep.subr.mxu0 0.0
    %9088 = vmatpush1.msra.mxu0 0.0
    %9089 = vmatprep.subr.mxu0 0.0
    %9090 = vmatpush1.msra.mxu0 0.0
    %9091 = vmatprep.subr.mxu0 0.0
    %9092 = vmatpush1.msra.mxu0 0.0
    %9093 = vmatprep.subr.mxu0 0.0
    %9094 = vmatpush1.msra.mxu0 0.0
    %9095 = vmatprep.subr.mxu0 0.0
    %9096 = vmatpush1.msra.mxu0 0.0
    %9097 = vmatprep.subr.mxu0 0.0
    %9098 = vmatpush1.msra.mxu0 0.0
    %9099 = vmatprep.subr.mxu0 0.0
    %9100 = vmatpush1.msra.mxu0 0.0
    %9101 = vmatprep.subr.mxu0 0.0
    %9102 = vmatpush1.msra.mxu0 0.0
    %9103 = vmatprep.subr.mxu0 0.0
    %9104 = vmatpush1.msra.mxu0 0.0
    %9105 = vmatprep.subr.mxu0 0.0
    %9106 = vmatpush1.msra.mxu0 0.0
    %9107 = vmatprep.subr.mxu0 0.0
    %9108 = vmatpush1.msra.mxu0 0.0
    %9109 = vmatprep.subr.mxu0 0.0
    %9110 = vmatpush1.msra.mxu0 0.0
    %9111 = vmatprep.subr.mxu0 0.0
    %9112 = vmatpush1.msra.mxu0 0.0
    %9113 = vmatprep.subr.mxu0 0.0
    %9114 = vmatpush1.msra.mxu0 0.0
    %9115 = vmatprep.subr.mxu0 0.0
    %9116 = vmatpush1.msra.mxu0 0.0
    %9117 = vmatprep.subr.mxu0 0.0
    %9118 = vmatpush1.msra.mxu0 0.0
    %9119 = vmatprep.subr.mxu0 0.0
    %9120 = vmatpush1.msra.mxu0 0.0
    %9121 = vmatprep.mubr.f32.mxu0 0.0
    %v9122 = vand.u32 %v8627, 4294901760
    %9123 = vmatmul.mubr.f32.gmra.mrb[0].mxu0 %v9122
    %v9124 = vpop.f32.mrb[0].mxu0
    %v9125 = vadd.f32 %v9046, %v9124
    %v9126 = vpop.f32.mrb[0].mxu0
    %9127 = vmatprep.mubr.f32.mxu0 0.0
    %v9128 = vand.u32 %v8630, 4294901760
    %9129 = vmatmul.mubr.f32.gmra.mrb[0].mxu0 %v9128
    %v9130 = vpop.f32.mrb[0].mxu0
    %v9131 = vadd.f32 %v9052, %v9130
    %v9132 = vpop.f32.mrb[0].mxu0
    %9133 = vdwg.mxu0
    %9138 = vrot.lane.b32.xlu0 %v6555, 8
    %v9139 = vpop.permute.xlu0 %9138
    %9140 = vrot.lane.b32.xlu0 %v6561, 8
    %v9141 = vpop.permute.xlu0 %9140
    %9142 = vrot.lane.b32.xlu0 %v7069, 8
    %v9143 = vpop.permute.xlu0 %9142
    %9144 = vrot.lane.b32.xlu0 %v7075, 8
    %v9145 = vpop.permute.xlu0 %9144
    %9154 = vrot.lane.b32.xlu0 %v7583, 16
    %v9155 = vpop.permute.xlu0 %9154
    %9156 = vrot.lane.b32.xlu0 %v7589, 16
    %v9157 = vpop.permute.xlu0 %9156
    %9158 = vrot.lane.b32.xlu0 %v8097, 16
    %v9159 = vpop.permute.xlu0 %9158
    %9160 = vrot.lane.b32.xlu0 %v8103, 16
    %v9161 = vpop.permute.xlu0 %9160
    %9170 = vrot.lane.b32.xlu0 %v8611, 24
    %v9171 = vpop.permute.xlu0 %9170
    %9172 = vrot.lane.b32.xlu0 %v8617, 24
    %v9173 = vpop.permute.xlu0 %9172
    %9174 = vrot.lane.b32.xlu0 %v9125, 24
    %v9175 = vpop.permute.xlu0 %9174
    %9176 = vrot.lane.b32.xlu0 %v9131, 24
    %v9177 = vpop.permute.xlu0 %9176
    %v9182 = vsel %vm720, %v5527, %v9139
    %v9183 = vsel %vm720, %v5533, %v9141
    %v9184 = vsel %vm720, %v6041, %v9143
    %v9185 = vsel %vm720, %v6047, %v9145
    %v9186 = vsel %vm4845, %v9182, %v9155
    %v9187 = vsel %vm4845, %v9183, %v9157
    %v9188 = vsel %vm4845, %v9184, %v9159
    %v9189 = vsel %vm4845, %v9185, %v9161
    %vm9190 = vcmask 195584
    %v9191 = vsel %vm9190, %v9186, %v9171
    %v9192 = vsel %vm9190, %v9187, %v9173
    %v9193 = vsel %vm9190, %v9188, %v9175
    %v9194 = vsel %vm9190, %v9189, %v9177
    %v9196 = vsel %vm61, %v9191, 0
    %v9199 = vsel %vm61, %v9192, 0
    %v9202 = vsel %vm61, %v9193, 0
    %v9205 = vsel %vm61, %v9194, 0
    %9207 = vmatprep.subr.mxu0 0.0
    %v9208 = vand.u32 %v40, 4294901760
    %9209 = vmatpush1.msra.mxu0 %v9208
    %9210 = vmatprep.subr.mxu0 0.0
    %v9211 = vand.u32 %v41, 4294901760
    %9212 = vmatpush1.msra.mxu0 %v9211
    %9213 = vmatprep.subr.mxu0 0.0
    %v9214 = vand.u32 %v42, 4294901760
    %9215 = vmatpush1.msra.mxu0 %v9214
    %9216 = vmatprep.subr.mxu0 0.0
    %v9217 = vand.u32 %v43, 4294901760
    %9218 = vmatpush1.msra.mxu0 %v9217
    %9219 = vmatprep.subr.mxu0 0.0
    %9220 = vmatpush1.msra.mxu0 0.0
    %9221 = vmatprep.subr.mxu0 0.0
    %9222 = vmatpush1.msra.mxu0 0.0
    %9223 = vmatprep.subr.mxu0 0.0
    %9224 = vmatpush1.msra.mxu0 0.0
    %9225 = vmatprep.subr.mxu0 0.0
    %9226 = vmatpush1.msra.mxu0 0.0
    %9227 = vmatprep.subr.mxu0 0.0
    %9228 = vmatpush1.msra.mxu0 0.0
    %9229 = vmatprep.subr.mxu0 0.0
    %9230 = vmatpush1.msra.mxu0 0.0
    %9231 = vmatprep.subr.mxu0 0.0
    %9232 = vmatpush1.msra.mxu0 0.0
    %9233 = vmatprep.subr.mxu0 0.0
    %9234 = vmatpush1.msra.mxu0 0.0
    %9235 = vmatprep.subr.mxu0 0.0
    %9236 = vmatpush1.msra.mxu0 0.0
    %9237 = vmatprep.subr.mxu0 0.0
    %9238 = vmatpush1.msra.mxu0 0.0
    %9239 = vmatprep.subr.mxu0 0.0
    %9240 = vmatpush1.msra.mxu0 0.0
    %9241 = vmatprep.subr.mxu0 0.0
    %9242 = vmatpush1.msra.mxu0 0.0
    %9243 = vmatprep.subr.mxu0 0.0
    %9244 = vmatpush1.msra.mxu0 0.0
    %9245 = vmatprep.subr.mxu0 0.0
    %9246 = vmatpush1.msra.mxu0 0.0
    %9247 = vmatprep.subr.mxu0 0.0
    %9248 = vmatpush1.msra.mxu0 0.0
    %9249 = vmatprep.subr.mxu0 0.0
    %9250 = vmatpush1.msra.mxu0 0.0
    %9251 = vmatprep.subr.mxu0 0.0
    %9252 = vmatpush1.msra.mxu0 0.0
    %9253 = vmatprep.subr.mxu0 0.0
    %9254 = vmatpush1.msra.mxu0 0.0
    %9255 = vmatprep.subr.mxu0 0.0
    %9256 = vmatpush1.msra.mxu0 0.0
    %9257 = vmatprep.subr.mxu0 0.0
    %9258 = vmatpush1.msra.mxu0 0.0
    %9259 = vmatprep.subr.mxu0 0.0
    %9260 = vmatpush1.msra.mxu0 0.0
    %9261 = vmatprep.subr.mxu0 0.0
    %9262 = vmatpush1.msra.mxu0 0.0
    %9263 = vmatprep.subr.mxu0 0.0
    %9264 = vmatpush1.msra.mxu0 0.0
    %9265 = vmatprep.subr.mxu0 0.0
    %9266 = vmatpush1.msra.mxu0 0.0
    %9267 = vmatprep.subr.mxu0 0.0
    %9268 = vmatpush1.msra.mxu0 0.0
    %9269 = vmatprep.subr.mxu0 0.0
    %9270 = vmatpush1.msra.mxu0 0.0
    %9271 = vmatprep.subr.mxu0 0.0
    %9272 = vmatpush1.msra.mxu0 0.0
    %9273 = vmatprep.subr.mxu0 0.0
    %9274 = vmatpush1.msra.mxu0 0.0
    %9275 = vmatprep.mubr.f32.mxu0 0.0
    %v9276 = vand.u32 %v9196, 4294901760
    %v9277 = vsub.f32 %v9196, %v9276
    %v9278 = vand.u32 %v9277, 4294901760
    %v9279 = vsub.f32 %v9277, %v9278
    %v9280 = vand.u32 %v9279, 4294901760
    %9281 = vmatmul.mubr.f32.gmra.mrb[0].mxu0 %v9280
    %v9282 = vpop.f32.mrb[0].mxu0
    %v9283 = vadd.f32 0.0, %v9282
    %v9284 = vpop.f32.mrb[0].mxu0
    %9285 = vmatprep.mubr.f32.mxu0 0.0
    %v9286 = vand.u32 %v9199, 4294901760
    %v9287 = vsub.f32 %v9199, %v9286
    %v9288 = vand.u32 %v9287, 4294901760
    %v9289 = vsub.f32 %v9287, %v9288
    %v9290 = vand.u32 %v9289, 4294901760
    %9291 = vmatmul.mubr.f32.gmra.mrb[0].mxu0 %v9290
    %v9292 = vpop.f32.mrb[0].mxu0
    %v9293 = vadd.f32 0.0, %v9292
    %v9294 = vpop.f32.mrb[0].mxu0
    %9295 = vmatprep.mubr.f32.mxu0 0.0
    %v9296 = vand.u32 %v9202, 4294901760
    %v9297 = vsub.f32 %v9202, %v9296
    %v9298 = vand.u32 %v9297, 4294901760
    %v9299 = vsub.f32 %v9297, %v9298
    %v9300 = vand.u32 %v9299, 4294901760
    %9301 = vmatmul.mubr.f32.gmra.mrb[0].mxu0 %v9300
    %v9302 = vpop.f32.mrb[0].mxu0
    %v9303 = vadd.f32 0.0, %v9302
    %v9304 = vpop.f32.mrb[0].mxu0
    %9305 = vmatprep.mubr.f32.mxu0 0.0
    %v9306 = vand.u32 %v9205, 4294901760
    %v9307 = vsub.f32 %v9205, %v9306
    %v9308 = vand.u32 %v9307, 4294901760
    %v9309 = vsub.f32 %v9307, %v9308
    %v9310 = vand.u32 %v9309, 4294901760
    %9311 = vmatmul.mubr.f32.gmra.mrb[0].mxu0 %v9310
    %v9312 = vpop.f32.mrb[0].mxu0
    %v9313 = vadd.f32 0.0, %v9312
    %v9314 = vpop.f32.mrb[0].mxu0
    %9315 = vdwg.mxu0
    %9316 = vmatprep.subr.mxu0 0.0
    %v9317 = vand.u32 %v40, 4294901760
    %v9318 = vsub.f32 %v40, %v9317
    %v9319 = vand.u32 %v9318, 4294901760
    %v9320 = vsub.f32 %v9318, %v9319
    %v9321 = vand.u32 %v9320, 4294901760
    %9322 = vmatpush1.msra.mxu0 %v9321
    %9323 = vmatprep.subr.mxu0 0.0
    %v9324 = vand.u32 %v41, 4294901760
    %v9325 = vsub.f32 %v41, %v9324
    %v9326 = vand.u32 %v9325, 4294901760
    %v9327 = vsub.f32 %v9325, %v9326
    %v9328 = vand.u32 %v9327, 4294901760
    %9329 = vmatpush1.msra.mxu0 %v9328
    %9330 = vmatprep.subr.mxu0 0.0
    %v9331 = vand.u32 %v42, 4294901760
    %v9332 = vsub.f32 %v42, %v9331
    %v9333 = vand.u32 %v9332, 4294901760
    %v9334 = vsub.f32 %v9332, %v9333
    %v9335 = vand.u32 %v9334, 4294901760
    %9336 = vmatpush1.msra.mxu0 %v9335
    %9337 = vmatprep.subr.mxu0 0.0
    %v9338 = vand.u32 %v43, 4294901760
    %v9339 = vsub.f32 %v43, %v9338
    %v9340 = vand.u32 %v9339, 4294901760
    %v9341 = vsub.f32 %v9339, %v9340
    %v9342 = vand.u32 %v9341, 4294901760
    %9343 = vmatpush1.msra.mxu0 %v9342
    %9344 = vmatprep.subr.mxu0 0.0
    %9345 = vmatpush1.msra.mxu0 0.0
    %9346 = vmatprep.subr.mxu0 0.0
    %9347 = vmatpush1.msra.mxu0 0.0
    %9348 = vmatprep.subr.mxu0 0.0
    %9349 = vmatpush1.msra.mxu0 0.0
    %9350 = vmatprep.subr.mxu0 0.0
    %9351 = vmatpush1.msra.mxu0 0.0
    %9352 = vmatprep.subr.mxu0 0.0
    %9353 = vmatpush1.msra.mxu0 0.0
    %9354 = vmatprep.subr.mxu0 0.0
    %9355 = vmatpush1.msra.mxu0 0.0
    %9356 = vmatprep.subr.mxu0 0.0
    %9357 = vmatpush1.msra.mxu0 0.0
    %9358 = vmatprep.subr.mxu0 0.0
    %9359 = vmatpush1.msra.mxu0 0.0
    %9360 = vmatprep.subr.mxu0 0.0
    %9361 = vmatpush1.msra.mxu0 0.0
    %9362 = vmatprep.subr.mxu0 0.0
    %9363 = vmatpush1.msra.mxu0 0.0
    %9364 = vmatprep.subr.mxu0 0.0
    %9365 = vmatpush1.msra.mxu0 0.0
    %9366 = vmatprep.subr.mxu0 0.0
    %9367 = vmatpush1.msra.mxu0 0.0
    %9368 = vmatprep.subr.mxu0 0.0
    %9369 = vmatpush1.msra.mxu0 0.0
    %9370 = vmatprep.subr.mxu0 0.0
    %9371 = vmatpush1.msra.mxu0 0.0
    %9372 = vmatprep.subr.mxu0 0.0
    %9373 = vmatpush1.msra.mxu0 0.0
    %9374 = vmatprep.subr.mxu0 0.0
    %9375 = vmatpush1.msra.mxu0 0.0
    %9376 = vmatprep.subr.mxu0 0.0
    %9377 = vmatpush1.msra.mxu0 0.0
    %9378 = vmatprep.subr.mxu0 0.0
    %9379 = vmatpush1.msra.mxu0 0.0
    %9380 = vmatprep.subr.mxu0 0.0
    %9381 = vmatpush1.msra.mxu0 0.0
    %9382 = vmatprep.subr.mxu0 0.0
    %9383 = vmatpush1.msra.mxu0 0.0
    %9384 = vmatprep.subr.mxu0 0.0
    %9385 = vmatpush1.msra.mxu0 0.0
    %9386 = vmatprep.subr.mxu0 0.0
    %9387 = vmatpush1.msra.mxu0 0.0
    %9388 = vmatprep.subr.mxu0 0.0
    %9389 = vmatpush1.msra.mxu0 0.0
    %9390 = vmatprep.subr.mxu0 0.0
    %9391 = vmatpush1.msra.mxu0 0.0
    %9392 = vmatprep.subr.mxu0 0.0
    %9393 = vmatpush1.msra.mxu0 0.0
    %9394 = vmatprep.subr.mxu0 0.0
    %9395 = vmatpush1.msra.mxu0 0.0
    %9396 = vmatprep.subr.mxu0 0.0
    %9397 = vmatpush1.msra.mxu0 0.0
    %9398 = vmatprep.subr.mxu0 0.0
    %9399 = vmatpush1.msra.mxu0 0.0
    %9400 = vmatprep.mubr.f32.mxu0 0.0
    %v9401 = vand.u32 %v9196, 4294901760
    %9402 = vmatmul.mubr.f32.gmra.mrb[0].mxu0 %v9401
    %v9403 = vpop.f32.mrb[0].mxu0
    %v9404 = vadd.f32 %v9283, %v9403
    %v9405 = vpop.f32.mrb[0].mxu0
    %9406 = vmatprep.mubr.f32.mxu0 0.0
    %v9407 = vand.u32 %v9199, 4294901760
    %9408 = vmatmul.mubr.f32.gmra.mrb[0].mxu0 %v9407
    %v9409 = vpop.f32.mrb[0].mxu0
    %v9410 = vadd.f32 %v9293, %v9409
    %v9411 = vpop.f32.mrb[0].mxu0
    %9412 = vmatprep.mubr.f32.mxu0 0.0
    %v9413 = vand.u32 %v9202, 4294901760
    %9414 = vmatmul.mubr.f32.gmra.mrb[0].mxu0 %v9413
    %v9415 = vpop.f32.mrb[0].mxu0
    %v9416 = vadd.f32 %v9303, %v9415
    %v9417 = vpop.f32.mrb[0].mxu0
    %9418 = vmatprep.mubr.f32.mxu0 0.0
    %v9419 = vand.u32 %v9205, 4294901760
    %9420 = vmatmul.mubr.f32.gmra.mrb[0].mxu0 %v9419
    %v9421 = vpop.f32.mrb[0].mxu0
    %v9422 = vadd.f32 %v9313, %v9421
    %v9423 = vpop.f32.mrb[0].mxu0
    %9424 = vdwg.mxu0
    %9425 = vmatprep.subr.mxu0 0.0
    %v9426 = vand.u32 %v40, 4294901760
    %v9427 = vsub.f32 %v40, %v9426
    %9428 = vmatpush1.msra.mxu0 %v9427
    %9429 = vmatprep.subr.mxu0 0.0
    %v9430 = vand.u32 %v41, 4294901760
    %v9431 = vsub.f32 %v41, %v9430
    %9432 = vmatpush1.msra.mxu0 %v9431
    %9433 = vmatprep.subr.mxu0 0.0
    %v9434 = vand.u32 %v42, 4294901760
    %v9435 = vsub.f32 %v42, %v9434
    %9436 = vmatpush1.msra.mxu0 %v9435
    %9437 = vmatprep.subr.mxu0 0.0
    %v9438 = vand.u32 %v43, 4294901760
    %v9439 = vsub.f32 %v43, %v9438
    %9440 = vmatpush1.msra.mxu0 %v9439
    %9441 = vmatprep.subr.mxu0 0.0
    %9442 = vmatpush1.msra.mxu0 0.0
    %9443 = vmatprep.subr.mxu0 0.0
    %9444 = vmatpush1.msra.mxu0 0.0
    %9445 = vmatprep.subr.mxu0 0.0
    %9446 = vmatpush1.msra.mxu0 0.0
    %9447 = vmatprep.subr.mxu0 0.0
    %9448 = vmatpush1.msra.mxu0 0.0
    %9449 = vmatprep.subr.mxu0 0.0
    %9450 = vmatpush1.msra.mxu0 0.0
    %9451 = vmatprep.subr.mxu0 0.0
    %9452 = vmatpush1.msra.mxu0 0.0
    %9453 = vmatprep.subr.mxu0 0.0
    %9454 = vmatpush1.msra.mxu0 0.0
    %9455 = vmatprep.subr.mxu0 0.0
    %9456 = vmatpush1.msra.mxu0 0.0
    %9457 = vmatprep.subr.mxu0 0.0
    %9458 = vmatpush1.msra.mxu0 0.0
    %9459 = vmatprep.subr.mxu0 0.0
    %9460 = vmatpush1.msra.mxu0 0.0
    %9461 = vmatprep.subr.mxu0 0.0
    %9462 = vmatpush1.msra.mxu0 0.0
    %9463 = vmatprep.subr.mxu0 0.0
    %9464 = vmatpush1.msra.mxu0 0.0
    %9465 = vmatprep.subr.mxu0 0.0
    %9466 = vmatpush1.msra.mxu0 0.0
    %9467 = vmatprep.subr.mxu0 0.0
    %9468 = vmatpush1.msra.mxu0 0.0
    %9469 = vmatprep.subr.mxu0 0.0
    %9470 = vmatpush1.msra.mxu0 0.0
    %9471 = vmatprep.subr.mxu0 0.0
    %9472 = vmatpush1.msra.mxu0 0.0
    %9473 = vmatprep.subr.mxu0 0.0
    %9474 = vmatpush1.msra.mxu0 0.0
    %9475 = vmatprep.subr.mxu0 0.0
    %9476 = vmatpush1.msra.mxu0 0.0
    %9477 = vmatprep.subr.mxu0 0.0
    %9478 = vmatpush1.msra.mxu0 0.0
    %9479 = vmatprep.subr.mxu0 0.0
    %9480 = vmatpush1.msra.mxu0 0.0
    %9481 = vmatprep.subr.mxu0 0.0
    %9482 = vmatpush1.msra.mxu0 0.0
    %9483 = vmatprep.subr.mxu0 0.0
    %9484 = vmatpush1.msra.mxu0 0.0
    %9485 = vmatprep.subr.mxu0 0.0
    %9486 = vmatpush1.msra.mxu0 0.0
    %9487 = vmatprep.subr.mxu0 0.0
    %9488 = vmatpush1.msra.mxu0 0.0
    %9489 = vmatprep.subr.mxu0 0.0
    %9490 = vmatpush1.msra.mxu0 0.0
    %9491 = vmatprep.subr.mxu0 0.0
    %9492 = vmatpush1.msra.mxu0 0.0
    %9493 = vmatprep.subr.mxu0 0.0
    %9494 = vmatpush1.msra.mxu0 0.0
    %9495 = vmatprep.subr.mxu0 0.0
    %9496 = vmatpush1.msra.mxu0 0.0
    %9497 = vmatprep.mubr.f32.mxu0 0.0
    %v9498 = vand.u32 %v9196, 4294901760
    %v9499 = vsub.f32 %v9196, %v9498
    %9500 = vmatmul.mubr.f32.gmra.mrb[0].mxu0 %v9499
    %v9501 = vpop.f32.mrb[0].mxu0
    %v9502 = vadd.f32 %v9404, %v9501
    %v9503 = vpop.f32.mrb[0].mxu0
    %9504 = vmatprep.mubr.f32.mxu0 0.0
    %v9505 = vand.u32 %v9199, 4294901760
    %v9506 = vsub.f32 %v9199, %v9505
    %9507 = vmatmul.mubr.f32.gmra.mrb[0].mxu0 %v9506
    %v9508 = vpop.f32.mrb[0].mxu0
    %v9509 = vadd.f32 %v9410, %v9508
    %v9510 = vpop.f32.mrb[0].mxu0
    %9511 = vmatprep.mubr.f32.mxu0 0.0
    %v9512 = vand.u32 %v9202, 4294901760
    %v9513 = vsub.f32 %v9202, %v9512
    %9514 = vmatmul.mubr.f32.gmra.mrb[0].mxu0 %v9513
    %v9515 = vpop.f32.mrb[0].mxu0
    %v9516 = vadd.f32 %v9416, %v9515
    %v9517 = vpop.f32.mrb[0].mxu0
    %9518 = vmatprep.mubr.f32.mxu0 0.0
    %v9519 = vand.u32 %v9205, 4294901760
    %v9520 = vsub.f32 %v9205, %v9519
    %9521 = vmatmul.mubr.f32.gmra.mrb[0].mxu0 %v9520
    %v9522 = vpop.f32.mrb[0].mxu0
    %v9523 = vadd.f32 %v9422, %v9522
    %v9524 = vpop.f32.mrb[0].mxu0
    %9525 = vdwg.mxu0
    %9526 = vmatprep.subr.mxu0 0.0
    %v9527 = vand.u32 %v40, 4294901760
    %9528 = vmatpush1.msra.mxu0 %v9527
    %9529 = vmatprep.subr.mxu0 0.0
    %v9530 = vand.u32 %v41, 4294901760
    %9531 = vmatpush1.msra.mxu0 %v9530
    %9532 = vmatprep.subr.mxu0 0.0
    %v9533 = vand.u32 %v42, 4294901760
    %9534 = vmatpush1.msra.mxu0 %v9533
    %9535 = vmatprep.subr.mxu0 0.0
    %v9536 = vand.u32 %v43, 4294901760
    %9537 = vmatpush1.msra.mxu0 %v9536
    %9538 = vmatprep.subr.mxu0 0.0
    %9539 = vmatpush1.msra.mxu0 0.0
    %9540 = vmatprep.subr.mxu0 0.0
    %9541 = vmatpush1.msra.mxu0 0.0
    %9542 = vmatprep.subr.mxu0 0.0
    %9543 = vmatpush1.msra.mxu0 0.0
    %9544 = vmatprep.subr.mxu0 0.0
    %9545 = vmatpush1.msra.mxu0 0.0
    %9546 = vmatprep.subr.mxu0 0.0
    %9547 = vmatpush1.msra.mxu0 0.0
    %9548 = vmatprep.subr.mxu0 0.0
    %9549 = vmatpush1.msra.mxu0 0.0
    %9550 = vmatprep.subr.mxu0 0.0
    %9551 = vmatpush1.msra.mxu0 0.0
    %9552 = vmatprep.subr.mxu0 0.0
    %9553 = vmatpush1.msra.mxu0 0.0
    %9554 = vmatprep.subr.mxu0 0.0
    %9555 = vmatpush1.msra.mxu0 0.0
    %9556 = vmatprep.subr.mxu0 0.0
    %9557 = vmatpush1.msra.mxu0 0.0
    %9558 = vmatprep.subr.mxu0 0.0
    %9559 = vmatpush1.msra.mxu0 0.0
    %9560 = vmatprep.subr.mxu0 0.0
    %9561 = vmatpush1.msra.mxu0 0.0
    %9562 = vmatprep.subr.mxu0 0.0
    %9563 = vmatpush1.msra.mxu0 0.0
    %9564 = vmatprep.subr.mxu0 0.0
    %9565 = vmatpush1.msra.mxu0 0.0
    %9566 = vmatprep.subr.mxu0 0.0
    %9567 = vmatpush1.msra.mxu0 0.0
    %9568 = vmatprep.subr.mxu0 0.0
    %9569 = vmatpush1.msra.mxu0 0.0
    %9570 = vmatprep.subr.mxu0 0.0
    %9571 = vmatpush1.msra.mxu0 0.0
    %9572 = vmatprep.subr.mxu0 0.0
    %9573 = vmatpush1.msra.mxu0 0.0
    %9574 = vmatprep.subr.mxu0 0.0
    %9575 = vmatpush1.msra.mxu0 0.0
    %9576 = vmatprep.subr.mxu0 0.0
    %9577 = vmatpush1.msra.mxu0 0.0
    %9578 = vmatprep.subr.mxu0 0.0
    %9579 = vmatpush1.msra.mxu0 0.0
    %9580 = vmatprep.subr.mxu0 0.0
    %9581 = vmatpush1.msra.mxu0 0.0
    %9582 = vmatprep.subr.mxu0 0.0
    %9583 = vmatpush1.msra.mxu0 0.0
    %9584 = vmatprep.subr.mxu0 0.0
    %9585 = vmatpush1.msra.mxu0 0.0
    %9586 = vmatprep.subr.mxu0 0.0
    %9587 = vmatpush1.msra.mxu0 0.0
    %9588 = vmatprep.subr.mxu0 0.0
    %9589 = vmatpush1.msra.mxu0 0.0
    %9590 = vmatprep.subr.mxu0 0.0
    %9591 = vmatpush1.msra.mxu0 0.0
    %9592 = vmatprep.subr.mxu0 0.0
    %9593 = vmatpush1.msra.mxu0 0.0
    %9594 = vmatprep.mubr.f32.mxu0 0.0
    %v9595 = vand.u32 %v9196, 4294901760
    %v9596 = vsub.f32 %v9196, %v9595
    %v9597 = vand.u32 %v9596, 4294901760
    %9598 = vmatmul.mubr.f32.gmra.mrb[0].mxu0 %v9597
    %v9599 = vpop.f32.mrb[0].mxu0
    %v9600 = vadd.f32 %v9502, %v9599
    %v9601 = vpop.f32.mrb[0].mxu0
    %9602 = vmatprep.mubr.f32.mxu0 0.0
    %v9603 = vand.u32 %v9199, 4294901760
    %v9604 = vsub.f32 %v9199, %v9603
    %v9605 = vand.u32 %v9604, 4294901760
    %9606 = vmatmul.mubr.f32.gmra.mrb[0].mxu0 %v9605
    %v9607 = vpop.f32.mrb[0].mxu0
    %v9608 = vadd.f32 %v9509, %v9607
    %v9609 = vpop.f32.mrb[0].mxu0
    %9610 = vmatprep.mubr.f32.mxu0 0.0
    %v9611 = vand.u32 %v9202, 4294901760
    %v9612 = vsub.f32 %v9202, %v9611
    %v9613 = vand.u32 %v9612, 4294901760
    %9614 = vmatmul.mubr.f32.gmra.mrb[0].mxu0 %v9613
    %v9615 = vpop.f32.mrb[0].mxu0
    %v9616 = vadd.f32 %v9516, %v9615
    %v9617 = vpop.f32.mrb[0].mxu0
    %9618 = vmatprep.mubr.f32.mxu0 0.0
    %v9619 = vand.u32 %v9205, 4294901760
    %v9620 = vsub.f32 %v9205, %v9619
    %v9621 = vand.u32 %v9620, 4294901760
    %9622 = vmatmul.mubr.f32.gmra.mrb[0].mxu0 %v9621
    %v9623 = vpop.f32.mrb[0].mxu0
    %v9624 = vadd.f32 %v9523, %v9623
    %v9625 = vpop.f32.mrb[0].mxu0
    %9626 = vdwg.mxu0
    %9627 = vmatprep.subr.mxu0 0.0
    %v9628 = vand.u32 %v40, 4294901760
    %v9629 = vsub.f32 %v40, %v9628
    %v9630 = vand.u32 %v9629, 4294901760
    %9631 = vmatpush1.msra.mxu0 %v9630
    %9632 = vmatprep.subr.mxu0 0.0
    %v9633 = vand.u32 %v41, 4294901760
    %v9634 = vsub.f32 %v41, %v9633
    %v9635 = vand.u32 %v9634, 4294901760
    %9636 = vmatpush1.msra.mxu0 %v9635
    %9637 = vmatprep.subr.mxu0 0.0
    %v9638 = vand.u32 %v42, 4294901760
    %v9639 = vsub.f32 %v42, %v9638
    %v9640 = vand.u32 %v9639, 4294901760
    %9641 = vmatpush1.msra.mxu0 %v9640
    %9642 = vmatprep.subr.mxu0 0.0
    %v9643 = vand.u32 %v43, 4294901760
    %v9644 = vsub.f32 %v43, %v9643
    %v9645 = vand.u32 %v9644, 4294901760
    %9646 = vmatpush1.msra.mxu0 %v9645
    %9647 = vmatprep.subr.mxu0 0.0
    %9648 = vmatpush1.msra.mxu0 0.0
    %9649 = vmatprep.subr.mxu0 0.0
    %9650 = vmatpush1.msra.mxu0 0.0
    %9651 = vmatprep.subr.mxu0 0.0
    %9652 = vmatpush1.msra.mxu0 0.0
    %9653 = vmatprep.subr.mxu0 0.0
    %9654 = vmatpush1.msra.mxu0 0.0
    %9655 = vmatprep.subr.mxu0 0.0
    %9656 = vmatpush1.msra.mxu0 0.0
    %9657 = vmatprep.subr.mxu0 0.0
    %9658 = vmatpush1.msra.mxu0 0.0
    %9659 = vmatprep.subr.mxu0 0.0
    %9660 = vmatpush1.msra.mxu0 0.0
    %9661 = vmatprep.subr.mxu0 0.0
    %9662 = vmatpush1.msra.mxu0 0.0
    %9663 = vmatprep.subr.mxu0 0.0
    %9664 = vmatpush1.msra.mxu0 0.0
    %9665 = vmatprep.subr.mxu0 0.0
    %9666 = vmatpush1.msra.mxu0 0.0
    %9667 = vmatprep.subr.mxu0 0.0
    %9668 = vmatpush1.msra.mxu0 0.0
    %9669 = vmatprep.subr.mxu0 0.0
    %9670 = vmatpush1.msra.mxu0 0.0
    %9671 = vmatprep.subr.mxu0 0.0
    %9672 = vmatpush1.msra.mxu0 0.0
    %9673 = vmatprep.subr.mxu0 0.0
    %9674 = vmatpush1.msra.mxu0 0.0
    %9675 = vmatprep.subr.mxu0 0.0
    %9676 = vmatpush1.msra.mxu0 0.0
    %9677 = vmatprep.subr.mxu0 0.0
    %9678 = vmatpush1.msra.mxu0 0.0
    %9679 = vmatprep.subr.mxu0 0.0
    %9680 = vmatpush1.msra.mxu0 0.0
    %9681 = vmatprep.subr.mxu0 0.0
    %9682 = vmatpush1.msra.mxu0 0.0
    %9683 = vmatprep.subr.mxu0 0.0
    %9684 = vmatpush1.msra.mxu0 0.0
    %9685 = vmatprep.subr.mxu0 0.0
    %9686 = vmatpush1.msra.mxu0 0.0
    %9687 = vmatprep.subr.mxu0 0.0
    %9688 = vmatpush1.msra.mxu0 0.0
    %9689 = vmatprep.subr.mxu0 0.0
    %9690 = vmatpush1.msra.mxu0 0.0
    %9691 = vmatprep.subr.mxu0 0.0
    %9692 = vmatpush1.msra.mxu0 0.0
    %9693 = vmatprep.subr.mxu0 0.0
    %9694 = vmatpush1.msra.mxu0 0.0
    %9695 = vmatprep.subr.mxu0 0.0
    %9696 = vmatpush1.msra.mxu0 0.0
    %9697 = vmatprep.subr.mxu0 0.0
    %9698 = vmatpush1.msra.mxu0 0.0
    %9699 = vmatprep.subr.mxu0 0.0
    %9700 = vmatpush1.msra.mxu0 0.0
    %9701 = vmatprep.subr.mxu0 0.0
    %9702 = vmatpush1.msra.mxu0 0.0
    %9703 = vmatprep.mubr.f32.mxu0 0.0
    %v9704 = vand.u32 %v9196, 4294901760
    %9705 = vmatmul.mubr.f32.gmra.mrb[0].mxu0 %v9704
    %v9706 = vpop.f32.mrb[0].mxu0
    %v9707 = vadd.f32 %v9600, %v9706
    %v9708 = vpop.f32.mrb[0].mxu0
    %9709 = vmatprep.mubr.f32.mxu0 0.0
    %v9710 = vand.u32 %v9199, 4294901760
    %9711 = vmatmul.mubr.f32.gmra.mrb[0].mxu0 %v9710
    %v9712 = vpop.f32.mrb[0].mxu0
    %v9713 = vadd.f32 %v9608, %v9712
    %v9714 = vpop.f32.mrb[0].mxu0
    %9715 = vmatprep.mubr.f32.mxu0 0.0
    %v9716 = vand.u32 %v9202, 4294901760
    %9717 = vmatmul.mubr.f32.gmra.mrb[0].mxu0 %v9716
    %v9718 = vpop.f32.mrb[0].mxu0
    %v9719 = vadd.f32 %v9616, %v9718
    %v9720 = vpop.f32.mrb[0].mxu0
    %9721 = vmatprep.mubr.f32.mxu0 0.0
    %v9722 = vand.u32 %v9205, 4294901760
    %9723 = vmatmul.mubr.f32.gmra.mrb[0].mxu0 %v9722
    %v9724 = vpop.f32.mrb[0].mxu0
    %v9725 = vadd.f32 %v9624, %v9724
    %v9726 = vpop.f32.mrb[0].mxu0
    %9727 = vdwg.mxu0
    %9728 = vmatprep.subr.mxu0 0.0
    %v9729 = vand.u32 %v40, 4294901760
    %9730 = vmatpush1.msra.mxu0 %v9729
    %9731 = vmatprep.subr.mxu0 0.0
    %v9732 = vand.u32 %v41, 4294901760
    %9733 = vmatpush1.msra.mxu0 %v9732
    %9734 = vmatprep.subr.mxu0 0.0
    %v9735 = vand.u32 %v42, 4294901760
    %9736 = vmatpush1.msra.mxu0 %v9735
    %9737 = vmatprep.subr.mxu0 0.0
    %v9738 = vand.u32 %v43, 4294901760
    %9739 = vmatpush1.msra.mxu0 %v9738
    %9740 = vmatprep.subr.mxu0 0.0
    %9741 = vmatpush1.msra.mxu0 0.0
    %9742 = vmatprep.subr.mxu0 0.0
    %9743 = vmatpush1.msra.mxu0 0.0
    %9744 = vmatprep.subr.mxu0 0.0
    %9745 = vmatpush1.msra.mxu0 0.0
    %9746 = vmatprep.subr.mxu0 0.0
    %9747 = vmatpush1.msra.mxu0 0.0
    %9748 = vmatprep.subr.mxu0 0.0
    %9749 = vmatpush1.msra.mxu0 0.0
    %9750 = vmatprep.subr.mxu0 0.0
    %9751 = vmatpush1.msra.mxu0 0.0
    %9752 = vmatprep.subr.mxu0 0.0
    %9753 = vmatpush1.msra.mxu0 0.0
    %9754 = vmatprep.subr.mxu0 0.0
    %9755 = vmatpush1.msra.mxu0 0.0
    %9756 = vmatprep.subr.mxu0 0.0
    %9757 = vmatpush1.msra.mxu0 0.0
    %9758 = vmatprep.subr.mxu0 0.0
    %9759 = vmatpush1.msra.mxu0 0.0
    %9760 = vmatprep.subr.mxu0 0.0
    %9761 = vmatpush1.msra.mxu0 0.0
    %9762 = vmatprep.subr.mxu0 0.0
    %9763 = vmatpush1.msra.mxu0 0.0
    %9764 = vmatprep.subr.mxu0 0.0
    %9765 = vmatpush1.msra.mxu0 0.0
    %9766 = vmatprep.subr.mxu0 0.0
    %9767 = vmatpush1.msra.mxu0 0.0
    %9768 = vmatprep.subr.mxu0 0.0
    %9769 = vmatpush1.msra.mxu0 0.0
    %9770 = vmatprep.subr.mxu0 0.0
    %9771 = vmatpush1.msra.mxu0 0.0
    %9772 = vmatprep.subr.mxu0 0.0
    %9773 = vmatpush1.msra.mxu0 0.0
    %9774 = vmatprep.subr.mxu0 0.0
    %9775 = vmatpush1.msra.mxu0 0.0
    %9776 = vmatprep.subr.mxu0 0.0
    %9777 = vmatpush1.msra.mxu0 0.0
    %9778 = vmatprep.subr.mxu0 0.0
    %9779 = vmatpush1.msra.mxu0 0.0
    %9780 = vmatprep.subr.mxu0 0.0
    %9781 = vmatpush1.msra.mxu0 0.0
    %9782 = vmatprep.subr.mxu0 0.0
    %9783 = vmatpush1.msra.mxu0 0.0
    %9784 = vmatprep.subr.mxu0 0.0
    %9785 = vmatpush1.msra.mxu0 0.0
    %9786 = vmatprep.subr.mxu0 0.0
    %9787 = vmatpush1.msra.mxu0 0.0
    %9788 = vmatprep.subr.mxu0 0.0
    %9789 = vmatpush1.msra.mxu0 0.0
    %9790 = vmatprep.subr.mxu0 0.0
    %9791 = vmatpush1.msra.mxu0 0.0
    %9792 = vmatprep.subr.mxu0 0.0
    %9793 = vmatpush1.msra.mxu0 0.0
    %9794 = vmatprep.subr.mxu0 0.0
    %9795 = vmatpush1.msra.mxu0 0.0
    %9796 = vmatprep.mubr.f32.mxu0 0.0
    %v9797 = vand.u32 %v9196, 4294901760
    %9798 = vmatmul.mubr.f32.gmra.mrb[0].mxu0 %v9797
    %v9799 = vpop.f32.mrb[0].mxu0
    %v9800 = vadd.f32 %v9707, %v9799
    %v9801 = vpop.f32.mrb[0].mxu0
    %9802 = vmatprep.mubr.f32.mxu0 0.0
    %v9803 = vand.u32 %v9199, 4294901760
    %9804 = vmatmul.mubr.f32.gmra.mrb[0].mxu0 %v9803
    %v9805 = vpop.f32.mrb[0].mxu0
    %v9806 = vadd.f32 %v9713, %v9805
    %v9807 = vpop.f32.mrb[0].mxu0
    %9808 = vmatprep.mubr.f32.mxu0 0.0
    %v9809 = vand.u32 %v9202, 4294901760
    %9810 = vmatmul.mubr.f32.gmra.mrb[0].mxu0 %v9809
    %v9811 = vpop.f32.mrb[0].mxu0
    %v9812 = vadd.f32 %v9719, %v9811
    %v9813 = vpop.f32.mrb[0].mxu0
    %9814 = vmatprep.mubr.f32.mxu0 0.0
    %v9815 = vand.u32 %v9205, 4294901760
    %9816 = vmatmul.mubr.f32.gmra.mrb[0].mxu0 %v9815
    %v9817 = vpop.f32.mrb[0].mxu0
    %v9818 = vadd.f32 %v9725, %v9817
    %v9819 = vpop.f32.mrb[0].mxu0
    %9820 = vdwg.mxu0
    %v9821 = vadd.f32 %v32, %v9800
    %v9822 = vadd.f32 %v33, %v9806
    %v9823 = vadd.f32 %v34, %v9812
    %v9824 = vadd.f32 %v35, %v9818
    %v9825 = vlaneseq
    %v9826 = vshrl.u32 %v9825, 7
    %v9827 = vsub.s32 1, %v9826
    %v9828 = vrot.slane %v56, %v9827
    %v9829 = vadd.f32 %v9821, %v9828
    %v9830 = vadd.f32 %v9822, %v9828
    %v9831 = vadd.f32 %v9823, %v9828
    %v9832 = vadd.f32 %v9824, %v9828
    %v9833 = vsel %vm61, %v9829, 0.0
    %v9834 = vsel %vm61, %v9830, 0.0
    %v9835 = vadd.f32 %v9833, %v9834
    %v9836 = vsel %vm61, %v9831, 0.0
    %v9837 = vadd.f32 %v9835, %v9836
    %v9838 = vsel %vm61, %v9832, 0.0
    %v9839 = vadd.f32 %v9837, %v9838
    %v9840 = vrot.slane %v9839, 4
    %v9841 = vadd.f32 %v9839, %v9840
    %v9842 = vrot.slane %v9841, 2
    %v9843 = vadd.f32 %v9841, %v9842
    %v9844 = vrot.slane %v9843, 1
    %v9845 = vadd.f32 %v9843, %v9844
    %v9846 = vmul.f32 %v9845, 0.03125
    %v9847 = vsub.f32 %v9829, %v9846
    %v9848 = vsub.f32 %v9830, %v9846
    %v9849 = vsub.f32 %v9831, %v9846
    %v9850 = vsub.f32 %v9832, %v9846
    %v9851 = vmul.f32 %v9847, %v9847
    %v9852 = vmul.f32 %v9848, %v9848
    %v9853 = vmul.f32 %v9849, %v9849
    %v9854 = vmul.f32 %v9850, %v9850
    %v9855 = vsel %vm61, %v9851, 0.0
    %v9856 = vsel %vm61, %v9852, 0.0
    %v9857 = vadd.f32 %v9855, %v9856
    %v9858 = vsel %vm61, %v9853, 0.0
    %v9859 = vadd.f32 %v9857, %v9858
    %v9860 = vsel %vm61, %v9854, 0.0
    %v9861 = vadd.f32 %v9859, %v9860
    %v9862 = vrot.slane %v9861, 4
    %v9863 = vadd.f32 %v9861, %v9862
    %v9864 = vrot.slane %v9863, 2
    %v9865 = vadd.f32 %v9863, %v9864
    %v9866 = vrot.slane %v9865, 1
    %v9867 = vadd.f32 %v9865, %v9866
    %v9868 = vmul.f32 %v9867, 0.03125
    %v9869 = vadd.f32 %v9868, 1e-05
    %v9870 = vrsqrt.pop %v9869
    %v9871 = vmul.f32 %v9870, %v56
    %v9872 = vlaneseq
    %v9873 = vshrl.u32 %v9872, 7
    %v9874 = vsub.s32 4, %v9873
    %v9875 = vrot.slane %v9871, %v9874
    %v9876 = vmul.f32 %v9847, %v9875
    %v9877 = vmul.f32 %v9848, %v9875
    %v9878 = vmul.f32 %v9849, %v9875
    %v9879 = vmul.f32 %v9850, %v9875
    %v9880 = vlaneseq
    %v9881 = vshrl.u32 %v9880, 7
    %v9882 = vsub.s32 5, %v9881
    %v9883 = vrot.slane %v56, %v9882
    %v9884 = vadd.f32 %v9876, %v9883
    %v9885 = vadd.f32 %v9877, %v9883
    %v9886 = vadd.f32 %v9878, %v9883
    %v9887 = vadd.f32 %v9879, %v9883
    %v9888 = vlaneseq
    %v9889 = vshrl.u32 %v9888, 7
    %v9890 = vsub.s32 2, %v9889
    %v9891 = vrot.slane %v56, %v9890
    %v9893 = vsel %vm61, %v9884, 0
    %v9896 = vsel %vm61, %v9885, 0
    %v9899 = vsel %vm61, %v9886, 0
    %v9902 = vsel %vm61, %v9887, 0
    %9904 = vmatprep.subr.mxu0 0.0
    %v9905 = vand.u32 %v44, 4294901760
    %9906 = vmatpush1.msra.mxu0 %v9905
    %9907 = vmatprep.subr.mxu0 0.0
    %v9908 = vand.u32 %v45, 4294901760
    %9909 = vmatpush1.msra.mxu0 %v9908
    %9910 = vmatprep.subr.mxu0 0.0
    %v9911 = vand.u32 %v46, 4294901760
    %9912 = vmatpush1.msra.mxu0 %v9911
    %9913 = vmatprep.subr.mxu0 0.0
    %v9914 = vand.u32 %v47, 4294901760
    %9915 = vmatpush1.msra.mxu0 %v9914
    %9916 = vmatprep.subr.mxu0 0.0
    %9917 = vmatpush1.msra.mxu0 0.0
    %9918 = vmatprep.subr.mxu0 0.0
    %9919 = vmatpush1.msra.mxu0 0.0
    %9920 = vmatprep.subr.mxu0 0.0
    %9921 = vmatpush1.msra.mxu0 0.0
    %9922 = vmatprep.subr.mxu0 0.0
    %9923 = vmatpush1.msra.mxu0 0.0
    %9924 = vmatprep.subr.mxu0 0.0
    %9925 = vmatpush1.msra.mxu0 0.0
    %9926 = vmatprep.subr.mxu0 0.0
    %9927 = vmatpush1.msra.mxu0 0.0
    %9928 = vmatprep.subr.mxu0 0.0
    %9929 = vmatpush1.msra.mxu0 0.0
    %9930 = vmatprep.subr.mxu0 0.0
    %9931 = vmatpush1.msra.mxu0 0.0
    %9932 = vmatprep.subr.mxu0 0.0
    %9933 = vmatpush1.msra.mxu0 0.0
    %9934 = vmatprep.subr.mxu0 0.0
    %9935 = vmatpush1.msra.mxu0 0.0
    %9936 = vmatprep.subr.mxu0 0.0
    %9937 = vmatpush1.msra.mxu0 0.0
    %9938 = vmatprep.subr.mxu0 0.0
    %9939 = vmatpush1.msra.mxu0 0.0
    %9940 = vmatprep.subr.mxu0 0.0
    %9941 = vmatpush1.msra.mxu0 0.0
    %9942 = vmatprep.subr.mxu0 0.0
    %9943 = vmatpush1.msra.mxu0 0.0
    %9944 = vmatprep.subr.mxu0 0.0
    %9945 = vmatpush1.msra.mxu0 0.0
    %9946 = vmatprep.subr.mxu0 0.0
    %9947 = vmatpush1.msra.mxu0 0.0
    %9948 = vmatprep.subr.mxu0 0.0
    %9949 = vmatpush1.msra.mxu0 0.0
    %9950 = vmatprep.subr.mxu0 0.0
    %9951 = vmatpush1.msra.mxu0 0.0
    %9952 = vmatprep.subr.mxu0 0.0
    %9953 = vmatpush1.msra.mxu0 0.0
    %9954 = vmatprep.subr.mxu0 0.0
    %9955 = vmatpush1.msra.mxu0 0.0
    %9956 = vmatprep.subr.mxu0 0.0
    %9957 = vmatpush1.msra.mxu0 0.0
    %9958 = vmatprep.subr.mxu0 0.0
    %9959 = vmatpush1.msra.mxu0 0.0
    %9960 = vmatprep.subr.mxu0 0.0
    %9961 = vmatpush1.msra.mxu0 0.0
    %9962 = vmatprep.subr.mxu0 0.0
    %9963 = vmatpush1.msra.mxu0 0.0
    %9964 = vmatprep.subr.mxu0 0.0
    %9965 = vmatpush1.msra.mxu0 0.0
    %9966 = vmatprep.subr.mxu0 0.0
    %9967 = vmatpush1.msra.mxu0 0.0
    %9968 = vmatprep.subr.mxu0 0.0
    %9969 = vmatpush1.msra.mxu0 0.0
    %9970 = vmatprep.subr.mxu0 0.0
    %9971 = vmatpush1.msra.mxu0 0.0
    %9972 = vmatprep.mubr.f32.mxu0 0.0
    %v9973 = vand.u32 %v9893, 4294901760
    %v9974 = vsub.f32 %v9893, %v9973
    %v9975 = vand.u32 %v9974, 4294901760
    %v9976 = vsub.f32 %v9974, %v9975
    %v9977 = vand.u32 %v9976, 4294901760
    %9978 = vmatmul.mubr.f32.gmra.mrb[0].mxu0 %v9977
    %v9979 = vpop.f32.mrb[0].mxu0
    %v9980 = vadd.f32 %v9891, %v9979
    %v9981 = vpop.f32.mrb[0].mxu0
    %9982 = vmatprep.mubr.f32.mxu0 0.0
    %v9983 = vand.u32 %v9896, 4294901760
    %v9984 = vsub.f32 %v9896, %v9983
    %v9985 = vand.u32 %v9984, 4294901760
    %v9986 = vsub.f32 %v9984, %v9985
    %v9987 = vand.u32 %v9986, 4294901760
    %9988 = vmatmul.mubr.f32.gmra.mrb[0].mxu0 %v9987
    %v9989 = vpop.f32.mrb[0].mxu0
    %v9990 = vadd.f32 %v9891, %v9989
    %v9991 = vpop.f32.mrb[0].mxu0
    %9992 = vmatprep.mubr.f32.mxu0 0.0
    %v9993 = vand.u32 %v9899, 4294901760
    %v9994 = vsub.f32 %v9899, %v9993
    %v9995 = vand.u32 %v9994, 4294901760
    %v9996 = vsub.f32 %v9994, %v9995
    %v9997 = vand.u32 %v9996, 4294901760
    %9998 = vmatmul.mubr.f32.gmra.mrb[0].mxu0 %v9997
    %v9999 = vpop.f32.mrb[0].mxu0
    %v10000 = vadd.f32 %v9891, %v9999
    %v10001 = vpop.f32.mrb[0].mxu0
    %10002 = vmatprep.mubr.f32.mxu0 0.0
    %v10003 = vand.u32 %v9902, 4294901760
    %v10004 = vsub.f32 %v9902, %v10003
    %v10005 = vand.u32 %v10004, 4294901760
    %v10006 = vsub.f32 %v10004, %v10005
    %v10007 = vand.u32 %v10006, 4294901760
    %10008 = vmatmul.mubr.f32.gmra.mrb[0].mxu0 %v10007
    %v10009 = vpop.f32.mrb[0].mxu0
    %v10010 = vadd.f32 %v9891, %v10009
    %v10011 = vpop.f32.mrb[0].mxu0
    %10012 = vdwg.mxu0
    %10013 = vmatprep.subr.mxu0 0.0
    %v10014 = vand.u32 %v44, 4294901760
    %v10015 = vsub.f32 %v44, %v10014
    %v10016 = vand.u32 %v10015, 4294901760
    %v10017 = vsub.f32 %v10015, %v10016
    %v10018 = vand.u32 %v10017, 4294901760
    %10019 = vmatpush1.msra.mxu0 %v10018
    %10020 = vmatprep.subr.mxu0 0.0
    %v10021 = vand.u32 %v45, 4294901760
    %v10022 = vsub.f32 %v45, %v10021
    %v10023 = vand.u32 %v10022, 4294901760
    %v10024 = vsub.f32 %v10022, %v10023
    %v10025 = vand.u32 %v10024, 4294901760
    %10026 = vmatpush1.msra.mxu0 %v10025
    %10027 = vmatprep.subr.mxu0 0.0
    %v10028 = vand.u32 %v46, 4294901760
    %v10029 = vsub.f32 %v46, %v10028
    %v10030 = vand.u32 %v10029, 4294901760
    %v10031 = vsub.f32 %v10029, %v10030
    %v10032 = vand.u32 %v10031, 4294901760
    %10033 = vmatpush1.msra.mxu0 %v10032
    %10034 = vmatprep.subr.mxu0 0.0
    %v10035 = vand.u32 %v47, 4294901760
    %v10036 = vsub.f32 %v47, %v10035
    %v10037 = vand.u32 %v10036, 4294901760
    %v10038 = vsub.f32 %v10036, %v10037
    %v10039 = vand.u32 %v10038, 4294901760
    %10040 = vmatpush1.msra.mxu0 %v10039
    %10041 = vmatprep.subr.mxu0 0.0
    %10042 = vmatpush1.msra.mxu0 0.0
    %10043 = vmatprep.subr.mxu0 0.0
    %10044 = vmatpush1.msra.mxu0 0.0
    %10045 = vmatprep.subr.mxu0 0.0
    %10046 = vmatpush1.msra.mxu0 0.0
    %10047 = vmatprep.subr.mxu0 0.0
    %10048 = vmatpush1.msra.mxu0 0.0
    %10049 = vmatprep.subr.mxu0 0.0
    %10050 = vmatpush1.msra.mxu0 0.0
    %10051 = vmatprep.subr.mxu0 0.0
    %10052 = vmatpush1.msra.mxu0 0.0
    %10053 = vmatprep.subr.mxu0 0.0
    %10054 = vmatpush1.msra.mxu0 0.0
    %10055 = vmatprep.subr.mxu0 0.0
    %10056 = vmatpush1.msra.mxu0 0.0
    %10057 = vmatprep.subr.mxu0 0.0
    %10058 = vmatpush1.msra.mxu0 0.0
    %10059 = vmatprep.subr.mxu0 0.0
    %10060 = vmatpush1.msra.mxu0 0.0
    %10061 = vmatprep.subr.mxu0 0.0
    %10062 = vmatpush1.msra.mxu0 0.0
    %10063 = vmatprep.subr.mxu0 0.0
    %10064 = vmatpush1.msra.mxu0 0.0
    %10065 = vmatprep.subr.mxu0 0.0
    %10066 = vmatpush1.msra.mxu0 0.0
    %10067 = vmatprep.subr.mxu0 0.0
    %10068 = vmatpush1.msra.mxu0 0.0
    %10069 = vmatprep.subr.mxu0 0.0
    %10070 = vmatpush1.msra.mxu0 0.0
    %10071 = vmatprep.subr.mxu0 0.0
    %10072 = vmatpush1.msra.mxu0 0.0
    %10073 = vmatprep.subr.mxu0 0.0
    %10074 = vmatpush1.msra.mxu0 0.0
    %10075 = vmatprep.subr.mxu0 0.0
    %10076 = vmatpush1.msra.mxu0 0.0
    %10077 = vmatprep.subr.mxu0 0.0
    %10078 = vmatpush1.msra.mxu0 0.0
    %10079 = vmatprep.subr.mxu0 0.0
    %10080 = vmatpush1.msra.mxu0 0.0
    %10081 = vmatprep.subr.mxu0 0.0
    %10082 = vmatpush1.msra.mxu0 0.0
    %10083 = vmatprep.subr.mxu0 0.0
    %10084 = vmatpush1.msra.mxu0 0.0
    %10085 = vmatprep.subr.mxu0 0.0
    %10086 = vmatpush1.msra.mxu0 0.0
    %10087 = vmatprep.subr.mxu0 0.0
    %10088 = vmatpush1.msra.mxu0 0.0
    %10089 = vmatprep.subr.mxu0 0.0
    %10090 = vmatpush1.msra.mxu0 0.0
    %10091 = vmatprep.subr.mxu0 0.0
    %10092 = vmatpush1.msra.mxu0 0.0
    %10093 = vmatprep.subr.mxu0 0.0
    %10094 = vmatpush1.msra.mxu0 0.0
    %10095 = vmatprep.subr.mxu0 0.0
    %10096 = vmatpush1.msra.mxu0 0.0
    %10097 = vmatprep.mubr.f32.mxu0 0.0
    %v10098 = vand.u32 %v9893, 4294901760
    %10099 = vmatmul.mubr.f32.gmra.mrb[0].mxu0 %v10098
    %v10100 = vpop.f32.mrb[0].mxu0
    %v10101 = vadd.f32 %v9980, %v10100
    %v10102 = vpop.f32.mrb[0].mxu0
    %10103 = vmatprep.mubr.f32.mxu0 0.0
    %v10104 = vand.u32 %v9896, 4294901760
    %10105 = vmatmul.mubr.f32.gmra.mrb[0].mxu0 %v10104
    %v10106 = vpop.f32.mrb[0].mxu0
    %v10107 = vadd.f32 %v9990, %v10106
    %v10108 = vpop.f32.mrb[0].mxu0
    %10109 = vmatprep.mubr.f32.mxu0 0.0
    %v10110 = vand.u32 %v9899, 4294901760
    %10111 = vmatmul.mubr.f32.gmra.mrb[0].mxu0 %v10110
    %v10112 = vpop.f32.mrb[0].mxu0
    %v10113 = vadd.f32 %v10000, %v10112
    %v10114 = vpop.f32.mrb[0].mxu0
    %10115 = vmatprep.mubr.f32.mxu0 0.0
    %v10116 = vand.u32 %v9902, 4294901760
    %10117 = vmatmul.mubr.f32.gmra.mrb[0].mxu0 %v10116
    %v10118 = vpop.f32.mrb[0].mxu0
    %v10119 = vadd.f32 %v10010, %v10118
    %v10120 = vpop.f32.mrb[0].mxu0
    %10121 = vdwg.mxu0
    %10122 = vmatprep.subr.mxu0 0.0
    %v10123 = vand.u32 %v44, 4294901760
    %v10124 = vsub.f32 %v44, %v10123
    %10125 = vmatpush1.msra.mxu0 %v10124
    %10126 = vmatprep.subr.mxu0 0.0
    %v10127 = vand.u32 %v45, 4294901760
    %v10128 = vsub.f32 %v45, %v10127
    %10129 = vmatpush1.msra.mxu0 %v10128
    %10130 = vmatprep.subr.mxu0 0.0
    %v10131 = vand.u32 %v46, 4294901760
    %v10132 = vsub.f32 %v46, %v10131
    %10133 = vmatpush1.msra.mxu0 %v10132
    %10134 = vmatprep.subr.mxu0 0.0
    %v10135 = vand.u32 %v47, 4294901760
    %v10136 = vsub.f32 %v47, %v10135
    %10137 = vmatpush1.msra.mxu0 %v10136
    %10138 = vmatprep.subr.mxu0 0.0
    %10139 = vmatpush1.msra.mxu0 0.0
    %10140 = vmatprep.subr.mxu0 0.0
    %10141 = vmatpush1.msra.mxu0 0.0
    %10142 = vmatprep.subr.mxu0 0.0
    %10143 = vmatpush1.msra.mxu0 0.0
    %10144 = vmatprep.subr.mxu0 0.0
    %10145 = vmatpush1.msra.mxu0 0.0
    %10146 = vmatprep.subr.mxu0 0.0
    %10147 = vmatpush1.msra.mxu0 0.0
    %10148 = vmatprep.subr.mxu0 0.0
    %10149 = vmatpush1.msra.mxu0 0.0
    %10150 = vmatprep.subr.mxu0 0.0
    %10151 = vmatpush1.msra.mxu0 0.0
    %10152 = vmatprep.subr.mxu0 0.0
    %10153 = vmatpush1.msra.mxu0 0.0
    %10154 = vmatprep.subr.mxu0 0.0
    %10155 = vmatpush1.msra.mxu0 0.0
    %10156 = vmatprep.subr.mxu0 0.0
    %10157 = vmatpush1.msra.mxu0 0.0
    %10158 = vmatprep.subr.mxu0 0.0
    %10159 = vmatpush1.msra.mxu0 0.0
    %10160 = vmatprep.subr.mxu0 0.0
    %10161 = vmatpush1.msra.mxu0 0.0
    %10162 = vmatprep.subr.mxu0 0.0
    %10163 = vmatpush1.msra.mxu0 0.0
    %10164 = vmatprep.subr.mxu0 0.0
    %10165 = vmatpush1.msra.mxu0 0.0
    %10166 = vmatprep.subr.mxu0 0.0
    %10167 = vmatpush1.msra.mxu0 0.0
    %10168 = vmatprep.subr.mxu0 0.0
    %10169 = vmatpush1.msra.mxu0 0.0
    %10170 = vmatprep.subr.mxu0 0.0
    %10171 = vmatpush1.msra.mxu0 0.0
    %10172 = vmatprep.subr.mxu0 0.0
    %10173 = vmatpush1.msra.mxu0 0.0
    %10174 = vmatprep.subr.mxu0 0.0
    %10175 = vmatpush1.msra.mxu0 0.0
    %10176 = vmatprep.subr.mxu0 0.0
    %10177 = vmatpush1.msra.mxu0 0.0
    %10178 = vmatprep.subr.mxu0 0.0
    %10179 = vmatpush1.msra.mxu0 0.0
    %10180 = vmatprep.subr.mxu0 0.0
    %10181 = vmatpush1.msra.mxu0 0.0
    %10182 = vmatprep.subr.mxu0 0.0
    %10183 = vmatpush1.msra.mxu0 0.0
    %10184 = vmatprep.subr.mxu0 0.0
    %10185 = vmatpush1.msra.mxu0 0.0
    %10186 = vmatprep.subr.mxu0 0.0
    %10187 = vmatpush1.msra.mxu0 0.0
    %10188 = vmatprep.subr.mxu0 0.0
    %10189 = vmatpush1.msra.mxu0 0.0
    %10190 = vmatprep.subr.mxu0 0.0
    %10191 = vmatpush1.msra.mxu0 0.0
    %10192 = vmatprep.subr.mxu0 0.0
    %10193 = vmatpush1.msra.mxu0 0.0
    %10194 = vmatprep.mubr.f32.mxu0 0.0
    %v10195 = vand.u32 %v9893, 4294901760
    %v10196 = vsub.f32 %v9893, %v10195
    %10197 = vmatmul.mubr.f32.gmra.mrb[0].mxu0 %v10196
    %v10198 = vpop.f32.mrb[0].mxu0
    %v10199 = vadd.f32 %v10101, %v10198
    %v10200 = vpop.f32.mrb[0].mxu0
    %10201 = vmatprep.mubr.f32.mxu0 0.0
    %v10202 = vand.u32 %v9896, 4294901760
    %v10203 = vsub.f32 %v9896, %v10202
    %10204 = vmatmul.mubr.f32.gmra.mrb[0].mxu0 %v10203
    %v10205 = vpop.f32.mrb[0].mxu0
    %v10206 = vadd.f32 %v10107, %v10205
    %v10207 = vpop.f32.mrb[0].mxu0
    %10208 = vmatprep.mubr.f32.mxu0 0.0
    %v10209 = vand.u32 %v9899, 4294901760
    %v10210 = vsub.f32 %v9899, %v10209
    %10211 = vmatmul.mubr.f32.gmra.mrb[0].mxu0 %v10210
    %v10212 = vpop.f32.mrb[0].mxu0
    %v10213 = vadd.f32 %v10113, %v10212
    %v10214 = vpop.f32.mrb[0].mxu0
    %10215 = vmatprep.mubr.f32.mxu0 0.0
    %v10216 = vand.u32 %v9902, 4294901760
    %v10217 = vsub.f32 %v9902, %v10216
    %10218 = vmatmul.mubr.f32.gmra.mrb[0].mxu0 %v10217
    %v10219 = vpop.f32.mrb[0].mxu0
    %v10220 = vadd.f32 %v10119, %v10219
    %v10221 = vpop.f32.mrb[0].mxu0
    %10222 = vdwg.mxu0
    %10223 = vmatprep.subr.mxu0 0.0
    %v10224 = vand.u32 %v44, 4294901760
    %10225 = vmatpush1.msra.mxu0 %v10224
    %10226 = vmatprep.subr.mxu0 0.0
    %v10227 = vand.u32 %v45, 4294901760
    %10228 = vmatpush1.msra.mxu0 %v10227
    %10229 = vmatprep.subr.mxu0 0.0
    %v10230 = vand.u32 %v46, 4294901760
    %10231 = vmatpush1.msra.mxu0 %v10230
    %10232 = vmatprep.subr.mxu0 0.0
    %v10233 = vand.u32 %v47, 4294901760
    %10234 = vmatpush1.msra.mxu0 %v10233
    %10235 = vmatprep.subr.mxu0 0.0
    %10236 = vmatpush1.msra.mxu0 0.0
    %10237 = vmatprep.subr.mxu0 0.0
    %10238 = vmatpush1.msra.mxu0 0.0
    %10239 = vmatprep.subr.mxu0 0.0
    %10240 = vmatpush1.msra.mxu0 0.0
    %10241 = vmatprep.subr.mxu0 0.0
    %10242 = vmatpush1.msra.mxu0 0.0
    %10243 = vmatprep.subr.mxu0 0.0
    %10244 = vmatpush1.msra.mxu0 0.0
    %10245 = vmatprep.subr.mxu0 0.0
    %10246 = vmatpush1.msra.mxu0 0.0
    %10247 = vmatprep.subr.mxu0 0.0
    %10248 = vmatpush1.msra.mxu0 0.0
    %10249 = vmatprep.subr.mxu0 0.0
    %10250 = vmatpush1.msra.mxu0 0.0
    %10251 = vmatprep.subr.mxu0 0.0
    %10252 = vmatpush1.msra.mxu0 0.0
    %10253 = vmatprep.subr.mxu0 0.0
    %10254 = vmatpush1.msra.mxu0 0.0
    %10255 = vmatprep.subr.mxu0 0.0
    %10256 = vmatpush1.msra.mxu0 0.0
    %10257 = vmatprep.subr.mxu0 0.0
    %10258 = vmatpush1.msra.mxu0 0.0
    %10259 = vmatprep.subr.mxu0 0.0
    %10260 = vmatpush1.msra.mxu0 0.0
    %10261 = vmatprep.subr.mxu0 0.0
    %10262 = vmatpush1.msra.mxu0 0.0
    %10263 = vmatprep.subr.mxu0 0.0
    %10264 = vmatpush1.msra.mxu0 0.0
    %10265 = vmatprep.subr.mxu0 0.0
    %10266 = vmatpush1.msra.mxu0 0.0
    %10267 = vmatprep.subr.mxu0 0.0
    %10268 = vmatpush1.msra.mxu0 0.0
    %10269 = vmatprep.subr.mxu0 0.0
    %10270 = vmatpush1.msra.mxu0 0.0
    %10271 = vmatprep.subr.mxu0 0.0
    %10272 = vmatpush1.msra.mxu0 0.0
    %10273 = vmatprep.subr.mxu0 0.0
    %10274 = vmatpush1.msra.mxu0 0.0
    %10275 = vmatprep.subr.mxu0 0.0
    %10276 = vmatpush1.msra.mxu0 0.0
    %10277 = vmatprep.subr.mxu0 0.0
    %10278 = vmatpush1.msra.mxu0 0.0
    %10279 = vmatprep.subr.mxu0 0.0
    %10280 = vmatpush1.msra.mxu0 0.0
    %10281 = vmatprep.subr.mxu0 0.0
    %10282 = vmatpush1.msra.mxu0 0.0
    %10283 = vmatprep.subr.mxu0 0.0
    %10284 = vmatpush1.msra.mxu0 0.0
    %10285 = vmatprep.subr.mxu0 0.0
    %10286 = vmatpush1.msra.mxu0 0.0
    %10287 = vmatprep.subr.mxu0 0.0
    %10288 = vmatpush1.msra.mxu0 0.0
    %10289 = vmatprep.subr.mxu0 0.0
    %10290 = vmatpush1.msra.mxu0 0.0
    %10291 = vmatprep.mubr.f32.mxu0 0.0
    %v10292 = vand.u32 %v9893, 4294901760
    %v10293 = vsub.f32 %v9893, %v10292
    %v10294 = vand.u32 %v10293, 4294901760
    %10295 = vmatmul.mubr.f32.gmra.mrb[0].mxu0 %v10294
    %v10296 = vpop.f32.mrb[0].mxu0
    %v10297 = vadd.f32 %v10199, %v10296
    %v10298 = vpop.f32.mrb[0].mxu0
    %10299 = vmatprep.mubr.f32.mxu0 0.0
    %v10300 = vand.u32 %v9896, 4294901760
    %v10301 = vsub.f32 %v9896, %v10300
    %v10302 = vand.u32 %v10301, 4294901760
    %10303 = vmatmul.mubr.f32.gmra.mrb[0].mxu0 %v10302
    %v10304 = vpop.f32.mrb[0].mxu0
    %v10305 = vadd.f32 %v10206, %v10304
    %v10306 = vpop.f32.mrb[0].mxu0
    %10307 = vmatprep.mubr.f32.mxu0 0.0
    %v10308 = vand.u32 %v9899, 4294901760
    %v10309 = vsub.f32 %v9899, %v10308
    %v10310 = vand.u32 %v10309, 4294901760
    %10311 = vmatmul.mubr.f32.gmra.mrb[0].mxu0 %v10310
    %v10312 = vpop.f32.mrb[0].mxu0
    %v10313 = vadd.f32 %v10213, %v10312
    %v10314 = vpop.f32.mrb[0].mxu0
    %10315 = vmatprep.mubr.f32.mxu0 0.0
    %v10316 = vand.u32 %v9902, 4294901760
    %v10317 = vsub.f32 %v9902, %v10316
    %v10318 = vand.u32 %v10317, 4294901760
    %10319 = vmatmul.mubr.f32.gmra.mrb[0].mxu0 %v10318
    %v10320 = vpop.f32.mrb[0].mxu0
    %v10321 = vadd.f32 %v10220, %v10320
    %v10322 = vpop.f32.mrb[0].mxu0
    %10323 = vdwg.mxu0
    %10324 = vmatprep.subr.mxu0 0.0
    %v10325 = vand.u32 %v44, 4294901760
    %v10326 = vsub.f32 %v44, %v10325
    %v10327 = vand.u32 %v10326, 4294901760
    %10328 = vmatpush1.msra.mxu0 %v10327
    %10329 = vmatprep.subr.mxu0 0.0
    %v10330 = vand.u32 %v45, 4294901760
    %v10331 = vsub.f32 %v45, %v10330
    %v10332 = vand.u32 %v10331, 4294901760
    %10333 = vmatpush1.msra.mxu0 %v10332
    %10334 = vmatprep.subr.mxu0 0.0
    %v10335 = vand.u32 %v46, 4294901760
    %v10336 = vsub.f32 %v46, %v10335
    %v10337 = vand.u32 %v10336, 4294901760
    %10338 = vmatpush1.msra.mxu0 %v10337
    %10339 = vmatprep.subr.mxu0 0.0
    %v10340 = vand.u32 %v47, 4294901760
    %v10341 = vsub.f32 %v47, %v10340
    %v10342 = vand.u32 %v10341, 4294901760
    %10343 = vmatpush1.msra.mxu0 %v10342
    %10344 = vmatprep.subr.mxu0 0.0
    %10345 = vmatpush1.msra.mxu0 0.0
    %10346 = vmatprep.subr.mxu0 0.0
    %10347 = vmatpush1.msra.mxu0 0.0
    %10348 = vmatprep.subr.mxu0 0.0
    %10349 = vmatpush1.msra.mxu0 0.0
    %10350 = vmatprep.subr.mxu0 0.0
    %10351 = vmatpush1.msra.mxu0 0.0
    %10352 = vmatprep.subr.mxu0 0.0
    %10353 = vmatpush1.msra.mxu0 0.0
    %10354 = vmatprep.subr.mxu0 0.0
    %10355 = vmatpush1.msra.mxu0 0.0
    %10356 = vmatprep.subr.mxu0 0.0
    %10357 = vmatpush1.msra.mxu0 0.0
    %10358 = vmatprep.subr.mxu0 0.0
    %10359 = vmatpush1.msra.mxu0 0.0
    %10360 = vmatprep.subr.mxu0 0.0
    %10361 = vmatpush1.msra.mxu0 0.0
    %10362 = vmatprep.subr.mxu0 0.0
    %10363 = vmatpush1.msra.mxu0 0.0
    %10364 = vmatprep.subr.mxu0 0.0
    %10365 = vmatpush1.msra.mxu0 0.0
    %10366 = vmatprep.subr.mxu0 0.0
    %10367 = vmatpush1.msra.mxu0 0.0
    %10368 = vmatprep.subr.mxu0 0.0
    %10369 = vmatpush1.msra.mxu0 0.0
    %10370 = vmatprep.subr.mxu0 0.0
    %10371 = vmatpush1.msra.mxu0 0.0
    %10372 = vmatprep.subr.mxu0 0.0
    %10373 = vmatpush1.msra.mxu0 0.0
    %10374 = vmatprep.subr.mxu0 0.0
    %10375 = vmatpush1.msra.mxu0 0.0
    %10376 = vmatprep.subr.mxu0 0.0
    %10377 = vmatpush1.msra.mxu0 0.0
    %10378 = vmatprep.subr.mxu0 0.0
    %10379 = vmatpush1.msra.mxu0 0.0
    %10380 = vmatprep.subr.mxu0 0.0
    %10381 = vmatpush1.msra.mxu0 0.0
    %10382 = vmatprep.subr.mxu0 0.0
    %10383 = vmatpush1.msra.mxu0 0.0
    %10384 = vmatprep.subr.mxu0 0.0
    %10385 = vmatpush1.msra.mxu0 0.0
    %10386 = vmatprep.subr.mxu0 0.0
    %10387 = vmatpush1.msra.mxu0 0.0
    %10388 = vmatprep.subr.mxu0 0.0
    %10389 = vmatpush1.msra.mxu0 0.0
    %10390 = vmatprep.subr.mxu0 0.0
    %10391 = vmatpush1.msra.mxu0 0.0
    %10392 = vmatprep.subr.mxu0 0.0
    %10393 = vmatpush1.msra.mxu0 0.0
    %10394 = vmatprep.subr.mxu0 0.0
    %10395 = vmatpush1.msra.mxu0 0.0
    %10396 = vmatprep.subr.mxu0 0.0
    %10397 = vmatpush1.msra.mxu0 0.0
    %10398 = vmatprep.subr.mxu0 0.0
    %10399 = vmatpush1.msra.mxu0 0.0
    %10400 = vmatprep.mubr.f32.mxu0 0.0
    %v10401 = vand.u32 %v9893, 4294901760
    %10402 = vmatmul.mubr.f32.gmra.mrb[0].mxu0 %v10401
    %v10403 = vpop.f32.mrb[0].mxu0
    %v10404 = vadd.f32 %v10297, %v10403
    %v10405 = vpop.f32.mrb[0].mxu0
    %10406 = vmatprep.mubr.f32.mxu0 0.0
    %v10407 = vand.u32 %v9896, 4294901760
    %10408 = vmatmul.mubr.f32.gmra.mrb[0].mxu0 %v10407
    %v10409 = vpop.f32.mrb[0].mxu0
    %v10410 = vadd.f32 %v10305, %v10409
    %v10411 = vpop.f32.mrb[0].mxu0
    %10412 = vmatprep.mubr.f32.mxu0 0.0
    %v10413 = vand.u32 %v9899, 4294901760
    %10414 = vmatmul.mubr.f32.gmra.mrb[0].mxu0 %v10413
    %v10415 = vpop.f32.mrb[0].mxu0
    %v10416 = vadd.f32 %v10313, %v10415
    %v10417 = vpop.f32.mrb[0].mxu0
    %10418 = vmatprep.mubr.f32.mxu0 0.0
    %v10419 = vand.u32 %v9902, 4294901760
    %10420 = vmatmul.mubr.f32.gmra.mrb[0].mxu0 %v10419
    %v10421 = vpop.f32.mrb[0].mxu0
    %v10422 = vadd.f32 %v10321, %v10421
    %v10423 = vpop.f32.mrb[0].mxu0
    %10424 = vdwg.mxu0
    %10425 = vmatprep.subr.mxu0 0.0
    %v10426 = vand.u32 %v44, 4294901760
    %10427 = vmatpush1.msra.mxu0 %v10426
    %10428 = vmatprep.subr.mxu0 0.0
    %v10429 = vand.u32 %v45, 4294901760
    %10430 = vmatpush1.msra.mxu0 %v10429
    %10431 = vmatprep.subr.mxu0 0.0
    %v10432 = vand.u32 %v46, 4294901760
    %10433 = vmatpush1.msra.mxu0 %v10432
    %10434 = vmatprep.subr.mxu0 0.0
    %v10435 = vand.u32 %v47, 4294901760
    %10436 = vmatpush1.msra.mxu0 %v10435
    %10437 = vmatprep.subr.mxu0 0.0
    %10438 = vmatpush1.msra.mxu0 0.0
    %10439 = vmatprep.subr.mxu0 0.0
    %10440 = vmatpush1.msra.mxu0 0.0
    %10441 = vmatprep.subr.mxu0 0.0
    %10442 = vmatpush1.msra.mxu0 0.0
    %10443 = vmatprep.subr.mxu0 0.0
    %10444 = vmatpush1.msra.mxu0 0.0
    %10445 = vmatprep.subr.mxu0 0.0
    %10446 = vmatpush1.msra.mxu0 0.0
    %10447 = vmatprep.subr.mxu0 0.0
    %10448 = vmatpush1.msra.mxu0 0.0
    %10449 = vmatprep.subr.mxu0 0.0
    %10450 = vmatpush1.msra.mxu0 0.0
    %10451 = vmatprep.subr.mxu0 0.0
    %10452 = vmatpush1.msra.mxu0 0.0
    %10453 = vmatprep.subr.mxu0 0.0
    %10454 = vmatpush1.msra.mxu0 0.0
    %10455 = vmatprep.subr.mxu0 0.0
    %10456 = vmatpush1.msra.mxu0 0.0
    %10457 = vmatprep.subr.mxu0 0.0
    %10458 = vmatpush1.msra.mxu0 0.0
    %10459 = vmatprep.subr.mxu0 0.0
    %10460 = vmatpush1.msra.mxu0 0.0
    %10461 = vmatprep.subr.mxu0 0.0
    %10462 = vmatpush1.msra.mxu0 0.0
    %10463 = vmatprep.subr.mxu0 0.0
    %10464 = vmatpush1.msra.mxu0 0.0
    %10465 = vmatprep.subr.mxu0 0.0
    %10466 = vmatpush1.msra.mxu0 0.0
    %10467 = vmatprep.subr.mxu0 0.0
    %10468 = vmatpush1.msra.mxu0 0.0
    %10469 = vmatprep.subr.mxu0 0.0
    %10470 = vmatpush1.msra.mxu0 0.0
    %10471 = vmatprep.subr.mxu0 0.0
    %10472 = vmatpush1.msra.mxu0 0.0
    %10473 = vmatprep.subr.mxu0 0.0
    %10474 = vmatpush1.msra.mxu0 0.0
    %10475 = vmatprep.subr.mxu0 0.0
    %10476 = vmatpush1.msra.mxu0 0.0
    %10477 = vmatprep.subr.mxu0 0.0
    %10478 = vmatpush1.msra.mxu0 0.0
    %10479 = vmatprep.subr.mxu0 0.0
    %10480 = vmatpush1.msra.mxu0 0.0
    %10481 = vmatprep.subr.mxu0 0.0
    %10482 = vmatpush1.msra.mxu0 0.0
    %10483 = vmatprep.subr.mxu0 0.0
    %10484 = vmatpush1.msra.mxu0 0.0
    %10485 = vmatprep.subr.mxu0 0.0
    %10486 = vmatpush1.msra.mxu0 0.0
    %10487 = vmatprep.subr.mxu0 0.0
    %10488 = vmatpush1.msra.mxu0 0.0
    %10489 = vmatprep.subr.mxu0 0.0
    %10490 = vmatpush1.msra.mxu0 0.0
    %10491 = vmatprep.subr.mxu0 0.0
    %10492 = vmatpush1.msra.mxu0 0.0
    %10493 = vmatprep.mubr.f32.mxu0 0.0
    %v10494 = vand.u32 %v9893, 4294901760
    %10495 = vmatmul.mubr.f32.gmra.mrb[0].mxu0 %v10494
    %v10496 = vpop.f32.mrb[0].mxu0
    %v10497 = vadd.f32 %v10404, %v10496
    %v10498 = vpop.f32.mrb[0].mxu0
    %10499 = vmatprep.mubr.f32.mxu0 0.0
    %v10500 = vand.u32 %v9896, 4294901760
    %10501 = vmatmul.mubr.f32.gmra.mrb[0].mxu0 %v10500
    %v10502 = vpop.f32.mrb[0].mxu0
    %v10503 = vadd.f32 %v10410, %v10502
    %v10504 = vpop.f32.mrb[0].mxu0
    %10505 = vmatprep.mubr.f32.mxu0 0.0
    %v10506 = vand.u32 %v9899, 4294901760
    %10507 = vmatmul.mubr.f32.gmra.mrb[0].mxu0 %v10506
    %v10508 = vpop.f32.mrb[0].mxu0
    %v10509 = vadd.f32 %v10416, %v10508
    %v10510 = vpop.f32.mrb[0].mxu0
    %10511 = vmatprep.mubr.f32.mxu0 0.0
    %v10512 = vand.u32 %v9902, 4294901760
    %10513 = vmatmul.mubr.f32.gmra.mrb[0].mxu0 %v10512
    %v10514 = vpop.f32.mrb[0].mxu0
    %v10515 = vadd.f32 %v10422, %v10514
    %v10516 = vpop.f32.mrb[0].mxu0
    %10517 = vdwg.mxu0
    %v10518 = vmul.f32 %v10497, 0.5
    %v10519 = vmul.f32 %v10503, 0.5
    %v10520 = vmul.f32 %v10509, 0.5
    %v10521 = vmul.f32 %v10515, 0.5
    %v10522 = vmul.f32 %v10497, 0.70710677
    %v10523 = vmul.f32 %v10503, 0.70710677
    %v10524 = vmul.f32 %v10509, 0.70710677
    %v10525 = vmul.f32 %v10515, 0.70710677
    %v10526 = verf.f32.pop %v10522
    %v10527 = verf.f32.pop %v10523
    %v10528 = verf.f32.pop %v10524
    %v10529 = verf.f32.pop %v10525
    %v10530 = vadd.f32 %v10526, 1.0
    %v10531 = vadd.f32 %v10527, 1.0
    %v10532 = vadd.f32 %v10528, 1.0
    %v10533 = vadd.f32 %v10529, 1.0
    %v10534 = vmul.f32 %v10518, %v10530
    %v10535 = vmul.f32 %v10519, %v10531
    %v10536 = vmul.f32 %v10520, %v10532
    %v10537 = vmul.f32 %v10521, %v10533
    %vm10538 = vcmask 523264
    %v10540 = vsel %vm10538, %v10534, 0
    %v10543 = vsel %vm10538, %v10535, 0
    %v10546 = vsel %vm10538, %v10536, 0
    %v10549 = vsel %vm10538, %v10537, 0
    %10551 = vmatprep.subr.mxu0 0.0
    %v10552 = vand.u32 %v48, 4294901760
    %10553 = vmatpush1.msra.mxu0 %v10552
    %10554 = vmatprep.subr.mxu0 0.0
    %v10555 = vand.u32 %v49, 4294901760
    %10556 = vmatpush1.msra.mxu0 %v10555
    %10557 = vmatprep.subr.mxu0 0.0
    %v10558 = vand.u32 %v50, 4294901760
    %10559 = vmatpush1.msra.mxu0 %v10558
    %10560 = vmatprep.subr.mxu0 0.0
    %v10561 = vand.u32 %v51, 4294901760
    %10562 = vmatpush1.msra.mxu0 %v10561
    %10563 = vmatprep.subr.mxu0 0.0
    %v10564 = vand.u32 %v52, 4294901760
    %10565 = vmatpush1.msra.mxu0 %v10564
    %10566 = vmatprep.subr.mxu0 0.0
    %v10567 = vand.u32 %v53, 4294901760
    %10568 = vmatpush1.msra.mxu0 %v10567
    %10569 = vmatprep.subr.mxu0 0.0
    %v10570 = vand.u32 %v54, 4294901760
    %10571 = vmatpush1.msra.mxu0 %v10570
    %10572 = vmatprep.subr.mxu0 0.0
    %v10573 = vand.u32 %v55, 4294901760
    %10574 = vmatpush1.msra.mxu0 %v10573
    %10575 = vmatprep.subr.mxu0 0.0
    %10576 = vmatpush1.msra.mxu0 0.0
    %10577 = vmatprep.subr.mxu0 0.0
    %10578 = vmatpush1.msra.mxu0 0.0
    %10579 = vmatprep.subr.mxu0 0.0
    %10580 = vmatpush1.msra.mxu0 0.0
    %10581 = vmatprep.subr.mxu0 0.0
    %10582 = vmatpush1.msra.mxu0 0.0
    %10583 = vmatprep.subr.mxu0 0.0
    %10584 = vmatpush1.msra.mxu0 0.0
    %10585 = vmatprep.subr.mxu0 0.0
    %10586 = vmatpush1.msra.mxu0 0.0
    %10587 = vmatprep.subr.mxu0 0.0
    %10588 = vmatpush1.msra.mxu0 0.0
    %10589 = vmatprep.subr.mxu0 0.0
    %10590 = vmatpush1.msra.mxu0 0.0
    %10591 = vmatprep.subr.mxu0 0.0
    %10592 = vmatpush1.msra.mxu0 0.0
    %10593 = vmatprep.subr.mxu0 0.0
    %10594 = vmatpush1.msra.mxu0 0.0
    %10595 = vmatprep.subr.mxu0 0.0
    %10596 = vmatpush1.msra.mxu0 0.0
    %10597 = vmatprep.subr.mxu0 0.0
    %10598 = vmatpush1.msra.mxu0 0.0
    %10599 = vmatprep.subr.mxu0 0.0
    %10600 = vmatpush1.msra.mxu0 0.0
    %10601 = vmatprep.subr.mxu0 0.0
    %10602 = vmatpush1.msra.mxu0 0.0
    %10603 = vmatprep.subr.mxu0 0.0
    %10604 = vmatpush1.msra.mxu0 0.0
    %10605 = vmatprep.subr.mxu0 0.0
    %10606 = vmatpush1.msra.mxu0 0.0
    %10607 = vmatprep.subr.mxu0 0.0
    %10608 = vmatpush1.msra.mxu0 0.0
    %10609 = vmatprep.subr.mxu0 0.0
    %10610 = vmatpush1.msra.mxu0 0.0
    %10611 = vmatprep.subr.mxu0 0.0
    %10612 = vmatpush1.msra.mxu0 0.0
    %10613 = vmatprep.subr.mxu0 0.0
    %10614 = vmatpush1.msra.mxu0 0.0
    %10615 = vmatprep.subr.mxu0 0.0
    %10616 = vmatpush1.msra.mxu0 0.0
    %10617 = vmatprep.subr.mxu0 0.0
    %10618 = vmatpush1.msra.mxu0 0.0
    %10619 = vmatprep.subr.mxu0 0.0
    %10620 = vmatpush1.msra.mxu0 0.0
    %10621 = vmatprep.subr.mxu0 0.0
    %10622 = vmatpush1.msra.mxu0 0.0
    %10623 = vmatprep.mubr.f32.mxu0 0.0
    %v10624 = vand.u32 %v10540, 4294901760
    %v10625 = vsub.f32 %v10540, %v10624
    %v10626 = vand.u32 %v10625, 4294901760
    %v10627 = vsub.f32 %v10625, %v10626
    %v10628 = vand.u32 %v10627, 4294901760
    %10629 = vmatmul.mubr.f32.gmra.mrb[0].mxu0 %v10628
    %v10630 = vpop.f32.mrb[0].mxu0
    %v10631 = vadd.f32 0.0, %v10630
    %v10632 = vpop.f32.mrb[0].mxu0
    %10633 = vmatprep.mubr.f32.mxu0 0.0
    %v10634 = vand.u32 %v10543, 4294901760
    %v10635 = vsub.f32 %v10543, %v10634
    %v10636 = vand.u32 %v10635, 4294901760
    %v10637 = vsub.f32 %v10635, %v10636
    %v10638 = vand.u32 %v10637, 4294901760
    %10639 = vmatmul.mubr.f32.gmra.mrb[0].mxu0 %v10638
    %v10640 = vpop.f32.mrb[0].mxu0
    %v10641 = vadd.f32 0.0, %v10640
    %v10642 = vpop.f32.mrb[0].mxu0
    %10643 = vmatprep.mubr.f32.mxu0 0.0
    %v10644 = vand.u32 %v10546, 4294901760
    %v10645 = vsub.f32 %v10546, %v10644
    %v10646 = vand.u32 %v10645, 4294901760
    %v10647 = vsub.f32 %v10645, %v10646
    %v10648 = vand.u32 %v10647, 4294901760
    %10649 = vmatmul.mubr.f32.gmra.mrb[0].mxu0 %v10648
    %v10650 = vpop.f32.mrb[0].mxu0
    %v10651 = vadd.f32 0.0, %v10650
    %v10652 = vpop.f32.mrb[0].mxu0
    %10653 = vmatprep.mubr.f32.mxu0 0.0
    %v10654 = vand.u32 %v10549, 4294901760
    %v10655 = vsub.f32 %v10549, %v10654
    %v10656 = vand.u32 %v10655, 4294901760
    %v10657 = vsub.f32 %v10655, %v10656
    %v10658 = vand.u32 %v10657, 4294901760
    %10659 = vmatmul.mubr.f32.gmra.mrb[0].mxu0 %v10658
    %v10660 = vpop.f32.mrb[0].mxu0
    %v10661 = vadd.f32 0.0, %v10660
    %v10662 = vpop.f32.mrb[0].mxu0
    %10663 = vdwg.mxu0
    %10664 = vmatprep.subr.mxu0 0.0
    %v10665 = vand.u32 %v48, 4294901760
    %v10666 = vsub.f32 %v48, %v10665
    %v10667 = vand.u32 %v10666, 4294901760
    %v10668 = vsub.f32 %v10666, %v10667
    %v10669 = vand.u32 %v10668, 4294901760
    %10670 = vmatpush1.msra.mxu0 %v10669
    %10671 = vmatprep.subr.mxu0 0.0
    %v10672 = vand.u32 %v49, 4294901760
    %v10673 = vsub.f32 %v49, %v10672
    %v10674 = vand.u32 %v10673, 4294901760
    %v10675 = vsub.f32 %v10673, %v10674
    %v10676 = vand.u32 %v10675, 4294901760
    %10677 = vmatpush1.msra.mxu0 %v10676
    %10678 = vmatprep.subr.mxu0 0.0
    %v10679 = vand.u32 %v50, 4294901760
    %v10680 = vsub.f32 %v50, %v10679
    %v10681 = vand.u32 %v10680, 4294901760
    %v10682 = vsub.f32 %v10680, %v10681
    %v10683 = vand.u32 %v10682, 4294901760
    %10684 = vmatpush1.msra.mxu0 %v10683
    %10685 = vmatprep.subr.mxu0 0.0
    %v10686 = vand.u32 %v51, 4294901760
    %v10687 = vsub.f32 %v51, %v10686
    %v10688 = vand.u32 %v10687, 4294901760
    %v10689 = vsub.f32 %v10687, %v10688
    %v10690 = vand.u32 %v10689, 4294901760
    %10691 = vmatpush1.msra.mxu0 %v10690
    %10692 = vmatprep.subr.mxu0 0.0
    %v10693 = vand.u32 %v52, 4294901760
    %v10694 = vsub.f32 %v52, %v10693
    %v10695 = vand.u32 %v10694, 4294901760
    %v10696 = vsub.f32 %v10694, %v10695
    %v10697 = vand.u32 %v10696, 4294901760
    %10698 = vmatpush1.msra.mxu0 %v10697
    %10699 = vmatprep.subr.mxu0 0.0
    %v10700 = vand.u32 %v53, 4294901760
    %v10701 = vsub.f32 %v53, %v10700
    %v10702 = vand.u32 %v10701, 4294901760
    %v10703 = vsub.f32 %v10701, %v10702
    %v10704 = vand.u32 %v10703, 4294901760
    %10705 = vmatpush1.msra.mxu0 %v10704
    %10706 = vmatprep.subr.mxu0 0.0
    %v10707 = vand.u32 %v54, 4294901760
    %v10708 = vsub.f32 %v54, %v10707
    %v10709 = vand.u32 %v10708, 4294901760
    %v10710 = vsub.f32 %v10708, %v10709
    %v10711 = vand.u32 %v10710, 4294901760
    %10712 = vmatpush1.msra.mxu0 %v10711
    %10713 = vmatprep.subr.mxu0 0.0
    %v10714 = vand.u32 %v55, 4294901760
    %v10715 = vsub.f32 %v55, %v10714
    %v10716 = vand.u32 %v10715, 4294901760
    %v10717 = vsub.f32 %v10715, %v10716
    %v10718 = vand.u32 %v10717, 4294901760
    %10719 = vmatpush1.msra.mxu0 %v10718
    %10720 = vmatprep.subr.mxu0 0.0
    %10721 = vmatpush1.msra.mxu0 0.0
    %10722 = vmatprep.subr.mxu0 0.0
    %10723 = vmatpush1.msra.mxu0 0.0
    %10724 = vmatprep.subr.mxu0 0.0
    %10725 = vmatpush1.msra.mxu0 0.0
    %10726 = vmatprep.subr.mxu0 0.0
    %10727 = vmatpush1.msra.mxu0 0.0
    %10728 = vmatprep.subr.mxu0 0.0
    %10729 = vmatpush1.msra.mxu0 0.0
    %10730 = vmatprep.subr.mxu0 0.0
    %10731 = vmatpush1.msra.mxu0 0.0
    %10732 = vmatprep.subr.mxu0 0.0
    %10733 = vmatpush1.msra.mxu0 0.0
    %10734 = vmatprep.subr.mxu0 0.0
    %10735 = vmatpush1.msra.mxu0 0.0
    %10736 = vmatprep.subr.mxu0 0.0
    %10737 = vmatpush1.msra.mxu0 0.0
    %10738 = vmatprep.subr.mxu0 0.0
    %10739 = vmatpush1.msra.mxu0 0.0
    %10740 = vmatprep.subr.mxu0 0.0
    %10741 = vmatpush1.msra.mxu0 0.0
    %10742 = vmatprep.subr.mxu0 0.0
    %10743 = vmatpush1.msra.mxu0 0.0
    %10744 = vmatprep.subr.mxu0 0.0
    %10745 = vmatpush1.msra.mxu0 0.0
    %10746 = vmatprep.subr.mxu0 0.0
    %10747 = vmatpush1.msra.mxu0 0.0
    %10748 = vmatprep.subr.mxu0 0.0
    %10749 = vmatpush1.msra.mxu0 0.0
    %10750 = vmatprep.subr.mxu0 0.0
    %10751 = vmatpush1.msra.mxu0 0.0
    %10752 = vmatprep.subr.mxu0 0.0
    %10753 = vmatpush1.msra.mxu0 0.0
    %10754 = vmatprep.subr.mxu0 0.0
    %10755 = vmatpush1.msra.mxu0 0.0
    %10756 = vmatprep.subr.mxu0 0.0
    %10757 = vmatpush1.msra.mxu0 0.0
    %10758 = vmatprep.subr.mxu0 0.0
    %10759 = vmatpush1.msra.mxu0 0.0
    %10760 = vmatprep.subr.mxu0 0.0
    %10761 = vmatpush1.msra.mxu0 0.0
    %10762 = vmatprep.subr.mxu0 0.0
    %10763 = vmatpush1.msra.mxu0 0.0
    %10764 = vmatprep.subr.mxu0 0.0
    %10765 = vmatpush1.msra.mxu0 0.0
    %10766 = vmatprep.subr.mxu0 0.0
    %10767 = vmatpush1.msra.mxu0 0.0
    %10768 = vmatprep.mubr.f32.mxu0 0.0
    %v10769 = vand.u32 %v10540, 4294901760
    %10770 = vmatmul.mubr.f32.gmra.mrb[0].mxu0 %v10769
    %v10771 = vpop.f32.mrb[0].mxu0
    %v10772 = vadd.f32 %v10631, %v10771
    %v10773 = vpop.f32.mrb[0].mxu0
    %10774 = vmatprep.mubr.f32.mxu0 0.0
    %v10775 = vand.u32 %v10543, 4294901760
    %10776 = vmatmul.mubr.f32.gmra.mrb[0].mxu0 %v10775
    %v10777 = vpop.f32.mrb[0].mxu0
    %v10778 = vadd.f32 %v10641, %v10777
    %v10779 = vpop.f32.mrb[0].mxu0
    %10780 = vmatprep.mubr.f32.mxu0 0.0
    %v10781 = vand.u32 %v10546, 4294901760
    %10782 = vmatmul.mubr.f32.gmra.mrb[0].mxu0 %v10781
    %v10783 = vpop.f32.mrb[0].mxu0
    %v10784 = vadd.f32 %v10651, %v10783
    %v10785 = vpop.f32.mrb[0].mxu0
    %10786 = vmatprep.mubr.f32.mxu0 0.0
    %v10787 = vand.u32 %v10549, 4294901760
    %10788 = vmatmul.mubr.f32.gmra.mrb[0].mxu0 %v10787
    %v10789 = vpop.f32.mrb[0].mxu0
    %v10790 = vadd.f32 %v10661, %v10789
    %v10791 = vpop.f32.mrb[0].mxu0
    %10792 = vdwg.mxu0
    %10793 = vmatprep.subr.mxu0 0.0
    %v10794 = vand.u32 %v48, 4294901760
    %v10795 = vsub.f32 %v48, %v10794
    %10796 = vmatpush1.msra.mxu0 %v10795
    %10797 = vmatprep.subr.mxu0 0.0
    %v10798 = vand.u32 %v49, 4294901760
    %v10799 = vsub.f32 %v49, %v10798
    %10800 = vmatpush1.msra.mxu0 %v10799
    %10801 = vmatprep.subr.mxu0 0.0
    %v10802 = vand.u32 %v50, 4294901760
    %v10803 = vsub.f32 %v50, %v10802
    %10804 = vmatpush1.msra.mxu0 %v10803
    %10805 = vmatprep.subr.mxu0 0.0
    %v10806 = vand.u32 %v51, 4294901760
    %v10807 = vsub.f32 %v51, %v10806
    %10808 = vmatpush1.msra.mxu0 %v10807
    %10809 = vmatprep.subr.mxu0 0.0
    %v10810 = vand.u32 %v52, 4294901760
    %v10811 = vsub.f32 %v52, %v10810
    %10812 = vmatpush1.msra.mxu0 %v10811
    %10813 = vmatprep.subr.mxu0 0.0
    %v10814 = vand.u32 %v53, 4294901760
    %v10815 = vsub.f32 %v53, %v10814
    %10816 = vmatpush1.msra.mxu0 %v10815
    %10817 = vmatprep.subr.mxu0 0.0
    %v10818 = vand.u32 %v54, 4294901760
    %v10819 = vsub.f32 %v54, %v10818
    %10820 = vmatpush1.msra.mxu0 %v10819
    %10821 = vmatprep.subr.mxu0 0.0
    %v10822 = vand.u32 %v55, 4294901760
    %v10823 = vsub.f32 %v55, %v10822
    %10824 = vmatpush1.msra.mxu0 %v10823
    %10825 = vmatprep.subr.mxu0 0.0
    %10826 = vmatpush1.msra.mxu0 0.0
    %10827 = vmatprep.subr.mxu0 0.0
    %10828 = vmatpush1.msra.mxu0 0.0
    %10829 = vmatprep.subr.mxu0 0.0
    %10830 = vmatpush1.msra.mxu0 0.0
    %10831 = vmatprep.subr.mxu0 0.0
    %10832 = vmatpush1.msra.mxu0 0.0
    %10833 = vmatprep.subr.mxu0 0.0
    %10834 = vmatpush1.msra.mxu0 0.0
    %10835 = vmatprep.subr.mxu0 0.0
    %10836 = vmatpush1.msra.mxu0 0.0
    %10837 = vmatprep.subr.mxu0 0.0
    %10838 = vmatpush1.msra.mxu0 0.0
    %10839 = vmatprep.subr.mxu0 0.0
    %10840 = vmatpush1.msra.mxu0 0.0
    %10841 = vmatprep.subr.mxu0 0.0
    %10842 = vmatpush1.msra.mxu0 0.0
    %10843 = vmatprep.subr.mxu0 0.0
    %10844 = vmatpush1.msra.mxu0 0.0
    %10845 = vmatprep.subr.mxu0 0.0
    %10846 = vmatpush1.msra.mxu0 0.0
    %10847 = vmatprep.subr.mxu0 0.0
    %10848 = vmatpush1.msra.mxu0 0.0
    %10849 = vmatprep.subr.mxu0 0.0
    %10850 = vmatpush1.msra.mxu0 0.0
    %10851 = vmatprep.subr.mxu0 0.0
    %10852 = vmatpush1.msra.mxu0 0.0
    %10853 = vmatprep.subr.mxu0 0.0
    %10854 = vmatpush1.msra.mxu0 0.0
    %10855 = vmatprep.subr.mxu0 0.0
    %10856 = vmatpush1.msra.mxu0 0.0
    %10857 = vmatprep.subr.mxu0 0.0
    %10858 = vmatpush1.msra.mxu0 0.0
    %10859 = vmatprep.subr.mxu0 0.0
    %10860 = vmatpush1.msra.mxu0 0.0
    %10861 = vmatprep.subr.mxu0 0.0
    %10862 = vmatpush1.msra.mxu0 0.0
    %10863 = vmatprep.subr.mxu0 0.0
    %10864 = vmatpush1.msra.mxu0 0.0
    %10865 = vmatprep.subr.mxu0 0.0
    %10866 = vmatpush1.msra.mxu0 0.0
    %10867 = vmatprep.subr.mxu0 0.0
    %10868 = vmatpush1.msra.mxu0 0.0
    %10869 = vmatprep.subr.mxu0 0.0
    %10870 = vmatpush1.msra.mxu0 0.0
    %10871 = vmatprep.subr.mxu0 0.0
    %10872 = vmatpush1.msra.mxu0 0.0
    %10873 = vmatprep.mubr.f32.mxu0 0.0
    %v10874 = vand.u32 %v10540, 4294901760
    %v10875 = vsub.f32 %v10540, %v10874
    %10876 = vmatmul.mubr.f32.gmra.mrb[0].mxu0 %v10875
    %v10877 = vpop.f32.mrb[0].mxu0
    %v10878 = vadd.f32 %v10772, %v10877
    %v10879 = vpop.f32.mrb[0].mxu0
    %10880 = vmatprep.mubr.f32.mxu0 0.0
    %v10881 = vand.u32 %v10543, 4294901760
    %v10882 = vsub.f32 %v10543, %v10881
    %10883 = vmatmul.mubr.f32.gmra.mrb[0].mxu0 %v10882
    %v10884 = vpop.f32.mrb[0].mxu0
    %v10885 = vadd.f32 %v10778, %v10884
    %v10886 = vpop.f32.mrb[0].mxu0
    %10887 = vmatprep.mubr.f32.mxu0 0.0
    %v10888 = vand.u32 %v10546, 4294901760
    %v10889 = vsub.f32 %v10546, %v10888
    %10890 = vmatmul.mubr.f32.gmra.mrb[0].mxu0 %v10889
    %v10891 = vpop.f32.mrb[0].mxu0
    %v10892 = vadd.f32 %v10784, %v10891
    %v10893 = vpop.f32.mrb[0].mxu0
    %10894 = vmatprep.mubr.f32.mxu0 0.0
    %v10895 = vand.u32 %v10549, 4294901760
    %v10896 = vsub.f32 %v10549, %v10895
    %10897 = vmatmul.mubr.f32.gmra.mrb[0].mxu0 %v10896
    %v10898 = vpop.f32.mrb[0].mxu0
    %v10899 = vadd.f32 %v10790, %v10898
    %v10900 = vpop.f32.mrb[0].mxu0
    %10901 = vdwg.mxu0
    %10902 = vmatprep.subr.mxu0 0.0
    %v10903 = vand.u32 %v48, 4294901760
    %10904 = vmatpush1.msra.mxu0 %v10903
    %10905 = vmatprep.subr.mxu0 0.0
    %v10906 = vand.u32 %v49, 4294901760
    %10907 = vmatpush1.msra.mxu0 %v10906
    %10908 = vmatprep.subr.mxu0 0.0
    %v10909 = vand.u32 %v50, 4294901760
    %10910 = vmatpush1.msra.mxu0 %v10909
    %10911 = vmatprep.subr.mxu0 0.0
    %v10912 = vand.u32 %v51, 4294901760
    %10913 = vmatpush1.msra.mxu0 %v10912
    %10914 = vmatprep.subr.mxu0 0.0
    %v10915 = vand.u32 %v52, 4294901760
    %10916 = vmatpush1.msra.mxu0 %v10915
    %10917 = vmatprep.subr.mxu0 0.0
    %v10918 = vand.u32 %v53, 4294901760
    %10919 = vmatpush1.msra.mxu0 %v10918
    %10920 = vmatprep.subr.mxu0 0.0
    %v10921 = vand.u32 %v54, 4294901760
    %10922 = vmatpush1.msra.mxu0 %v10921
    %10923 = vmatprep.subr.mxu0 0.0
    %v10924 = vand.u32 %v55, 4294901760
    %10925 = vmatpush1.msra.mxu0 %v10924
    %10926 = vmatprep.subr.mxu0 0.0
    %10927 = vmatpush1.msra.mxu0 0.0
    %10928 = vmatprep.subr.mxu0 0.0
    %10929 = vmatpush1.msra.mxu0 0.0
    %10930 = vmatprep.subr.mxu0 0.0
    %10931 = vmatpush1.msra.mxu0 0.0
    %10932 = vmatprep.subr.mxu0 0.0
    %10933 = vmatpush1.msra.mxu0 0.0
    %10934 = vmatprep.subr.mxu0 0.0
    %10935 = vmatpush1.msra.mxu0 0.0
    %10936 = vmatprep.subr.mxu0 0.0
    %10937 = vmatpush1.msra.mxu0 0.0
    %10938 = vmatprep.subr.mxu0 0.0
    %10939 = vmatpush1.msra.mxu0 0.0
    %10940 = vmatprep.subr.mxu0 0.0
    %10941 = vmatpush1.msra.mxu0 0.0
    %10942 = vmatprep.subr.mxu0 0.0
    %10943 = vmatpush1.msra.mxu0 0.0
    %10944 = vmatprep.subr.mxu0 0.0
    %10945 = vmatpush1.msra.mxu0 0.0
    %10946 = vmatprep.subr.mxu0 0.0
    %10947 = vmatpush1.msra.mxu0 0.0
    %10948 = vmatprep.subr.mxu0 0.0
    %10949 = vmatpush1.msra.mxu0 0.0
    %10950 = vmatprep.subr.mxu0 0.0
    %10951 = vmatpush1.msra.mxu0 0.0
    %10952 = vmatprep.subr.mxu0 0.0
    %10953 = vmatpush1.msra.mxu0 0.0
    %10954 = vmatprep.subr.mxu0 0.0
    %10955 = vmatpush1.msra.mxu0 0.0
    %10956 = vmatprep.subr.mxu0 0.0
    %10957 = vmatpush1.msra.mxu0 0.0
    %10958 = vmatprep.subr.mxu0 0.0
    %10959 = vmatpush1.msra.mxu0 0.0
    %10960 = vmatprep.subr.mxu0 0.0
    %10961 = vmatpush1.msra.mxu0 0.0
    %10962 = vmatprep.subr.mxu0 0.0
    %10963 = vmatpush1.msra.mxu0 0.0
    %10964 = vmatprep.subr.mxu0 0.0
    %10965 = vmatpush1.msra.mxu0 0.0
    %10966 = vmatprep.subr.mxu0 0.0
    %10967 = vmatpush1.msra.mxu0 0.0
    %10968 = vmatprep.subr.mxu0 0.0
    %10969 = vmatpush1.msra.mxu0 0.0
    %10970 = vmatprep.subr.mxu0 0.0
    %10971 = vmatpush1.msra.mxu0 0.0
    %10972 = vmatprep.subr.mxu0 0.0
    %10973 = vmatpush1.msra.mxu0 0.0
    %10974 = vmatprep.mubr.f32.mxu0 0.0
    %v10975 = vand.u32 %v10540, 4294901760
    %v10976 = vsub.f32 %v10540, %v10975
    %v10977 = vand.u32 %v10976, 4294901760
    %10978 = vmatmul.mubr.f32.gmra.mrb[0].mxu0 %v10977
    %v10979 = vpop.f32.mrb[0].mxu0
    %v10980 = vadd.f32 %v10878, %v10979
    %v10981 = vpop.f32.mrb[0].mxu0
    %10982 = vmatprep.mubr.f32.mxu0 0.0
    %v10983 = vand.u32 %v10543, 4294901760
    %v10984 = vsub.f32 %v10543, %v10983
    %v10985 = vand.u32 %v10984, 4294901760
    %10986 = vmatmul.mubr.f32.gmra.mrb[0].mxu0 %v10985
    %v10987 = vpop.f32.mrb[0].mxu0
    %v10988 = vadd.f32 %v10885, %v10987
    %v10989 = vpop.f32.mrb[0].mxu0
    %10990 = vmatprep.mubr.f32.mxu0 0.0
    %v10991 = vand.u32 %v10546, 4294901760
    %v10992 = vsub.f32 %v10546, %v10991
    %v10993 = vand.u32 %v10992, 4294901760
    %10994 = vmatmul.mubr.f32.gmra.mrb[0].mxu0 %v10993
    %v10995 = vpop.f32.mrb[0].mxu0
    %v10996 = vadd.f32 %v10892, %v10995
    %v10997 = vpop.f32.mrb[0].mxu0
    %10998 = vmatprep.mubr.f32.mxu0 0.0
    %v10999 = vand.u32 %v10549, 4294901760
    %v11000 = vsub.f32 %v10549, %v10999
    %v11001 = vand.u32 %v11000, 4294901760
    %11002 = vmatmul.mubr.f32.gmra.mrb[0].mxu0 %v11001
    %v11003 = vpop.f32.mrb[0].mxu0
    %v11004 = vadd.f32 %v10899, %v11003
    %v11005 = vpop.f32.mrb[0].mxu0
    %11006 = vdwg.mxu0
    %11007 = vmatprep.subr.mxu0 0.0
    %v11008 = vand.u32 %v48, 4294901760
    %v11009 = vsub.f32 %v48, %v11008
    %v11010 = vand.u32 %v11009, 4294901760
    %11011 = vmatpush1.msra.mxu0 %v11010
    %11012 = vmatprep.subr.mxu0 0.0
    %v11013 = vand.u32 %v49, 4294901760
    %v11014 = vsub.f32 %v49, %v11013
    %v11015 = vand.u32 %v11014, 4294901760
    %11016 = vmatpush1.msra.mxu0 %v11015
    %11017 = vmatprep.subr.mxu0 0.0
    %v11018 = vand.u32 %v50, 4294901760
    %v11019 = vsub.f32 %v50, %v11018
    %v11020 = vand.u32 %v11019, 4294901760
    %11021 = vmatpush1.msra.mxu0 %v11020
    %11022 = vmatprep.subr.mxu0 0.0
    %v11023 = vand.u32 %v51, 4294901760
    %v11024 = vsub.f32 %v51, %v11023
    %v11025 = vand.u32 %v11024, 4294901760
    %11026 = vmatpush1.msra.mxu0 %v11025
    %11027 = vmatprep.subr.mxu0 0.0
    %v11028 = vand.u32 %v52, 4294901760
    %v11029 = vsub.f32 %v52, %v11028
    %v11030 = vand.u32 %v11029, 4294901760
    %11031 = vmatpush1.msra.mxu0 %v11030
    %11032 = vmatprep.subr.mxu0 0.0
    %v11033 = vand.u32 %v53, 4294901760
    %v11034 = vsub.f32 %v53, %v11033
    %v11035 = vand.u32 %v11034, 4294901760
    %11036 = vmatpush1.msra.mxu0 %v11035
    %11037 = vmatprep.subr.mxu0 0.0
    %v11038 = vand.u32 %v54, 4294901760
    %v11039 = vsub.f32 %v54, %v11038
    %v11040 = vand.u32 %v11039, 4294901760
    %11041 = vmatpush1.msra.mxu0 %v11040
    %11042 = vmatprep.subr.mxu0 0.0
    %v11043 = vand.u32 %v55, 4294901760
    %v11044 = vsub.f32 %v55, %v11043
    %v11045 = vand.u32 %v11044, 4294901760
    %11046 = vmatpush1.msra.mxu0 %v11045
    %11047 = vmatprep.subr.mxu0 0.0
    %11048 = vmatpush1.msra.mxu0 0.0
    %11049 = vmatprep.subr.mxu0 0.0
    %11050 = vmatpush1.msra.mxu0 0.0
    %11051 = vmatprep.subr.mxu0 0.0
    %11052 = vmatpush1.msra.mxu0 0.0
    %11053 = vmatprep.subr.mxu0 0.0
    %11054 = vmatpush1.msra.mxu0 0.0
    %11055 = vmatprep.subr.mxu0 0.0
    %11056 = vmatpush1.msra.mxu0 0.0
    %11057 = vmatprep.subr.mxu0 0.0
    %11058 = vmatpush1.msra.mxu0 0.0
    %11059 = vmatprep.subr.mxu0 0.0
    %11060 = vmatpush1.msra.mxu0 0.0
    %11061 = vmatprep.subr.mxu0 0.0
    %11062 = vmatpush1.msra.mxu0 0.0
    %11063 = vmatprep.subr.mxu0 0.0
    %11064 = vmatpush1.msra.mxu0 0.0
    %11065 = vmatprep.subr.mxu0 0.0
    %11066 = vmatpush1.msra.mxu0 0.0
    %11067 = vmatprep.subr.mxu0 0.0
    %11068 = vmatpush1.msra.mxu0 0.0
    %11069 = vmatprep.subr.mxu0 0.0
    %11070 = vmatpush1.msra.mxu0 0.0
    %11071 = vmatprep.subr.mxu0 0.0
    %11072 = vmatpush1.msra.mxu0 0.0
    %11073 = vmatprep.subr.mxu0 0.0
    %11074 = vmatpush1.msra.mxu0 0.0
    %11075 = vmatprep.subr.mxu0 0.0
    %11076 = vmatpush1.msra.mxu0 0.0
    %11077 = vmatprep.subr.mxu0 0.0
    %11078 = vmatpush1.msra.mxu0 0.0
    %11079 = vmatprep.subr.mxu0 0.0
    %11080 = vmatpush1.msra.mxu0 0.0
    %11081 = vmatprep.subr.mxu0 0.0
    %11082 = vmatpush1.msra.mxu0 0.0
    %11083 = vmatprep.subr.mxu0 0.0
    %11084 = vmatpush1.msra.mxu0 0.0
    %11085 = vmatprep.subr.mxu0 0.0
    %11086 = vmatpush1.msra.mxu0 0.0
    %11087 = vmatprep.subr.mxu0 0.0
    %11088 = vmatpush1.msra.mxu0 0.0
    %11089 = vmatprep.subr.mxu0 0.0
    %11090 = vmatpush1.msra.mxu0 0.0
    %11091 = vmatprep.subr.mxu0 0.0
    %11092 = vmatpush1.msra.mxu0 0.0
    %11093 = vmatprep.subr.mxu0 0.0
    %11094 = vmatpush1.msra.mxu0 0.0
    %11095 = vmatprep.mubr.f32.mxu0 0.0
    %v11096 = vand.u32 %v10540, 4294901760
    %11097 = vmatmul.mubr.f32.gmra.mrb[0].mxu0 %v11096
    %v11098 = vpop.f32.mrb[0].mxu0
    %v11099 = vadd.f32 %v10980, %v11098
    %v11100 = vpop.f32.mrb[0].mxu0
    %11101 = vmatprep.mubr.f32.mxu0 0.0
    %v11102 = vand.u32 %v10543, 4294901760
    %11103 = vmatmul.mubr.f32.gmra.mrb[0].mxu0 %v11102
    %v11104 = vpop.f32.mrb[0].mxu0
    %v11105 = vadd.f32 %v10988, %v11104
    %v11106 = vpop.f32.mrb[0].mxu0
    %11107 = vmatprep.mubr.f32.mxu0 0.0
    %v11108 = vand.u32 %v10546, 4294901760
    %11109 = vmatmul.mubr.f32.gmra.mrb[0].mxu0 %v11108
    %v11110 = vpop.f32.mrb[0].mxu0
    %v11111 = vadd.f32 %v10996, %v11110
    %v11112 = vpop.f32.mrb[0].mxu0
    %11113 = vmatprep.mubr.f32.mxu0 0.0
    %v11114 = vand.u32 %v10549, 4294901760
    %11115 = vmatmul.mubr.f32.gmra.mrb[0].mxu0 %v11114
    %v11116 = vpop.f32.mrb[0].mxu0
    %v11117 = vadd.f32 %v11004, %v11116
    %v11118 = vpop.f32.mrb[0].mxu0
    %11119 = vdwg.mxu0
    %11120 = vmatprep.subr.mxu0 0.0
    %v11121 = vand.u32 %v48, 4294901760
    %11122 = vmatpush1.msra.mxu0 %v11121
    %11123 = vmatprep.subr.mxu0 0.0
    %v11124 = vand.u32 %v49, 4294901760
    %11125 = vmatpush1.msra.mxu0 %v11124
    %11126 = vmatprep.subr.mxu0 0.0
    %v11127 = vand.u32 %v50, 4294901760
    %11128 = vmatpush1.msra.mxu0 %v11127
    %11129 = vmatprep.subr.mxu0 0.0
    %v11130 = vand.u32 %v51, 4294901760
    %11131 = vmatpush1.msra.mxu0 %v11130
    %11132 = vmatprep.subr.mxu0 0.0
    %v11133 = vand.u32 %v52, 4294901760
    %11134 = vmatpush1.msra.mxu0 %v11133
    %11135 = vmatprep.subr.mxu0 0.0
    %v11136 = vand.u32 %v53, 4294901760
    %11137 = vmatpush1.msra.mxu0 %v11136
    %11138 = vmatprep.subr.mxu0 0.0
    %v11139 = vand.u32 %v54, 4294901760
    %11140 = vmatpush1.msra.mxu0 %v11139
    %11141 = vmatprep.subr.mxu0 0.0
    %v11142 = vand.u32 %v55, 4294901760
    %11143 = vmatpush1.msra.mxu0 %v11142
    %11144 = vmatprep.subr.mxu0 0.0
    %11145 = vmatpush1.msra.mxu0 0.0
    %11146 = vmatprep.subr.mxu0 0.0
    %11147 = vmatpush1.msra.mxu0 0.0
    %11148 = vmatprep.subr.mxu0 0.0
    %11149 = vmatpush1.msra.mxu0 0.0
    %11150 = vmatprep.subr.mxu0 0.0
    %11151 = vmatpush1.msra.mxu0 0.0
    %11152 = vmatprep.subr.mxu0 0.0
    %11153 = vmatpush1.msra.mxu0 0.0
    %11154 = vmatprep.subr.mxu0 0.0
    %11155 = vmatpush1.msra.mxu0 0.0
    %11156 = vmatprep.subr.mxu0 0.0
    %11157 = vmatpush1.msra.mxu0 0.0
    %11158 = vmatprep.subr.mxu0 0.0
    %11159 = vmatpush1.msra.mxu0 0.0
    %11160 = vmatprep.subr.mxu0 0.0
    %11161 = vmatpush1.msra.mxu0 0.0
    %11162 = vmatprep.subr.mxu0 0.0
    %11163 = vmatpush1.msra.mxu0 0.0
    %11164 = vmatprep.subr.mxu0 0.0
    %11165 = vmatpush1.msra.mxu0 0.0
    %11166 = vmatprep.subr.mxu0 0.0
    %11167 = vmatpush1.msra.mxu0 0.0
    %11168 = vmatprep.subr.mxu0 0.0
    %11169 = vmatpush1.msra.mxu0 0.0
    %11170 = vmatprep.subr.mxu0 0.0
    %11171 = vmatpush1.msra.mxu0 0.0
    %11172 = vmatprep.subr.mxu0 0.0
    %11173 = vmatpush1.msra.mxu0 0.0
    %11174 = vmatprep.subr.mxu0 0.0
    %11175 = vmatpush1.msra.mxu0 0.0
    %11176 = vmatprep.subr.mxu0 0.0
    %11177 = vmatpush1.msra.mxu0 0.0
    %11178 = vmatprep.subr.mxu0 0.0
    %11179 = vmatpush1.msra.mxu0 0.0
    %11180 = vmatprep.subr.mxu0 0.0
    %11181 = vmatpush1.msra.mxu0 0.0
    %11182 = vmatprep.subr.mxu0 0.0
    %11183 = vmatpush1.msra.mxu0 0.0
    %11184 = vmatprep.subr.mxu0 0.0
    %11185 = vmatpush1.msra.mxu0 0.0
    %11186 = vmatprep.subr.mxu0 0.0
    %11187 = vmatpush1.msra.mxu0 0.0
    %11188 = vmatprep.subr.mxu0 0.0
    %11189 = vmatpush1.msra.mxu0 0.0
    %11190 = vmatprep.subr.mxu0 0.0
    %11191 = vmatpush1.msra.mxu0 0.0
    %11192 = vmatprep.mubr.f32.mxu0 0.0
    %v11193 = vand.u32 %v10540, 4294901760
    %11194 = vmatmul.mubr.f32.gmra.mrb[0].mxu0 %v11193
    %v11195 = vpop.f32.mrb[0].mxu0
    %v11196 = vadd.f32 %v11099, %v11195
    %v11197 = vpop.f32.mrb[0].mxu0
    %11198 = vmatprep.mubr.f32.mxu0 0.0
    %v11199 = vand.u32 %v10543, 4294901760
    %11200 = vmatmul.mubr.f32.gmra.mrb[0].mxu0 %v11199
    %v11201 = vpop.f32.mrb[0].mxu0
    %v11202 = vadd.f32 %v11105, %v11201
    %v11203 = vpop.f32.mrb[0].mxu0
    %11204 = vmatprep.mubr.f32.mxu0 0.0
    %v11205 = vand.u32 %v10546, 4294901760
    %11206 = vmatmul.mubr.f32.gmra.mrb[0].mxu0 %v11205
    %v11207 = vpop.f32.mrb[0].mxu0
    %v11208 = vadd.f32 %v11111, %v11207
    %v11209 = vpop.f32.mrb[0].mxu0
    %11210 = vmatprep.mubr.f32.mxu0 0.0
    %v11211 = vand.u32 %v10549, 4294901760
    %11212 = vmatmul.mubr.f32.gmra.mrb[0].mxu0 %v11211
    %v11213 = vpop.f32.mrb[0].mxu0
    %v11214 = vadd.f32 %v11117, %v11213
    %v11215 = vpop.f32.mrb[0].mxu0
    %11216 = vdwg.mxu0
    %v11217 = vadd.f32 %v9884, %v11196
    %v11218 = vadd.f32 %v9885, %v11202
    %v11219 = vadd.f32 %v9886, %v11208
    %v11220 = vadd.f32 %v9887, %v11214
    %v11221 = vlaneseq
    %v11222 = vshrl.u32 %v11221, 7
    %v11223 = vsub.s32 3, %v11222
    %v11224 = vrot.slane %v56, %v11223
    %v11225 = vadd.f32 %v11217, %v11224
    %v11226 = vadd.f32 %v11218, %v11224
    %v11227 = vadd.f32 %v11219, %v11224
    %v11228 = vadd.f32 %v11220, %v11224
    %v11229 = vsel %vm61, %v11225, 0.0
    %v11230 = vsel %vm61, %v11226, 0.0
    %v11231 = vadd.f32 %v11229, %v11230
    %v11232 = vsel %vm61, %v11227, 0.0
    %v11233 = vadd.f32 %v11231, %v11232
    %v11234 = vsel %vm61, %v11228, 0.0
    %v11235 = vadd.f32 %v11233, %v11234
    %v11236 = vrot.slane %v11235, 4
    %v11237 = vadd.f32 %v11235, %v11236
    %v11238 = vrot.slane %v11237, 2
    %v11239 = vadd.f32 %v11237, %v11238
    %v11240 = vrot.slane %v11239, 1
    %v11241 = vadd.f32 %v11239, %v11240
    %v11242 = vmul.f32 %v11241, 0.03125
    %v11243 = vsub.f32 %v11225, %v11242
    %v11244 = vsub.f32 %v11226, %v11242
    %v11245 = vsub.f32 %v11227, %v11242
    %v11246 = vsub.f32 %v11228, %v11242
    %v11247 = vmul.f32 %v11243, %v11243
    %v11248 = vmul.f32 %v11244, %v11244
    %v11249 = vmul.f32 %v11245, %v11245
    %v11250 = vmul.f32 %v11246, %v11246
    %v11251 = vsel %vm61, %v11247, 0.0
    %v11252 = vsel %vm61, %v11248, 0.0
    %v11253 = vadd.f32 %v11251, %v11252
    %v11254 = vsel %vm61, %v11249, 0.0
    %v11255 = vadd.f32 %v11253, %v11254
    %v11256 = vsel %vm61, %v11250, 0.0
    %v11257 = vadd.f32 %v11255, %v11256
    %v11258 = vrot.slane %v11257, 4
    %v11259 = vadd.f32 %v11257, %v11258
    %v11260 = vrot.slane %v11259, 2
    %v11261 = vadd.f32 %v11259, %v11260
    %v11262 = vrot.slane %v11261, 1
    %v11263 = vadd.f32 %v11261, %v11262
    %v11264 = vmul.f32 %v11263, 0.03125
    %v11265 = vadd.f32 %v11264, 1e-05
    %v11266 = vrsqrt.pop %v11265
    %v11267 = vmul.f32 %v11266, %v56
    %v11268 = vlaneseq
    %v11269 = vshrl.u32 %v11268, 7
    %v11270 = vsub.s32 6, %v11269
    %v11271 = vrot.slane %v11267, %v11270
    %v11272 = vmul.f32 %v11243, %v11271
    %v11273 = vmul.f32 %v11244, %v11271
    %v11274 = vmul.f32 %v11245, %v11271
    %v11275 = vmul.f32 %v11246, %v11271
    %v11276 = vlaneseq
    %v11277 = vshrl.u32 %v11276, 7
    %v11278 = vsub.s32 7, %v11277
    %v11279 = vrot.slane %v56, %v11278
    %v11280 = vadd.f32 %v11272, %v11279
    %v11281 = vadd.f32 %v11273, %v11279
    %v11282 = vadd.f32 %v11274, %v11279
    %v11283 = vadd.f32 %v11275, %v11279
    %11284 = vst.msk [vmem:[#allocation5] sm:$0xff] %vm61, %v11280
    %11285 = vst.msk [vmem:[#allocation5 + $0x8] sm:$0xff] %vm61, %v11281
    %11286 = vst.msk [vmem:[#allocation5 + $0x10] sm:$0xff] %vm61, %v11282
    %11287 = vst.msk [vmem:[#allocation5 + $0x18] sm:$0xff] %vm61, %v11283
    // Predicated region
    $region22: #{tpu_custom_call.1} parent=1 // pred_check
      _
    $region23: #{tpu_custom_call.1} parent=1 // pred_check_branch
      %11289 = sbr.rel (0) target = $region25
    $region24: #{tpu_custom_call.1} parent=1 // pred_region
      %s11291 = ssub.s32 512, 512
      %11292 = vsyncadd [#allocation4], %s11291
      %s11293 = sshll.u32 [#allocation5], 4
      %s11294 = int_to_ptr.vmem [resolvable:$true] %s11293
      %11299 = dma.vmem_to_hbm [thread:$0]  %s11294, 512, %s4, [#allocation4], 128, 128, 8
    $region25: #{tpu_custom_call.1} parent=1 // pred_fallthru
      _
    // Predicated region
    $region26: #{tpu_custom_call.1} parent=1 // pred_check
      _
    $region27: #{tpu_custom_call.1} parent=1 // pred_check_branch
      %11301 = sbr.rel (0) target = $region29
    $region28: #{tpu_custom_call.1} parent=1 // pred_region
      %11302 = dma.done [#allocation4], 512
    $region29: #{tpu_custom_call.1} parent=1 // pred_fallthru
      _
    %11303 = vsyncpa [#allocation3], 1
    %11304 = vsyncpa [#allocation4], 1

</llo_original>
